<compile_context>
chip_gen: v6e
topology: v6e:2x2x1
jax: 0.10.0
libtpu: 0.0.40
codegen_flags: <defaults>
</compile_context>

<pallas_src>
import functools

import jax
import jax.numpy as jnp
from jax.experimental import pallas as pl
from jax.experimental.pallas import tpu as pltpu


def _round_up(x, m):
    return ((x + m - 1) // m) * m


# -----------------------------------------------------------------------------
# Pallas kernel: tiled fused (im2col-matmul) conv + BN/bias + SiLU + residual
# -----------------------------------------------------------------------------
def _fused_conv_kernel(*refs, act, use_res):
    if use_res:
        x_ref, w_ref, s_ref, b_ref, r_ref, o_ref, acc_ref = refs
    else:
        x_ref, w_ref, s_ref, b_ref, o_ref, acc_ref = refs
        r_ref = None

    k = pl.program_id(2)

    @pl.when(k == 0)
    def _():
        acc_ref[...] = jnp.zeros_like(acc_ref)

    acc_ref[...] += jnp.dot(
        x_ref[...], w_ref[...], preferred_element_type=jnp.float32)

    # Epilogue only after the last partial sum (scale/bias, SiLU, residual).
    @pl.when(k == pl.num_programs(2) - 1)
    def _():
        acc = acc_ref[...]
        acc = acc * s_ref[...] + b_ref[...]      # folded BN (or conv bias)
        if act:
            acc = acc * jax.nn.sigmoid(acc)      # SiLU (EUP, epilogue only)
        if use_res:
            acc = acc + r_ref[...].astype(jnp.float32)   # Bottleneck shortcut
        o_ref[...] = acc.astype(o_ref.dtype)


def _im2col(x, k, stride, pad):
    """(N,H,W,C) -> (N*Ho*Wo, k*k*C) with per-pixel ordering (kh, kw, C)."""
    N, H, W, C = x.shape
    if pad > 0:
        x = jnp.pad(x, ((0, 0), (pad, pad), (pad, pad), (0, 0)))
    Ho = (H + 2 * pad - k) // stride + 1
    Wo = (W + 2 * pad - k) // stride + 1
    cols = []
    for kh in range(k):
        for kw in range(k):
            cols.append(
                x[:, kh:kh + stride * (Ho - 1) + 1:stride,
                  kw:kw + stride * (Wo - 1) + 1:stride, :])
    patches = jnp.concatenate(cols, axis=-1)     # (N,Ho,Wo,k*k*C)
    return patches.reshape(N * Ho * Wo, k * k * C), (N, Ho, Wo)


def conv_fused(x, weight_oihw, scale, bias, *, stride=1, pad=None, act=True,
               residual=None):
    """Conv2d (PyTorch OIHW weights) fused with scale/bias/SiLU/residual."""
    C_out, C_in, k, _ = weight_oihw.shape
    if pad is None:
        pad = k // 2

    xm, (N, Ho, Wo) = _im2col(x.astype(jnp.bfloat16), k, stride, pad)
    # (C_out,C_in,kh,kw) -> (kh,kw,C_in,C_out) -> (k*k*C_in, C_out) to match
    # the (kh, kw, C_in) patch ordering produced by _im2col.
    wm = jnp.transpose(weight_oihw, (2, 3, 1, 0)).reshape(
        k * k * C_in, C_out).astype(jnp.bfloat16)
    M, K = xm.shape

    # ---- MXU / lane aligned tile sizes ----
    tn = 128                                   # lane-dense output tiles
    tm = min(256, _round_up(M, 8))             # sublane-aligned M tiles
    tk = min(512, _round_up(K, 128))           # contraction tiles
    Mp = _round_up(M, tm)
    Kp = _round_up(K, tk)
    Np = _round_up(C_out, tn)

    # Zero-pad to tile multiples (zero K-padding is exact for the matmul;
    # padded M rows / N cols are sliced off below).
    xm = jnp.pad(xm, ((0, Mp - M), (0, Kp - K)))
    wm = jnp.pad(wm, ((0, Kp - K), (0, Np - C_out)))
    sc = jnp.pad(scale.astype(jnp.float32), (0, Np - C_out)).reshape(1, Np)
    bs = jnp.pad(bias.astype(jnp.float32), (0, Np - C_out)).reshape(1, Np)

    inputs = [xm, wm, sc, bs]
    in_specs = [
        pl.BlockSpec((tm, tk), lambda i, j, kk: (i, kk)),
        pl.BlockSpec((tk, tn), lambda i, j, kk: (kk, j)),
        pl.BlockSpec((1, tn), lambda i, j, kk: (0, j)),
        pl.BlockSpec((1, tn), lambda i, j, kk: (0, j)),
    ]

    use_res = residual is not None
    if use_res:
        r = residual.reshape(M, C_out).astype(jnp.bfloat16)
        r = jnp.pad(r, ((0, Mp - M), (0, Np - C_out)))
        inputs.append(r)
        in_specs.append(pl.BlockSpec((tm, tn), lambda i, j, kk: (i, j)))

    grid = (Mp // tm, Np // tn, Kp // tk)

    out = pl.pallas_call(
        functools.partial(_fused_conv_kernel, act=act, use_res=use_res),
        out_shape=jax.ShapeDtypeStruct((Mp, Np), jnp.bfloat16),
        grid_spec=pltpu.PrefetchScalarGridSpec(
            num_scalar_prefetch=0,
            grid=grid,
            in_specs=in_specs,
            out_specs=pl.BlockSpec((tm, tn), lambda i, j, kk: (i, j)),
            scratch_shapes=[pltpu.VMEM((tm, tn), jnp.float32)],
        ),
        compiler_params=pltpu.CompilerParams(
            dimension_semantics=("parallel", "parallel", "arbitrary"),
            vmem_limit_bytes=32 * 1024 * 1024,
        ),
    )(*inputs)

    return out[:M, :C_out].reshape(N, Ho, Wo, C_out)


# -----------------------------------------------------------------------------
# Deterministic parameter construction (shapes mirror the PyTorch __init__)
# -----------------------------------------------------------------------------
class ParamGen:
    def __init__(self, seed=0):
        self.key = jax.random.PRNGKey(seed)
        self.i = 0

    def _k(self):
        self.i += 1
        return jax.random.fold_in(self.key, self.i)

    def normal(self, shape, scale=1.0):
        return scale * jax.random.normal(self._k(), shape, dtype=jnp.float32)

    def uniform(self, shape, lo=0.5, hi=1.5):
        return jax.random.uniform(self._k(), shape, jnp.float32, lo, hi)


def make_conv_block(gen, c1, c2, k):
    """Conv(bias=False) + BatchNorm2d (eval, folded) + SiLU."""
    w = gen.normal((c2, c1, k, k), scale=1.0 / (c1 * k * k) ** 0.5)
    gamma = gen.uniform((c2,))
    beta = gen.normal((c2,), 0.1)
    mean = gen.normal((c2,), 0.1)
    var = gen.uniform((c2,))
    scale = gamma / jnp.sqrt(var + 1e-5)
    bias = beta - mean * scale
    return dict(w=w, scale=scale, bias=bias)


def make_plain_conv(gen, c1, c2, k):
    """nn.Conv2d with bias, no BN, no activation."""
    w = gen.normal((c2, c1, k, k), scale=1.0 / (c1 * k * k) ** 0.5)
    b = gen.normal((c2,), 0.1)
    return dict(w=w, scale=jnp.ones((c2,), jnp.float32), bias=b)


def make_c2f(gen, c1, c2, n):
    c_ = int(c2 * 0.5)
    return dict(
        cv1=make_conv_block(gen, c1, 2 * c_, 1),
        cv2=make_conv_block(gen, (2 + n) * c_, c2, 1),
        m=[dict(cv1=make_conv_block(gen, c_, c_, 1),
                cv2=make_conv_block(gen, c_, c_, 3)) for _ in range(n)],
    )


def make_neck(gen, channels):
    c0, c1, c2 = channels
    return dict(
        reduce_conv1=make_plain_conv(gen, c2, c1, 1),
        c2f1=make_c2f(gen, 2 * c1, c1, 3),
        reduce_conv2=make_plain_conv(gen, c1, c0, 1),
        c2f2=make_c2f(gen, 2 * c0, c0, 3),
        downsample1=make_plain_conv(gen, c0, c0, 3),
        c2f3=make_c2f(gen, c0 + c1, c1, 3),
        downsample2=make_plain_conv(gen, c1, c1, 3),
        c2f4=make_c2f(gen, c1 + c2, c2, 3),
    )


# -----------------------------------------------------------------------------
# Forward pass (mirrors Neck.forward)
# -----------------------------------------------------------------------------
def apply_conv_block(p, x, *, stride=1, act=True, residual=None, pad=None):
    return conv_fused(x, p['w'], p['scale'], p['bias'], stride=stride,
                      pad=pad, act=act, residual=residual)


def apply_c2f(p, x):
    y = apply_conv_block(p['cv1'], x)             # 1x1 Conv+BN+SiLU
    c_ = y.shape[-1] // 2                         # static split point
    ys = [y[..., :c_], y[..., c_:]]               # torch.chunk(2, dim=1)
    cur = ys[-1]
    for bp in p['m']:                             # Bottlenecks (shortcut=True)
        t = apply_conv_block(bp['cv1'], cur)      # 1x1
        cur = apply_conv_block(bp['cv2'], t, residual=cur)  # 3x3 + shortcut
        ys.append(cur)
    return apply_conv_block(p['cv2'], jnp.concatenate(ys, axis=-1))


def upsample2x(x):
    # nn.Upsample(scale_factor=2, mode='nearest') on NHWC
    return jnp.repeat(jnp.repeat(x, 2, axis=1), 2, axis=2)


def neck_forward(params, P3, P4, P5):
    P3 = P3.astype(jnp.bfloat16)
    P4 = P4.astype(jnp.bfloat16)
    P5 = P5.astype(jnp.bfloat16)

    x = apply_conv_block(params['reduce_conv1'], P5, act=False, pad=0)
    x = upsample2x(x)
    x = jnp.concatenate([x, P4], axis=-1)
    x = apply_c2f(params['c2f1'], x)

    y = apply_conv_block(params['reduce_conv2'], x, act=False, pad=0)
    y = upsample2x(y)
    y = jnp.concatenate([y, P3], axis=-1)
    y = apply_c2f(params['c2f2'], y)

    z = apply_conv_block(params['downsample1'], y, stride=2, act=False, pad=1)
    z = jnp.concatenate([z, x], axis=-1)
    z = apply_c2f(params['c2f3'], z)

    w = apply_conv_block(params['downsample2'], z, stride=2, act=False, pad=1)
    w = jnp.concatenate([w, P5], axis=-1)
    w = apply_c2f(params['c2f4'], w)
    return w


# -----------------------------------------------------------------------------
if __name__ == "__main__":
    channels = [16, 32, 64]        # small stand-in for the default [64,128,256]
    N, S = 2, 16                   # P3: SxS, P4: S/2, P5: S/4

    key = jax.random.PRNGKey(0)
    k3, k4, k5 = jax.random.split(key, 3)
    P3 = jax.random.normal(k3, (N, S, S, channels[0]), jnp.float32)
    P4 = jax.random.normal(k4, (N, S // 2, S // 2, channels[1]), jnp.float32)
    P5 = jax.random.normal(k5, (N, S // 4, S // 4, channels[2]), jnp.float32)

    params = make_neck(ParamGen(0), channels)

    fwd = jax.jit(neck_forward)
    out = fwd(params, P3, P4, P5)
    out = jax.block_until_ready(out)

    assert out.shape == (N, S // 4, S // 4, channels[2]), out.shape
    assert bool(jnp.isfinite(out.astype(jnp.float32)).all())
    print("KERNEL_OK")
</pallas_src>

<mosaic_0001>
module attributes {stable_mosaic.version = 11 : i64} {
  func.func @_fused_conv_kernel(%arg0: i32, %arg1: i32, %arg2: i32, %arg3: memref<32x128xbf16, #tpu.memory_space<vmem>>, %arg4: memref<128x128xbf16, #tpu.memory_space<vmem>>, %arg5: memref<1x128xf32, #tpu.memory_space<vmem>>, %arg6: memref<1x128xf32, #tpu.memory_space<vmem>>, %arg7: memref<32x128xbf16, #tpu.memory_space<vmem>>, %arg8: memref<32x128xf32, #tpu.memory_space<vmem>>) attributes {dimension_semantics = [#tpu.dimension_semantics<parallel>, #tpu.dimension_semantics<parallel>, #tpu.dimension_semantics<arbitrary>], iteration_bounds = array<i64: 1, 1, 1>, scalar_prefetch = 0 : i64, scratch_operands = 1 : i64, tpu.core_type = #tpu.core_type<tc>, window_params = [{transform_indices = @transform_0, window_bounds = array<i64: 32, 128>}, {transform_indices = @transform_1, window_bounds = array<i64: 128, 128>}, {transform_indices = @transform_2, window_bounds = array<i64: 1, 128>}, {transform_indices = @transform_3, window_bounds = array<i64: 1, 128>}, {transform_indices = @transform_4, window_bounds = array<i64: 32, 128>}]} {
    %c0_i32 = arith.constant 0 : i32
    %0 = arith.cmpi eq, %arg2, %c0_i32 : i32
    %1 = arith.extui %0 : i1 to i32
    %c0_i32_0 = arith.constant 0 : i32
    %2 = arith.cmpi ne, %1, %c0_i32_0 : i32
    scf.if %2 {
      %cst_10 = arith.constant 0.000000e+00 : f32
      %12 = vector.broadcast %cst_10 : f32 to vector<32x128xf32>
      %c0_11 = arith.constant 0 : index
      %c0_12 = arith.constant 0 : index
      %13 = vector.load %arg8[%c0_11, %c0_12] : memref<32x128xf32, #tpu.memory_space<vmem>>, vector<32x128xf32>
      tpu.vector_store %arg8[%c0_11, %c0_12], %12 {strides = array<i32>} : memref<32x128xf32, #tpu.memory_space<vmem>>, vector<32x128xf32>,
    } else {
    }
    %c0 = arith.constant 0 : index
    %c0_1 = arith.constant 0 : index
    %3 = vector.load %arg8[%c0, %c0_1] : memref<32x128xf32, #tpu.memory_space<vmem>>, vector<32x128xf32>
    %c0_2 = arith.constant 0 : index
    %c0_3 = arith.constant 0 : index
    %4 = vector.load %arg3[%c0_2, %c0_3] : memref<32x128xbf16, #tpu.memory_space<vmem>>, vector<32x128xbf16>
    %c0_4 = arith.constant 0 : index
    %c0_5 = arith.constant 0 : index
    %5 = vector.load %arg4[%c0_4, %c0_5] : memref<128x128xbf16, #tpu.memory_space<vmem>>, vector<128x128xbf16>
    %cst = arith.constant dense<0.000000e+00> : vector<32x128xf32>
    %6 = tpu.matmul %4, %5, %cst {dimension_numbers = #tpu.dot_dimension_numbers<[1], [0], [0], [1], [0, 0, 1, 1], [], []>} : vector<32x128xbf16>, vector<128x128xbf16>, vector<32x128xf32> -> vector<32x128xf32>
    %7 = arith.addf %3, %6 : vector<32x128xf32>
    %c0_6 = arith.constant 0 : index
    %c0_7 = arith.constant 0 : index
    %8 = vector.load %arg8[%c0_6, %c0_7] : memref<32x128xf32, #tpu.memory_space<vmem>>, vector<32x128xf32>
    tpu.vector_store %arg8[%c0_6, %c0_7], %7 {strides = array<i32>} : memref<32x128xf32, #tpu.memory_space<vmem>>, vector<32x128xf32>,
    %c0_i32_8 = arith.constant 0 : i32
    %9 = arith.cmpi eq, %arg2, %c0_i32_8 : i32
    %10 = arith.extui %9 : i1 to i32
    %c0_i32_9 = arith.constant 0 : i32
    %11 = arith.cmpi ne, %10, %c0_i32_9 : i32
    scf.if %11 {
      %c0_10 = arith.constant 0 : index
      %c0_11 = arith.constant 0 : index
      %12 = vector.load %arg8[%c0_10, %c0_11] : memref<32x128xf32, #tpu.memory_space<vmem>>, vector<32x128xf32>
      %c0_12 = arith.constant 0 : index
      %c0_13 = arith.constant 0 : index
      %13 = vector.load %arg5[%c0_12, %c0_13] : memref<1x128xf32, #tpu.memory_space<vmem>>, vector<1x128xf32>
      %14 = vector.broadcast %13 : vector<1x128xf32> to vector<32x128xf32>
      %15 = arith.mulf %12, %14 : vector<32x128xf32>
      %c0_14 = arith.constant 0 : index
      %c0_15 = arith.constant 0 : index
      %16 = vector.load %arg6[%c0_14, %c0_15] : memref<1x128xf32, #tpu.memory_space<vmem>>, vector<1x128xf32>
      %17 = vector.broadcast %16 : vector<1x128xf32> to vector<32x128xf32>
      %18 = arith.addf %15, %17 : vector<32x128xf32>
      %19 = arith.truncf %18 : vector<32x128xf32> to vector<32x128xbf16>
      %c0_16 = arith.constant 0 : index
      %c0_17 = arith.constant 0 : index
      %20 = vector.load %arg7[%c0_16, %c0_17] : memref<32x128xbf16, #tpu.memory_space<vmem>>, vector<32x128xbf16>
      tpu.vector_store %arg7[%c0_16, %c0_17], %19 {strides = array<i32>} : memref<32x128xbf16, #tpu.memory_space<vmem>>, vector<32x128xbf16>,
    } else {
    }
    return
  }
  func.func @transform_0(%arg0: i32, %arg1: i32, %arg2: i32) -> (i32, i32) {
    %c0_i32 = arith.constant 0 : i32
    return %arg0, %arg2 : i32, i32
  }
  func.func @transform_1(%arg0: i32, %arg1: i32, %arg2: i32) -> (i32, i32) {
    %c0_i32 = arith.constant 0 : i32
    return %arg2, %arg1 : i32, i32
  }
  func.func @transform_2(%arg0: i32, %arg1: i32, %arg2: i32) -> (i32, i32) {
    %c0_i32 = arith.constant 0 : i32
    %c0_i32_0 = arith.constant 0 : i32
    return %c0_i32, %arg1 : i32, i32
  }
  func.func @transform_3(%arg0: i32, %arg1: i32, %arg2: i32) -> (i32, i32) {
    %c0_i32 = arith.constant 0 : i32
    %c0_i32_0 = arith.constant 0 : i32
    return %c0_i32, %arg1 : i32, i32
  }
  func.func @transform_4(%arg0: i32, %arg1: i32, %arg2: i32) -> (i32, i32) {
    %c0_i32 = arith.constant 0 : i32
    return %arg0, %arg1 : i32, i32
  }
}

module attributes {stable_mosaic.version = 11 : i64} {
  func.func @_fused_conv_kernel(%arg0: i32, %arg1: i32, %arg2: i32, %arg3: memref<128x128xbf16, #tpu.memory_space<vmem>>, %arg4: memref<128x128xbf16, #tpu.memory_space<vmem>>, %arg5: memref<1x128xf32, #tpu.memory_space<vmem>>, %arg6: memref<1x128xf32, #tpu.memory_space<vmem>>, %arg7: memref<128x128xbf16, #tpu.memory_space<vmem>>, %arg8: memref<128x128xf32, #tpu.memory_space<vmem>>) attributes {dimension_semantics = [#tpu.dimension_semantics<parallel>, #tpu.dimension_semantics<parallel>, #tpu.dimension_semantics<arbitrary>], iteration_bounds = array<i64: 1, 1, 1>, scalar_prefetch = 0 : i64, scratch_operands = 1 : i64, tpu.core_type = #tpu.core_type<tc>, window_params = [{transform_indices = @transform_0, window_bounds = array<i64: 128, 128>}, {transform_indices = @transform_1, window_bounds = array<i64: 128, 128>}, {transform_indices = @transform_2, window_bounds = array<i64: 1, 128>}, {transform_indices = @transform_3, window_bounds = array<i64: 1, 128>}, {transform_indices = @transform_4, window_bounds = array<i64: 128, 128>}]} {
    %c0_i32 = arith.constant 0 : i32
    %0 = arith.cmpi eq, %arg2, %c0_i32 : i32
    %1 = arith.extui %0 : i1 to i32
    %c0_i32_0 = arith.constant 0 : i32
    %2 = arith.cmpi ne, %1, %c0_i32_0 : i32
    scf.if %2 {
      %cst_10 = arith.constant 0.000000e+00 : f32
      %12 = vector.broadcast %cst_10 : f32 to vector<128x128xf32>
      %c0_11 = arith.constant 0 : index
      %c0_12 = arith.constant 0 : index
      %13 = vector.load %arg8[%c0_11, %c0_12] : memref<128x128xf32, #tpu.memory_space<vmem>>, vector<128x128xf32>
      tpu.vector_store %arg8[%c0_11, %c0_12], %12 {strides = array<i32>} : memref<128x128xf32, #tpu.memory_space<vmem>>, vector<128x128xf32>,
    } else {
    }
    %c0 = arith.constant 0 : index
    %c0_1 = arith.constant 0 : index
    %3 = vector.load %arg8[%c0, %c0_1] : memref<128x128xf32, #tpu.memory_space<vmem>>, vector<128x128xf32>
    %c0_2 = arith.constant 0 : index
    %c0_3 = arith.constant 0 : index
    %4 = vector.load %arg3[%c0_2, %c0_3] : memref<128x128xbf16, #tpu.memory_space<vmem>>, vector<128x128xbf16>
    %c0_4 = arith.constant 0 : index
    %c0_5 = arith.constant 0 : index
    %5 = vector.load %arg4[%c0_4, %c0_5] : memref<128x128xbf16, #tpu.memory_space<vmem>>, vector<128x128xbf16>
    %cst = arith.constant dense<0.000000e+00> : vector<128x128xf32>
    %6 = tpu.matmul %4, %5, %cst {dimension_numbers = #tpu.dot_dimension_numbers<[1], [0], [0], [1], [0, 0, 1, 1], [], []>} : vector<128x128xbf16>, vector<128x128xbf16>, vector<128x128xf32> -> vector<128x128xf32>
    %7 = arith.addf %3, %6 : vector<128x128xf32>
    %c0_6 = arith.constant 0 : index
    %c0_7 = arith.constant 0 : index
    %8 = vector.load %arg8[%c0_6, %c0_7] : memref<128x128xf32, #tpu.memory_space<vmem>>, vector<128x128xf32>
    tpu.vector_store %arg8[%c0_6, %c0_7], %7 {strides = array<i32>} : memref<128x128xf32, #tpu.memory_space<vmem>>, vector<128x128xf32>,
    %c0_i32_8 = arith.constant 0 : i32
    %9 = arith.cmpi eq, %arg2, %c0_i32_8 : i32
    %10 = arith.extui %9 : i1 to i32
    %c0_i32_9 = arith.constant 0 : i32
    %11 = arith.cmpi ne, %10, %c0_i32_9 : i32
    scf.if %11 {
      %c0_10 = arith.constant 0 : index
      %c0_11 = arith.constant 0 : index
      %12 = vector.load %arg8[%c0_10, %c0_11] : memref<128x128xf32, #tpu.memory_space<vmem>>, vector<128x128xf32>
      %c0_12 = arith.constant 0 : index
      %c0_13 = arith.constant 0 : index
      %13 = vector.load %arg5[%c0_12, %c0_13] : memref<1x128xf32, #tpu.memory_space<vmem>>, vector<1x128xf32>
      %14 = vector.broadcast %13 : vector<1x128xf32> to vector<128x128xf32>
      %15 = arith.mulf %12, %14 : vector<128x128xf32>
      %c0_14 = arith.constant 0 : index
      %c0_15 = arith.constant 0 : index
      %16 = vector.load %arg6[%c0_14, %c0_15] : memref<1x128xf32, #tpu.memory_space<vmem>>, vector<1x128xf32>
      %17 = vector.broadcast %16 : vector<1x128xf32> to vector<128x128xf32>
      %18 = arith.addf %15, %17 : vector<128x128xf32>
      %19 = arith.negf %18 : vector<128x128xf32>
      %20 = math.exp %19 : vector<128x128xf32>
      %cst_16 = arith.constant 1.000000e+00 : f32
      %21 = vector.broadcast %cst_16 : f32 to vector<128x128xf32>
      %22 = arith.addf %21, %20 : vector<128x128xf32>
      %23 = arith.divf %21, %22 : vector<128x128xf32>
      %24 = arith.mulf %18, %23 : vector<128x128xf32>
      %25 = arith.truncf %24 : vector<128x128xf32> to vector<128x128xbf16>
      %c0_17 = arith.constant 0 : index
      %c0_18 = arith.constant 0 : index
      %26 = vector.load %arg7[%c0_17, %c0_18] : memref<128x128xbf16, #tpu.memory_space<vmem>>, vector<128x128xbf16>
      tpu.vector_store %arg7[%c0_17, %c0_18], %25 {strides = array<i32>} : memref<128x128xbf16, #tpu.memory_space<vmem>>, vector<128x128xbf16>,
    } else {
    }
    return
  }
  func.func @transform_0(%arg0: i32, %arg1: i32, %arg2: i32) -> (i32, i32) {
    %c0_i32 = arith.constant 0 : i32
    return %arg0, %arg2 : i32, i32
  }
  func.func @transform_1(%arg0: i32, %arg1: i32, %arg2: i32) -> (i32, i32) {
    %c0_i32 = arith.constant 0 : i32
    return %arg2, %arg1 : i32, i32
  }
  func.func @transform_2(%arg0: i32, %arg1: i32, %arg2: i32) -> (i32, i32) {
    %c0_i32 = arith.constant 0 : i32
    %c0_i32_0 = arith.constant 0 : i32
    return %c0_i32, %arg1 : i32, i32
  }
  func.func @transform_3(%arg0: i32, %arg1: i32, %arg2: i32) -> (i32, i32) {
    %c0_i32 = arith.constant 0 : i32
    %c0_i32_0 = arith.constant 0 : i32
    return %c0_i32, %arg1 : i32, i32
  }
  func.func @transform_4(%arg0: i32, %arg1: i32, %arg2: i32) -> (i32, i32) {
    %c0_i32 = arith.constant 0 : i32
    return %arg0, %arg1 : i32, i32
  }
}

module attributes {stable_mosaic.version = 11 : i64} {
  func.func @_fused_conv_kernel(%arg0: i32, %arg1: i32, %arg2: i32, %arg3: memref<128x256xbf16, #tpu.memory_space<vmem>>, %arg4: memref<256x128xbf16, #tpu.memory_space<vmem>>, %arg5: memref<1x128xf32, #tpu.memory_space<vmem>>, %arg6: memref<1x128xf32, #tpu.memory_space<vmem>>, %arg7: memref<128x128xbf16, #tpu.memory_space<vmem>>, %arg8: memref<128x128xbf16, #tpu.memory_space<vmem>>, %arg9: memref<128x128xf32, #tpu.memory_space<vmem>>) attributes {dimension_semantics = [#tpu.dimension_semantics<parallel>, #tpu.dimension_semantics<parallel>, #tpu.dimension_semantics<arbitrary>], iteration_bounds = array<i64: 1, 1, 1>, scalar_prefetch = 0 : i64, scratch_operands = 1 : i64, tpu.core_type = #tpu.core_type<tc>, window_params = [{transform_indices = @transform_0, window_bounds = array<i64: 128, 256>}, {transform_indices = @transform_1, window_bounds = array<i64: 256, 128>}, {transform_indices = @transform_2, window_bounds = array<i64: 1, 128>}, {transform_indices = @transform_3, window_bounds = array<i64: 1, 128>}, {transform_indices = @transform_4, window_bounds = array<i64: 128, 128>}, {transform_indices = @transform_5, window_bounds = array<i64: 128, 128>}]} {
    %c0_i32 = arith.constant 0 : i32
    %0 = arith.cmpi eq, %arg2, %c0_i32 : i32
    %1 = arith.extui %0 : i1 to i32
    %c0_i32_0 = arith.constant 0 : i32
    %2 = arith.cmpi ne, %1, %c0_i32_0 : i32
    scf.if %2 {
      %cst_10 = arith.constant 0.000000e+00 : f32
      %12 = vector.broadcast %cst_10 : f32 to vector<128x128xf32>
      %c0_11 = arith.constant 0 : index
      %c0_12 = arith.constant 0 : index
      %13 = vector.load %arg9[%c0_11, %c0_12] : memref<128x128xf32, #tpu.memory_space<vmem>>, vector<128x128xf32>
      tpu.vector_store %arg9[%c0_11, %c0_12], %12 {strides = array<i32>} : memref<128x128xf32, #tpu.memory_space<vmem>>, vector<128x128xf32>,
    } else {
    }
    %c0 = arith.constant 0 : index
    %c0_1 = arith.constant 0 : index
    %3 = vector.load %arg9[%c0, %c0_1] : memref<128x128xf32, #tpu.memory_space<vmem>>, vector<128x128xf32>
    %c0_2 = arith.constant 0 : index
    %c0_3 = arith.constant 0 : index
    %4 = vector.load %arg3[%c0_2, %c0_3] : memref<128x256xbf16, #tpu.memory_space<vmem>>, vector<128x256xbf16>
    %c0_4 = arith.constant 0 : index
    %c0_5 = arith.constant 0 : index
    %5 = vector.load %arg4[%c0_4, %c0_5] : memref<256x128xbf16, #tpu.memory_space<vmem>>, vector<256x128xbf16>
    %cst = arith.constant dense<0.000000e+00> : vector<128x128xf32>
    %6 = tpu.matmul %4, %5, %cst {dimension_numbers = #tpu.dot_dimension_numbers<[1], [0], [0], [1], [0, 0, 1, 1], [], []>} : vector<128x256xbf16>, vector<256x128xbf16>, vector<128x128xf32> -> vector<128x128xf32>
    %7 = arith.addf %3, %6 : vector<128x128xf32>
    %c0_6 = arith.constant 0 : index
    %c0_7 = arith.constant 0 : index
    %8 = vector.load %arg9[%c0_6, %c0_7] : memref<128x128xf32, #tpu.memory_space<vmem>>, vector<128x128xf32>
    tpu.vector_store %arg9[%c0_6, %c0_7], %7 {strides = array<i32>} : memref<128x128xf32, #tpu.memory_space<vmem>>, vector<128x128xf32>,
    %c0_i32_8 = arith.constant 0 : i32
    %9 = arith.cmpi eq, %arg2, %c0_i32_8 : i32
    %10 = arith.extui %9 : i1 to i32
    %c0_i32_9 = arith.constant 0 : i32
    %11 = arith.cmpi ne, %10, %c0_i32_9 : i32
    scf.if %11 {
      %c0_10 = arith.constant 0 : index
      %c0_11 = arith.constant 0 : index
      %12 = vector.load %arg9[%c0_10, %c0_11] : memref<128x128xf32, #tpu.memory_space<vmem>>, vector<128x128xf32>
      %c0_12 = arith.constant 0 : index
      %c0_13 = arith.constant 0 : index
      %13 = vector.load %arg5[%c0_12, %c0_13] : memref<1x128xf32, #tpu.memory_space<vmem>>, vector<1x128xf32>
      %14 = vector.broadcast %13 : vector<1x128xf32> to vector<128x128xf32>
      %15 = arith.mulf %12, %14 : vector<128x128xf32>
      %c0_14 = arith.constant 0 : index
      %c0_15 = arith.constant 0 : index
      %16 = vector.load %arg6[%c0_14, %c0_15] : memref<1x128xf32, #tpu.memory_space<vmem>>, vector<1x128xf32>
      %17 = vector.broadcast %16 : vector<1x128xf32> to vector<128x128xf32>
      %18 = arith.addf %15, %17 : vector<128x128xf32>
      %19 = arith.negf %18 : vector<128x128xf32>
      %20 = math.exp %19 : vector<128x128xf32>
      %cst_16 = arith.constant 1.000000e+00 : f32
      %21 = vector.broadcast %cst_16 : f32 to vector<128x128xf32>
      %22 = arith.addf %21, %20 : vector<128x128xf32>
      %23 = arith.divf %21, %22 : vector<128x128xf32>
      %24 = arith.mulf %18, %23 : vector<128x128xf32>
      %c0_17 = arith.constant 0 : index
      %c0_18 = arith.constant 0 : index
      %25 = vector.load %arg7[%c0_17, %c0_18] : memref<128x128xbf16, #tpu.memory_space<vmem>>, vector<128x128xbf16>
      %26 = arith.extf %25 : vector<128x128xbf16> to vector<128x128xf32>
      %27 = arith.addf %24, %26 : vector<128x128xf32>
      %28 = arith.truncf %27 : vector<128x128xf32> to vector<128x128xbf16>
      %c0_19 = arith.constant 0 : index
      %c0_20 = arith.constant 0 : index
      %29 = vector.load %arg8[%c0_19, %c0_20] : memref<128x128xbf16, #tpu.memory_space<vmem>>, vector<128x128xbf16>
      tpu.vector_store %arg8[%c0_19, %c0_20], %28 {strides = array<i32>} : memref<128x128xbf16, #tpu.memory_space<vmem>>, vector<128x128xbf16>,
    } else {
    }
    return
  }
  func.func @transform_0(%arg0: i32, %arg1: i32, %arg2: i32) -> (i32, i32) {
    %c0_i32 = arith.constant 0 : i32
    return %arg0, %arg2 : i32, i32
  }
  func.func @transform_1(%arg0: i32, %arg1: i32, %arg2: i32) -> (i32, i32) {
    %c0_i32 = arith.constant 0 : i32
    return %arg2, %arg1 : i32, i32
  }
  func.func @transform_2(%arg0: i32, %arg1: i32, %arg2: i32) -> (i32, i32) {
    %c0_i32 = arith.constant 0 : i32
    %c0_i32_0 = arith.constant 0 : i32
    return %c0_i32, %arg1 : i32, i32
  }
  func.func @transform_3(%arg0: i32, %arg1: i32, %arg2: i32) -> (i32, i32) {
    %c0_i32 = arith.constant 0 : i32
    %c0_i32_0 = arith.constant 0 : i32
    return %c0_i32, %arg1 : i32, i32
  }
  func.func @transform_4(%arg0: i32, %arg1: i32, %arg2: i32) -> (i32, i32) {
    %c0_i32 = arith.constant 0 : i32
    return %arg0, %arg1 : i32, i32
  }
  func.func @transform_5(%arg0: i32, %arg1: i32, %arg2: i32) -> (i32, i32) {
    %c0_i32 = arith.constant 0 : i32
    return %arg0, %arg1 : i32, i32
  }
}

module attributes {stable_mosaic.version = 11 : i64} {
  func.func @_fused_conv_kernel(%arg0: i32, %arg1: i32, %arg2: i32, %arg3: memref<128x128xbf16, #tpu.memory_space<vmem>>, %arg4: memref<128x128xbf16, #tpu.memory_space<vmem>>, %arg5: memref<1x128xf32, #tpu.memory_space<vmem>>, %arg6: memref<1x128xf32, #tpu.memory_space<vmem>>, %arg7: memref<128x128xbf16, #tpu.memory_space<vmem>>, %arg8: memref<128x128xf32, #tpu.memory_space<vmem>>) attributes {dimension_semantics = [#tpu.dimension_semantics<parallel>, #tpu.dimension_semantics<parallel>, #tpu.dimension_semantics<arbitrary>], iteration_bounds = array<i64: 1, 1, 1>, scalar_prefetch = 0 : i64, scratch_operands = 1 : i64, tpu.core_type = #tpu.core_type<tc>, window_params = [{transform_indices = @transform_0, window_bounds = array<i64: 128, 128>}, {transform_indices = @transform_1, window_bounds = array<i64: 128, 128>}, {transform_indices = @transform_2, window_bounds = array<i64: 1, 128>}, {transform_indices = @transform_3, window_bounds = array<i64: 1, 128>}, {transform_indices = @transform_4, window_bounds = array<i64: 128, 128>}]} {
    %c0_i32 = arith.constant 0 : i32
    %0 = arith.cmpi eq, %arg2, %c0_i32 : i32
    %1 = arith.extui %0 : i1 to i32
    %c0_i32_0 = arith.constant 0 : i32
    %2 = arith.cmpi ne, %1, %c0_i32_0 : i32
    scf.if %2 {
      %cst_10 = arith.constant 0.000000e+00 : f32
      %12 = vector.broadcast %cst_10 : f32 to vector<128x128xf32>
      %c0_11 = arith.constant 0 : index
      %c0_12 = arith.constant 0 : index
      %13 = vector.load %arg8[%c0_11, %c0_12] : memref<128x128xf32, #tpu.memory_space<vmem>>, vector<128x128xf32>
      tpu.vector_store %arg8[%c0_11, %c0_12], %12 {strides = array<i32>} : memref<128x128xf32, #tpu.memory_space<vmem>>, vector<128x128xf32>,
    } else {
    }
    %c0 = arith.constant 0 : index
    %c0_1 = arith.constant 0 : index
    %3 = vector.load %arg8[%c0, %c0_1] : memref<128x128xf32, #tpu.memory_space<vmem>>, vector<128x128xf32>
    %c0_2 = arith.constant 0 : index
    %c0_3 = arith.constant 0 : index
    %4 = vector.load %arg3[%c0_2, %c0_3] : memref<128x128xbf16, #tpu.memory_space<vmem>>, vector<128x128xbf16>
    %c0_4 = arith.constant 0 : index
    %c0_5 = arith.constant 0 : index
    %5 = vector.load %arg4[%c0_4, %c0_5] : memref<128x128xbf16, #tpu.memory_space<vmem>>, vector<128x128xbf16>
    %cst = arith.constant dense<0.000000e+00> : vector<128x128xf32>
    %6 = tpu.matmul %4, %5, %cst {dimension_numbers = #tpu.dot_dimension_numbers<[1], [0], [0], [1], [0, 0, 1, 1], [], []>} : vector<128x128xbf16>, vector<128x128xbf16>, vector<128x128xf32> -> vector<128x128xf32>
    %7 = arith.addf %3, %6 : vector<128x128xf32>
    %c0_6 = arith.constant 0 : index
    %c0_7 = arith.constant 0 : index
    %8 = vector.load %arg8[%c0_6, %c0_7] : memref<128x128xf32, #tpu.memory_space<vmem>>, vector<128x128xf32>
    tpu.vector_store %arg8[%c0_6, %c0_7], %7 {strides = array<i32>} : memref<128x128xf32, #tpu.memory_space<vmem>>, vector<128x128xf32>,
    %c0_i32_8 = arith.constant 0 : i32
    %9 = arith.cmpi eq, %arg2, %c0_i32_8 : i32
    %10 = arith.extui %9 : i1 to i32
    %c0_i32_9 = arith.constant 0 : i32
    %11 = arith.cmpi ne, %10, %c0_i32_9 : i32
    scf.if %11 {
      %c0_10 = arith.constant 0 : index
      %c0_11 = arith.constant 0 : index
      %12 = vector.load %arg8[%c0_10, %c0_11] : memref<128x128xf32, #tpu.memory_space<vmem>>, vector<128x128xf32>
      %c0_12 = arith.constant 0 : index
      %c0_13 = arith.constant 0 : index
      %13 = vector.load %arg5[%c0_12, %c0_13] : memref<1x128xf32, #tpu.memory_space<vmem>>, vector<1x128xf32>
      %14 = vector.broadcast %13 : vector<1x128xf32> to vector<128x128xf32>
      %15 = arith.mulf %12, %14 : vector<128x128xf32>
      %c0_14 = arith.constant 0 : index
      %c0_15 = arith.constant 0 : index
      %16 = vector.load %arg6[%c0_14, %c0_15] : memref<1x128xf32, #tpu.memory_space<vmem>>, vector<1x128xf32>
      %17 = vector.broadcast %16 : vector<1x128xf32> to vector<128x128xf32>
      %18 = arith.addf %15, %17 : vector<128x128xf32>
      %19 = arith.truncf %18 : vector<128x128xf32> to vector<128x128xbf16>
      %c0_16 = arith.constant 0 : index
      %c0_17 = arith.constant 0 : index
      %20 = vector.load %arg7[%c0_16, %c0_17] : memref<128x128xbf16, #tpu.memory_space<vmem>>, vector<128x128xbf16>
      tpu.vector_store %arg7[%c0_16, %c0_17], %19 {strides = array<i32>} : memref<128x128xbf16, #tpu.memory_space<vmem>>, vector<128x128xbf16>,
    } else {
    }
    return
  }
  func.func @transform_0(%arg0: i32, %arg1: i32, %arg2: i32) -> (i32, i32) {
    %c0_i32 = arith.constant 0 : i32
    return %arg0, %arg2 : i32, i32
  }
  func.func @transform_1(%arg0: i32, %arg1: i32, %arg2: i32) -> (i32, i32) {
    %c0_i32 = arith.constant 0 : i32
    return %arg2, %arg1 : i32, i32
  }
  func.func @transform_2(%arg0: i32, %arg1: i32, %arg2: i32) -> (i32, i32) {
    %c0_i32 = arith.constant 0 : i32
    %c0_i32_0 = arith.constant 0 : i32
    return %c0_i32, %arg1 : i32, i32
  }
  func.func @transform_3(%arg0: i32, %arg1: i32, %arg2: i32) -> (i32, i32) {
    %c0_i32 = arith.constant 0 : i32
    %c0_i32_0 = arith.constant 0 : i32
    return %c0_i32, %arg1 : i32, i32
  }
  func.func @transform_4(%arg0: i32, %arg1: i32, %arg2: i32) -> (i32, i32) {
    %c0_i32 = arith.constant 0 : i32
    return %arg0, %arg1 : i32, i32
  }
}

module attributes {stable_mosaic.version = 11 : i64} {
  func.func @_fused_conv_kernel(%arg0: i32, %arg1: i32, %arg2: i32, %arg3: memref<256x128xbf16, #tpu.memory_space<vmem>>, %arg4: memref<128x128xbf16, #tpu.memory_space<vmem>>, %arg5: memref<1x128xf32, #tpu.memory_space<vmem>>, %arg6: memref<1x128xf32, #tpu.memory_space<vmem>>, %arg7: memref<256x128xbf16, #tpu.memory_space<vmem>>, %arg8: memref<256x128xf32, #tpu.memory_space<vmem>>) attributes {dimension_semantics = [#tpu.dimension_semantics<parallel>, #tpu.dimension_semantics<parallel>, #tpu.dimension_semantics<arbitrary>], iteration_bounds = array<i64: 2, 1, 1>, scalar_prefetch = 0 : i64, scratch_operands = 1 : i64, tpu.core_type = #tpu.core_type<tc>, window_params = [{transform_indices = @transform_0, window_bounds = array<i64: 256, 128>}, {transform_indices = @transform_1, window_bounds = array<i64: 128, 128>}, {transform_indices = @transform_2, window_bounds = array<i64: 1, 128>}, {transform_indices = @transform_3, window_bounds = array<i64: 1, 128>}, {transform_indices = @transform_4, window_bounds = array<i64: 256, 128>}]} {
    %c0_i32 = arith.constant 0 : i32
    %0 = arith.cmpi eq, %arg2, %c0_i32 : i32
    %1 = arith.extui %0 : i1 to i32
    %c0_i32_0 = arith.constant 0 : i32
    %2 = arith.cmpi ne, %1, %c0_i32_0 : i32
    scf.if %2 {
      %cst_10 = arith.constant 0.000000e+00 : f32
      %12 = vector.broadcast %cst_10 : f32 to vector<256x128xf32>
      %c0_11 = arith.constant 0 : index
      %c0_12 = arith.constant 0 : index
      %13 = vector.load %arg8[%c0_11, %c0_12] : memref<256x128xf32, #tpu.memory_space<vmem>>, vector<256x128xf32>
      tpu.vector_store %arg8[%c0_11, %c0_12], %12 {strides = array<i32>} : memref<256x128xf32, #tpu.memory_space<vmem>>, vector<256x128xf32>,
    } else {
    }
    %c0 = arith.constant 0 : index
    %c0_1 = arith.constant 0 : index
    %3 = vector.load %arg8[%c0, %c0_1] : memref<256x128xf32, #tpu.memory_space<vmem>>, vector<256x128xf32>
    %c0_2 = arith.constant 0 : index
    %c0_3 = arith.constant 0 : index
    %4 = vector.load %arg3[%c0_2, %c0_3] : memref<256x128xbf16, #tpu.memory_space<vmem>>, vector<256x128xbf16>
    %c0_4 = arith.constant 0 : index
    %c0_5 = arith.constant 0 : index
    %5 = vector.load %arg4[%c0_4, %c0_5] : memref<128x128xbf16, #tpu.memory_space<vmem>>, vector<128x128xbf16>
    %cst = arith.constant dense<0.000000e+00> : vector<256x128xf32>
    %6 = tpu.matmul %4, %5, %cst {dimension_numbers = #tpu.dot_dimension_numbers<[1], [0], [0], [1], [0, 0, 1, 1], [], []>} : vector<256x128xbf16>, vector<128x128xbf16>, vector<256x128xf32> -> vector<256x128xf32>
    %7 = arith.addf %3, %6 : vector<256x128xf32>
    %c0_6 = arith.constant 0 : index
    %c0_7 = arith.constant 0 : index
    %8 = vector.load %arg8[%c0_6, %c0_7] : memref<256x128xf32, #tpu.memory_space<vmem>>, vector<256x128xf32>
    tpu.vector_store %arg8[%c0_6, %c0_7], %7 {strides = array<i32>} : memref<256x128xf32, #tpu.memory_space<vmem>>, vector<256x128xf32>,
    %c0_i32_8 = arith.constant 0 : i32
    %9 = arith.cmpi eq, %arg2, %c0_i32_8 : i32
    %10 = arith.extui %9 : i1 to i32
    %c0_i32_9 = arith.constant 0 : i32
    %11 = arith.cmpi ne, %10, %c0_i32_9 : i32
    scf.if %11 {
      %c0_10 = arith.constant 0 : index
      %c0_11 = arith.constant 0 : index
      %12 = vector.load %arg8[%c0_10, %c0_11] : memref<256x128xf32, #tpu.memory_space<vmem>>, vector<256x128xf32>
      %c0_12 = arith.constant 0 : index
      %c0_13 = arith.constant 0 : index
      %13 = vector.load %arg5[%c0_12, %c0_13] : memref<1x128xf32, #tpu.memory_space<vmem>>, vector<1x128xf32>
      %14 = vector.broadcast %13 : vector<1x128xf32> to vector<256x128xf32>
      %15 = arith.mulf %12, %14 : vector<256x128xf32>
      %c0_14 = arith.constant 0 : index
      %c0_15 = arith.constant 0 : index
      %16 = vector.load %arg6[%c0_14, %c0_15] : memref<1x128xf32, #tpu.memory_space<vmem>>, vector<1x128xf32>
      %17 = vector.broadcast %16 : vector<1x128xf32> to vector<256x128xf32>
      %18 = arith.addf %15, %17 : vector<256x128xf32>
      %19 = arith.negf %18 : vector<256x128xf32>
      %20 = math.exp %19 : vector<256x128xf32>
      %cst_16 = arith.constant 1.000000e+00 : f32
      %21 = vector.broadcast %cst_16 : f32 to vector<256x128xf32>
      %22 = arith.addf %21, %20 : vector<256x128xf32>
      %23 = arith.divf %21, %22 : vector<256x128xf32>
      %24 = arith.mulf %18, %23 : vector<256x128xf32>
      %25 = arith.truncf %24 : vector<256x128xf32> to vector<256x128xbf16>
      %c0_17 = arith.constant 0 : index
      %c0_18 = arith.constant 0 : index
      %26 = vector.load %arg7[%c0_17, %c0_18] : memref<256x128xbf16, #tpu.memory_space<vmem>>, vector<256x128xbf16>
      tpu.vector_store %arg7[%c0_17, %c0_18], %25 {strides = array<i32>} : memref<256x128xbf16, #tpu.memory_space<vmem>>, vector<256x128xbf16>,
    } else {
    }
    return
  }
  func.func @transform_0(%arg0: i32, %arg1: i32, %arg2: i32) -> (i32, i32) {
    %c0_i32 = arith.constant 0 : i32
    return %arg0, %arg2 : i32, i32
  }
  func.func @transform_1(%arg0: i32, %arg1: i32, %arg2: i32) -> (i32, i32) {
    %c0_i32 = arith.constant 0 : i32
    return %arg2, %arg1 : i32, i32
  }
  func.func @transform_2(%arg0: i32, %arg1: i32, %arg2: i32) -> (i32, i32) {
    %c0_i32 = arith.constant 0 : i32
    %c0_i32_0 = arith.constant 0 : i32
    return %c0_i32, %arg1 : i32, i32
  }
  func.func @transform_3(%arg0: i32, %arg1: i32, %arg2: i32) -> (i32, i32) {
    %c0_i32 = arith.constant 0 : i32
    %c0_i32_0 = arith.constant 0 : i32
    return %c0_i32, %arg1 : i32, i32
  }
  func.func @transform_4(%arg0: i32, %arg1: i32, %arg2: i32) -> (i32, i32) {
    %c0_i32 = arith.constant 0 : i32
    return %arg0, %arg1 : i32, i32
  }
}

module attributes {stable_mosaic.version = 11 : i64} {
  func.func @_fused_conv_kernel(%arg0: i32, %arg1: i32, %arg2: i32, %arg3: memref<256x128xbf16, #tpu.memory_space<vmem>>, %arg4: memref<128x128xbf16, #tpu.memory_space<vmem>>, %arg5: memref<1x128xf32, #tpu.memory_space<vmem>>, %arg6: memref<1x128xf32, #tpu.memory_space<vmem>>, %arg7: memref<256x128xbf16, #tpu.memory_space<vmem>>, %arg8: memref<256x128xbf16, #tpu.memory_space<vmem>>, %arg9: memref<256x128xf32, #tpu.memory_space<vmem>>) attributes {dimension_semantics = [#tpu.dimension_semantics<parallel>, #tpu.dimension_semantics<parallel>, #tpu.dimension_semantics<arbitrary>], iteration_bounds = array<i64: 2, 1, 1>, scalar_prefetch = 0 : i64, scratch_operands = 1 : i64, tpu.core_type = #tpu.core_type<tc>, window_params = [{transform_indices = @transform_0, window_bounds = array<i64: 256, 128>}, {transform_indices = @transform_1, window_bounds = array<i64: 128, 128>}, {transform_indices = @transform_2, window_bounds = array<i64: 1, 128>}, {transform_indices = @transform_3, window_bounds = array<i64: 1, 128>}, {transform_indices = @transform_4, window_bounds = array<i64: 256, 128>}, {transform_indices = @transform_5, window_bounds = array<i64: 256, 128>}]} {
    %c0_i32 = arith.constant 0 : i32
    %0 = arith.cmpi eq, %arg2, %c0_i32 : i32
    %1 = arith.extui %0 : i1 to i32
    %c0_i32_0 = arith.constant 0 : i32
    %2 = arith.cmpi ne, %1, %c0_i32_0 : i32
    scf.if %2 {
      %cst_10 = arith.constant 0.000000e+00 : f32
      %12 = vector.broadcast %cst_10 : f32 to vector<256x128xf32>
      %c0_11 = arith.constant 0 : index
      %c0_12 = arith.constant 0 : index
      %13 = vector.load %arg9[%c0_11, %c0_12] : memref<256x128xf32, #tpu.memory_space<vmem>>, vector<256x128xf32>
      tpu.vector_store %arg9[%c0_11, %c0_12], %12 {strides = array<i32>} : memref<256x128xf32, #tpu.memory_space<vmem>>, vector<256x128xf32>,
    } else {
    }
    %c0 = arith.constant 0 : index
    %c0_1 = arith.constant 0 : index
    %3 = vector.load %arg9[%c0, %c0_1] : memref<256x128xf32, #tpu.memory_space<vmem>>, vector<256x128xf32>
    %c0_2 = arith.constant 0 : index
    %c0_3 = arith.constant 0 : index
    %4 = vector.load %arg3[%c0_2, %c0_3] : memref<256x128xbf16, #tpu.memory_space<vmem>>, vector<256x128xbf16>
    %c0_4 = arith.constant 0 : index
    %c0_5 = arith.constant 0 : index
    %5 = vector.load %arg4[%c0_4, %c0_5] : memref<128x128xbf16, #tpu.memory_space<vmem>>, vector<128x128xbf16>
    %cst = arith.constant dense<0.000000e+00> : vector<256x128xf32>
    %6 = tpu.matmul %4, %5, %cst {dimension_numbers = #tpu.dot_dimension_numbers<[1], [0], [0], [1], [0, 0, 1, 1], [], []>} : vector<256x128xbf16>, vector<128x128xbf16>, vector<256x128xf32> -> vector<256x128xf32>
    %7 = arith.addf %3, %6 : vector<256x128xf32>
    %c0_6 = arith.constant 0 : index
    %c0_7 = arith.constant 0 : index
    %8 = vector.load %arg9[%c0_6, %c0_7] : memref<256x128xf32, #tpu.memory_space<vmem>>, vector<256x128xf32>
    tpu.vector_store %arg9[%c0_6, %c0_7], %7 {strides = array<i32>} : memref<256x128xf32, #tpu.memory_space<vmem>>, vector<256x128xf32>,
    %c0_i32_8 = arith.constant 0 : i32
    %9 = arith.cmpi eq, %arg2, %c0_i32_8 : i32
    %10 = arith.extui %9 : i1 to i32
    %c0_i32_9 = arith.constant 0 : i32
    %11 = arith.cmpi ne, %10, %c0_i32_9 : i32
    scf.if %11 {
      %c0_10 = arith.constant 0 : index
      %c0_11 = arith.constant 0 : index
      %12 = vector.load %arg9[%c0_10, %c0_11] : memref<256x128xf32, #tpu.memory_space<vmem>>, vector<256x128xf32>
      %c0_12 = arith.constant 0 : index
      %c0_13 = arith.constant 0 : index
      %13 = vector.load %arg5[%c0_12, %c0_13] : memref<1x128xf32, #tpu.memory_space<vmem>>, vector<1x128xf32>
      %14 = vector.broadcast %13 : vector<1x128xf32> to vector<256x128xf32>
      %15 = arith.mulf %12, %14 : vector<256x128xf32>
      %c0_14 = arith.constant 0 : index
      %c0_15 = arith.constant 0 : index
      %16 = vector.load %arg6[%c0_14, %c0_15] : memref<1x128xf32, #tpu.memory_space<vmem>>, vector<1x128xf32>
      %17 = vector.broadcast %16 : vector<1x128xf32> to vector<256x128xf32>
      %18 = arith.addf %15, %17 : vector<256x128xf32>
      %19 = arith.negf %18 : vector<256x128xf32>
      %20 = math.exp %19 : vector<256x128xf32>
      %cst_16 = arith.constant 1.000000e+00 : f32
      %21 = vector.broadcast %cst_16 : f32 to vector<256x128xf32>
      %22 = arith.addf %21, %20 : vector<256x128xf32>
      %23 = arith.divf %21, %22 : vector<256x128xf32>
      %24 = arith.mulf %18, %23 : vector<256x128xf32>
      %c0_17 = arith.constant 0 : index
      %c0_18 = arith.constant 0 : index
      %25 = vector.load %arg7[%c0_17, %c0_18] : memref<256x128xbf16, #tpu.memory_space<vmem>>, vector<256x128xbf16>
      %26 = arith.extf %25 : vector<256x128xbf16> to vector<256x128xf32>
      %27 = arith.addf %24, %26 : vector<256x128xf32>
      %28 = arith.truncf %27 : vector<256x128xf32> to vector<256x128xbf16>
      %c0_19 = arith.constant 0 : index
      %c0_20 = arith.constant 0 : index
      %29 = vector.load %arg8[%c0_19, %c0_20] : memref<256x128xbf16, #tpu.memory_space<vmem>>, vector<256x128xbf16>
      tpu.vector_store %arg8[%c0_19, %c0_20], %28 {strides = array<i32>} : memref<256x128xbf16, #tpu.memory_space<vmem>>, vector<256x128xbf16>,
    } else {
    }
    return
  }
  func.func @transform_0(%arg0: i32, %arg1: i32, %arg2: i32) -> (i32, i32) {
    %c0_i32 = arith.constant 0 : i32
    return %arg0, %arg2 : i32, i32
  }
  func.func @transform_1(%arg0: i32, %arg1: i32, %arg2: i32) -> (i32, i32) {
    %c0_i32 = arith.constant 0 : i32
    return %arg2, %arg1 : i32, i32
  }
  func.func @transform_2(%arg0: i32, %arg1: i32, %arg2: i32) -> (i32, i32) {
    %c0_i32 = arith.constant 0 : i32
    %c0_i32_0 = arith.constant 0 : i32
    return %c0_i32, %arg1 : i32, i32
  }
  func.func @transform_3(%arg0: i32, %arg1: i32, %arg2: i32) -> (i32, i32) {
    %c0_i32 = arith.constant 0 : i32
    %c0_i32_0 = arith.constant 0 : i32
    return %c0_i32, %arg1 : i32, i32
  }
  func.func @transform_4(%arg0: i32, %arg1: i32, %arg2: i32) -> (i32, i32) {
    %c0_i32 = arith.constant 0 : i32
    return %arg0, %arg1 : i32, i32
  }
  func.func @transform_5(%arg0: i32, %arg1: i32, %arg2: i32) -> (i32, i32) {
    %c0_i32 = arith.constant 0 : i32
    return %arg0, %arg1 : i32, i32
  }
}

module attributes {stable_mosaic.version = 11 : i64} {
  func.func @_fused_conv_kernel(%arg0: i32, %arg1: i32, %arg2: i32, %arg3: memref<128x256xbf16, #tpu.memory_space<vmem>>, %arg4: memref<256x128xbf16, #tpu.memory_space<vmem>>, %arg5: memref<1x128xf32, #tpu.memory_space<vmem>>, %arg6: memref<1x128xf32, #tpu.memory_space<vmem>>, %arg7: memref<128x128xbf16, #tpu.memory_space<vmem>>, %arg8: memref<128x128xf32, #tpu.memory_space<vmem>>) attributes {dimension_semantics = [#tpu.dimension_semantics<parallel>, #tpu.dimension_semantics<parallel>, #tpu.dimension_semantics<arbitrary>], iteration_bounds = array<i64: 1, 1, 1>, scalar_prefetch = 0 : i64, scratch_operands = 1 : i64, tpu.core_type = #tpu.core_type<tc>, window_params = [{transform_indices = @transform_0, window_bounds = array<i64: 128, 256>}, {transform_indices = @transform_1, window_bounds = array<i64: 256, 128>}, {transform_indices = @transform_2, window_bounds = array<i64: 1, 128>}, {transform_indices = @transform_3, window_bounds = array<i64: 1, 128>}, {transform_indices = @transform_4, window_bounds = array<i64: 128, 128>}]} {
    %c0_i32 = arith.constant 0 : i32
    %0 = arith.cmpi eq, %arg2, %c0_i32 : i32
    %1 = arith.extui %0 : i1 to i32
    %c0_i32_0 = arith.constant 0 : i32
    %2 = arith.cmpi ne, %1, %c0_i32_0 : i32
    scf.if %2 {
      %cst_10 = arith.constant 0.000000e+00 : f32
      %12 = vector.broadcast %cst_10 : f32 to vector<128x128xf32>
      %c0_11 = arith.constant 0 : index
      %c0_12 = arith.constant 0 : index
      %13 = vector.load %arg8[%c0_11, %c0_12] : memref<128x128xf32, #tpu.memory_space<vmem>>, vector<128x128xf32>
      tpu.vector_store %arg8[%c0_11, %c0_12], %12 {strides = array<i32>} : memref<128x128xf32, #tpu.memory_space<vmem>>, vector<128x128xf32>,
    } else {
    }
    %c0 = arith.constant 0 : index
    %c0_1 = arith.constant 0 : index
    %3 = vector.load %arg8[%c0, %c0_1] : memref<128x128xf32, #tpu.memory_space<vmem>>, vector<128x128xf32>
    %c0_2 = arith.constant 0 : index
    %c0_3 = arith.constant 0 : index
    %4 = vector.load %arg3[%c0_2, %c0_3] : memref<128x256xbf16, #tpu.memory_space<vmem>>, vector<128x256xbf16>
    %c0_4 = arith.constant 0 : index
    %c0_5 = arith.constant 0 : index
    %5 = vector.load %arg4[%c0_4, %c0_5] : memref<256x128xbf16, #tpu.memory_space<vmem>>, vector<256x128xbf16>
    %cst = arith.constant dense<0.000000e+00> : vector<128x128xf32>
    %6 = tpu.matmul %4, %5, %cst {dimension_numbers = #tpu.dot_dimension_numbers<[1], [0], [0], [1], [0, 0, 1, 1], [], []>} : vector<128x256xbf16>, vector<256x128xbf16>, vector<128x128xf32> -> vector<128x128xf32>
    %7 = arith.addf %3, %6 : vector<128x128xf32>
    %c0_6 = arith.constant 0 : index
    %c0_7 = arith.constant 0 : index
    %8 = vector.load %arg8[%c0_6, %c0_7] : memref<128x128xf32, #tpu.memory_space<vmem>>, vector<128x128xf32>
    tpu.vector_store %arg8[%c0_6, %c0_7], %7 {strides = array<i32>} : memref<128x128xf32, #tpu.memory_space<vmem>>, vector<128x128xf32>,
    %c0_i32_8 = arith.constant 0 : i32
    %9 = arith.cmpi eq, %arg2, %c0_i32_8 : i32
    %10 = arith.extui %9 : i1 to i32
    %c0_i32_9 = arith.constant 0 : i32
    %11 = arith.cmpi ne, %10, %c0_i32_9 : i32
    scf.if %11 {
      %c0_10 = arith.constant 0 : index
      %c0_11 = arith.constant 0 : index
      %12 = vector.load %arg8[%c0_10, %c0_11] : memref<128x128xf32, #tpu.memory_space<vmem>>, vector<128x128xf32>
      %c0_12 = arith.constant 0 : index
      %c0_13 = arith.constant 0 : index
      %13 = vector.load %arg5[%c0_12, %c0_13] : memref<1x128xf32, #tpu.memory_space<vmem>>, vector<1x128xf32>
      %14 = vector.broadcast %13 : vector<1x128xf32> to vector<128x128xf32>
      %15 = arith.mulf %12, %14 : vector<128x128xf32>
      %c0_14 = arith.constant 0 : index
      %c0_15 = arith.constant 0 : index
      %16 = vector.load %arg6[%c0_14, %c0_15] : memref<1x128xf32, #tpu.memory_space<vmem>>, vector<1x128xf32>
      %17 = vector.broadcast %16 : vector<1x128xf32> to vector<128x128xf32>
      %18 = arith.addf %15, %17 : vector<128x128xf32>
      %19 = arith.truncf %18 : vector<128x128xf32> to vector<128x128xbf16>
      %c0_16 = arith.constant 0 : index
      %c0_17 = arith.constant 0 : index
      %20 = vector.load %arg7[%c0_16, %c0_17] : memref<128x128xbf16, #tpu.memory_space<vmem>>, vector<128x128xbf16>
      tpu.vector_store %arg7[%c0_16, %c0_17], %19 {strides = array<i32>} : memref<128x128xbf16, #tpu.memory_space<vmem>>, vector<128x128xbf16>,
    } else {
    }
    return
  }
  func.func @transform_0(%arg0: i32, %arg1: i32, %arg2: i32) -> (i32, i32) {
    %c0_i32 = arith.constant 0 : i32
    return %arg0, %arg2 : i32, i32
  }
  func.func @transform_1(%arg0: i32, %arg1: i32, %arg2: i32) -> (i32, i32) {
    %c0_i32 = arith.constant 0 : i32
    return %arg2, %arg1 : i32, i32
  }
  func.func @transform_2(%arg0: i32, %arg1: i32, %arg2: i32) -> (i32, i32) {
    %c0_i32 = arith.constant 0 : i32
    %c0_i32_0 = arith.constant 0 : i32
    return %c0_i32, %arg1 : i32, i32
  }
  func.func @transform_3(%arg0: i32, %arg1: i32, %arg2: i32) -> (i32, i32) {
    %c0_i32 = arith.constant 0 : i32
    %c0_i32_0 = arith.constant 0 : i32
    return %c0_i32, %arg1 : i32, i32
  }
  func.func @transform_4(%arg0: i32, %arg1: i32, %arg2: i32) -> (i32, i32) {
    %c0_i32 = arith.constant 0 : i32
    return %arg0, %arg1 : i32, i32
  }
}

module attributes {stable_mosaic.version = 11 : i64} {
  func.func @_fused_conv_kernel(%arg0: i32, %arg1: i32, %arg2: i32, %arg3: memref<32x384xbf16, #tpu.memory_space<vmem>>, %arg4: memref<384x128xbf16, #tpu.memory_space<vmem>>, %arg5: memref<1x128xf32, #tpu.memory_space<vmem>>, %arg6: memref<1x128xf32, #tpu.memory_space<vmem>>, %arg7: memref<32x128xbf16, #tpu.memory_space<vmem>>, %arg8: memref<32x128xf32, #tpu.memory_space<vmem>>) attributes {dimension_semantics = [#tpu.dimension_semantics<parallel>, #tpu.dimension_semantics<parallel>, #tpu.dimension_semantics<arbitrary>], iteration_bounds = array<i64: 1, 1, 1>, scalar_prefetch = 0 : i64, scratch_operands = 1 : i64, tpu.core_type = #tpu.core_type<tc>, window_params = [{transform_indices = @transform_0, window_bounds = array<i64: 32, 384>}, {transform_indices = @transform_1, window_bounds = array<i64: 384, 128>}, {transform_indices = @transform_2, window_bounds = array<i64: 1, 128>}, {transform_indices = @transform_3, window_bounds = array<i64: 1, 128>}, {transform_indices = @transform_4, window_bounds = array<i64: 32, 128>}]} {
    %c0_i32 = arith.constant 0 : i32
    %0 = arith.cmpi eq, %arg2, %c0_i32 : i32
    %1 = arith.extui %0 : i1 to i32
    %c0_i32_0 = arith.constant 0 : i32
    %2 = arith.cmpi ne, %1, %c0_i32_0 : i32
    scf.if %2 {
      %cst_10 = arith.constant 0.000000e+00 : f32
      %12 = vector.broadcast %cst_10 : f32 to vector<32x128xf32>
      %c0_11 = arith.constant 0 : index
      %c0_12 = arith.constant 0 : index
      %13 = vector.load %arg8[%c0_11, %c0_12] : memref<32x128xf32, #tpu.memory_space<vmem>>, vector<32x128xf32>
      tpu.vector_store %arg8[%c0_11, %c0_12], %12 {strides = array<i32>} : memref<32x128xf32, #tpu.memory_space<vmem>>, vector<32x128xf32>,
    } else {
    }
    %c0 = arith.constant 0 : index
    %c0_1 = arith.constant 0 : index
    %3 = vector.load %arg8[%c0, %c0_1] : memref<32x128xf32, #tpu.memory_space<vmem>>, vector<32x128xf32>
    %c0_2 = arith.constant 0 : index
    %c0_3 = arith.constant 0 : index
    %4 = vector.load %arg3[%c0_2, %c0_3] : memref<32x384xbf16, #tpu.memory_space<vmem>>, vector<32x384xbf16>
    %c0_4 = arith.constant 0 : index
    %c0_5 = arith.constant 0 : index
    %5 = vector.load %arg4[%c0_4, %c0_5] : memref<384x128xbf16, #tpu.memory_space<vmem>>, vector<384x128xbf16>
    %cst = arith.constant dense<0.000000e+00> : vector<32x128xf32>
    %6 = tpu.matmul %4, %5, %cst {dimension_numbers = #tpu.dot_dimension_numbers<[1], [0], [0], [1], [0, 0, 1, 1], [], []>} : vector<32x384xbf16>, vector<384x128xbf16>, vector<32x128xf32> -> vector<32x128xf32>
    %7 = arith.addf %3, %6 : vector<32x128xf32>
    %c0_6 = arith.constant 0 : index
    %c0_7 = arith.constant 0 : index
    %8 = vector.load %arg8[%c0_6, %c0_7] : memref<32x128xf32, #tpu.memory_space<vmem>>, vector<32x128xf32>
    tpu.vector_store %arg8[%c0_6, %c0_7], %7 {strides = array<i32>} : memref<32x128xf32, #tpu.memory_space<vmem>>, vector<32x128xf32>,
    %c0_i32_8 = arith.constant 0 : i32
    %9 = arith.cmpi eq, %arg2, %c0_i32_8 : i32
    %10 = arith.extui %9 : i1 to i32
    %c0_i32_9 = arith.constant 0 : i32
    %11 = arith.cmpi ne, %10, %c0_i32_9 : i32
    scf.if %11 {
      %c0_10 = arith.constant 0 : index
      %c0_11 = arith.constant 0 : index
      %12 = vector.load %arg8[%c0_10, %c0_11] : memref<32x128xf32, #tpu.memory_space<vmem>>, vector<32x128xf32>
      %c0_12 = arith.constant 0 : index
      %c0_13 = arith.constant 0 : index
      %13 = vector.load %arg5[%c0_12, %c0_13] : memref<1x128xf32, #tpu.memory_space<vmem>>, vector<1x128xf32>
      %14 = vector.broadcast %13 : vector<1x128xf32> to vector<32x128xf32>
      %15 = arith.mulf %12, %14 : vector<32x128xf32>
      %c0_14 = arith.constant 0 : index
      %c0_15 = arith.constant 0 : index
      %16 = vector.load %arg6[%c0_14, %c0_15] : memref<1x128xf32, #tpu.memory_space<vmem>>, vector<1x128xf32>
      %17 = vector.broadcast %16 : vector<1x128xf32> to vector<32x128xf32>
      %18 = arith.addf %15, %17 : vector<32x128xf32>
      %19 = arith.truncf %18 : vector<32x128xf32> to vector<32x128xbf16>
      %c0_16 = arith.constant 0 : index
      %c0_17 = arith.constant 0 : index
      %20 = vector.load %arg7[%c0_16, %c0_17] : memref<32x128xbf16, #tpu.memory_space<vmem>>, vector<32x128xbf16>
      tpu.vector_store %arg7[%c0_16, %c0_17], %19 {strides = array<i32>} : memref<32x128xbf16, #tpu.memory_space<vmem>>, vector<32x128xbf16>,
    } else {
    }
    return
  }
  func.func @transform_0(%arg0: i32, %arg1: i32, %arg2: i32) -> (i32, i32) {
    %c0_i32 = arith.constant 0 : i32
    return %arg0, %arg2 : i32, i32
  }
  func.func @transform_1(%arg0: i32, %arg1: i32, %arg2: i32) -> (i32, i32) {
    %c0_i32 = arith.constant 0 : i32
    return %arg2, %arg1 : i32, i32
  }
  func.func @transform_2(%arg0: i32, %arg1: i32, %arg2: i32) -> (i32, i32) {
    %c0_i32 = arith.constant 0 : i32
    %c0_i32_0 = arith.constant 0 : i32
    return %c0_i32, %arg1 : i32, i32
  }
  func.func @transform_3(%arg0: i32, %arg1: i32, %arg2: i32) -> (i32, i32) {
    %c0_i32 = arith.constant 0 : i32
    %c0_i32_0 = arith.constant 0 : i32
    return %c0_i32, %arg1 : i32, i32
  }
  func.func @transform_4(%arg0: i32, %arg1: i32, %arg2: i32) -> (i32, i32) {
    %c0_i32 = arith.constant 0 : i32
    return %arg0, %arg1 : i32, i32
  }
}

module attributes {stable_mosaic.version = 11 : i64} {
  func.func @_fused_conv_kernel(%arg0: i32, %arg1: i32, %arg2: i32, %arg3: memref<32x128xbf16, #tpu.memory_space<vmem>>, %arg4: memref<128x128xbf16, #tpu.memory_space<vmem>>, %arg5: memref<1x128xf32, #tpu.memory_space<vmem>>, %arg6: memref<1x128xf32, #tpu.memory_space<vmem>>, %arg7: memref<32x128xbf16, #tpu.memory_space<vmem>>, %arg8: memref<32x128xf32, #tpu.memory_space<vmem>>) attributes {dimension_semantics = [#tpu.dimension_semantics<parallel>, #tpu.dimension_semantics<parallel>, #tpu.dimension_semantics<arbitrary>], iteration_bounds = array<i64: 1, 1, 1>, scalar_prefetch = 0 : i64, scratch_operands = 1 : i64, tpu.core_type = #tpu.core_type<tc>, window_params = [{transform_indices = @transform_0, window_bounds = array<i64: 32, 128>}, {transform_indices = @transform_1, window_bounds = array<i64: 128, 128>}, {transform_indices = @transform_2, window_bounds = array<i64: 1, 128>}, {transform_indices = @transform_3, window_bounds = array<i64: 1, 128>}, {transform_indices = @transform_4, window_bounds = array<i64: 32, 128>}]} {
    %c0_i32 = arith.constant 0 : i32
    %0 = arith.cmpi eq, %arg2, %c0_i32 : i32
    %1 = arith.extui %0 : i1 to i32
    %c0_i32_0 = arith.constant 0 : i32
    %2 = arith.cmpi ne, %1, %c0_i32_0 : i32
    scf.if %2 {
      %cst_10 = arith.constant 0.000000e+00 : f32
      %12 = vector.broadcast %cst_10 : f32 to vector<32x128xf32>
      %c0_11 = arith.constant 0 : index
      %c0_12 = arith.constant 0 : index
      %13 = vector.load %arg8[%c0_11, %c0_12] : memref<32x128xf32, #tpu.memory_space<vmem>>, vector<32x128xf32>
      tpu.vector_store %arg8[%c0_11, %c0_12], %12 {strides = array<i32>} : memref<32x128xf32, #tpu.memory_space<vmem>>, vector<32x128xf32>,
    } else {
    }
    %c0 = arith.constant 0 : index
    %c0_1 = arith.constant 0 : index
    %3 = vector.load %arg8[%c0, %c0_1] : memref<32x128xf32, #tpu.memory_space<vmem>>, vector<32x128xf32>
    %c0_2 = arith.constant 0 : index
    %c0_3 = arith.constant 0 : index
    %4 = vector.load %arg3[%c0_2, %c0_3] : memref<32x128xbf16, #tpu.memory_space<vmem>>, vector<32x128xbf16>
    %c0_4 = arith.constant 0 : index
    %c0_5 = arith.constant 0 : index
    %5 = vector.load %arg4[%c0_4, %c0_5] : memref<128x128xbf16, #tpu.memory_space<vmem>>, vector<128x128xbf16>
    %cst = arith.constant dense<0.000000e+00> : vector<32x128xf32>
    %6 = tpu.matmul %4, %5, %cst {dimension_numbers = #tpu.dot_dimension_numbers<[1], [0], [0], [1], [0, 0, 1, 1], [], []>} : vector<32x128xbf16>, vector<128x128xbf16>, vector<32x128xf32> -> vector<32x128xf32>
    %7 = arith.addf %3, %6 : vector<32x128xf32>
    %c0_6 = arith.constant 0 : index
    %c0_7 = arith.constant 0 : index
    %8 = vector.load %arg8[%c0_6, %c0_7] : memref<32x128xf32, #tpu.memory_space<vmem>>, vector<32x128xf32>
    tpu.vector_store %arg8[%c0_6, %c0_7], %7 {strides = array<i32>} : memref<32x128xf32, #tpu.memory_space<vmem>>, vector<32x128xf32>,
    %c0_i32_8 = arith.constant 0 : i32
    %9 = arith.cmpi eq, %arg2, %c0_i32_8 : i32
    %10 = arith.extui %9 : i1 to i32
    %c0_i32_9 = arith.constant 0 : i32
    %11 = arith.cmpi ne, %10, %c0_i32_9 : i32
    scf.if %11 {
      %c0_10 = arith.constant 0 : index
      %c0_11 = arith.constant 0 : index
      %12 = vector.load %arg8[%c0_10, %c0_11] : memref<32x128xf32, #tpu.memory_space<vmem>>, vector<32x128xf32>
      %c0_12 = arith.constant 0 : index
      %c0_13 = arith.constant 0 : index
      %13 = vector.load %arg5[%c0_12, %c0_13] : memref<1x128xf32, #tpu.memory_space<vmem>>, vector<1x128xf32>
      %14 = vector.broadcast %13 : vector<1x128xf32> to vector<32x128xf32>
      %15 = arith.mulf %12, %14 : vector<32x128xf32>
      %c0_14 = arith.constant 0 : index
      %c0_15 = arith.constant 0 : index
      %16 = vector.load %arg6[%c0_14, %c0_15] : memref<1x128xf32, #tpu.memory_space<vmem>>, vector<1x128xf32>
      %17 = vector.broadcast %16 : vector<1x128xf32> to vector<32x128xf32>
      %18 = arith.addf %15, %17 : vector<32x128xf32>
      %19 = arith.negf %18 : vector<32x128xf32>
      %20 = math.exp %19 : vector<32x128xf32>
      %cst_16 = arith.constant 1.000000e+00 : f32
      %21 = vector.broadcast %cst_16 : f32 to vector<32x128xf32>
      %22 = arith.addf %21, %20 : vector<32x128xf32>
      %23 = arith.divf %21, %22 : vector<32x128xf32>
      %24 = arith.mulf %18, %23 : vector<32x128xf32>
      %25 = arith.truncf %24 : vector<32x128xf32> to vector<32x128xbf16>
      %c0_17 = arith.constant 0 : index
      %c0_18 = arith.constant 0 : index
      %26 = vector.load %arg7[%c0_17, %c0_18] : memref<32x128xbf16, #tpu.memory_space<vmem>>, vector<32x128xbf16>
      tpu.vector_store %arg7[%c0_17, %c0_18], %25 {strides = array<i32>} : memref<32x128xbf16, #tpu.memory_space<vmem>>, vector<32x128xbf16>,
    } else {
    }
    return
  }
  func.func @transform_0(%arg0: i32, %arg1: i32, %arg2: i32) -> (i32, i32) {
    %c0_i32 = arith.constant 0 : i32
    return %arg0, %arg2 : i32, i32
  }
  func.func @transform_1(%arg0: i32, %arg1: i32, %arg2: i32) -> (i32, i32) {
    %c0_i32 = arith.constant 0 : i32
    return %arg2, %arg1 : i32, i32
  }
  func.func @transform_2(%arg0: i32, %arg1: i32, %arg2: i32) -> (i32, i32) {
    %c0_i32 = arith.constant 0 : i32
    %c0_i32_0 = arith.constant 0 : i32
    return %c0_i32, %arg1 : i32, i32
  }
  func.func @transform_3(%arg0: i32, %arg1: i32, %arg2: i32) -> (i32, i32) {
    %c0_i32 = arith.constant 0 : i32
    %c0_i32_0 = arith.constant 0 : i32
    return %c0_i32, %arg1 : i32, i32
  }
  func.func @transform_4(%arg0: i32, %arg1: i32, %arg2: i32) -> (i32, i32) {
    %c0_i32 = arith.constant 0 : i32
    return %arg0, %arg1 : i32, i32
  }
}

module attributes {stable_mosaic.version = 11 : i64} {
  func.func @_fused_conv_kernel(%arg0: i32, %arg1: i32, %arg2: i32, %arg3: memref<32x384xbf16, #tpu.memory_space<vmem>>, %arg4: memref<384x128xbf16, #tpu.memory_space<vmem>>, %arg5: memref<1x128xf32, #tpu.memory_space<vmem>>, %arg6: memref<1x128xf32, #tpu.memory_space<vmem>>, %arg7: memref<32x128xbf16, #tpu.memory_space<vmem>>, %arg8: memref<32x128xbf16, #tpu.memory_space<vmem>>, %arg9: memref<32x128xf32, #tpu.memory_space<vmem>>) attributes {dimension_semantics = [#tpu.dimension_semantics<parallel>, #tpu.dimension_semantics<parallel>, #tpu.dimension_semantics<arbitrary>], iteration_bounds = array<i64: 1, 1, 1>, scalar_prefetch = 0 : i64, scratch_operands = 1 : i64, tpu.core_type = #tpu.core_type<tc>, window_params = [{transform_indices = @transform_0, window_bounds = array<i64: 32, 384>}, {transform_indices = @transform_1, window_bounds = array<i64: 384, 128>}, {transform_indices = @transform_2, window_bounds = array<i64: 1, 128>}, {transform_indices = @transform_3, window_bounds = array<i64: 1, 128>}, {transform_indices = @transform_4, window_bounds = array<i64: 32, 128>}, {transform_indices = @transform_5, window_bounds = array<i64: 32, 128>}]} {
    %c0_i32 = arith.constant 0 : i32
    %0 = arith.cmpi eq, %arg2, %c0_i32 : i32
    %1 = arith.extui %0 : i1 to i32
    %c0_i32_0 = arith.constant 0 : i32
    %2 = arith.cmpi ne, %1, %c0_i32_0 : i32
    scf.if %2 {
      %cst_10 = arith.constant 0.000000e+00 : f32
      %12 = vector.broadcast %cst_10 : f32 to vector<32x128xf32>
      %c0_11 = arith.constant 0 : index
      %c0_12 = arith.constant 0 : index
      %13 = vector.load %arg9[%c0_11, %c0_12] : memref<32x128xf32, #tpu.memory_space<vmem>>, vector<32x128xf32>
      tpu.vector_store %arg9[%c0_11, %c0_12], %12 {strides = array<i32>} : memref<32x128xf32, #tpu.memory_space<vmem>>, vector<32x128xf32>,
    } else {
    }
    %c0 = arith.constant 0 : index
    %c0_1 = arith.constant 0 : index
    %3 = vector.load %arg9[%c0, %c0_1] : memref<32x128xf32, #tpu.memory_space<vmem>>, vector<32x128xf32>
    %c0_2 = arith.constant 0 : index
    %c0_3 = arith.constant 0 : index
    %4 = vector.load %arg3[%c0_2, %c0_3] : memref<32x384xbf16, #tpu.memory_space<vmem>>, vector<32x384xbf16>
    %c0_4 = arith.constant 0 : index
    %c0_5 = arith.constant 0 : index
    %5 = vector.load %arg4[%c0_4, %c0_5] : memref<384x128xbf16, #tpu.memory_space<vmem>>, vector<384x128xbf16>
    %cst = arith.constant dense<0.000000e+00> : vector<32x128xf32>
    %6 = tpu.matmul %4, %5, %cst {dimension_numbers = #tpu.dot_dimension_numbers<[1], [0], [0], [1], [0, 0, 1, 1], [], []>} : vector<32x384xbf16>, vector<384x128xbf16>, vector<32x128xf32> -> vector<32x128xf32>
    %7 = arith.addf %3, %6 : vector<32x128xf32>
    %c0_6 = arith.constant 0 : index
    %c0_7 = arith.constant 0 : index
    %8 = vector.load %arg9[%c0_6, %c0_7] : memref<32x128xf32, #tpu.memory_space<vmem>>, vector<32x128xf32>
    tpu.vector_store %arg9[%c0_6, %c0_7], %7 {strides = array<i32>} : memref<32x128xf32, #tpu.memory_space<vmem>>, vector<32x128xf32>,
    %c0_i32_8 = arith.constant 0 : i32
    %9 = arith.cmpi eq, %arg2, %c0_i32_8 : i32
    %10 = arith.extui %9 : i1 to i32
    %c0_i32_9 = arith.constant 0 : i32
    %11 = arith.cmpi ne, %10, %c0_i32_9 : i32
    scf.if %11 {
      %c0_10 = arith.constant 0 : index
      %c0_11 = arith.constant 0 : index
      %12 = vector.load %arg9[%c0_10, %c0_11] : memref<32x128xf32, #tpu.memory_space<vmem>>, vector<32x128xf32>
      %c0_12 = arith.constant 0 : index
      %c0_13 = arith.constant 0 : index
      %13 = vector.load %arg5[%c0_12, %c0_13] : memref<1x128xf32, #tpu.memory_space<vmem>>, vector<1x128xf32>
      %14 = vector.broadcast %13 : vector<1x128xf32> to vector<32x128xf32>
      %15 = arith.mulf %12, %14 : vector<32x128xf32>
      %c0_14 = arith.constant 0 : index
      %c0_15 = arith.constant 0 : index
      %16 = vector.load %arg6[%c0_14, %c0_15] : memref<1x128xf32, #tpu.memory_space<vmem>>, vector<1x128xf32>
      %17 = vector.broadcast %16 : vector<1x128xf32> to vector<32x128xf32>
      %18 = arith.addf %15, %17 : vector<32x128xf32>
      %19 = arith.negf %18 : vector<32x128xf32>
      %20 = math.exp %19 : vector<32x128xf32>
      %cst_16 = arith.constant 1.000000e+00 : f32
      %21 = vector.broadcast %cst_16 : f32 to vector<32x128xf32>
      %22 = arith.addf %21, %20 : vector<32x128xf32>
      %23 = arith.divf %21, %22 : vector<32x128xf32>
      %24 = arith.mulf %18, %23 : vector<32x128xf32>
      %c0_17 = arith.constant 0 : index
      %c0_18 = arith.constant 0 : index
      %25 = vector.load %arg7[%c0_17, %c0_18] : memref<32x128xbf16, #tpu.memory_space<vmem>>, vector<32x128xbf16>
      %26 = arith.extf %25 : vector<32x128xbf16> to vector<32x128xf32>
      %27 = arith.addf %24, %26 : vector<32x128xf32>
      %28 = arith.truncf %27 : vector<32x128xf32> to vector<32x128xbf16>
      %c0_19 = arith.constant 0 : index
      %c0_20 = arith.constant 0 : index
      %29 = vector.load %arg8[%c0_19, %c0_20] : memref<32x128xbf16, #tpu.memory_space<vmem>>, vector<32x128xbf16>
      tpu.vector_store %arg8[%c0_19, %c0_20], %28 {strides = array<i32>} : memref<32x128xbf16, #tpu.memory_space<vmem>>, vector<32x128xbf16>,
    } else {
    }
    return
  }
  func.func @transform_0(%arg0: i32, %arg1: i32, %arg2: i32) -> (i32, i32) {
    %c0_i32 = arith.constant 0 : i32
    return %arg0, %arg2 : i32, i32
  }
  func.func @transform_1(%arg0: i32, %arg1: i32, %arg2: i32) -> (i32, i32) {
    %c0_i32 = arith.constant 0 : i32
    return %arg2, %arg1 : i32, i32
  }
  func.func @transform_2(%arg0: i32, %arg1: i32, %arg2: i32) -> (i32, i32) {
    %c0_i32 = arith.constant 0 : i32
    %c0_i32_0 = arith.constant 0 : i32
    return %c0_i32, %arg1 : i32, i32
  }
  func.func @transform_3(%arg0: i32, %arg1: i32, %arg2: i32) -> (i32, i32) {
    %c0_i32 = arith.constant 0 : i32
    %c0_i32_0 = arith.constant 0 : i32
    return %c0_i32, %arg1 : i32, i32
  }
  func.func @transform_4(%arg0: i32, %arg1: i32, %arg2: i32) -> (i32, i32) {
    %c0_i32 = arith.constant 0 : i32
    return %arg0, %arg1 : i32, i32
  }
  func.func @transform_5(%arg0: i32, %arg1: i32, %arg2: i32) -> (i32, i32) {
    %c0_i32 = arith.constant 0 : i32
    return %arg0, %arg1 : i32, i32
  }
}

module attributes {stable_mosaic.version = 11 : i64} {
  func.func @_fused_conv_kernel(%arg0: i32, %arg1: i32, %arg2: i32, %arg3: memref<32x256xbf16, #tpu.memory_space<vmem>>, %arg4: memref<256x128xbf16, #tpu.memory_space<vmem>>, %arg5: memref<1x128xf32, #tpu.memory_space<vmem>>, %arg6: memref<1x128xf32, #tpu.memory_space<vmem>>, %arg7: memref<32x128xbf16, #tpu.memory_space<vmem>>, %arg8: memref<32x128xf32, #tpu.memory_space<vmem>>) attributes {dimension_semantics = [#tpu.dimension_semantics<parallel>, #tpu.dimension_semantics<parallel>, #tpu.dimension_semantics<arbitrary>], iteration_bounds = array<i64: 1, 1, 1>, scalar_prefetch = 0 : i64, scratch_operands = 1 : i64, tpu.core_type = #tpu.core_type<tc>, window_params = [{transform_indices = @transform_0, window_bounds = array<i64: 32, 256>}, {transform_indices = @transform_1, window_bounds = array<i64: 256, 128>}, {transform_indices = @transform_2, window_bounds = array<i64: 1, 128>}, {transform_indices = @transform_3, window_bounds = array<i64: 1, 128>}, {transform_indices = @transform_4, window_bounds = array<i64: 32, 128>}]} {
    %c0_i32 = arith.constant 0 : i32
    %0 = arith.cmpi eq, %arg2, %c0_i32 : i32
    %1 = arith.extui %0 : i1 to i32
    %c0_i32_0 = arith.constant 0 : i32
    %2 = arith.cmpi ne, %1, %c0_i32_0 : i32
    scf.if %2 {
      %cst_10 = arith.constant 0.000000e+00 : f32
      %12 = vector.broadcast %cst_10 : f32 to vector<32x128xf32>
      %c0_11 = arith.constant 0 : index
      %c0_12 = arith.constant 0 : index
      %13 = vector.load %arg8[%c0_11, %c0_12] : memref<32x128xf32, #tpu.memory_space<vmem>>, vector<32x128xf32>
      tpu.vector_store %arg8[%c0_11, %c0_12], %12 {strides = array<i32>} : memref<32x128xf32, #tpu.memory_space<vmem>>, vector<32x128xf32>,
    } else {
    }
    %c0 = arith.constant 0 : index
    %c0_1 = arith.constant 0 : index
    %3 = vector.load %arg8[%c0, %c0_1] : memref<32x128xf32, #tpu.memory_space<vmem>>, vector<32x128xf32>
    %c0_2 = arith.constant 0 : index
    %c0_3 = arith.constant 0 : index
    %4 = vector.load %arg3[%c0_2, %c0_3] : memref<32x256xbf16, #tpu.memory_space<vmem>>, vector<32x256xbf16>
    %c0_4 = arith.constant 0 : index
    %c0_5 = arith.constant 0 : index
    %5 = vector.load %arg4[%c0_4, %c0_5] : memref<256x128xbf16, #tpu.memory_space<vmem>>, vector<256x128xbf16>
    %cst = arith.constant dense<0.000000e+00> : vector<32x128xf32>
    %6 = tpu.matmul %4, %5, %cst {dimension_numbers = #tpu.dot_dimension_numbers<[1], [0], [0], [1], [0, 0, 1, 1], [], []>} : vector<32x256xbf16>, vector<256x128xbf16>, vector<32x128xf32> -> vector<32x128xf32>
    %7 = arith.addf %3, %6 : vector<32x128xf32>
    %c0_6 = arith.constant 0 : index
    %c0_7 = arith.constant 0 : index
    %8 = vector.load %arg8[%c0_6, %c0_7] : memref<32x128xf32, #tpu.memory_space<vmem>>, vector<32x128xf32>
    tpu.vector_store %arg8[%c0_6, %c0_7], %7 {strides = array<i32>} : memref<32x128xf32, #tpu.memory_space<vmem>>, vector<32x128xf32>,
    %c0_i32_8 = arith.constant 0 : i32
    %9 = arith.cmpi eq, %arg2, %c0_i32_8 : i32
    %10 = arith.extui %9 : i1 to i32
    %c0_i32_9 = arith.constant 0 : i32
    %11 = arith.cmpi ne, %10, %c0_i32_9 : i32
    scf.if %11 {
      %c0_10 = arith.constant 0 : index
      %c0_11 = arith.constant 0 : index
      %12 = vector.load %arg8[%c0_10, %c0_11] : memref<32x128xf32, #tpu.memory_space<vmem>>, vector<32x128xf32>
      %c0_12 = arith.constant 0 : index
      %c0_13 = arith.constant 0 : index
      %13 = vector.load %arg5[%c0_12, %c0_13] : memref<1x128xf32, #tpu.memory_space<vmem>>, vector<1x128xf32>
      %14 = vector.broadcast %13 : vector<1x128xf32> to vector<32x128xf32>
      %15 = arith.mulf %12, %14 : vector<32x128xf32>
      %c0_14 = arith.constant 0 : index
      %c0_15 = arith.constant 0 : index
      %16 = vector.load %arg6[%c0_14, %c0_15] : memref<1x128xf32, #tpu.memory_space<vmem>>, vector<1x128xf32>
      %17 = vector.broadcast %16 : vector<1x128xf32> to vector<32x128xf32>
      %18 = arith.addf %15, %17 : vector<32x128xf32>
      %19 = arith.negf %18 : vector<32x128xf32>
      %20 = math.exp %19 : vector<32x128xf32>
      %cst_16 = arith.constant 1.000000e+00 : f32
      %21 = vector.broadcast %cst_16 : f32 to vector<32x128xf32>
      %22 = arith.addf %21, %20 : vector<32x128xf32>
      %23 = arith.divf %21, %22 : vector<32x128xf32>
      %24 = arith.mulf %18, %23 : vector<32x128xf32>
      %25 = arith.truncf %24 : vector<32x128xf32> to vector<32x128xbf16>
      %c0_17 = arith.constant 0 : index
      %c0_18 = arith.constant 0 : index
      %26 = vector.load %arg7[%c0_17, %c0_18] : memref<32x128xbf16, #tpu.memory_space<vmem>>, vector<32x128xbf16>
      tpu.vector_store %arg7[%c0_17, %c0_18], %25 {strides = array<i32>} : memref<32x128xbf16, #tpu.memory_space<vmem>>, vector<32x128xbf16>,
    } else {
    }
    return
  }
  func.func @transform_0(%arg0: i32, %arg1: i32, %arg2: i32) -> (i32, i32) {
    %c0_i32 = arith.constant 0 : i32
    return %arg0, %arg2 : i32, i32
  }
  func.func @transform_1(%arg0: i32, %arg1: i32, %arg2: i32) -> (i32, i32) {
    %c0_i32 = arith.constant 0 : i32
    return %arg2, %arg1 : i32, i32
  }
  func.func @transform_2(%arg0: i32, %arg1: i32, %arg2: i32) -> (i32, i32) {
    %c0_i32 = arith.constant 0 : i32
    %c0_i32_0 = arith.constant 0 : i32
    return %c0_i32, %arg1 : i32, i32
  }
  func.func @transform_3(%arg0: i32, %arg1: i32, %arg2: i32) -> (i32, i32) {
    %c0_i32 = arith.constant 0 : i32
    %c0_i32_0 = arith.constant 0 : i32
    return %c0_i32, %arg1 : i32, i32
  }
  func.func @transform_4(%arg0: i32, %arg1: i32, %arg2: i32) -> (i32, i32) {
    %c0_i32 = arith.constant 0 : i32
    return %arg0, %arg1 : i32, i32
  }
}

</mosaic_0001>

<llo_original>
// kernel: neck_forward.36
$region0: #{neck_forward.36}
  #allocation0 [shape = 'u32[]', space=smem, size = 0x4, offset = 0x4, fixed_abs, tag = 'smem constant byte address 0x4 - core index']
  #allocation1 [shape = 'u32[144,128]{1,0:T(1,128)}', space=vmem, size = 0x12000, scoped, tag = 'internal scratch']
  #allocation2 [shape = 'f32[32,128]{1,0:T(8,128)}', space=vmem, size = 0x4000, scoped, tag = 'scratch operand']
  %s0 = inlined_call_operand.vmem [shape: bf16[32,128], index: 0, kind: input, shape index: {}]
  %s1 = inlined_call_operand.vmem [shape: bf16[128,128], index: 1, kind: input, shape index: {}]
  %s2 = inlined_call_operand.vmem [shape: f32[1,128], index: 2, kind: input, shape index: {}]
  %s3 = inlined_call_operand.vmem [shape: f32[1,128], index: 3, kind: input, shape index: {}]
  %s4 = inlined_call_operand.vmem [shape: bf16[32,128], index: 4, kind: output, shape index: {}]
  %s5 = sld [smem:[#allocation0]]
  $region34: #{neck_forward.36} parent=0
    _
  %s7 = ssub.s32 1, %s5
  %s8 = scalar_select 0, %s7, %s5
  // Predicated region
  $region2: #{neck_forward.36} parent=0 // pred_check
    _
  $region3: #{neck_forward.36} parent=0 // pred_check_branch
    %10 = sbr.rel (0) target = $region5
  $region4: #{neck_forward.36} parent=0 // pred_region
    _
  $region5: #{neck_forward.36} parent=0 // pred_fallthru
    _
  // Predicated region
  $region6: #{neck_forward.36} parent=0 // pred_check
    _
  $region7: #{neck_forward.36} parent=0 // pred_check_branch
    %12 = sbr.rel (0) target = $region9
  $region8: #{neck_forward.36} parent=0 // pred_region
    _
  $region9: #{neck_forward.36} parent=0 // pred_fallthru
    _
  // Predicated region
  $region10: #{neck_forward.36} parent=0 // pred_check
    _
  $region11: #{neck_forward.36} parent=0 // pred_check_branch
    %14 = sbr.rel (0) target = $region13
  $region12: #{neck_forward.36} parent=0 // pred_region
    _
  $region13: #{neck_forward.36} parent=0 // pred_fallthru
    _
  // Predicated region
  $region14: #{neck_forward.36} parent=0 // pred_check
    _
  $region15: #{neck_forward.36} parent=0 // pred_check_branch
    %16 = sbr.rel (0) target = $region17
  $region16: #{neck_forward.36} parent=0 // pred_region
    _
  $region17: #{neck_forward.36} parent=0 // pred_fallthru
    _
  %p18 = scmp.eq.s32.totalorder 0, 0
  // Predicated region
  $region18: #{neck_forward.36} parent=0 // pred_check
    %p19 = pneg %p18
  $region19: #{neck_forward.36} parent=0 // pred_check_branch
    %21 = sbr.rel (%p19) target = $region21
  $region20: #{neck_forward.36} parent=0 // pred_region
    %22 = vst [vmem:[#allocation2] sm:$0xff] 0.0
    %23 = vst [vmem:[#allocation2 + $0x8] sm:$0xff] 0.0
    %24 = vst [vmem:[#allocation2 + $0x10] sm:$0xff] 0.0
    %25 = vst [vmem:[#allocation2 + $0x18] sm:$0xff] 0.0
  $region21: #{neck_forward.36} parent=0 // pred_fallthru
    _
  %v26 = vld [vmem:[#allocation2] sm:$0xff]
  %v27 = vld [vmem:[#allocation2 + $0x8] sm:$0xff]
  %v28 = vld [vmem:[#allocation2 + $0x10] sm:$0xff]
  %v29 = vld [vmem:[#allocation2 + $0x18] sm:$0xff]
  %v30 = vld [vmem:[%s0] sm:$0xf]
  %v31 = vld [vmem:[%s0 + $0x4] sm:$0xf]
  %v32 = vld [vmem:[%s0 + $0x8] sm:$0xf]
  %v33 = vld [vmem:[%s0 + $0xc] sm:$0xf]
  %v34 = vld [vmem:[%s1] sm:$0xf]
  %v35 = vld [vmem:[%s1 + $0x4] sm:$0xf]
  %v36 = vld [vmem:[%s1 + $0x8] sm:$0xf]
  %v37 = vld [vmem:[%s1 + $0xc] sm:$0xf]
  %v38 = vld [vmem:[%s1 + $0x10] sm:$0xf]
  %v39 = vld [vmem:[%s1 + $0x14] sm:$0xf]
  %v40 = vld [vmem:[%s1 + $0x18] sm:$0xf]
  %v41 = vld [vmem:[%s1 + $0x1c] sm:$0xf]
  %v42 = vld [vmem:[%s1 + $0x20] sm:$0xf]
  %v43 = vld [vmem:[%s1 + $0x24] sm:$0xf]
  %v44 = vld [vmem:[%s1 + $0x28] sm:$0xf]
  %v45 = vld [vmem:[%s1 + $0x2c] sm:$0xf]
  %v46 = vld [vmem:[%s1 + $0x30] sm:$0xf]
  %v47 = vld [vmem:[%s1 + $0x34] sm:$0xf]
  %v48 = vld [vmem:[%s1 + $0x38] sm:$0xf]
  %v49 = vld [vmem:[%s1 + $0x3c] sm:$0xf]
  %v54 = vunpack.c.l.b16 %v30
  %v55 = vunpack.c.l.b16 %v31
  %v56 = vunpack.c.l.b16 %v32
  %v57 = vunpack.c.l.b16 %v33
  %v58 = vpack.c.b16 %v55, %v54
  %v59 = vpack.c.b16 %v57, %v56
  %v78 = vunpack.c.l.b16 %v34
  %v79 = vunpack.c.l.b16 %v35
  %v80 = vunpack.c.l.b16 %v36
  %v81 = vunpack.c.l.b16 %v37
  %v82 = vunpack.c.l.b16 %v38
  %v83 = vunpack.c.l.b16 %v39
  %v84 = vunpack.c.l.b16 %v40
  %v85 = vunpack.c.l.b16 %v41
  %v86 = vunpack.c.l.b16 %v42
  %v87 = vunpack.c.l.b16 %v43
  %v88 = vunpack.c.l.b16 %v44
  %v89 = vunpack.c.l.b16 %v45
  %v90 = vunpack.c.l.b16 %v46
  %v91 = vunpack.c.l.b16 %v47
  %v92 = vunpack.c.l.b16 %v48
  %v93 = vunpack.c.l.b16 %v49
  %v94 = vpack.c.b16 %v79, %v78
  %v95 = vpack.c.b16 %v81, %v80
  %v96 = vpack.c.b16 %v83, %v82
  %v97 = vpack.c.b16 %v85, %v84
  %v98 = vpack.c.b16 %v87, %v86
  %v99 = vpack.c.b16 %v89, %v88
  %v100 = vpack.c.b16 %v91, %v90
  %v101 = vpack.c.b16 %v93, %v92
  %110 = vmatprep.subr.bf16.mxu0 0
  %111 = vmatpush1.bf16.msra.mxu0 %v101
  %112 = vmatprep.subr.bf16.mxu0 0
  %113 = vmatpush1.bf16.msra.mxu0 %v100
  %114 = vmatprep.subr.bf16.mxu0 0
  %115 = vmatpush1.bf16.msra.mxu0 %v99
  %116 = vmatprep.subr.bf16.mxu0 0
  %117 = vmatpush1.bf16.msra.mxu0 %v98
  %118 = vmatprep.subr.bf16.mxu0 0
  %119 = vmatpush1.bf16.msra.mxu0 %v97
  %120 = vmatprep.subr.bf16.mxu0 0
  %121 = vmatpush1.bf16.msra.mxu0 %v96
  %122 = vmatprep.subr.bf16.mxu0 0
  %123 = vmatpush1.bf16.msra.mxu0 %v95
  %124 = vmatprep.subr.bf16.mxu0 0
  %125 = vmatpush1.bf16.msra.mxu0 %v94
  %126 = vmatprep.subr.bf16.mxu0 0
  %127 = vmatpush2.bf16.msra.mxu0 0
  %128 = vmatprep.subr.bf16.mxu0 0
  %129 = vmatpush2.bf16.msra.mxu0 0
  %130 = vmatprep.subr.bf16.mxu0 0
  %131 = vmatpush2.bf16.msra.mxu0 0
  %132 = vmatprep.subr.bf16.mxu0 0
  %133 = vmatpush2.bf16.msra.mxu0 0
  %134 = vmatprep.subr.bf16.mxu0 0
  %135 = vmatpush2.bf16.msra.mxu0 0
  %136 = vmatprep.subr.bf16.mxu0 0
  %137 = vmatpush2.bf16.msra.mxu0 0
  %138 = vmatprep.subr.bf16.mxu0 0
  %139 = vmatpush2.bf16.msra.mxu0 0
  %140 = vmatprep.subr.bf16.mxu0 0
  %141 = vmatpush2.bf16.msra.mxu0 0
  %142 = vmatprep.mubr.bf16.mxu0 0
  %143 = vmatmul.mubr.bf16.gmra.mxu0 %v58
  %v144 = vpop.f32.mrf.mxu0
  %v145 = vadd.f32 0.0, %v144
  %v146 = vpop.f32.mrf.mxu0
  %v147 = vpop.f32.mrf.mxu0
  %v148 = vadd.f32 0.0, %v147
  %v149 = vpop.f32.mrf.mxu0
  %150 = vmatprep.mubr.bf16.mxu0 0
  %151 = vmatmul.mubr.bf16.gmra.mxu0 %v59
  %v152 = vpop.f32.mrf.mxu0
  %v153 = vadd.f32 0.0, %v152
  %v154 = vpop.f32.mrf.mxu0
  %v155 = vpop.f32.mrf.mxu0
  %v156 = vadd.f32 0.0, %v155
  %v157 = vpop.f32.mrf.mxu0
  %158 = vdwg.mxu0
  %v159 = vadd.f32 %v26, %v145
  %v160 = vadd.f32 %v27, %v148
  %v161 = vadd.f32 %v28, %v153
  %v162 = vadd.f32 %v29, %v156
  %163 = vst [vmem:[#allocation2] sm:$0xff] %v159
  %164 = vst [vmem:[#allocation2 + $0x8] sm:$0xff] %v160
  %165 = vst [vmem:[#allocation2 + $0x10] sm:$0xff] %v161
  %166 = vst [vmem:[#allocation2 + $0x18] sm:$0xff] %v162
  // Predicated region
  $region22: #{neck_forward.36} parent=0 // pred_check
    %p167 = pneg %p18
  $region23: #{neck_forward.36} parent=0 // pred_check_branch
    %169 = sbr.rel (%p167) target = $region25
  $region24: #{neck_forward.36} parent=0 // pred_region
    %v170 = vld [vmem:[#allocation2] sm:$0xff]
    %v171 = vld [vmem:[#allocation2 + $0x8] sm:$0xff]
    %v172 = vld [vmem:[#allocation2 + $0x10] sm:$0xff]
    %v173 = vld [vmem:[#allocation2 + $0x18] sm:$0xff]
    %v174 = vld [vmem:[%s2] sm:$0x1]
    %v176 = vlaneseq
    %v177 = vshrl.u32 %v176, 7
    %v178 = vsub.s32 0, %v177
    %v179 = vrot.slane %v174, %v178
    %v181 = vmul.f32 %v170, %v179
    %v182 = vmul.f32 %v171, %v179
    %v183 = vmul.f32 %v172, %v179
    %v184 = vmul.f32 %v173, %v179
    %v185 = vld [vmem:[%s3] sm:$0x1]
    %v187 = vlaneseq
    %v188 = vshrl.u32 %v187, 7
    %v189 = vsub.s32 0, %v188
    %v190 = vrot.slane %v185, %v189
    %v192 = vadd.f32 %v181, %v190
    %v193 = vadd.f32 %v182, %v190
    %v194 = vadd.f32 %v183, %v190
    %v195 = vadd.f32 %v184, %v190
    %v196 = vpack.c.bf16 %v193, %v192
    %v197 = vpack.c.bf16 %v195, %v194
    %v200 = vunpack.c.l.b16 %v196
    %v201 = vunpack.c.h.b16 %v196
    %v202 = vunpack.c.l.b16 %v197
    %v203 = vunpack.c.h.b16 %v197
    %v204 = vpack.c.b16 %v200, %v200
    %v205 = vpack.c.b16 %v201, %v201
    %v206 = vpack.c.b16 %v202, %v202
    %v207 = vpack.c.b16 %v203, %v203
    %212 = vst [vmem:[%s4] sm:$0xf] %v204
    %213 = vst [vmem:[%s4 + $0x4] sm:$0xf] %v205
    %214 = vst [vmem:[%s4 + $0x8] sm:$0xf] %v206
    %215 = vst [vmem:[%s4 + $0xc] sm:$0xf] %v207
  $region25: #{neck_forward.36} parent=0 // pred_fallthru
    _
  // Predicated region
  $region26: #{neck_forward.36} parent=0 // pred_check
    _
  $region27: #{neck_forward.36} parent=0 // pred_check_branch
    %217 = sbr.rel (0) target = $region29
  $region28: #{neck_forward.36} parent=0 // pred_region
    _
  $region29: #{neck_forward.36} parent=0 // pred_fallthru
    _
  // Predicated region
  $region30: #{neck_forward.36} parent=0 // pred_check
    _
  $region31: #{neck_forward.36} parent=0 // pred_check_branch
    %219 = sbr.rel (0) target = $region33
  $region32: #{neck_forward.36} parent=0 // pred_region
    _
  $region33: #{neck_forward.36} parent=0 // pred_fallthru
    _

// kernel: neck_forward.37
$region0: #{neck_forward.37}
  #allocation0 [shape = 'u32[]', space=smem, size = 0x4, offset = 0x4, fixed_abs, tag = 'smem constant byte address 0x4 - core index']
  #allocation1 [shape = 'u32[144,128]{1,0:T(1,128)}', space=vmem, size = 0x12000, scoped, tag = 'internal scratch']
  #allocation2 [shape = 'f32[128,128]{1,0:T(8,128)}', space=vmem, size = 0x10000, scoped, tag = 'scratch operand']
  %s0 = inlined_call_operand.vmem [shape: bf16[128,128], index: 0, kind: input, shape index: {}]
  %s1 = inlined_call_operand.vmem [shape: bf16[128,128], index: 1, kind: input, shape index: {}]
  %s2 = inlined_call_operand.vmem [shape: f32[1,128], index: 2, kind: input, shape index: {}]
  %s3 = inlined_call_operand.vmem [shape: f32[1,128], index: 3, kind: input, shape index: {}]
  %s4 = inlined_call_operand.vmem [shape: bf16[128,128], index: 4, kind: output, shape index: {}]
  %s5 = sld [smem:[#allocation0]]
  $region34: #{neck_forward.37} parent=0
    _
  %s7 = ssub.s32 1, %s5
  %s8 = scalar_select 0, %s7, %s5
  // Predicated region
  $region2: #{neck_forward.37} parent=0 // pred_check
    _
  $region3: #{neck_forward.37} parent=0 // pred_check_branch
    %10 = sbr.rel (0) target = $region5
  $region4: #{neck_forward.37} parent=0 // pred_region
    _
  $region5: #{neck_forward.37} parent=0 // pred_fallthru
    _
  // Predicated region
  $region6: #{neck_forward.37} parent=0 // pred_check
    _
  $region7: #{neck_forward.37} parent=0 // pred_check_branch
    %12 = sbr.rel (0) target = $region9
  $region8: #{neck_forward.37} parent=0 // pred_region
    _
  $region9: #{neck_forward.37} parent=0 // pred_fallthru
    _
  // Predicated region
  $region10: #{neck_forward.37} parent=0 // pred_check
    _
  $region11: #{neck_forward.37} parent=0 // pred_check_branch
    %14 = sbr.rel (0) target = $region13
  $region12: #{neck_forward.37} parent=0 // pred_region
    _
  $region13: #{neck_forward.37} parent=0 // pred_fallthru
    _
  // Predicated region
  $region14: #{neck_forward.37} parent=0 // pred_check
    _
  $region15: #{neck_forward.37} parent=0 // pred_check_branch
    %16 = sbr.rel (0) target = $region17
  $region16: #{neck_forward.37} parent=0 // pred_region
    _
  $region17: #{neck_forward.37} parent=0 // pred_fallthru
    _
  %p18 = scmp.eq.s32.totalorder 0, 0
  // Predicated region
  $region18: #{neck_forward.37} parent=0 // pred_check
    %p19 = pneg %p18
  $region19: #{neck_forward.37} parent=0 // pred_check_branch
    %21 = sbr.rel (%p19) target = $region21
  $region20: #{neck_forward.37} parent=0 // pred_region
    %22 = vst [vmem:[#allocation2] sm:$0xff] 0.0
    %23 = vst [vmem:[#allocation2 + $0x8] sm:$0xff] 0.0
    %24 = vst [vmem:[#allocation2 + $0x10] sm:$0xff] 0.0
    %25 = vst [vmem:[#allocation2 + $0x18] sm:$0xff] 0.0
    %26 = vst [vmem:[#allocation2 + $0x20] sm:$0xff] 0.0
    %27 = vst [vmem:[#allocation2 + $0x28] sm:$0xff] 0.0
    %28 = vst [vmem:[#allocation2 + $0x30] sm:$0xff] 0.0
    %29 = vst [vmem:[#allocation2 + $0x38] sm:$0xff] 0.0
    %30 = vst [vmem:[#allocation2 + $0x40] sm:$0xff] 0.0
    %31 = vst [vmem:[#allocation2 + $0x48] sm:$0xff] 0.0
    %32 = vst [vmem:[#allocation2 + $0x50] sm:$0xff] 0.0
    %33 = vst [vmem:[#allocation2 + $0x58] sm:$0xff] 0.0
    %34 = vst [vmem:[#allocation2 + $0x60] sm:$0xff] 0.0
    %35 = vst [vmem:[#allocation2 + $0x68] sm:$0xff] 0.0
    %36 = vst [vmem:[#allocation2 + $0x70] sm:$0xff] 0.0
    %37 = vst [vmem:[#allocation2 + $0x78] sm:$0xff] 0.0
  $region21: #{neck_forward.37} parent=0 // pred_fallthru
    _
  %v38 = vld [vmem:[#allocation2] sm:$0xff]
  %v39 = vld [vmem:[#allocation2 + $0x8] sm:$0xff]
  %v40 = vld [vmem:[#allocation2 + $0x10] sm:$0xff]
  %v41 = vld [vmem:[#allocation2 + $0x18] sm:$0xff]
  %v42 = vld [vmem:[#allocation2 + $0x20] sm:$0xff]
  %v43 = vld [vmem:[#allocation2 + $0x28] sm:$0xff]
  %v44 = vld [vmem:[#allocation2 + $0x30] sm:$0xff]
  %v45 = vld [vmem:[#allocation2 + $0x38] sm:$0xff]
  %v46 = vld [vmem:[#allocation2 + $0x40] sm:$0xff]
  %v47 = vld [vmem:[#allocation2 + $0x48] sm:$0xff]
  %v48 = vld [vmem:[#allocation2 + $0x50] sm:$0xff]
  %v49 = vld [vmem:[#allocation2 + $0x58] sm:$0xff]
  %v50 = vld [vmem:[#allocation2 + $0x60] sm:$0xff]
  %v51 = vld [vmem:[#allocation2 + $0x68] sm:$0xff]
  %v52 = vld [vmem:[#allocation2 + $0x70] sm:$0xff]
  %v53 = vld [vmem:[#allocation2 + $0x78] sm:$0xff]
  %v54 = vld [vmem:[%s0] sm:$0xf]
  %v55 = vld [vmem:[%s0 + $0x4] sm:$0xf]
  %v56 = vld [vmem:[%s0 + $0x8] sm:$0xf]
  %v57 = vld [vmem:[%s0 + $0xc] sm:$0xf]
  %v58 = vld [vmem:[%s0 + $0x10] sm:$0xf]
  %v59 = vld [vmem:[%s0 + $0x14] sm:$0xf]
  %v60 = vld [vmem:[%s0 + $0x18] sm:$0xf]
  %v61 = vld [vmem:[%s0 + $0x1c] sm:$0xf]
  %v62 = vld [vmem:[%s0 + $0x20] sm:$0xf]
  %v63 = vld [vmem:[%s0 + $0x24] sm:$0xf]
  %v64 = vld [vmem:[%s0 + $0x28] sm:$0xf]
  %v65 = vld [vmem:[%s0 + $0x2c] sm:$0xf]
  %v66 = vld [vmem:[%s0 + $0x30] sm:$0xf]
  %v67 = vld [vmem:[%s0 + $0x34] sm:$0xf]
  %v68 = vld [vmem:[%s0 + $0x38] sm:$0xf]
  %v69 = vld [vmem:[%s0 + $0x3c] sm:$0xf]
  %v70 = vld [vmem:[%s1] sm:$0xf]
  %v71 = vld [vmem:[%s1 + $0x4] sm:$0xf]
  %v72 = vld [vmem:[%s1 + $0x8] sm:$0xf]
  %v73 = vld [vmem:[%s1 + $0xc] sm:$0xf]
  %v74 = vld [vmem:[%s1 + $0x10] sm:$0xf]
  %v75 = vld [vmem:[%s1 + $0x14] sm:$0xf]
  %v76 = vld [vmem:[%s1 + $0x18] sm:$0xf]
  %v77 = vld [vmem:[%s1 + $0x1c] sm:$0xf]
  %v78 = vld [vmem:[%s1 + $0x20] sm:$0xf]
  %v79 = vld [vmem:[%s1 + $0x24] sm:$0xf]
  %v80 = vld [vmem:[%s1 + $0x28] sm:$0xf]
  %v81 = vld [vmem:[%s1 + $0x2c] sm:$0xf]
  %v82 = vld [vmem:[%s1 + $0x30] sm:$0xf]
  %v83 = vld [vmem:[%s1 + $0x34] sm:$0xf]
  %v84 = vld [vmem:[%s1 + $0x38] sm:$0xf]
  %v85 = vld [vmem:[%s1 + $0x3c] sm:$0xf]
  %v102 = vunpack.c.l.b16 %v54
  %v103 = vunpack.c.l.b16 %v55
  %v104 = vunpack.c.l.b16 %v56
  %v105 = vunpack.c.l.b16 %v57
  %v106 = vunpack.c.l.b16 %v58
  %v107 = vunpack.c.l.b16 %v59
  %v108 = vunpack.c.l.b16 %v60
  %v109 = vunpack.c.l.b16 %v61
  %v110 = vunpack.c.l.b16 %v62
  %v111 = vunpack.c.l.b16 %v63
  %v112 = vunpack.c.l.b16 %v64
  %v113 = vunpack.c.l.b16 %v65
  %v114 = vunpack.c.l.b16 %v66
  %v115 = vunpack.c.l.b16 %v67
  %v116 = vunpack.c.l.b16 %v68
  %v117 = vunpack.c.l.b16 %v69
  %v118 = vpack.c.b16 %v103, %v102
  %v119 = vpack.c.b16 %v105, %v104
  %v120 = vpack.c.b16 %v107, %v106
  %v121 = vpack.c.b16 %v109, %v108
  %v122 = vpack.c.b16 %v111, %v110
  %v123 = vpack.c.b16 %v113, %v112
  %v124 = vpack.c.b16 %v115, %v114
  %v125 = vpack.c.b16 %v117, %v116
  %v150 = vunpack.c.l.b16 %v70
  %v151 = vunpack.c.l.b16 %v71
  %v152 = vunpack.c.l.b16 %v72
  %v153 = vunpack.c.l.b16 %v73
  %v154 = vunpack.c.l.b16 %v74
  %v155 = vunpack.c.l.b16 %v75
  %v156 = vunpack.c.l.b16 %v76
  %v157 = vunpack.c.l.b16 %v77
  %v158 = vunpack.c.l.b16 %v78
  %v159 = vunpack.c.l.b16 %v79
  %v160 = vunpack.c.l.b16 %v80
  %v161 = vunpack.c.l.b16 %v81
  %v162 = vunpack.c.l.b16 %v82
  %v163 = vunpack.c.l.b16 %v83
  %v164 = vunpack.c.l.b16 %v84
  %v165 = vunpack.c.l.b16 %v85
  %v166 = vpack.c.b16 %v151, %v150
  %v167 = vpack.c.b16 %v153, %v152
  %v168 = vpack.c.b16 %v155, %v154
  %v169 = vpack.c.b16 %v157, %v156
  %v170 = vpack.c.b16 %v159, %v158
  %v171 = vpack.c.b16 %v161, %v160
  %v172 = vpack.c.b16 %v163, %v162
  %v173 = vpack.c.b16 %v165, %v164
  %182 = vmatprep.subr.bf16.mxu0 0
  %183 = vmatpush1.bf16.msra.mxu0 %v173
  %184 = vmatprep.subr.bf16.mxu0 0
  %185 = vmatpush1.bf16.msra.mxu0 %v172
  %186 = vmatprep.subr.bf16.mxu0 0
  %187 = vmatpush1.bf16.msra.mxu0 %v171
  %188 = vmatprep.subr.bf16.mxu0 0
  %189 = vmatpush1.bf16.msra.mxu0 %v170
  %190 = vmatprep.subr.bf16.mxu0 0
  %191 = vmatpush1.bf16.msra.mxu0 %v169
  %192 = vmatprep.subr.bf16.mxu0 0
  %193 = vmatpush1.bf16.msra.mxu0 %v168
  %194 = vmatprep.subr.bf16.mxu0 0
  %195 = vmatpush1.bf16.msra.mxu0 %v167
  %196 = vmatprep.subr.bf16.mxu0 0
  %197 = vmatpush1.bf16.msra.mxu0 %v166
  %198 = vmatprep.subr.bf16.mxu0 0
  %199 = vmatpush2.bf16.msra.mxu0 0
  %200 = vmatprep.subr.bf16.mxu0 0
  %201 = vmatpush2.bf16.msra.mxu0 0
  %202 = vmatprep.subr.bf16.mxu0 0
  %203 = vmatpush2.bf16.msra.mxu0 0
  %204 = vmatprep.subr.bf16.mxu0 0
  %205 = vmatpush2.bf16.msra.mxu0 0
  %206 = vmatprep.subr.bf16.mxu0 0
  %207 = vmatpush2.bf16.msra.mxu0 0
  %208 = vmatprep.subr.bf16.mxu0 0
  %209 = vmatpush2.bf16.msra.mxu0 0
  %210 = vmatprep.subr.bf16.mxu0 0
  %211 = vmatpush2.bf16.msra.mxu0 0
  %212 = vmatprep.subr.bf16.mxu0 0
  %213 = vmatpush2.bf16.msra.mxu0 0
  %214 = vmatprep.mubr.bf16.mxu0 0
  %215 = vmatmul.mubr.bf16.gmra.mxu0 %v118
  %v216 = vpop.f32.mrf.mxu0
  %v217 = vadd.f32 0.0, %v216
  %v218 = vpop.f32.mrf.mxu0
  %v219 = vpop.f32.mrf.mxu0
  %v220 = vadd.f32 0.0, %v219
  %v221 = vpop.f32.mrf.mxu0
  %222 = vmatprep.mubr.bf16.mxu0 0
  %223 = vmatmul.mubr.bf16.gmra.mxu0 %v119
  %v224 = vpop.f32.mrf.mxu0
  %v225 = vadd.f32 0.0, %v224
  %v226 = vpop.f32.mrf.mxu0
  %v227 = vpop.f32.mrf.mxu0
  %v228 = vadd.f32 0.0, %v227
  %v229 = vpop.f32.mrf.mxu0
  %230 = vmatprep.mubr.bf16.mxu0 0
  %231 = vmatmul.mubr.bf16.gmra.mxu0 %v120
  %v232 = vpop.f32.mrf.mxu0
  %v233 = vadd.f32 0.0, %v232
  %v234 = vpop.f32.mrf.mxu0
  %v235 = vpop.f32.mrf.mxu0
  %v236 = vadd.f32 0.0, %v235
  %v237 = vpop.f32.mrf.mxu0
  %238 = vmatprep.mubr.bf16.mxu0 0
  %239 = vmatmul.mubr.bf16.gmra.mxu0 %v121
  %v240 = vpop.f32.mrf.mxu0
  %v241 = vadd.f32 0.0, %v240
  %v242 = vpop.f32.mrf.mxu0
  %v243 = vpop.f32.mrf.mxu0
  %v244 = vadd.f32 0.0, %v243
  %v245 = vpop.f32.mrf.mxu0
  %246 = vmatprep.mubr.bf16.mxu0 0
  %247 = vmatmul.mubr.bf16.gmra.mxu0 %v122
  %v248 = vpop.f32.mrf.mxu0
  %v249 = vadd.f32 0.0, %v248
  %v250 = vpop.f32.mrf.mxu0
  %v251 = vpop.f32.mrf.mxu0
  %v252 = vadd.f32 0.0, %v251
  %v253 = vpop.f32.mrf.mxu0
  %254 = vmatprep.mubr.bf16.mxu0 0
  %255 = vmatmul.mubr.bf16.gmra.mxu0 %v123
  %v256 = vpop.f32.mrf.mxu0
  %v257 = vadd.f32 0.0, %v256
  %v258 = vpop.f32.mrf.mxu0
  %v259 = vpop.f32.mrf.mxu0
  %v260 = vadd.f32 0.0, %v259
  %v261 = vpop.f32.mrf.mxu0
  %262 = vmatprep.mubr.bf16.mxu0 0
  %263 = vmatmul.mubr.bf16.gmra.mxu0 %v124
  %v264 = vpop.f32.mrf.mxu0
  %v265 = vadd.f32 0.0, %v264
  %v266 = vpop.f32.mrf.mxu0
  %v267 = vpop.f32.mrf.mxu0
  %v268 = vadd.f32 0.0, %v267
  %v269 = vpop.f32.mrf.mxu0
  %270 = vmatprep.mubr.bf16.mxu0 0
  %271 = vmatmul.mubr.bf16.gmra.mxu0 %v125
  %v272 = vpop.f32.mrf.mxu0
  %v273 = vadd.f32 0.0, %v272
  %v274 = vpop.f32.mrf.mxu0
  %v275 = vpop.f32.mrf.mxu0
  %v276 = vadd.f32 0.0, %v275
  %v277 = vpop.f32.mrf.mxu0
  %278 = vdwg.mxu0
  %v279 = vadd.f32 %v38, %v217
  %v280 = vadd.f32 %v39, %v220
  %v281 = vadd.f32 %v40, %v225
  %v282 = vadd.f32 %v41, %v228
  %v283 = vadd.f32 %v42, %v233
  %v284 = vadd.f32 %v43, %v236
  %v285 = vadd.f32 %v44, %v241
  %v286 = vadd.f32 %v45, %v244
  %v287 = vadd.f32 %v46, %v249
  %v288 = vadd.f32 %v47, %v252
  %v289 = vadd.f32 %v48, %v257
  %v290 = vadd.f32 %v49, %v260
  %v291 = vadd.f32 %v50, %v265
  %v292 = vadd.f32 %v51, %v268
  %v293 = vadd.f32 %v52, %v273
  %v294 = vadd.f32 %v53, %v276
  %295 = vst [vmem:[#allocation2] sm:$0xff] %v279
  %296 = vst [vmem:[#allocation2 + $0x8] sm:$0xff] %v280
  %297 = vst [vmem:[#allocation2 + $0x10] sm:$0xff] %v281
  %298 = vst [vmem:[#allocation2 + $0x18] sm:$0xff] %v282
  %299 = vst [vmem:[#allocation2 + $0x20] sm:$0xff] %v283
  %300 = vst [vmem:[#allocation2 + $0x28] sm:$0xff] %v284
  %301 = vst [vmem:[#allocation2 + $0x30] sm:$0xff] %v285
  %302 = vst [vmem:[#allocation2 + $0x38] sm:$0xff] %v286
  %303 = vst [vmem:[#allocation2 + $0x40] sm:$0xff] %v287
  %304 = vst [vmem:[#allocation2 + $0x48] sm:$0xff] %v288
  %305 = vst [vmem:[#allocation2 + $0x50] sm:$0xff] %v289
  %306 = vst [vmem:[#allocation2 + $0x58] sm:$0xff] %v290
  %307 = vst [vmem:[#allocation2 + $0x60] sm:$0xff] %v291
  %308 = vst [vmem:[#allocation2 + $0x68] sm:$0xff] %v292
  %309 = vst [vmem:[#allocation2 + $0x70] sm:$0xff] %v293
  %310 = vst [vmem:[#allocation2 + $0x78] sm:$0xff] %v294
  // Predicated region
  $region22: #{neck_forward.37} parent=0 // pred_check
    %p311 = pneg %p18
  $region23: #{neck_forward.37} parent=0 // pred_check_branch
    %313 = sbr.rel (%p311) target = $region25
  $region24: #{neck_forward.37} parent=0 // pred_region
    %v314 = vld [vmem:[#allocation2] sm:$0xff]
    %v315 = vld [vmem:[#allocation2 + $0x8] sm:$0xff]
    %v316 = vld [vmem:[#allocation2 + $0x10] sm:$0xff]
    %v317 = vld [vmem:[#allocation2 + $0x18] sm:$0xff]
    %v318 = vld [vmem:[#allocation2 + $0x20] sm:$0xff]
    %v319 = vld [vmem:[#allocation2 + $0x28] sm:$0xff]
    %v320 = vld [vmem:[#allocation2 + $0x30] sm:$0xff]
    %v321 = vld [vmem:[#allocation2 + $0x38] sm:$0xff]
    %v322 = vld [vmem:[#allocation2 + $0x40] sm:$0xff]
    %v323 = vld [vmem:[#allocation2 + $0x48] sm:$0xff]
    %v324 = vld [vmem:[#allocation2 + $0x50] sm:$0xff]
    %v325 = vld [vmem:[#allocation2 + $0x58] sm:$0xff]
    %v326 = vld [vmem:[#allocation2 + $0x60] sm:$0xff]
    %v327 = vld [vmem:[#allocation2 + $0x68] sm:$0xff]
    %v328 = vld [vmem:[#allocation2 + $0x70] sm:$0xff]
    %v329 = vld [vmem:[#allocation2 + $0x78] sm:$0xff]
    %v330 = vld [vmem:[%s2] sm:$0x1]
    %v332 = vlaneseq
    %v333 = vshrl.u32 %v332, 7
    %v334 = vsub.s32 0, %v333
    %v335 = vrot.slane %v330, %v334
    %v337 = vmul.f32 %v314, %v335
    %v338 = vmul.f32 %v315, %v335
    %v339 = vmul.f32 %v316, %v335
    %v340 = vmul.f32 %v317, %v335
    %v341 = vmul.f32 %v318, %v335
    %v342 = vmul.f32 %v319, %v335
    %v343 = vmul.f32 %v320, %v335
    %v344 = vmul.f32 %v321, %v335
    %v345 = vmul.f32 %v322, %v335
    %v346 = vmul.f32 %v323, %v335
    %v347 = vmul.f32 %v324, %v335
    %v348 = vmul.f32 %v325, %v335
    %v349 = vmul.f32 %v326, %v335
    %v350 = vmul.f32 %v327, %v335
    %v351 = vmul.f32 %v328, %v335
    %v352 = vmul.f32 %v329, %v335
    %v353 = vld [vmem:[%s3] sm:$0x1]
    %v355 = vlaneseq
    %v356 = vshrl.u32 %v355, 7
    %v357 = vsub.s32 0, %v356
    %v358 = vrot.slane %v353, %v357
    %v360 = vadd.f32 %v337, %v358
    %v361 = vadd.f32 %v338, %v358
    %v362 = vadd.f32 %v339, %v358
    %v363 = vadd.f32 %v340, %v358
    %v364 = vadd.f32 %v341, %v358
    %v365 = vadd.f32 %v342, %v358
    %v366 = vadd.f32 %v343, %v358
    %v367 = vadd.f32 %v344, %v358
    %v368 = vadd.f32 %v345, %v358
    %v369 = vadd.f32 %v346, %v358
    %v370 = vadd.f32 %v347, %v358
    %v371 = vadd.f32 %v348, %v358
    %v372 = vadd.f32 %v349, %v358
    %v373 = vadd.f32 %v350, %v358
    %v374 = vadd.f32 %v351, %v358
    %v375 = vadd.f32 %v352, %v358
    %v376 = vxor.u32 %v360, 2147483648
    %v377 = vxor.u32 %v361, 2147483648
    %v378 = vxor.u32 %v362, 2147483648
    %v379 = vxor.u32 %v363, 2147483648
    %v380 = vxor.u32 %v364, 2147483648
    %v381 = vxor.u32 %v365, 2147483648
    %v382 = vxor.u32 %v366, 2147483648
    %v383 = vxor.u32 %v367, 2147483648
    %v384 = vxor.u32 %v368, 2147483648
    %v385 = vxor.u32 %v369, 2147483648
    %v386 = vxor.u32 %v370, 2147483648
    %v387 = vxor.u32 %v371, 2147483648
    %v388 = vxor.u32 %v372, 2147483648
    %v389 = vxor.u32 %v373, 2147483648
    %v390 = vxor.u32 %v374, 2147483648
    %v391 = vxor.u32 %v375, 2147483648
    %v392 = vmul.f32 %v376, 1.442695
    %v393 = vpow.pop %v392
    %v394 = vmul.f32 %v377, 1.442695
    %v395 = vpow.pop %v394
    %v396 = vmul.f32 %v378, 1.442695
    %v397 = vpow.pop %v396
    %v398 = vmul.f32 %v379, 1.442695
    %v399 = vpow.pop %v398
    %v400 = vmul.f32 %v380, 1.442695
    %v401 = vpow.pop %v400
    %v402 = vmul.f32 %v381, 1.442695
    %v403 = vpow.pop %v402
    %v404 = vmul.f32 %v382, 1.442695
    %v405 = vpow.pop %v404
    %v406 = vmul.f32 %v383, 1.442695
    %v407 = vpow.pop %v406
    %v408 = vmul.f32 %v384, 1.442695
    %v409 = vpow.pop %v408
    %v410 = vmul.f32 %v385, 1.442695
    %v411 = vpow.pop %v410
    %v412 = vmul.f32 %v386, 1.442695
    %v413 = vpow.pop %v412
    %v414 = vmul.f32 %v387, 1.442695
    %v415 = vpow.pop %v414
    %v416 = vmul.f32 %v388, 1.442695
    %v417 = vpow.pop %v416
    %v418 = vmul.f32 %v389, 1.442695
    %v419 = vpow.pop %v418
    %v420 = vmul.f32 %v390, 1.442695
    %v421 = vpow.pop %v420
    %v422 = vmul.f32 %v391, 1.442695
    %v423 = vpow.pop %v422
    %v424 = vadd.f32 %v393, 1.0
    %v425 = vadd.f32 %v395, 1.0
    %v426 = vadd.f32 %v397, 1.0
    %v427 = vadd.f32 %v399, 1.0
    %v428 = vadd.f32 %v401, 1.0
    %v429 = vadd.f32 %v403, 1.0
    %v430 = vadd.f32 %v405, 1.0
    %v431 = vadd.f32 %v407, 1.0
    %v432 = vadd.f32 %v409, 1.0
    %v433 = vadd.f32 %v411, 1.0
    %v434 = vadd.f32 %v413, 1.0
    %v435 = vadd.f32 %v415, 1.0
    %v436 = vadd.f32 %v417, 1.0
    %v437 = vadd.f32 %v419, 1.0
    %v438 = vadd.f32 %v421, 1.0
    %v439 = vadd.f32 %v423, 1.0
    %v440 = vrcp.pop %v424
    %v441 = vmul.f32 1.0, %v440
    %v442 = vrcp.pop %v425
    %v443 = vmul.f32 1.0, %v442
    %v444 = vrcp.pop %v426
    %v445 = vmul.f32 1.0, %v444
    %v446 = vrcp.pop %v427
    %v447 = vmul.f32 1.0, %v446
    %v448 = vrcp.pop %v428
    %v449 = vmul.f32 1.0, %v448
    %v450 = vrcp.pop %v429
    %v451 = vmul.f32 1.0, %v450
    %v452 = vrcp.pop %v430
    %v453 = vmul.f32 1.0, %v452
    %v454 = vrcp.pop %v431
    %v455 = vmul.f32 1.0, %v454
    %v456 = vrcp.pop %v432
    %v457 = vmul.f32 1.0, %v456
    %v458 = vrcp.pop %v433
    %v459 = vmul.f32 1.0, %v458
    %v460 = vrcp.pop %v434
    %v461 = vmul.f32 1.0, %v460
    %v462 = vrcp.pop %v435
    %v463 = vmul.f32 1.0, %v462
    %v464 = vrcp.pop %v436
    %v465 = vmul.f32 1.0, %v464
    %v466 = vrcp.pop %v437
    %v467 = vmul.f32 1.0, %v466
    %v468 = vrcp.pop %v438
    %v469 = vmul.f32 1.0, %v468
    %v470 = vrcp.pop %v439
    %v471 = vmul.f32 1.0, %v470
    %v472 = vmul.f32 %v360, %v441
    %v473 = vmul.f32 %v361, %v443
    %v474 = vmul.f32 %v362, %v445
    %v475 = vmul.f32 %v363, %v447
    %v476 = vmul.f32 %v364, %v449
    %v477 = vmul.f32 %v365, %v451
    %v478 = vmul.f32 %v366, %v453
    %v479 = vmul.f32 %v367, %v455
    %v480 = vmul.f32 %v368, %v457
    %v481 = vmul.f32 %v369, %v459
    %v482 = vmul.f32 %v370, %v461
    %v483 = vmul.f32 %v371, %v463
    %v484 = vmul.f32 %v372, %v465
    %v485 = vmul.f32 %v373, %v467
    %v486 = vmul.f32 %v374, %v469
    %v487 = vmul.f32 %v375, %v471
    %v488 = vpack.c.bf16 %v473, %v472
    %v489 = vpack.c.bf16 %v475, %v474
    %v490 = vpack.c.bf16 %v477, %v476
    %v491 = vpack.c.bf16 %v479, %v478
    %v492 = vpack.c.bf16 %v481, %v480
    %v493 = vpack.c.bf16 %v483, %v482
    %v494 = vpack.c.bf16 %v485, %v484
    %v495 = vpack.c.bf16 %v487, %v486
    %v504 = vunpack.c.l.b16 %v488
    %v505 = vunpack.c.h.b16 %v488
    %v506 = vunpack.c.l.b16 %v489
    %v507 = vunpack.c.h.b16 %v489
    %v508 = vunpack.c.l.b16 %v490
    %v509 = vunpack.c.h.b16 %v490
    %v510 = vunpack.c.l.b16 %v491
    %v511 = vunpack.c.h.b16 %v491
    %v512 = vunpack.c.l.b16 %v492
    %v513 = vunpack.c.h.b16 %v492
    %v514 = vunpack.c.l.b16 %v493
    %v515 = vunpack.c.h.b16 %v493
    %v516 = vunpack.c.l.b16 %v494
    %v517 = vunpack.c.h.b16 %v494
    %v518 = vunpack.c.l.b16 %v495
    %v519 = vunpack.c.h.b16 %v495
    %v520 = vpack.c.b16 %v504, %v504
    %v521 = vpack.c.b16 %v505, %v505
    %v522 = vpack.c.b16 %v506, %v506
    %v523 = vpack.c.b16 %v507, %v507
    %v524 = vpack.c.b16 %v508, %v508
    %v525 = vpack.c.b16 %v509, %v509
    %v526 = vpack.c.b16 %v510, %v510
    %v527 = vpack.c.b16 %v511, %v511
    %v528 = vpack.c.b16 %v512, %v512
    %v529 = vpack.c.b16 %v513, %v513
    %v530 = vpack.c.b16 %v514, %v514
    %v531 = vpack.c.b16 %v515, %v515
    %v532 = vpack.c.b16 %v516, %v516
    %v533 = vpack.c.b16 %v517, %v517
    %v534 = vpack.c.b16 %v518, %v518
    %v535 = vpack.c.b16 %v519, %v519
    %552 = vst [vmem:[%s4] sm:$0xf] %v520
    %553 = vst [vmem:[%s4 + $0x4] sm:$0xf] %v521
    %554 = vst [vmem:[%s4 + $0x8] sm:$0xf] %v522
    %555 = vst [vmem:[%s4 + $0xc] sm:$0xf] %v523
    %556 = vst [vmem:[%s4 + $0x10] sm:$0xf] %v524
    %557 = vst [vmem:[%s4 + $0x14] sm:$0xf] %v525
    %558 = vst [vmem:[%s4 + $0x18] sm:$0xf] %v526
    %559 = vst [vmem:[%s4 + $0x1c] sm:$0xf] %v527
    %560 = vst [vmem:[%s4 + $0x20] sm:$0xf] %v528
    %561 = vst [vmem:[%s4 + $0x24] sm:$0xf] %v529
    %562 = vst [vmem:[%s4 + $0x28] sm:$0xf] %v530
    %563 = vst [vmem:[%s4 + $0x2c] sm:$0xf] %v531
    %564 = vst [vmem:[%s4 + $0x30] sm:$0xf] %v532
    %565 = vst [vmem:[%s4 + $0x34] sm:$0xf] %v533
    %566 = vst [vmem:[%s4 + $0x38] sm:$0xf] %v534
    %567 = vst [vmem:[%s4 + $0x3c] sm:$0xf] %v535
  $region25: #{neck_forward.37} parent=0 // pred_fallthru
    _
  // Predicated region
  $region26: #{neck_forward.37} parent=0 // pred_check
    _
  $region27: #{neck_forward.37} parent=0 // pred_check_branch
    %569 = sbr.rel (0) target = $region29
  $region28: #{neck_forward.37} parent=0 // pred_region
    _
  $region29: #{neck_forward.37} parent=0 // pred_fallthru
    _
  // Predicated region
  $region30: #{neck_forward.37} parent=0 // pred_check
    _
  $region31: #{neck_forward.37} parent=0 // pred_check_branch
    %571 = sbr.rel (0) target = $region33
  $region32: #{neck_forward.37} parent=0 // pred_region
    _
  $region33: #{neck_forward.37} parent=0 // pred_fallthru
    _

// kernel: neck_forward.39
$region0: #{neck_forward.39}
  #allocation0 [shape = 'u32[]', space=smem, size = 0x4, offset = 0x4, fixed_abs, tag = 'smem constant byte address 0x4 - core index']
  #allocation1 [shape = 'u32[144,128]{1,0:T(1,128)}', space=vmem, size = 0x12000, scoped, tag = 'internal scratch']
  #allocation2 [shape = 'f32[128,128]{1,0:T(8,128)}', space=vmem, size = 0x10000, scoped, tag = 'scratch operand']
  %s0 = inlined_call_operand.vmem [shape: bf16[128,256], index: 0, kind: input, shape index: {}]
  %s1 = inlined_call_operand.vmem [shape: bf16[256,128], index: 1, kind: input, shape index: {}]
  %s2 = inlined_call_operand.vmem [shape: f32[1,128], index: 2, kind: input, shape index: {}]
  %s3 = inlined_call_operand.vmem [shape: f32[1,128], index: 3, kind: input, shape index: {}]
  %s4 = inlined_call_operand.vmem [shape: bf16[128,128], index: 4, kind: input, shape index: {}]
  %s5 = inlined_call_operand.vmem [shape: bf16[128,128], index: 5, kind: output, shape index: {}]
  %s6 = sld [smem:[#allocation0]]
  $region38: #{neck_forward.39} parent=0
    _
  %s8 = ssub.s32 1, %s6
  %s9 = scalar_select 0, %s8, %s6
  // Predicated region
  $region2: #{neck_forward.39} parent=0 // pred_check
    _
  $region3: #{neck_forward.39} parent=0 // pred_check_branch
    %11 = sbr.rel (0) target = $region5
  $region4: #{neck_forward.39} parent=0 // pred_region
    _
  $region5: #{neck_forward.39} parent=0 // pred_fallthru
    _
  // Predicated region
  $region6: #{neck_forward.39} parent=0 // pred_check
    _
  $region7: #{neck_forward.39} parent=0 // pred_check_branch
    %13 = sbr.rel (0) target = $region9
  $region8: #{neck_forward.39} parent=0 // pred_region
    _
  $region9: #{neck_forward.39} parent=0 // pred_fallthru
    _
  // Predicated region
  $region10: #{neck_forward.39} parent=0 // pred_check
    _
  $region11: #{neck_forward.39} parent=0 // pred_check_branch
    %15 = sbr.rel (0) target = $region13
  $region12: #{neck_forward.39} parent=0 // pred_region
    _
  $region13: #{neck_forward.39} parent=0 // pred_fallthru
    _
  // Predicated region
  $region14: #{neck_forward.39} parent=0 // pred_check
    _
  $region15: #{neck_forward.39} parent=0 // pred_check_branch
    %17 = sbr.rel (0) target = $region17
  $region16: #{neck_forward.39} parent=0 // pred_region
    _
  $region17: #{neck_forward.39} parent=0 // pred_fallthru
    _
  // Predicated region
  $region18: #{neck_forward.39} parent=0 // pred_check
    _
  $region19: #{neck_forward.39} parent=0 // pred_check_branch
    %19 = sbr.rel (0) target = $region21
  $region20: #{neck_forward.39} parent=0 // pred_region
    _
  $region21: #{neck_forward.39} parent=0 // pred_fallthru
    _
  %p21 = scmp.eq.s32.totalorder 0, 0
  // Predicated region
  $region22: #{neck_forward.39} parent=0 // pred_check
    %p22 = pneg %p21
  $region23: #{neck_forward.39} parent=0 // pred_check_branch
    %24 = sbr.rel (%p22) target = $region25
  $region24: #{neck_forward.39} parent=0 // pred_region
    %25 = vst [vmem:[#allocation2] sm:$0xff] 0.0
    %26 = vst [vmem:[#allocation2 + $0x8] sm:$0xff] 0.0
    %27 = vst [vmem:[#allocation2 + $0x10] sm:$0xff] 0.0
    %28 = vst [vmem:[#allocation2 + $0x18] sm:$0xff] 0.0
    %29 = vst [vmem:[#allocation2 + $0x20] sm:$0xff] 0.0
    %30 = vst [vmem:[#allocation2 + $0x28] sm:$0xff] 0.0
    %31 = vst [vmem:[#allocation2 + $0x30] sm:$0xff] 0.0
    %32 = vst [vmem:[#allocation2 + $0x38] sm:$0xff] 0.0
    %33 = vst [vmem:[#allocation2 + $0x40] sm:$0xff] 0.0
    %34 = vst [vmem:[#allocation2 + $0x48] sm:$0xff] 0.0
    %35 = vst [vmem:[#allocation2 + $0x50] sm:$0xff] 0.0
    %36 = vst [vmem:[#allocation2 + $0x58] sm:$0xff] 0.0
    %37 = vst [vmem:[#allocation2 + $0x60] sm:$0xff] 0.0
    %38 = vst [vmem:[#allocation2 + $0x68] sm:$0xff] 0.0
    %39 = vst [vmem:[#allocation2 + $0x70] sm:$0xff] 0.0
    %40 = vst [vmem:[#allocation2 + $0x78] sm:$0xff] 0.0
  $region25: #{neck_forward.39} parent=0 // pred_fallthru
    _
  %v41 = vld [vmem:[#allocation2] sm:$0xff]
  %v42 = vld [vmem:[#allocation2 + $0x8] sm:$0xff]
  %v43 = vld [vmem:[#allocation2 + $0x10] sm:$0xff]
  %v44 = vld [vmem:[#allocation2 + $0x18] sm:$0xff]
  %v45 = vld [vmem:[#allocation2 + $0x20] sm:$0xff]
  %v46 = vld [vmem:[#allocation2 + $0x28] sm:$0xff]
  %v47 = vld [vmem:[#allocation2 + $0x30] sm:$0xff]
  %v48 = vld [vmem:[#allocation2 + $0x38] sm:$0xff]
  %v49 = vld [vmem:[#allocation2 + $0x40] sm:$0xff]
  %v50 = vld [vmem:[#allocation2 + $0x48] sm:$0xff]
  %v51 = vld [vmem:[#allocation2 + $0x50] sm:$0xff]
  %v52 = vld [vmem:[#allocation2 + $0x58] sm:$0xff]
  %v53 = vld [vmem:[#allocation2 + $0x60] sm:$0xff]
  %v54 = vld [vmem:[#allocation2 + $0x68] sm:$0xff]
  %v55 = vld [vmem:[#allocation2 + $0x70] sm:$0xff]
  %v56 = vld [vmem:[#allocation2 + $0x78] sm:$0xff]
  %v57 = vld [vmem:[%s0] sm:$0xff]
  %v58 = vld [vmem:[%s0 + $0x8] sm:$0xff]
  %v59 = vld [vmem:[%s0 + $0x10] sm:$0xff]
  %v60 = vld [vmem:[%s0 + $0x18] sm:$0xff]
  %v61 = vld [vmem:[%s0 + $0x20] sm:$0xff]
  %v62 = vld [vmem:[%s0 + $0x28] sm:$0xff]
  %v63 = vld [vmem:[%s0 + $0x30] sm:$0xff]
  %v64 = vld [vmem:[%s0 + $0x38] sm:$0xff]
  %v65 = vld [vmem:[%s0 + $0x40] sm:$0xff]
  %v66 = vld [vmem:[%s0 + $0x48] sm:$0xff]
  %v67 = vld [vmem:[%s0 + $0x50] sm:$0xff]
  %v68 = vld [vmem:[%s0 + $0x58] sm:$0xff]
  %v69 = vld [vmem:[%s0 + $0x60] sm:$0xff]
  %v70 = vld [vmem:[%s0 + $0x68] sm:$0xff]
  %v71 = vld [vmem:[%s0 + $0x70] sm:$0xff]
  %v72 = vld [vmem:[%s0 + $0x78] sm:$0xff]
  %v73 = vld [vmem:[%s1] sm:$0xf]
  %v74 = vld [vmem:[%s1 + $0x4] sm:$0xf]
  %v75 = vld [vmem:[%s1 + $0x8] sm:$0xf]
  %v76 = vld [vmem:[%s1 + $0xc] sm:$0xf]
  %v77 = vld [vmem:[%s1 + $0x10] sm:$0xf]
  %v78 = vld [vmem:[%s1 + $0x14] sm:$0xf]
  %v79 = vld [vmem:[%s1 + $0x18] sm:$0xf]
  %v80 = vld [vmem:[%s1 + $0x1c] sm:$0xf]
  %v81 = vld [vmem:[%s1 + $0x20] sm:$0xf]
  %v82 = vld [vmem:[%s1 + $0x24] sm:$0xf]
  %v83 = vld [vmem:[%s1 + $0x28] sm:$0xf]
  %v84 = vld [vmem:[%s1 + $0x2c] sm:$0xf]
  %v85 = vld [vmem:[%s1 + $0x30] sm:$0xf]
  %v86 = vld [vmem:[%s1 + $0x34] sm:$0xf]
  %v87 = vld [vmem:[%s1 + $0x38] sm:$0xf]
  %v88 = vld [vmem:[%s1 + $0x3c] sm:$0xf]
  %v89 = vld [vmem:[%s1 + $0x40] sm:$0xf]
  %v90 = vld [vmem:[%s1 + $0x44] sm:$0xf]
  %v91 = vld [vmem:[%s1 + $0x48] sm:$0xf]
  %v92 = vld [vmem:[%s1 + $0x4c] sm:$0xf]
  %v93 = vld [vmem:[%s1 + $0x50] sm:$0xf]
  %v94 = vld [vmem:[%s1 + $0x54] sm:$0xf]
  %v95 = vld [vmem:[%s1 + $0x58] sm:$0xf]
  %v96 = vld [vmem:[%s1 + $0x5c] sm:$0xf]
  %v97 = vld [vmem:[%s1 + $0x60] sm:$0xf]
  %v98 = vld [vmem:[%s1 + $0x64] sm:$0xf]
  %v99 = vld [vmem:[%s1 + $0x68] sm:$0xf]
  %v100 = vld [vmem:[%s1 + $0x6c] sm:$0xf]
  %v101 = vld [vmem:[%s1 + $0x70] sm:$0xf]
  %v102 = vld [vmem:[%s1 + $0x74] sm:$0xf]
  %v103 = vld [vmem:[%s1 + $0x78] sm:$0xf]
  %v104 = vld [vmem:[%s1 + $0x7c] sm:$0xf]
  %v121 = vunpack.c.l.b16 %v57
  %v122 = vunpack.c.h.b16 %v57
  %v123 = vunpack.c.l.b16 %v58
  %v124 = vunpack.c.h.b16 %v58
  %v125 = vunpack.c.l.b16 %v59
  %v126 = vunpack.c.h.b16 %v59
  %v127 = vunpack.c.l.b16 %v60
  %v128 = vunpack.c.h.b16 %v60
  %v129 = vunpack.c.l.b16 %v61
  %v130 = vunpack.c.h.b16 %v61
  %v131 = vunpack.c.l.b16 %v62
  %v132 = vunpack.c.h.b16 %v62
  %v133 = vunpack.c.l.b16 %v63
  %v134 = vunpack.c.h.b16 %v63
  %v135 = vunpack.c.l.b16 %v64
  %v136 = vunpack.c.h.b16 %v64
  %v137 = vunpack.c.l.b16 %v65
  %v138 = vunpack.c.h.b16 %v65
  %v139 = vunpack.c.l.b16 %v66
  %v140 = vunpack.c.h.b16 %v66
  %v141 = vunpack.c.l.b16 %v67
  %v142 = vunpack.c.h.b16 %v67
  %v143 = vunpack.c.l.b16 %v68
  %v144 = vunpack.c.h.b16 %v68
  %v145 = vunpack.c.l.b16 %v69
  %v146 = vunpack.c.h.b16 %v69
  %v147 = vunpack.c.l.b16 %v70
  %v148 = vunpack.c.h.b16 %v70
  %v149 = vunpack.c.l.b16 %v71
  %v150 = vunpack.c.h.b16 %v71
  %v151 = vunpack.c.l.b16 %v72
  %v152 = vunpack.c.h.b16 %v72
  %v153 = vpack.c.b16 %v123, %v121
  %v154 = vpack.c.b16 %v124, %v122
  %v155 = vpack.c.b16 %v127, %v125
  %v156 = vpack.c.b16 %v128, %v126
  %v157 = vpack.c.b16 %v131, %v129
  %v158 = vpack.c.b16 %v132, %v130
  %v159 = vpack.c.b16 %v135, %v133
  %v160 = vpack.c.b16 %v136, %v134
  %v161 = vpack.c.b16 %v139, %v137
  %v162 = vpack.c.b16 %v140, %v138
  %v163 = vpack.c.b16 %v143, %v141
  %v164 = vpack.c.b16 %v144, %v142
  %v165 = vpack.c.b16 %v147, %v145
  %v166 = vpack.c.b16 %v148, %v146
  %v167 = vpack.c.b16 %v151, %v149
  %v168 = vpack.c.b16 %v152, %v150
  %v217 = vunpack.c.l.b16 %v73
  %v218 = vunpack.c.l.b16 %v74
  %v219 = vunpack.c.l.b16 %v75
  %v220 = vunpack.c.l.b16 %v76
  %v221 = vunpack.c.l.b16 %v77
  %v222 = vunpack.c.l.b16 %v78
  %v223 = vunpack.c.l.b16 %v79
  %v224 = vunpack.c.l.b16 %v80
  %v225 = vunpack.c.l.b16 %v81
  %v226 = vunpack.c.l.b16 %v82
  %v227 = vunpack.c.l.b16 %v83
  %v228 = vunpack.c.l.b16 %v84
  %v229 = vunpack.c.l.b16 %v85
  %v230 = vunpack.c.l.b16 %v86
  %v231 = vunpack.c.l.b16 %v87
  %v232 = vunpack.c.l.b16 %v88
  %v233 = vunpack.c.l.b16 %v89
  %v234 = vunpack.c.l.b16 %v90
  %v235 = vunpack.c.l.b16 %v91
  %v236 = vunpack.c.l.b16 %v92
  %v237 = vunpack.c.l.b16 %v93
  %v238 = vunpack.c.l.b16 %v94
  %v239 = vunpack.c.l.b16 %v95
  %v240 = vunpack.c.l.b16 %v96
  %v241 = vunpack.c.l.b16 %v97
  %v242 = vunpack.c.l.b16 %v98
  %v243 = vunpack.c.l.b16 %v99
  %v244 = vunpack.c.l.b16 %v100
  %v245 = vunpack.c.l.b16 %v101
  %v246 = vunpack.c.l.b16 %v102
  %v247 = vunpack.c.l.b16 %v103
  %v248 = vunpack.c.l.b16 %v104
  %v249 = vpack.c.b16 %v218, %v217
  %v250 = vpack.c.b16 %v220, %v219
  %v251 = vpack.c.b16 %v222, %v221
  %v252 = vpack.c.b16 %v224, %v223
  %v253 = vpack.c.b16 %v226, %v225
  %v254 = vpack.c.b16 %v228, %v227
  %v255 = vpack.c.b16 %v230, %v229
  %v256 = vpack.c.b16 %v232, %v231
  %v257 = vpack.c.b16 %v234, %v233
  %v258 = vpack.c.b16 %v236, %v235
  %v259 = vpack.c.b16 %v238, %v237
  %v260 = vpack.c.b16 %v240, %v239
  %v261 = vpack.c.b16 %v242, %v241
  %v262 = vpack.c.b16 %v244, %v243
  %v263 = vpack.c.b16 %v246, %v245
  %v264 = vpack.c.b16 %v248, %v247
  %281 = vmatprep.subr.bf16.mxu0 0
  %282 = vmatpush1.bf16.msra.mxu0 %v256
  %283 = vmatprep.subr.bf16.mxu0 0
  %284 = vmatpush1.bf16.msra.mxu0 %v255
  %285 = vmatprep.subr.bf16.mxu0 0
  %286 = vmatpush1.bf16.msra.mxu0 %v254
  %287 = vmatprep.subr.bf16.mxu0 0
  %288 = vmatpush1.bf16.msra.mxu0 %v253
  %289 = vmatprep.subr.bf16.mxu0 0
  %290 = vmatpush1.bf16.msra.mxu0 %v252
  %291 = vmatprep.subr.bf16.mxu0 0
  %292 = vmatpush1.bf16.msra.mxu0 %v251
  %293 = vmatprep.subr.bf16.mxu0 0
  %294 = vmatpush1.bf16.msra.mxu0 %v250
  %295 = vmatprep.subr.bf16.mxu0 0
  %296 = vmatpush1.bf16.msra.mxu0 %v249
  %297 = vmatprep.subr.bf16.mxu0 0
  %298 = vmatpush2.bf16.msra.mxu0 %v264
  %299 = vmatprep.subr.bf16.mxu0 0
  %300 = vmatpush2.bf16.msra.mxu0 %v263
  %301 = vmatprep.subr.bf16.mxu0 0
  %302 = vmatpush2.bf16.msra.mxu0 %v262
  %303 = vmatprep.subr.bf16.mxu0 0
  %304 = vmatpush2.bf16.msra.mxu0 %v261
  %305 = vmatprep.subr.bf16.mxu0 0
  %306 = vmatpush2.bf16.msra.mxu0 %v260
  %307 = vmatprep.subr.bf16.mxu0 0
  %308 = vmatpush2.bf16.msra.mxu0 %v259
  %309 = vmatprep.subr.bf16.mxu0 0
  %310 = vmatpush2.bf16.msra.mxu0 %v258
  %311 = vmatprep.subr.bf16.mxu0 0
  %312 = vmatpush2.bf16.msra.mxu0 %v257
  %313 = vmatprep.mubr.bf16.mxu0 %v154
  %314 = vmatmul.mubr.bf16.gmra.mxu0 %v153
  %v315 = vpop.f32.mrf.mxu0
  %v316 = vadd.f32 0.0, %v315
  %v317 = vpop.f32.mrf.mxu0
  %v318 = vpop.f32.mrf.mxu0
  %v319 = vadd.f32 0.0, %v318
  %v320 = vpop.f32.mrf.mxu0
  %321 = vmatprep.mubr.bf16.mxu0 %v156
  %322 = vmatmul.mubr.bf16.gmra.mxu0 %v155
  %v323 = vpop.f32.mrf.mxu0
  %v324 = vadd.f32 0.0, %v323
  %v325 = vpop.f32.mrf.mxu0
  %v326 = vpop.f32.mrf.mxu0
  %v327 = vadd.f32 0.0, %v326
  %v328 = vpop.f32.mrf.mxu0
  %329 = vmatprep.mubr.bf16.mxu0 %v158
  %330 = vmatmul.mubr.bf16.gmra.mxu0 %v157
  %v331 = vpop.f32.mrf.mxu0
  %v332 = vadd.f32 0.0, %v331
  %v333 = vpop.f32.mrf.mxu0
  %v334 = vpop.f32.mrf.mxu0
  %v335 = vadd.f32 0.0, %v334
  %v336 = vpop.f32.mrf.mxu0
  %337 = vmatprep.mubr.bf16.mxu0 %v160
  %338 = vmatmul.mubr.bf16.gmra.mxu0 %v159
  %v339 = vpop.f32.mrf.mxu0
  %v340 = vadd.f32 0.0, %v339
  %v341 = vpop.f32.mrf.mxu0
  %v342 = vpop.f32.mrf.mxu0
  %v343 = vadd.f32 0.0, %v342
  %v344 = vpop.f32.mrf.mxu0
  %345 = vmatprep.mubr.bf16.mxu0 %v162
  %346 = vmatmul.mubr.bf16.gmra.mxu0 %v161
  %v347 = vpop.f32.mrf.mxu0
  %v348 = vadd.f32 0.0, %v347
  %v349 = vpop.f32.mrf.mxu0
  %v350 = vpop.f32.mrf.mxu0
  %v351 = vadd.f32 0.0, %v350
  %v352 = vpop.f32.mrf.mxu0
  %353 = vmatprep.mubr.bf16.mxu0 %v164
  %354 = vmatmul.mubr.bf16.gmra.mxu0 %v163
  %v355 = vpop.f32.mrf.mxu0
  %v356 = vadd.f32 0.0, %v355
  %v357 = vpop.f32.mrf.mxu0
  %v358 = vpop.f32.mrf.mxu0
  %v359 = vadd.f32 0.0, %v358
  %v360 = vpop.f32.mrf.mxu0
  %361 = vmatprep.mubr.bf16.mxu0 %v166
  %362 = vmatmul.mubr.bf16.gmra.mxu0 %v165
  %v363 = vpop.f32.mrf.mxu0
  %v364 = vadd.f32 0.0, %v363
  %v365 = vpop.f32.mrf.mxu0
  %v366 = vpop.f32.mrf.mxu0
  %v367 = vadd.f32 0.0, %v366
  %v368 = vpop.f32.mrf.mxu0
  %369 = vmatprep.mubr.bf16.mxu0 %v168
  %370 = vmatmul.mubr.bf16.gmra.mxu0 %v167
  %v371 = vpop.f32.mrf.mxu0
  %v372 = vadd.f32 0.0, %v371
  %v373 = vpop.f32.mrf.mxu0
  %v374 = vpop.f32.mrf.mxu0
  %v375 = vadd.f32 0.0, %v374
  %v376 = vpop.f32.mrf.mxu0
  %377 = vdwg.mxu0
  %v378 = vadd.f32 %v41, %v316
  %v379 = vadd.f32 %v42, %v319
  %v380 = vadd.f32 %v43, %v324
  %v381 = vadd.f32 %v44, %v327
  %v382 = vadd.f32 %v45, %v332
  %v383 = vadd.f32 %v46, %v335
  %v384 = vadd.f32 %v47, %v340
  %v385 = vadd.f32 %v48, %v343
  %v386 = vadd.f32 %v49, %v348
  %v387 = vadd.f32 %v50, %v351
  %v388 = vadd.f32 %v51, %v356
  %v389 = vadd.f32 %v52, %v359
  %v390 = vadd.f32 %v53, %v364
  %v391 = vadd.f32 %v54, %v367
  %v392 = vadd.f32 %v55, %v372
  %v393 = vadd.f32 %v56, %v375
  %394 = vst [vmem:[#allocation2] sm:$0xff] %v378
  %395 = vst [vmem:[#allocation2 + $0x8] sm:$0xff] %v379
  %396 = vst [vmem:[#allocation2 + $0x10] sm:$0xff] %v380
  %397 = vst [vmem:[#allocation2 + $0x18] sm:$0xff] %v381
  %398 = vst [vmem:[#allocation2 + $0x20] sm:$0xff] %v382
  %399 = vst [vmem:[#allocation2 + $0x28] sm:$0xff] %v383
  %400 = vst [vmem:[#allocation2 + $0x30] sm:$0xff] %v384
  %401 = vst [vmem:[#allocation2 + $0x38] sm:$0xff] %v385
  %402 = vst [vmem:[#allocation2 + $0x40] sm:$0xff] %v386
  %403 = vst [vmem:[#allocation2 + $0x48] sm:$0xff] %v387
  %404 = vst [vmem:[#allocation2 + $0x50] sm:$0xff] %v388
  %405 = vst [vmem:[#allocation2 + $0x58] sm:$0xff] %v389
  %406 = vst [vmem:[#allocation2 + $0x60] sm:$0xff] %v390
  %407 = vst [vmem:[#allocation2 + $0x68] sm:$0xff] %v391
  %408 = vst [vmem:[#allocation2 + $0x70] sm:$0xff] %v392
  %409 = vst [vmem:[#allocation2 + $0x78] sm:$0xff] %v393
  // Predicated region
  $region26: #{neck_forward.39} parent=0 // pred_check
    %p410 = pneg %p21
  $region27: #{neck_forward.39} parent=0 // pred_check_branch
    %412 = sbr.rel (%p410) target = $region29
  $region28: #{neck_forward.39} parent=0 // pred_region
    %v413 = vld [vmem:[#allocation2] sm:$0xff]
    %v414 = vld [vmem:[#allocation2 + $0x8] sm:$0xff]
    %v415 = vld [vmem:[#allocation2 + $0x10] sm:$0xff]
    %v416 = vld [vmem:[#allocation2 + $0x18] sm:$0xff]
    %v417 = vld [vmem:[#allocation2 + $0x20] sm:$0xff]
    %v418 = vld [vmem:[#allocation2 + $0x28] sm:$0xff]
    %v419 = vld [vmem:[#allocation2 + $0x30] sm:$0xff]
    %v420 = vld [vmem:[#allocation2 + $0x38] sm:$0xff]
    %v421 = vld [vmem:[#allocation2 + $0x40] sm:$0xff]
    %v422 = vld [vmem:[#allocation2 + $0x48] sm:$0xff]
    %v423 = vld [vmem:[#allocation2 + $0x50] sm:$0xff]
    %v424 = vld [vmem:[#allocation2 + $0x58] sm:$0xff]
    %v425 = vld [vmem:[#allocation2 + $0x60] sm:$0xff]
    %v426 = vld [vmem:[#allocation2 + $0x68] sm:$0xff]
    %v427 = vld [vmem:[#allocation2 + $0x70] sm:$0xff]
    %v428 = vld [vmem:[#allocation2 + $0x78] sm:$0xff]
    %v429 = vld [vmem:[%s2] sm:$0x1]
    %v431 = vlaneseq
    %v432 = vshrl.u32 %v431, 7
    %v433 = vsub.s32 0, %v432
    %v434 = vrot.slane %v429, %v433
    %v436 = vmul.f32 %v413, %v434
    %v437 = vmul.f32 %v414, %v434
    %v438 = vmul.f32 %v415, %v434
    %v439 = vmul.f32 %v416, %v434
    %v440 = vmul.f32 %v417, %v434
    %v441 = vmul.f32 %v418, %v434
    %v442 = vmul.f32 %v419, %v434
    %v443 = vmul.f32 %v420, %v434
    %v444 = vmul.f32 %v421, %v434
    %v445 = vmul.f32 %v422, %v434
    %v446 = vmul.f32 %v423, %v434
    %v447 = vmul.f32 %v424, %v434
    %v448 = vmul.f32 %v425, %v434
    %v449 = vmul.f32 %v426, %v434
    %v450 = vmul.f32 %v427, %v434
    %v451 = vmul.f32 %v428, %v434
    %v452 = vld [vmem:[%s3] sm:$0x1]
    %v454 = vlaneseq
    %v455 = vshrl.u32 %v454, 7
    %v456 = vsub.s32 0, %v455
    %v457 = vrot.slane %v452, %v456
    %v459 = vadd.f32 %v436, %v457
    %v460 = vadd.f32 %v437, %v457
    %v461 = vadd.f32 %v438, %v457
    %v462 = vadd.f32 %v439, %v457
    %v463 = vadd.f32 %v440, %v457
    %v464 = vadd.f32 %v441, %v457
    %v465 = vadd.f32 %v442, %v457
    %v466 = vadd.f32 %v443, %v457
    %v467 = vadd.f32 %v444, %v457
    %v468 = vadd.f32 %v445, %v457
    %v469 = vadd.f32 %v446, %v457
    %v470 = vadd.f32 %v447, %v457
    %v471 = vadd.f32 %v448, %v457
    %v472 = vadd.f32 %v449, %v457
    %v473 = vadd.f32 %v450, %v457
    %v474 = vadd.f32 %v451, %v457
    %v475 = vxor.u32 %v459, 2147483648
    %v476 = vxor.u32 %v460, 2147483648
    %v477 = vxor.u32 %v461, 2147483648
    %v478 = vxor.u32 %v462, 2147483648
    %v479 = vxor.u32 %v463, 2147483648
    %v480 = vxor.u32 %v464, 2147483648
    %v481 = vxor.u32 %v465, 2147483648
    %v482 = vxor.u32 %v466, 2147483648
    %v483 = vxor.u32 %v467, 2147483648
    %v484 = vxor.u32 %v468, 2147483648
    %v485 = vxor.u32 %v469, 2147483648
    %v486 = vxor.u32 %v470, 2147483648
    %v487 = vxor.u32 %v471, 2147483648
    %v488 = vxor.u32 %v472, 2147483648
    %v489 = vxor.u32 %v473, 2147483648
    %v490 = vxor.u32 %v474, 2147483648
    %v491 = vmul.f32 %v475, 1.442695
    %v492 = vpow.pop %v491
    %v493 = vmul.f32 %v476, 1.442695
    %v494 = vpow.pop %v493
    %v495 = vmul.f32 %v477, 1.442695
    %v496 = vpow.pop %v495
    %v497 = vmul.f32 %v478, 1.442695
    %v498 = vpow.pop %v497
    %v499 = vmul.f32 %v479, 1.442695
    %v500 = vpow.pop %v499
    %v501 = vmul.f32 %v480, 1.442695
    %v502 = vpow.pop %v501
    %v503 = vmul.f32 %v481, 1.442695
    %v504 = vpow.pop %v503
    %v505 = vmul.f32 %v482, 1.442695
    %v506 = vpow.pop %v505
    %v507 = vmul.f32 %v483, 1.442695
    %v508 = vpow.pop %v507
    %v509 = vmul.f32 %v484, 1.442695
    %v510 = vpow.pop %v509
    %v511 = vmul.f32 %v485, 1.442695
    %v512 = vpow.pop %v511
    %v513 = vmul.f32 %v486, 1.442695
    %v514 = vpow.pop %v513
    %v515 = vmul.f32 %v487, 1.442695
    %v516 = vpow.pop %v515
    %v517 = vmul.f32 %v488, 1.442695
    %v518 = vpow.pop %v517
    %v519 = vmul.f32 %v489, 1.442695
    %v520 = vpow.pop %v519
    %v521 = vmul.f32 %v490, 1.442695
    %v522 = vpow.pop %v521
    %v523 = vadd.f32 %v492, 1.0
    %v524 = vadd.f32 %v494, 1.0
    %v525 = vadd.f32 %v496, 1.0
    %v526 = vadd.f32 %v498, 1.0
    %v527 = vadd.f32 %v500, 1.0
    %v528 = vadd.f32 %v502, 1.0
    %v529 = vadd.f32 %v504, 1.0
    %v530 = vadd.f32 %v506, 1.0
    %v531 = vadd.f32 %v508, 1.0
    %v532 = vadd.f32 %v510, 1.0
    %v533 = vadd.f32 %v512, 1.0
    %v534 = vadd.f32 %v514, 1.0
    %v535 = vadd.f32 %v516, 1.0
    %v536 = vadd.f32 %v518, 1.0
    %v537 = vadd.f32 %v520, 1.0
    %v538 = vadd.f32 %v522, 1.0
    %v539 = vrcp.pop %v523
    %v540 = vmul.f32 1.0, %v539
    %v541 = vrcp.pop %v524
    %v542 = vmul.f32 1.0, %v541
    %v543 = vrcp.pop %v525
    %v544 = vmul.f32 1.0, %v543
    %v545 = vrcp.pop %v526
    %v546 = vmul.f32 1.0, %v545
    %v547 = vrcp.pop %v527
    %v548 = vmul.f32 1.0, %v547
    %v549 = vrcp.pop %v528
    %v550 = vmul.f32 1.0, %v549
    %v551 = vrcp.pop %v529
    %v552 = vmul.f32 1.0, %v551
    %v553 = vrcp.pop %v530
    %v554 = vmul.f32 1.0, %v553
    %v555 = vrcp.pop %v531
    %v556 = vmul.f32 1.0, %v555
    %v557 = vrcp.pop %v532
    %v558 = vmul.f32 1.0, %v557
    %v559 = vrcp.pop %v533
    %v560 = vmul.f32 1.0, %v559
    %v561 = vrcp.pop %v534
    %v562 = vmul.f32 1.0, %v561
    %v563 = vrcp.pop %v535
    %v564 = vmul.f32 1.0, %v563
    %v565 = vrcp.pop %v536
    %v566 = vmul.f32 1.0, %v565
    %v567 = vrcp.pop %v537
    %v568 = vmul.f32 1.0, %v567
    %v569 = vrcp.pop %v538
    %v570 = vmul.f32 1.0, %v569
    %v571 = vmul.f32 %v459, %v540
    %v572 = vmul.f32 %v460, %v542
    %v573 = vmul.f32 %v461, %v544
    %v574 = vmul.f32 %v462, %v546
    %v575 = vmul.f32 %v463, %v548
    %v576 = vmul.f32 %v464, %v550
    %v577 = vmul.f32 %v465, %v552
    %v578 = vmul.f32 %v466, %v554
    %v579 = vmul.f32 %v467, %v556
    %v580 = vmul.f32 %v468, %v558
    %v581 = vmul.f32 %v469, %v560
    %v582 = vmul.f32 %v470, %v562
    %v583 = vmul.f32 %v471, %v564
    %v584 = vmul.f32 %v472, %v566
    %v585 = vmul.f32 %v473, %v568
    %v586 = vmul.f32 %v474, %v570
    %v587 = vld [vmem:[%s4] sm:$0xf]
    %v588 = vld [vmem:[%s4 + $0x4] sm:$0xf]
    %v589 = vld [vmem:[%s4 + $0x8] sm:$0xf]
    %v590 = vld [vmem:[%s4 + $0xc] sm:$0xf]
    %v591 = vld [vmem:[%s4 + $0x10] sm:$0xf]
    %v592 = vld [vmem:[%s4 + $0x14] sm:$0xf]
    %v593 = vld [vmem:[%s4 + $0x18] sm:$0xf]
    %v594 = vld [vmem:[%s4 + $0x1c] sm:$0xf]
    %v595 = vld [vmem:[%s4 + $0x20] sm:$0xf]
    %v596 = vld [vmem:[%s4 + $0x24] sm:$0xf]
    %v597 = vld [vmem:[%s4 + $0x28] sm:$0xf]
    %v598 = vld [vmem:[%s4 + $0x2c] sm:$0xf]
    %v599 = vld [vmem:[%s4 + $0x30] sm:$0xf]
    %v600 = vld [vmem:[%s4 + $0x34] sm:$0xf]
    %v601 = vld [vmem:[%s4 + $0x38] sm:$0xf]
    %v602 = vld [vmem:[%s4 + $0x3c] sm:$0xf]
    %v603 = vunpack.c.l.bf16 %v587
    %v604 = vunpack.c.l.bf16 %v588
    %v605 = vunpack.c.l.bf16 %v589
    %v606 = vunpack.c.l.bf16 %v590
    %v607 = vunpack.c.l.bf16 %v591
    %v608 = vunpack.c.l.bf16 %v592
    %v609 = vunpack.c.l.bf16 %v593
    %v610 = vunpack.c.l.bf16 %v594
    %v611 = vunpack.c.l.bf16 %v595
    %v612 = vunpack.c.l.bf16 %v596
    %v613 = vunpack.c.l.bf16 %v597
    %v614 = vunpack.c.l.bf16 %v598
    %v615 = vunpack.c.l.bf16 %v599
    %v616 = vunpack.c.l.bf16 %v600
    %v617 = vunpack.c.l.bf16 %v601
    %v618 = vunpack.c.l.bf16 %v602
    %v619 = vadd.f32 %v571, %v603
    %v620 = vadd.f32 %v572, %v604
    %v621 = vadd.f32 %v573, %v605
    %v622 = vadd.f32 %v574, %v606
    %v623 = vadd.f32 %v575, %v607
    %v624 = vadd.f32 %v576, %v608
    %v625 = vadd.f32 %v577, %v609
    %v626 = vadd.f32 %v578, %v610
    %v627 = vadd.f32 %v579, %v611
    %v628 = vadd.f32 %v580, %v612
    %v629 = vadd.f32 %v581, %v613
    %v630 = vadd.f32 %v582, %v614
    %v631 = vadd.f32 %v583, %v615
    %v632 = vadd.f32 %v584, %v616
    %v633 = vadd.f32 %v585, %v617
    %v634 = vadd.f32 %v586, %v618
    %v635 = vpack.c.bf16 %v620, %v619
    %v636 = vpack.c.bf16 %v622, %v621
    %v637 = vpack.c.bf16 %v624, %v623
    %v638 = vpack.c.bf16 %v626, %v625
    %v639 = vpack.c.bf16 %v628, %v627
    %v640 = vpack.c.bf16 %v630, %v629
    %v641 = vpack.c.bf16 %v632, %v631
    %v642 = vpack.c.bf16 %v634, %v633
    %v651 = vunpack.c.l.b16 %v635
    %v652 = vunpack.c.h.b16 %v635
    %v653 = vunpack.c.l.b16 %v636
    %v654 = vunpack.c.h.b16 %v636
    %v655 = vunpack.c.l.b16 %v637
    %v656 = vunpack.c.h.b16 %v637
    %v657 = vunpack.c.l.b16 %v638
    %v658 = vunpack.c.h.b16 %v638
    %v659 = vunpack.c.l.b16 %v639
    %v660 = vunpack.c.h.b16 %v639
    %v661 = vunpack.c.l.b16 %v640
    %v662 = vunpack.c.h.b16 %v640
    %v663 = vunpack.c.l.b16 %v641
    %v664 = vunpack.c.h.b16 %v641
    %v665 = vunpack.c.l.b16 %v642
    %v666 = vunpack.c.h.b16 %v642
    %v667 = vpack.c.b16 %v651, %v651
    %v668 = vpack.c.b16 %v652, %v652
    %v669 = vpack.c.b16 %v653, %v653
    %v670 = vpack.c.b16 %v654, %v654
    %v671 = vpack.c.b16 %v655, %v655
    %v672 = vpack.c.b16 %v656, %v656
    %v673 = vpack.c.b16 %v657, %v657
    %v674 = vpack.c.b16 %v658, %v658
    %v675 = vpack.c.b16 %v659, %v659
    %v676 = vpack.c.b16 %v660, %v660
    %v677 = vpack.c.b16 %v661, %v661
    %v678 = vpack.c.b16 %v662, %v662
    %v679 = vpack.c.b16 %v663, %v663
    %v680 = vpack.c.b16 %v664, %v664
    %v681 = vpack.c.b16 %v665, %v665
    %v682 = vpack.c.b16 %v666, %v666
    %699 = vst [vmem:[%s5] sm:$0xf] %v667
    %700 = vst [vmem:[%s5 + $0x4] sm:$0xf] %v668
    %701 = vst [vmem:[%s5 + $0x8] sm:$0xf] %v669
    %702 = vst [vmem:[%s5 + $0xc] sm:$0xf] %v670
    %703 = vst [vmem:[%s5 + $0x10] sm:$0xf] %v671
    %704 = vst [vmem:[%s5 + $0x14] sm:$0xf] %v672
    %705 = vst [vmem:[%s5 + $0x18] sm:$0xf] %v673
    %706 = vst [vmem:[%s5 + $0x1c] sm:$0xf] %v674
    %707 = vst [vmem:[%s5 + $0x20] sm:$0xf] %v675
    %708 = vst [vmem:[%s5 + $0x24] sm:$0xf] %v676
    %709 = vst [vmem:[%s5 + $0x28] sm:$0xf] %v677
    %710 = vst [vmem:[%s5 + $0x2c] sm:$0xf] %v678
    %711 = vst [vmem:[%s5 + $0x30] sm:$0xf] %v679
    %712 = vst [vmem:[%s5 + $0x34] sm:$0xf] %v680
    %713 = vst [vmem:[%s5 + $0x38] sm:$0xf] %v681
    %714 = vst [vmem:[%s5 + $0x3c] sm:$0xf] %v682
  $region29: #{neck_forward.39} parent=0 // pred_fallthru
    _
  // Predicated region
  $region30: #{neck_forward.39} parent=0 // pred_check
    _
  $region31: #{neck_forward.39} parent=0 // pred_check_branch
    %716 = sbr.rel (0) target = $region33
  $region32: #{neck_forward.39} parent=0 // pred_region
    _
  $region33: #{neck_forward.39} parent=0 // pred_fallthru
    _
  // Predicated region
  $region34: #{neck_forward.39} parent=0 // pred_check
    _
  $region35: #{neck_forward.39} parent=0 // pred_check_branch
    %718 = sbr.rel (0) target = $region37
  $region36: #{neck_forward.39} parent=0 // pred_region
    _
  $region37: #{neck_forward.39} parent=0 // pred_fallthru
    _

// kernel: neck_forward.45
$region0: #{neck_forward.45}
  #allocation0 [shape = 'u32[]', space=smem, size = 0x4, offset = 0x4, fixed_abs, tag = 'smem constant byte address 0x4 - core index']
  #allocation1 [shape = 'u32[144,128]{1,0:T(1,128)}', space=vmem, size = 0x12000, scoped, tag = 'internal scratch']
  #allocation2 [shape = 'f32[128,128]{1,0:T(8,128)}', space=vmem, size = 0x10000, scoped, tag = 'scratch operand']
  %s0 = inlined_call_operand.vmem [shape: bf16[128,128], index: 0, kind: input, shape index: {}]
  %s1 = inlined_call_operand.vmem [shape: bf16[128,128], index: 1, kind: input, shape index: {}]
  %s2 = inlined_call_operand.vmem [shape: f32[1,128], index: 2, kind: input, shape index: {}]
  %s3 = inlined_call_operand.vmem [shape: f32[1,128], index: 3, kind: input, shape index: {}]
  %s4 = inlined_call_operand.vmem [shape: bf16[128,128], index: 4, kind: output, shape index: {}]
  %s5 = sld [smem:[#allocation0]]
  $region34: #{neck_forward.45} parent=0
    _
  %s7 = ssub.s32 1, %s5
  %s8 = scalar_select 0, %s7, %s5
  // Predicated region
  $region2: #{neck_forward.45} parent=0 // pred_check
    _
  $region3: #{neck_forward.45} parent=0 // pred_check_branch
    %10 = sbr.rel (0) target = $region5
  $region4: #{neck_forward.45} parent=0 // pred_region
    _
  $region5: #{neck_forward.45} parent=0 // pred_fallthru
    _
  // Predicated region
  $region6: #{neck_forward.45} parent=0 // pred_check
    _
  $region7: #{neck_forward.45} parent=0 // pred_check_branch
    %12 = sbr.rel (0) target = $region9
  $region8: #{neck_forward.45} parent=0 // pred_region
    _
  $region9: #{neck_forward.45} parent=0 // pred_fallthru
    _
  // Predicated region
  $region10: #{neck_forward.45} parent=0 // pred_check
    _
  $region11: #{neck_forward.45} parent=0 // pred_check_branch
    %14 = sbr.rel (0) target = $region13
  $region12: #{neck_forward.45} parent=0 // pred_region
    _
  $region13: #{neck_forward.45} parent=0 // pred_fallthru
    _
  // Predicated region
  $region14: #{neck_forward.45} parent=0 // pred_check
    _
  $region15: #{neck_forward.45} parent=0 // pred_check_branch
    %16 = sbr.rel (0) target = $region17
  $region16: #{neck_forward.45} parent=0 // pred_region
    _
  $region17: #{neck_forward.45} parent=0 // pred_fallthru
    _
  %p18 = scmp.eq.s32.totalorder 0, 0
  // Predicated region
  $region18: #{neck_forward.45} parent=0 // pred_check
    %p19 = pneg %p18
  $region19: #{neck_forward.45} parent=0 // pred_check_branch
    %21 = sbr.rel (%p19) target = $region21
  $region20: #{neck_forward.45} parent=0 // pred_region
    %22 = vst [vmem:[#allocation2] sm:$0xff] 0.0
    %23 = vst [vmem:[#allocation2 + $0x8] sm:$0xff] 0.0
    %24 = vst [vmem:[#allocation2 + $0x10] sm:$0xff] 0.0
    %25 = vst [vmem:[#allocation2 + $0x18] sm:$0xff] 0.0
    %26 = vst [vmem:[#allocation2 + $0x20] sm:$0xff] 0.0
    %27 = vst [vmem:[#allocation2 + $0x28] sm:$0xff] 0.0
    %28 = vst [vmem:[#allocation2 + $0x30] sm:$0xff] 0.0
    %29 = vst [vmem:[#allocation2 + $0x38] sm:$0xff] 0.0
    %30 = vst [vmem:[#allocation2 + $0x40] sm:$0xff] 0.0
    %31 = vst [vmem:[#allocation2 + $0x48] sm:$0xff] 0.0
    %32 = vst [vmem:[#allocation2 + $0x50] sm:$0xff] 0.0
    %33 = vst [vmem:[#allocation2 + $0x58] sm:$0xff] 0.0
    %34 = vst [vmem:[#allocation2 + $0x60] sm:$0xff] 0.0
    %35 = vst [vmem:[#allocation2 + $0x68] sm:$0xff] 0.0
    %36 = vst [vmem:[#allocation2 + $0x70] sm:$0xff] 0.0
    %37 = vst [vmem:[#allocation2 + $0x78] sm:$0xff] 0.0
  $region21: #{neck_forward.45} parent=0 // pred_fallthru
    _
  %v38 = vld [vmem:[#allocation2] sm:$0xff]
  %v39 = vld [vmem:[#allocation2 + $0x8] sm:$0xff]
  %v40 = vld [vmem:[#allocation2 + $0x10] sm:$0xff]
  %v41 = vld [vmem:[#allocation2 + $0x18] sm:$0xff]
  %v42 = vld [vmem:[#allocation2 + $0x20] sm:$0xff]
  %v43 = vld [vmem:[#allocation2 + $0x28] sm:$0xff]
  %v44 = vld [vmem:[#allocation2 + $0x30] sm:$0xff]
  %v45 = vld [vmem:[#allocation2 + $0x38] sm:$0xff]
  %v46 = vld [vmem:[#allocation2 + $0x40] sm:$0xff]
  %v47 = vld [vmem:[#allocation2 + $0x48] sm:$0xff]
  %v48 = vld [vmem:[#allocation2 + $0x50] sm:$0xff]
  %v49 = vld [vmem:[#allocation2 + $0x58] sm:$0xff]
  %v50 = vld [vmem:[#allocation2 + $0x60] sm:$0xff]
  %v51 = vld [vmem:[#allocation2 + $0x68] sm:$0xff]
  %v52 = vld [vmem:[#allocation2 + $0x70] sm:$0xff]
  %v53 = vld [vmem:[#allocation2 + $0x78] sm:$0xff]
  %v54 = vld [vmem:[%s0] sm:$0xf]
  %v55 = vld [vmem:[%s0 + $0x4] sm:$0xf]
  %v56 = vld [vmem:[%s0 + $0x8] sm:$0xf]
  %v57 = vld [vmem:[%s0 + $0xc] sm:$0xf]
  %v58 = vld [vmem:[%s0 + $0x10] sm:$0xf]
  %v59 = vld [vmem:[%s0 + $0x14] sm:$0xf]
  %v60 = vld [vmem:[%s0 + $0x18] sm:$0xf]
  %v61 = vld [vmem:[%s0 + $0x1c] sm:$0xf]
  %v62 = vld [vmem:[%s0 + $0x20] sm:$0xf]
  %v63 = vld [vmem:[%s0 + $0x24] sm:$0xf]
  %v64 = vld [vmem:[%s0 + $0x28] sm:$0xf]
  %v65 = vld [vmem:[%s0 + $0x2c] sm:$0xf]
  %v66 = vld [vmem:[%s0 + $0x30] sm:$0xf]
  %v67 = vld [vmem:[%s0 + $0x34] sm:$0xf]
  %v68 = vld [vmem:[%s0 + $0x38] sm:$0xf]
  %v69 = vld [vmem:[%s0 + $0x3c] sm:$0xf]
  %v70 = vld [vmem:[%s1] sm:$0xf]
  %v71 = vld [vmem:[%s1 + $0x4] sm:$0xf]
  %v72 = vld [vmem:[%s1 + $0x8] sm:$0xf]
  %v73 = vld [vmem:[%s1 + $0xc] sm:$0xf]
  %v74 = vld [vmem:[%s1 + $0x10] sm:$0xf]
  %v75 = vld [vmem:[%s1 + $0x14] sm:$0xf]
  %v76 = vld [vmem:[%s1 + $0x18] sm:$0xf]
  %v77 = vld [vmem:[%s1 + $0x1c] sm:$0xf]
  %v78 = vld [vmem:[%s1 + $0x20] sm:$0xf]
  %v79 = vld [vmem:[%s1 + $0x24] sm:$0xf]
  %v80 = vld [vmem:[%s1 + $0x28] sm:$0xf]
  %v81 = vld [vmem:[%s1 + $0x2c] sm:$0xf]
  %v82 = vld [vmem:[%s1 + $0x30] sm:$0xf]
  %v83 = vld [vmem:[%s1 + $0x34] sm:$0xf]
  %v84 = vld [vmem:[%s1 + $0x38] sm:$0xf]
  %v85 = vld [vmem:[%s1 + $0x3c] sm:$0xf]
  %v102 = vunpack.c.l.b16 %v54
  %v103 = vunpack.c.l.b16 %v55
  %v104 = vunpack.c.l.b16 %v56
  %v105 = vunpack.c.l.b16 %v57
  %v106 = vunpack.c.l.b16 %v58
  %v107 = vunpack.c.l.b16 %v59
  %v108 = vunpack.c.l.b16 %v60
  %v109 = vunpack.c.l.b16 %v61
  %v110 = vunpack.c.l.b16 %v62
  %v111 = vunpack.c.l.b16 %v63
  %v112 = vunpack.c.l.b16 %v64
  %v113 = vunpack.c.l.b16 %v65
  %v114 = vunpack.c.l.b16 %v66
  %v115 = vunpack.c.l.b16 %v67
  %v116 = vunpack.c.l.b16 %v68
  %v117 = vunpack.c.l.b16 %v69
  %v118 = vpack.c.b16 %v103, %v102
  %v119 = vpack.c.b16 %v105, %v104
  %v120 = vpack.c.b16 %v107, %v106
  %v121 = vpack.c.b16 %v109, %v108
  %v122 = vpack.c.b16 %v111, %v110
  %v123 = vpack.c.b16 %v113, %v112
  %v124 = vpack.c.b16 %v115, %v114
  %v125 = vpack.c.b16 %v117, %v116
  %v150 = vunpack.c.l.b16 %v70
  %v151 = vunpack.c.l.b16 %v71
  %v152 = vunpack.c.l.b16 %v72
  %v153 = vunpack.c.l.b16 %v73
  %v154 = vunpack.c.l.b16 %v74
  %v155 = vunpack.c.l.b16 %v75
  %v156 = vunpack.c.l.b16 %v76
  %v157 = vunpack.c.l.b16 %v77
  %v158 = vunpack.c.l.b16 %v78
  %v159 = vunpack.c.l.b16 %v79
  %v160 = vunpack.c.l.b16 %v80
  %v161 = vunpack.c.l.b16 %v81
  %v162 = vunpack.c.l.b16 %v82
  %v163 = vunpack.c.l.b16 %v83
  %v164 = vunpack.c.l.b16 %v84
  %v165 = vunpack.c.l.b16 %v85
  %v166 = vpack.c.b16 %v151, %v150
  %v167 = vpack.c.b16 %v153, %v152
  %v168 = vpack.c.b16 %v155, %v154
  %v169 = vpack.c.b16 %v157, %v156
  %v170 = vpack.c.b16 %v159, %v158
  %v171 = vpack.c.b16 %v161, %v160
  %v172 = vpack.c.b16 %v163, %v162
  %v173 = vpack.c.b16 %v165, %v164
  %182 = vmatprep.subr.bf16.mxu0 0
  %183 = vmatpush1.bf16.msra.mxu0 %v173
  %184 = vmatprep.subr.bf16.mxu0 0
  %185 = vmatpush1.bf16.msra.mxu0 %v172
  %186 = vmatprep.subr.bf16.mxu0 0
  %187 = vmatpush1.bf16.msra.mxu0 %v171
  %188 = vmatprep.subr.bf16.mxu0 0
  %189 = vmatpush1.bf16.msra.mxu0 %v170
  %190 = vmatprep.subr.bf16.mxu0 0
  %191 = vmatpush1.bf16.msra.mxu0 %v169
  %192 = vmatprep.subr.bf16.mxu0 0
  %193 = vmatpush1.bf16.msra.mxu0 %v168
  %194 = vmatprep.subr.bf16.mxu0 0
  %195 = vmatpush1.bf16.msra.mxu0 %v167
  %196 = vmatprep.subr.bf16.mxu0 0
  %197 = vmatpush1.bf16.msra.mxu0 %v166
  %198 = vmatprep.subr.bf16.mxu0 0
  %199 = vmatpush2.bf16.msra.mxu0 0
  %200 = vmatprep.subr.bf16.mxu0 0
  %201 = vmatpush2.bf16.msra.mxu0 0
  %202 = vmatprep.subr.bf16.mxu0 0
  %203 = vmatpush2.bf16.msra.mxu0 0
  %204 = vmatprep.subr.bf16.mxu0 0
  %205 = vmatpush2.bf16.msra.mxu0 0
  %206 = vmatprep.subr.bf16.mxu0 0
  %207 = vmatpush2.bf16.msra.mxu0 0
  %208 = vmatprep.subr.bf16.mxu0 0
  %209 = vmatpush2.bf16.msra.mxu0 0
  %210 = vmatprep.subr.bf16.mxu0 0
  %211 = vmatpush2.bf16.msra.mxu0 0
  %212 = vmatprep.subr.bf16.mxu0 0
  %213 = vmatpush2.bf16.msra.mxu0 0
  %214 = vmatprep.mubr.bf16.mxu0 0
  %215 = vmatmul.mubr.bf16.gmra.mxu0 %v118
  %v216 = vpop.f32.mrf.mxu0
  %v217 = vadd.f32 0.0, %v216
  %v218 = vpop.f32.mrf.mxu0
  %v219 = vpop.f32.mrf.mxu0
  %v220 = vadd.f32 0.0, %v219
  %v221 = vpop.f32.mrf.mxu0
  %222 = vmatprep.mubr.bf16.mxu0 0
  %223 = vmatmul.mubr.bf16.gmra.mxu0 %v119
  %v224 = vpop.f32.mrf.mxu0
  %v225 = vadd.f32 0.0, %v224
  %v226 = vpop.f32.mrf.mxu0
  %v227 = vpop.f32.mrf.mxu0
  %v228 = vadd.f32 0.0, %v227
  %v229 = vpop.f32.mrf.mxu0
  %230 = vmatprep.mubr.bf16.mxu0 0
  %231 = vmatmul.mubr.bf16.gmra.mxu0 %v120
  %v232 = vpop.f32.mrf.mxu0
  %v233 = vadd.f32 0.0, %v232
  %v234 = vpop.f32.mrf.mxu0
  %v235 = vpop.f32.mrf.mxu0
  %v236 = vadd.f32 0.0, %v235
  %v237 = vpop.f32.mrf.mxu0
  %238 = vmatprep.mubr.bf16.mxu0 0
  %239 = vmatmul.mubr.bf16.gmra.mxu0 %v121
  %v240 = vpop.f32.mrf.mxu0
  %v241 = vadd.f32 0.0, %v240
  %v242 = vpop.f32.mrf.mxu0
  %v243 = vpop.f32.mrf.mxu0
  %v244 = vadd.f32 0.0, %v243
  %v245 = vpop.f32.mrf.mxu0
  %246 = vmatprep.mubr.bf16.mxu0 0
  %247 = vmatmul.mubr.bf16.gmra.mxu0 %v122
  %v248 = vpop.f32.mrf.mxu0
  %v249 = vadd.f32 0.0, %v248
  %v250 = vpop.f32.mrf.mxu0
  %v251 = vpop.f32.mrf.mxu0
  %v252 = vadd.f32 0.0, %v251
  %v253 = vpop.f32.mrf.mxu0
  %254 = vmatprep.mubr.bf16.mxu0 0
  %255 = vmatmul.mubr.bf16.gmra.mxu0 %v123
  %v256 = vpop.f32.mrf.mxu0
  %v257 = vadd.f32 0.0, %v256
  %v258 = vpop.f32.mrf.mxu0
  %v259 = vpop.f32.mrf.mxu0
  %v260 = vadd.f32 0.0, %v259
  %v261 = vpop.f32.mrf.mxu0
  %262 = vmatprep.mubr.bf16.mxu0 0
  %263 = vmatmul.mubr.bf16.gmra.mxu0 %v124
  %v264 = vpop.f32.mrf.mxu0
  %v265 = vadd.f32 0.0, %v264
  %v266 = vpop.f32.mrf.mxu0
  %v267 = vpop.f32.mrf.mxu0
  %v268 = vadd.f32 0.0, %v267
  %v269 = vpop.f32.mrf.mxu0
  %270 = vmatprep.mubr.bf16.mxu0 0
  %271 = vmatmul.mubr.bf16.gmra.mxu0 %v125
  %v272 = vpop.f32.mrf.mxu0
  %v273 = vadd.f32 0.0, %v272
  %v274 = vpop.f32.mrf.mxu0
  %v275 = vpop.f32.mrf.mxu0
  %v276 = vadd.f32 0.0, %v275
  %v277 = vpop.f32.mrf.mxu0
  %278 = vdwg.mxu0
  %v279 = vadd.f32 %v38, %v217
  %v280 = vadd.f32 %v39, %v220
  %v281 = vadd.f32 %v40, %v225
  %v282 = vadd.f32 %v41, %v228
  %v283 = vadd.f32 %v42, %v233
  %v284 = vadd.f32 %v43, %v236
  %v285 = vadd.f32 %v44, %v241
  %v286 = vadd.f32 %v45, %v244
  %v287 = vadd.f32 %v46, %v249
  %v288 = vadd.f32 %v47, %v252
  %v289 = vadd.f32 %v48, %v257
  %v290 = vadd.f32 %v49, %v260
  %v291 = vadd.f32 %v50, %v265
  %v292 = vadd.f32 %v51, %v268
  %v293 = vadd.f32 %v52, %v273
  %v294 = vadd.f32 %v53, %v276
  %295 = vst [vmem:[#allocation2] sm:$0xff] %v279
  %296 = vst [vmem:[#allocation2 + $0x8] sm:$0xff] %v280
  %297 = vst [vmem:[#allocation2 + $0x10] sm:$0xff] %v281
  %298 = vst [vmem:[#allocation2 + $0x18] sm:$0xff] %v282
  %299 = vst [vmem:[#allocation2 + $0x20] sm:$0xff] %v283
  %300 = vst [vmem:[#allocation2 + $0x28] sm:$0xff] %v284
  %301 = vst [vmem:[#allocation2 + $0x30] sm:$0xff] %v285
  %302 = vst [vmem:[#allocation2 + $0x38] sm:$0xff] %v286
  %303 = vst [vmem:[#allocation2 + $0x40] sm:$0xff] %v287
  %304 = vst [vmem:[#allocation2 + $0x48] sm:$0xff] %v288
  %305 = vst [vmem:[#allocation2 + $0x50] sm:$0xff] %v289
  %306 = vst [vmem:[#allocation2 + $0x58] sm:$0xff] %v290
  %307 = vst [vmem:[#allocation2 + $0x60] sm:$0xff] %v291
  %308 = vst [vmem:[#allocation2 + $0x68] sm:$0xff] %v292
  %309 = vst [vmem:[#allocation2 + $0x70] sm:$0xff] %v293
  %310 = vst [vmem:[#allocation2 + $0x78] sm:$0xff] %v294
  // Predicated region
  $region22: #{neck_forward.45} parent=0 // pred_check
    %p311 = pneg %p18
  $region23: #{neck_forward.45} parent=0 // pred_check_branch
    %313 = sbr.rel (%p311) target = $region25
  $region24: #{neck_forward.45} parent=0 // pred_region
    %v314 = vld [vmem:[#allocation2] sm:$0xff]
    %v315 = vld [vmem:[#allocation2 + $0x8] sm:$0xff]
    %v316 = vld [vmem:[#allocation2 + $0x10] sm:$0xff]
    %v317 = vld [vmem:[#allocation2 + $0x18] sm:$0xff]
    %v318 = vld [vmem:[#allocation2 + $0x20] sm:$0xff]
    %v319 = vld [vmem:[#allocation2 + $0x28] sm:$0xff]
    %v320 = vld [vmem:[#allocation2 + $0x30] sm:$0xff]
    %v321 = vld [vmem:[#allocation2 + $0x38] sm:$0xff]
    %v322 = vld [vmem:[#allocation2 + $0x40] sm:$0xff]
    %v323 = vld [vmem:[#allocation2 + $0x48] sm:$0xff]
    %v324 = vld [vmem:[#allocation2 + $0x50] sm:$0xff]
    %v325 = vld [vmem:[#allocation2 + $0x58] sm:$0xff]
    %v326 = vld [vmem:[#allocation2 + $0x60] sm:$0xff]
    %v327 = vld [vmem:[#allocation2 + $0x68] sm:$0xff]
    %v328 = vld [vmem:[#allocation2 + $0x70] sm:$0xff]
    %v329 = vld [vmem:[#allocation2 + $0x78] sm:$0xff]
    %v330 = vld [vmem:[%s2] sm:$0x1]
    %v332 = vlaneseq
    %v333 = vshrl.u32 %v332, 7
    %v334 = vsub.s32 0, %v333
    %v335 = vrot.slane %v330, %v334
    %v337 = vmul.f32 %v314, %v335
    %v338 = vmul.f32 %v315, %v335
    %v339 = vmul.f32 %v316, %v335
    %v340 = vmul.f32 %v317, %v335
    %v341 = vmul.f32 %v318, %v335
    %v342 = vmul.f32 %v319, %v335
    %v343 = vmul.f32 %v320, %v335
    %v344 = vmul.f32 %v321, %v335
    %v345 = vmul.f32 %v322, %v335
    %v346 = vmul.f32 %v323, %v335
    %v347 = vmul.f32 %v324, %v335
    %v348 = vmul.f32 %v325, %v335
    %v349 = vmul.f32 %v326, %v335
    %v350 = vmul.f32 %v327, %v335
    %v351 = vmul.f32 %v328, %v335
    %v352 = vmul.f32 %v329, %v335
    %v353 = vld [vmem:[%s3] sm:$0x1]
    %v355 = vlaneseq
    %v356 = vshrl.u32 %v355, 7
    %v357 = vsub.s32 0, %v356
    %v358 = vrot.slane %v353, %v357
    %v360 = vadd.f32 %v337, %v358
    %v361 = vadd.f32 %v338, %v358
    %v362 = vadd.f32 %v339, %v358
    %v363 = vadd.f32 %v340, %v358
    %v364 = vadd.f32 %v341, %v358
    %v365 = vadd.f32 %v342, %v358
    %v366 = vadd.f32 %v343, %v358
    %v367 = vadd.f32 %v344, %v358
    %v368 = vadd.f32 %v345, %v358
    %v369 = vadd.f32 %v346, %v358
    %v370 = vadd.f32 %v347, %v358
    %v371 = vadd.f32 %v348, %v358
    %v372 = vadd.f32 %v349, %v358
    %v373 = vadd.f32 %v350, %v358
    %v374 = vadd.f32 %v351, %v358
    %v375 = vadd.f32 %v352, %v358
    %v376 = vpack.c.bf16 %v361, %v360
    %v377 = vpack.c.bf16 %v363, %v362
    %v378 = vpack.c.bf16 %v365, %v364
    %v379 = vpack.c.bf16 %v367, %v366
    %v380 = vpack.c.bf16 %v369, %v368
    %v381 = vpack.c.bf16 %v371, %v370
    %v382 = vpack.c.bf16 %v373, %v372
    %v383 = vpack.c.bf16 %v375, %v374
    %v392 = vunpack.c.l.b16 %v376
    %v393 = vunpack.c.h.b16 %v376
    %v394 = vunpack.c.l.b16 %v377
    %v395 = vunpack.c.h.b16 %v377
    %v396 = vunpack.c.l.b16 %v378
    %v397 = vunpack.c.h.b16 %v378
    %v398 = vunpack.c.l.b16 %v379
    %v399 = vunpack.c.h.b16 %v379
    %v400 = vunpack.c.l.b16 %v380
    %v401 = vunpack.c.h.b16 %v380
    %v402 = vunpack.c.l.b16 %v381
    %v403 = vunpack.c.h.b16 %v381
    %v404 = vunpack.c.l.b16 %v382
    %v405 = vunpack.c.h.b16 %v382
    %v406 = vunpack.c.l.b16 %v383
    %v407 = vunpack.c.h.b16 %v383
    %v408 = vpack.c.b16 %v392, %v392
    %v409 = vpack.c.b16 %v393, %v393
    %v410 = vpack.c.b16 %v394, %v394
    %v411 = vpack.c.b16 %v395, %v395
    %v412 = vpack.c.b16 %v396, %v396
    %v413 = vpack.c.b16 %v397, %v397
    %v414 = vpack.c.b16 %v398, %v398
    %v415 = vpack.c.b16 %v399, %v399
    %v416 = vpack.c.b16 %v400, %v400
    %v417 = vpack.c.b16 %v401, %v401
    %v418 = vpack.c.b16 %v402, %v402
    %v419 = vpack.c.b16 %v403, %v403
    %v420 = vpack.c.b16 %v404, %v404
    %v421 = vpack.c.b16 %v405, %v405
    %v422 = vpack.c.b16 %v406, %v406
    %v423 = vpack.c.b16 %v407, %v407
    %440 = vst [vmem:[%s4] sm:$0xf] %v408
    %441 = vst [vmem:[%s4 + $0x4] sm:$0xf] %v409
    %442 = vst [vmem:[%s4 + $0x8] sm:$0xf] %v410
    %443 = vst [vmem:[%s4 + $0xc] sm:$0xf] %v411
    %444 = vst [vmem:[%s4 + $0x10] sm:$0xf] %v412
    %445 = vst [vmem:[%s4 + $0x14] sm:$0xf] %v413
    %446 = vst [vmem:[%s4 + $0x18] sm:$0xf] %v414
    %447 = vst [vmem:[%s4 + $0x1c] sm:$0xf] %v415
    %448 = vst [vmem:[%s4 + $0x20] sm:$0xf] %v416
    %449 = vst [vmem:[%s4 + $0x24] sm:$0xf] %v417
    %450 = vst [vmem:[%s4 + $0x28] sm:$0xf] %v418
    %451 = vst [vmem:[%s4 + $0x2c] sm:$0xf] %v419
    %452 = vst [vmem:[%s4 + $0x30] sm:$0xf] %v420
    %453 = vst [vmem:[%s4 + $0x34] sm:$0xf] %v421
    %454 = vst [vmem:[%s4 + $0x38] sm:$0xf] %v422
    %455 = vst [vmem:[%s4 + $0x3c] sm:$0xf] %v423
  $region25: #{neck_forward.45} parent=0 // pred_fallthru
    _
  // Predicated region
  $region26: #{neck_forward.45} parent=0 // pred_check
    _
  $region27: #{neck_forward.45} parent=0 // pred_check_branch
    %457 = sbr.rel (0) target = $region29
  $region28: #{neck_forward.45} parent=0 // pred_region
    _
  $region29: #{neck_forward.45} parent=0 // pred_fallthru
    _
  // Predicated region
  $region30: #{neck_forward.45} parent=0 // pred_check
    _
  $region31: #{neck_forward.45} parent=0 // pred_check_branch
    %459 = sbr.rel (0) target = $region33
  $region32: #{neck_forward.45} parent=0 // pred_region
    _
  $region33: #{neck_forward.45} parent=0 // pred_fallthru
    _

// kernel: neck_forward.46
$region0: #{neck_forward.46}
  #allocation0 [shape = 'u32[]', space=smem, size = 0x4, offset = 0x4, fixed_abs, tag = 'smem constant byte address 0x4 - core index']
  #allocation1 [shape = 'u32[144,128]{1,0:T(1,128)}', space=vmem, size = 0x12000, scoped, tag = 'internal scratch']
  #allocation2 [shape = 'f32[256,128]{1,0:T(8,128)}', space=vmem, size = 0x20000, scoped, tag = 'scratch operand']
  %s0 = inlined_call_operand.vmem [shape: bf16[512,128], index: 0, kind: input, shape index: {}]
  %s1 = inlined_call_operand.vmem [shape: bf16[128,128], index: 1, kind: input, shape index: {}]
  %s2 = inlined_call_operand.vmem [shape: f32[1,128], index: 2, kind: input, shape index: {}]
  %s3 = inlined_call_operand.vmem [shape: f32[1,128], index: 3, kind: input, shape index: {}]
  %s4 = inlined_call_operand.vmem [shape: bf16[512,128], index: 4, kind: output, shape index: {}]
  %s5 = sld [smem:[#allocation0]]
  $region57: #{neck_forward.46} parent=0
    _
  %s7 = ssub.s32 1, %s5
  %s8 = scalar_select 0, %s7, %s5
  loop: start=0, step=1, limit=4
  $region2: #{neck_forward.46} parent=0 // loop_pre_header
    _
  $region3: #{neck_forward.46} parent=0 // loop_header
    %s10 = sphi 0, %s14
    %p11 = scmp.ge.s32.totalorder %s10, 4
    %s17 = sphi 0, %s36
    %s18 = sphi 0, %s32
    %s19 = sphi 0, %s28
    %s20 = sphi 0, %s17
    %s21 = sphi 0, %s18
    %s22 = sphi 0, %s19
    %s23 = sphi 0, %s20
    %s24 = sphi 0, %s21
    %s25 = sphi 0, %s22
    %s41 = sphi 0, %s43
    %s44 = sphi 0, %s41
    %s45 = sphi 0, %s44
    %s61 = sphi 0, %s45
    %s69 = sphi 0, %s71
    %s72 = sphi 0, %s69
    %s73 = sphi 0, %s72
    %s89 = sphi 0, %s73
    %s95 = sphi 0, %s97
    %s98 = sphi 0, %s95
    %s99 = sphi 0, %s98
    %s115 = sphi 0, %s99
    %s121 = sphi 0, %s123
    %s124 = sphi 0, %s121
    %s125 = sphi 0, %s124
    %s141 = sphi 0, %s125
    %s149 = sphi 0, %s151
    %s152 = sphi 0, %s149
    %s153 = sphi 0, %s152
    %s169 = sphi 0, %s153
  $region4: #{neck_forward.46} parent=0 // loop_header_branch
    %13 = sbr.rel (%p11) target = $region8
  $region5: #{neck_forward.46} parent=0 // loop_body
    %s15 = ssub.s32 %s10, 1
    %s16 = ssub.s32 %s10, 2
    %s26 = sadd.s32 1, %s19
    %p27 = scmp.ge.s32.totalorder %s26, 1
    %s28 = scalar_select %p27, 0, %s26
    %s29 = sadd.s32 1, %s18
    %s30 = scalar_select %p27, %s29, %s18
    %p31 = scmp.ge.s32.totalorder %s30, 1
    %s32 = scalar_select %p31, 0, %s30
    %s33 = sadd.s32 1, %s17
    %s34 = scalar_select %p31, %s33, %s17
    %p35 = scmp.ge.s32.totalorder %s34, 2
    %s36 = scalar_select %p35, 0, %s34
    %s37 = ssub.s32 %s17, %s36
    %s38 = ssub.s32 %s19, %s28
    %s39 = sor.u32 %s37, %s38
    %p40 = scmp.eq.s32.totalorder %s39, 0
    %s42 = sadd.s32 %s41, 1
    %s43 = scalar_select %p40, %s41, %s42
    %p46 = pneg %p40
    %p47 = scmp.eq.s32.totalorder %s10, 1
    %p48 = por %p46, %p47
    %p49 = scmp.ne.s32.totalorder %s41, %s44
    %p50 = scmp.eq.s32.totalorder %s10, 0
    %p51 = por %p49, %p50
    %p52 = scmp.ne.s32.totalorder %s41, %s44
    %p53 = scmp.eq.s32.totalorder %s15, 1
    %p54 = por %p52, %p53
    %p55 = scmp.ne.s32.totalorder %s44, %s45
    %p56 = scmp.eq.s32.totalorder %s15, 0
    %p57 = por %p55, %p56
    %p58 = scmp.ne.s32.totalorder %s44, %s45
    %p59 = scmp.eq.s32.totalorder %s16, 1
    %p60 = por %p58, %p59
    %p62 = scmp.ne.s32.totalorder %s45, %s61
    %p63 = scmp.eq.s32.totalorder %s16, 0
    %p64 = por %p62, %p63
    %s65 = ssub.s32 %s19, %s28
    %s66 = ssub.s32 %s18, %s32
    %s67 = sor.u32 %s65, %s66
    %p68 = scmp.eq.s32.totalorder %s67, 0
    %s70 = sadd.s32 %s69, 1
    %s71 = scalar_select %p68, %s69, %s70
    %p74 = pneg %p68
    %p75 = scmp.eq.s32.totalorder %s10, 1
    %p76 = por %p74, %p75
    %p77 = scmp.ne.s32.totalorder %s69, %s72
    %p78 = scmp.eq.s32.totalorder %s10, 0
    %p79 = por %p77, %p78
    %p80 = scmp.ne.s32.totalorder %s69, %s72
    %p81 = scmp.eq.s32.totalorder %s15, 1
    %p82 = por %p80, %p81
    %p83 = scmp.ne.s32.totalorder %s72, %s73
    %p84 = scmp.eq.s32.totalorder %s15, 0
    %p85 = por %p83, %p84
    %p86 = scmp.ne.s32.totalorder %s72, %s73
    %p87 = scmp.eq.s32.totalorder %s16, 1
    %p88 = por %p86, %p87
    %p90 = scmp.ne.s32.totalorder %s73, %s89
    %p91 = scmp.eq.s32.totalorder %s16, 0
    %p92 = por %p90, %p91
    %s93 = ssub.s32 %s18, %s32
    %p94 = scmp.eq.s32.totalorder %s93, 0
    %s96 = sadd.s32 %s95, 1
    %s97 = scalar_select %p94, %s95, %s96
    %p100 = pneg %p94
    %p101 = scmp.eq.s32.totalorder %s10, 1
    %p102 = por %p100, %p101
    %p103 = scmp.ne.s32.totalorder %s95, %s98
    %p104 = scmp.eq.s32.totalorder %s10, 0
    %p105 = por %p103, %p104
    %p106 = scmp.ne.s32.totalorder %s95, %s98
    %p107 = scmp.eq.s32.totalorder %s15, 1
    %p108 = por %p106, %p107
    %p109 = scmp.ne.s32.totalorder %s98, %s99
    %p110 = scmp.eq.s32.totalorder %s15, 0
    %p111 = por %p109, %p110
    %p112 = scmp.ne.s32.totalorder %s98, %s99
    %p113 = scmp.eq.s32.totalorder %s16, 1
    %p114 = por %p112, %p113
    %p116 = scmp.ne.s32.totalorder %s99, %s115
    %p117 = scmp.eq.s32.totalorder %s16, 0
    %p118 = por %p116, %p117
    %s119 = ssub.s32 %s18, %s32
    %p120 = scmp.eq.s32.totalorder %s119, 0
    %s122 = sadd.s32 %s121, 1
    %s123 = scalar_select %p120, %s121, %s122
    %p126 = pneg %p120
    %p127 = scmp.eq.s32.totalorder %s10, 1
    %p128 = por %p126, %p127
    %p129 = scmp.ne.s32.totalorder %s121, %s124
    %p130 = scmp.eq.s32.totalorder %s10, 0
    %p131 = por %p129, %p130
    %p132 = scmp.ne.s32.totalorder %s121, %s124
    %p133 = scmp.eq.s32.totalorder %s15, 1
    %p134 = por %p132, %p133
    %p135 = scmp.ne.s32.totalorder %s124, %s125
    %p136 = scmp.eq.s32.totalorder %s15, 0
    %p137 = por %p135, %p136
    %p138 = scmp.ne.s32.totalorder %s124, %s125
    %p139 = scmp.eq.s32.totalorder %s16, 1
    %p140 = por %p138, %p139
    %p142 = scmp.ne.s32.totalorder %s125, %s141
    %p143 = scmp.eq.s32.totalorder %s16, 0
    %p144 = por %p142, %p143
    %s145 = ssub.s32 %s17, %s36
    %s146 = ssub.s32 %s18, %s32
    %s147 = sor.u32 %s145, %s146
    %p148 = scmp.eq.s32.totalorder %s147, 0
    %s150 = sadd.s32 %s149, 1
    %s151 = scalar_select %p148, %s149, %s150
    %p154 = pneg %p148
    %p155 = scmp.eq.s32.totalorder %s10, 1
    %p156 = por %p154, %p155
    %p157 = scmp.ne.s32.totalorder %s149, %s152
    %p158 = scmp.eq.s32.totalorder %s10, 0
    %p159 = por %p157, %p158
    %p160 = scmp.ne.s32.totalorder %s149, %s152
    %p161 = scmp.eq.s32.totalorder %s15, 1
    %p162 = por %p160, %p161
    %p163 = scmp.ne.s32.totalorder %s152, %s153
    %p164 = scmp.eq.s32.totalorder %s15, 0
    %p165 = por %p163, %p164
    %p166 = scmp.ne.s32.totalorder %s152, %s153
    %p167 = scmp.eq.s32.totalorder %s16, 1
    %p168 = por %p166, %p167
    %p170 = scmp.ne.s32.totalorder %s153, %s169
    %p171 = scmp.eq.s32.totalorder %s16, 0
    %p172 = por %p170, %p171
    %p173 = scmp.le.s32.totalorder 1, %s10
    %p174 = scmp.lt.s32.totalorder %s10, 3
    %p175 = pnand %p173, %p174
    %p176 = pneg %p175
    // Predicated region
    $region9: #{neck_forward.46} parent=5 // pred_check
      _
    $region10: #{neck_forward.46} parent=5 // pred_check_branch
      %178 = sbr.rel (%p175) target = $region12
    $region11: #{neck_forward.46} parent=5 // pred_region
      %s179 = ssub.s32 %s10, 1
      // Predicated region
      $region13: #{neck_forward.46} parent=11 // pred_check
        %p180 = pneg %p85
      $region14: #{neck_forward.46} parent=11 // pred_check_branch
        %182 = sbr.rel (%p180) target = $region16
      $region15: #{neck_forward.46} parent=11 // pred_region
        %s183 = smul.u32 16, %s22
        %p184 = scmp.lt.s32.totalorder %s183, 15
        %s185 = scalar_select %p184, %s183, 15
        %p186 = scmp.lt.s32.totalorder %s21, 0
        %s187 = scalar_select %p186, %s21, 0
        %s188 = sadd.s32 %s187, %s185
        %s189 = smul.addr %s188, 4
        %s190 = scalar_lea.vmem %s1, %s189
        %s191 = smul.u32 16, %s22
      $region16: #{neck_forward.46} parent=11 // pred_fallthru
        _
      // Predicated region
      $region17: #{neck_forward.46} parent=11 // pred_check
        %p192 = pneg %p111
      $region18: #{neck_forward.46} parent=11 // pred_check_branch
        %194 = sbr.rel (%p192) target = $region20
      $region19: #{neck_forward.46} parent=11 // pred_region
        %p195 = scmp.lt.s32.totalorder %s21, 0
        %s196 = scalar_select %p195, %s21, 0
        %s197 = scalar_lea.vmem %s2, %s196
      $region20: #{neck_forward.46} parent=11 // pred_fallthru
        _
      // Predicated region
      $region21: #{neck_forward.46} parent=11 // pred_check
        %p198 = pneg %p137
      $region22: #{neck_forward.46} parent=11 // pred_check_branch
        %200 = sbr.rel (%p198) target = $region24
      $region23: #{neck_forward.46} parent=11 // pred_region
        %p201 = scmp.lt.s32.totalorder %s21, 0
        %s202 = scalar_select %p201, %s21, 0
        %s203 = scalar_lea.vmem %s3, %s202
      $region24: #{neck_forward.46} parent=11 // pred_fallthru
        _
    $region12: #{neck_forward.46} parent=5 // pred_fallthru
      _
    %p204 = scmp.lt.s32.totalorder %s10, 2
    // Predicated region
    $region25: #{neck_forward.46} parent=5 // pred_check
      %p205 = pneg %p204
    $region26: #{neck_forward.46} parent=5 // pred_check_branch
      %207 = sbr.rel (%p205) target = $region28
    $region27: #{neck_forward.46} parent=5 // pred_region
      // Predicated region
      $region29: #{neck_forward.46} parent=27 // pred_check
        %p208 = pneg %p51
      $region30: #{neck_forward.46} parent=27 // pred_check_branch
        %210 = sbr.rel (%p208) target = $region32
      $region31: #{neck_forward.46} parent=27 // pred_region
        %s211 = smul.u32 32, %s17
        %p212 = scmp.lt.s32.totalorder %s211, 63
        %s213 = scalar_select %p212, %s211, 63
        %p214 = scmp.lt.s32.totalorder %s19, 0
        %s215 = scalar_select %p214, %s19, 0
        %s216 = sadd.s32 %s215, %s213
        %s217 = smul.addr %s216, 4
        %s218 = scalar_lea.vmem %s0, %s217
        %s219 = smul.u32 32, %s17
      $region32: #{neck_forward.46} parent=27 // pred_fallthru
        _
    $region28: #{neck_forward.46} parent=5 // pred_fallthru
      _
    %p220 = scmp.le.s32.totalorder 1, %s10
    %p221 = scmp.lt.s32.totalorder %s10, 3
    %p222 = pnand %p220, %p221
    %p223 = pneg %p222
    // Predicated region
    $region33: #{neck_forward.46} parent=5 // pred_check
      _
    $region34: #{neck_forward.46} parent=5 // pred_check_branch
      %225 = sbr.rel (%p222) target = $region36
    $region35: #{neck_forward.46} parent=5 // pred_region
      %s226 = ssub.s32 %s10, 1
      %s227 = smul.u32 32, %s20
      %p228 = scmp.lt.s32.totalorder %s227, 63
      %s229 = scalar_select %p228, %s227, 63
      %p230 = scmp.lt.s32.totalorder %s22, 0
      %s231 = scalar_select %p230, %s22, 0
      %s232 = sadd.s32 %s231, %s229
      %s233 = smul.addr %s232, 4
      %s234 = scalar_lea.vmem %s0, %s233
      %p235 = pneg %p57
      %p236 = pneg %p54
      %s237 = smul.u32 16, %s22
      %p238 = scmp.lt.s32.totalorder %s237, 15
      %s239 = scalar_select %p238, %s237, 15
      %p240 = scmp.lt.s32.totalorder %s21, 0
      %s241 = scalar_select %p240, %s21, 0
      %s242 = sadd.s32 %s241, %s239
      %s243 = smul.addr %s242, 4
      %s244 = scalar_lea.vmem %s1, %s243
      %p245 = pneg %p85
      %p246 = pneg %p82
      %p247 = scmp.lt.s32.totalorder %s21, 0
      %s248 = scalar_select %p247, %s21, 0
      %s249 = scalar_lea.vmem %s2, %s248
      %p250 = pneg %p111
      %p251 = pneg %p108
      %p252 = scmp.lt.s32.totalorder %s21, 0
      %s253 = scalar_select %p252, %s21, 0
      %s254 = scalar_lea.vmem %s3, %s253
      %p255 = pneg %p137
      %p256 = pneg %p134
      %p257 = pneg %p165
      %p258 = pneg %p162
      %s259 = smul.u32 32, %s20
      %p260 = scmp.lt.s32.totalorder %s259, 63
      %s261 = scalar_select %p260, %s259, 63
      %p262 = scmp.lt.s32.totalorder %s21, 0
      %s263 = scalar_select %p262, %s21, 0
      %s264 = sadd.s32 %s263, %s261
      %s265 = smul.addr %s264, 4
      %s266 = scalar_lea.vmem %s4, %s265
      %s267 = smul.u32 32, %s20
      %p268 = scmp.lt.s32.totalorder %s267, 63
      %s269 = scalar_select %p268, %s267, 63
      %p270 = scmp.lt.s32.totalorder %s22, 0
      %s271 = scalar_select %p270, %s22, 0
      %s272 = sadd.s32 %s271, %s269
      %s273 = smul.addr %s272, 4
      %s274 = scalar_lea.vmem %s0, %s273
      %s275 = smul.u32 32, %s20
      %s276 = smul.u32 16, %s22
      %p277 = scmp.lt.s32.totalorder %s276, 15
      %s278 = scalar_select %p277, %s276, 15
      %p279 = scmp.lt.s32.totalorder %s21, 0
      %s280 = scalar_select %p279, %s21, 0
      %s281 = sadd.s32 %s280, %s278
      %s282 = smul.addr %s281, 4
      %s283 = scalar_lea.vmem %s1, %s282
      %s284 = smul.u32 16, %s22
      %p285 = scmp.lt.s32.totalorder %s21, 0
      %s286 = scalar_select %p285, %s21, 0
      %s287 = scalar_lea.vmem %s2, %s286
      %p288 = scmp.lt.s32.totalorder %s21, 0
      %s289 = scalar_select %p288, %s21, 0
      %s290 = scalar_lea.vmem %s3, %s289
      %s291 = smul.u32 32, %s20
      %p292 = scmp.lt.s32.totalorder %s291, 63
      %s293 = scalar_select %p292, %s291, 63
      %p294 = scmp.lt.s32.totalorder %s21, 0
      %s295 = scalar_select %p294, %s21, 0
      %s296 = sadd.s32 %s295, %s293
      %s297 = smul.addr %s296, 4
      %s298 = scalar_lea.vmem %s4, %s297
      %s299 = smul.u32 32, %s20
      %p301 = scmp.eq.s32.totalorder %s22, 0
      // Predicated region
      $region37: #{neck_forward.46} parent=35 // pred_check
        %p302 = pneg %p301
      $region38: #{neck_forward.46} parent=35 // pred_check_branch
        %304 = sbr.rel (%p302) target = $region40
      $region39: #{neck_forward.46} parent=35 // pred_region
        %305 = vst [vmem:[#allocation2] sm:$0xff] 0.0
        %306 = vst [vmem:[#allocation2 + $0x8] sm:$0xff] 0.0
        %307 = vst [vmem:[#allocation2 + $0x10] sm:$0xff] 0.0
        %308 = vst [vmem:[#allocation2 + $0x18] sm:$0xff] 0.0
        %309 = vst [vmem:[#allocation2 + $0x20] sm:$0xff] 0.0
        %310 = vst [vmem:[#allocation2 + $0x28] sm:$0xff] 0.0
        %311 = vst [vmem:[#allocation2 + $0x30] sm:$0xff] 0.0
        %312 = vst [vmem:[#allocation2 + $0x38] sm:$0xff] 0.0
        %313 = vst [vmem:[#allocation2 + $0x40] sm:$0xff] 0.0
        %314 = vst [vmem:[#allocation2 + $0x48] sm:$0xff] 0.0
        %315 = vst [vmem:[#allocation2 + $0x50] sm:$0xff] 0.0
        %316 = vst [vmem:[#allocation2 + $0x58] sm:$0xff] 0.0
        %317 = vst [vmem:[#allocation2 + $0x60] sm:$0xff] 0.0
        %318 = vst [vmem:[#allocation2 + $0x68] sm:$0xff] 0.0
        %319 = vst [vmem:[#allocation2 + $0x70] sm:$0xff] 0.0
        %320 = vst [vmem:[#allocation2 + $0x78] sm:$0xff] 0.0
        %321 = vst [vmem:[#allocation2 + $0x80] sm:$0xff] 0.0
        %322 = vst [vmem:[#allocation2 + $0x88] sm:$0xff] 0.0
        %323 = vst [vmem:[#allocation2 + $0x90] sm:$0xff] 0.0
        %324 = vst [vmem:[#allocation2 + $0x98] sm:$0xff] 0.0
        %325 = vst [vmem:[#allocation2 + $0xa0] sm:$0xff] 0.0
        %326 = vst [vmem:[#allocation2 + $0xa8] sm:$0xff] 0.0
        %327 = vst [vmem:[#allocation2 + $0xb0] sm:$0xff] 0.0
        %328 = vst [vmem:[#allocation2 + $0xb8] sm:$0xff] 0.0
        %329 = vst [vmem:[#allocation2 + $0xc0] sm:$0xff] 0.0
        %330 = vst [vmem:[#allocation2 + $0xc8] sm:$0xff] 0.0
        %331 = vst [vmem:[#allocation2 + $0xd0] sm:$0xff] 0.0
        %332 = vst [vmem:[#allocation2 + $0xd8] sm:$0xff] 0.0
        %333 = vst [vmem:[#allocation2 + $0xe0] sm:$0xff] 0.0
        %334 = vst [vmem:[#allocation2 + $0xe8] sm:$0xff] 0.0
        %335 = vst [vmem:[#allocation2 + $0xf0] sm:$0xff] 0.0
        %336 = vst [vmem:[#allocation2 + $0xf8] sm:$0xff] 0.0
      $region40: #{neck_forward.46} parent=35 // pred_fallthru
        _
      %v337 = vld [vmem:[#allocation2] sm:$0xff]
      %v338 = vld [vmem:[#allocation2 + $0x8] sm:$0xff]
      %v339 = vld [vmem:[#allocation2 + $0x10] sm:$0xff]
      %v340 = vld [vmem:[#allocation2 + $0x18] sm:$0xff]
      %v341 = vld [vmem:[#allocation2 + $0x20] sm:$0xff]
      %v342 = vld [vmem:[#allocation2 + $0x28] sm:$0xff]
      %v343 = vld [vmem:[#allocation2 + $0x30] sm:$0xff]
      %v344 = vld [vmem:[#allocation2 + $0x38] sm:$0xff]
      %v345 = vld [vmem:[#allocation2 + $0x40] sm:$0xff]
      %v346 = vld [vmem:[#allocation2 + $0x48] sm:$0xff]
      %v347 = vld [vmem:[#allocation2 + $0x50] sm:$0xff]
      %v348 = vld [vmem:[#allocation2 + $0x58] sm:$0xff]
      %v349 = vld [vmem:[#allocation2 + $0x60] sm:$0xff]
      %v350 = vld [vmem:[#allocation2 + $0x68] sm:$0xff]
      %v351 = vld [vmem:[#allocation2 + $0x70] sm:$0xff]
      %v352 = vld [vmem:[#allocation2 + $0x78] sm:$0xff]
      %v353 = vld [vmem:[#allocation2 + $0x80] sm:$0xff]
      %v354 = vld [vmem:[#allocation2 + $0x88] sm:$0xff]
      %v355 = vld [vmem:[#allocation2 + $0x90] sm:$0xff]
      %v356 = vld [vmem:[#allocation2 + $0x98] sm:$0xff]
      %v357 = vld [vmem:[#allocation2 + $0xa0] sm:$0xff]
      %v358 = vld [vmem:[#allocation2 + $0xa8] sm:$0xff]
      %v359 = vld [vmem:[#allocation2 + $0xb0] sm:$0xff]
      %v360 = vld [vmem:[#allocation2 + $0xb8] sm:$0xff]
      %v361 = vld [vmem:[#allocation2 + $0xc0] sm:$0xff]
      %v362 = vld [vmem:[#allocation2 + $0xc8] sm:$0xff]
      %v363 = vld [vmem:[#allocation2 + $0xd0] sm:$0xff]
      %v364 = vld [vmem:[#allocation2 + $0xd8] sm:$0xff]
      %v365 = vld [vmem:[#allocation2 + $0xe0] sm:$0xff]
      %v366 = vld [vmem:[#allocation2 + $0xe8] sm:$0xff]
      %v367 = vld [vmem:[#allocation2 + $0xf0] sm:$0xff]
      %v368 = vld [vmem:[#allocation2 + $0xf8] sm:$0xff]
      %v369 = vld [vmem:[%s274] sm:$0xf]
      %v370 = vld [vmem:[%s274 + $0x4] sm:$0xf]
      %v371 = vld [vmem:[%s274 + $0x8] sm:$0xf]
      %v372 = vld [vmem:[%s274 + $0xc] sm:$0xf]
      %v373 = vld [vmem:[%s274 + $0x10] sm:$0xf]
      %v374 = vld [vmem:[%s274 + $0x14] sm:$0xf]
      %v375 = vld [vmem:[%s274 + $0x18] sm:$0xf]
      %v376 = vld [vmem:[%s274 + $0x1c] sm:$0xf]
      %v377 = vld [vmem:[%s274 + $0x20] sm:$0xf]
      %v378 = vld [vmem:[%s274 + $0x24] sm:$0xf]
      %v379 = vld [vmem:[%s274 + $0x28] sm:$0xf]
      %v380 = vld [vmem:[%s274 + $0x2c] sm:$0xf]
      %v381 = vld [vmem:[%s274 + $0x30] sm:$0xf]
      %v382 = vld [vmem:[%s274 + $0x34] sm:$0xf]
      %v383 = vld [vmem:[%s274 + $0x38] sm:$0xf]
      %v384 = vld [vmem:[%s274 + $0x3c] sm:$0xf]
      %v385 = vld [vmem:[%s274 + $0x40] sm:$0xf]
      %v386 = vld [vmem:[%s274 + $0x44] sm:$0xf]
      %v387 = vld [vmem:[%s274 + $0x48] sm:$0xf]
      %v388 = vld [vmem:[%s274 + $0x4c] sm:$0xf]
      %v389 = vld [vmem:[%s274 + $0x50] sm:$0xf]
      %v390 = vld [vmem:[%s274 + $0x54] sm:$0xf]
      %v391 = vld [vmem:[%s274 + $0x58] sm:$0xf]
      %v392 = vld [vmem:[%s274 + $0x5c] sm:$0xf]
      %v393 = vld [vmem:[%s274 + $0x60] sm:$0xf]
      %v394 = vld [vmem:[%s274 + $0x64] sm:$0xf]
      %v395 = vld [vmem:[%s274 + $0x68] sm:$0xf]
      %v396 = vld [vmem:[%s274 + $0x6c] sm:$0xf]
      %v397 = vld [vmem:[%s274 + $0x70] sm:$0xf]
      %v398 = vld [vmem:[%s274 + $0x74] sm:$0xf]
      %v399 = vld [vmem:[%s274 + $0x78] sm:$0xf]
      %v400 = vld [vmem:[%s274 + $0x7c] sm:$0xf]
      %v401 = vld [vmem:[%s283] sm:$0xf]
      %v402 = vld [vmem:[%s283 + $0x4] sm:$0xf]
      %v403 = vld [vmem:[%s283 + $0x8] sm:$0xf]
      %v404 = vld [vmem:[%s283 + $0xc] sm:$0xf]
      %v405 = vld [vmem:[%s283 + $0x10] sm:$0xf]
      %v406 = vld [vmem:[%s283 + $0x14] sm:$0xf]
      %v407 = vld [vmem:[%s283 + $0x18] sm:$0xf]
      %v408 = vld [vmem:[%s283 + $0x1c] sm:$0xf]
      %v409 = vld [vmem:[%s283 + $0x20] sm:$0xf]
      %v410 = vld [vmem:[%s283 + $0x24] sm:$0xf]
      %v411 = vld [vmem:[%s283 + $0x28] sm:$0xf]
      %v412 = vld [vmem:[%s283 + $0x2c] sm:$0xf]
      %v413 = vld [vmem:[%s283 + $0x30] sm:$0xf]
      %v414 = vld [vmem:[%s283 + $0x34] sm:$0xf]
      %v415 = vld [vmem:[%s283 + $0x38] sm:$0xf]
      %v416 = vld [vmem:[%s283 + $0x3c] sm:$0xf]
      %v449 = vunpack.c.l.b16 %v369
      %v450 = vunpack.c.l.b16 %v370
      %v451 = vunpack.c.l.b16 %v371
      %v452 = vunpack.c.l.b16 %v372
      %v453 = vunpack.c.l.b16 %v373
      %v454 = vunpack.c.l.b16 %v374
      %v455 = vunpack.c.l.b16 %v375
      %v456 = vunpack.c.l.b16 %v376
      %v457 = vunpack.c.l.b16 %v377
      %v458 = vunpack.c.l.b16 %v378
      %v459 = vunpack.c.l.b16 %v379
      %v460 = vunpack.c.l.b16 %v380
      %v461 = vunpack.c.l.b16 %v381
      %v462 = vunpack.c.l.b16 %v382
      %v463 = vunpack.c.l.b16 %v383
      %v464 = vunpack.c.l.b16 %v384
      %v465 = vunpack.c.l.b16 %v385
      %v466 = vunpack.c.l.b16 %v386
      %v467 = vunpack.c.l.b16 %v387
      %v468 = vunpack.c.l.b16 %v388
      %v469 = vunpack.c.l.b16 %v389
      %v470 = vunpack.c.l.b16 %v390
      %v471 = vunpack.c.l.b16 %v391
      %v472 = vunpack.c.l.b16 %v392
      %v473 = vunpack.c.l.b16 %v393
      %v474 = vunpack.c.l.b16 %v394
      %v475 = vunpack.c.l.b16 %v395
      %v476 = vunpack.c.l.b16 %v396
      %v477 = vunpack.c.l.b16 %v397
      %v478 = vunpack.c.l.b16 %v398
      %v479 = vunpack.c.l.b16 %v399
      %v480 = vunpack.c.l.b16 %v400
      %v481 = vpack.c.b16 %v450, %v449
      %v482 = vpack.c.b16 %v452, %v451
      %v483 = vpack.c.b16 %v454, %v453
      %v484 = vpack.c.b16 %v456, %v455
      %v485 = vpack.c.b16 %v458, %v457
      %v486 = vpack.c.b16 %v460, %v459
      %v487 = vpack.c.b16 %v462, %v461
      %v488 = vpack.c.b16 %v464, %v463
      %v489 = vpack.c.b16 %v466, %v465
      %v490 = vpack.c.b16 %v468, %v467
      %v491 = vpack.c.b16 %v470, %v469
      %v492 = vpack.c.b16 %v472, %v471
      %v493 = vpack.c.b16 %v474, %v473
      %v494 = vpack.c.b16 %v476, %v475
      %v495 = vpack.c.b16 %v478, %v477
      %v496 = vpack.c.b16 %v480, %v479
      %v529 = vunpack.c.l.b16 %v401
      %v530 = vunpack.c.l.b16 %v402
      %v531 = vunpack.c.l.b16 %v403
      %v532 = vunpack.c.l.b16 %v404
      %v533 = vunpack.c.l.b16 %v405
      %v534 = vunpack.c.l.b16 %v406
      %v535 = vunpack.c.l.b16 %v407
      %v536 = vunpack.c.l.b16 %v408
      %v537 = vunpack.c.l.b16 %v409
      %v538 = vunpack.c.l.b16 %v410
      %v539 = vunpack.c.l.b16 %v411
      %v540 = vunpack.c.l.b16 %v412
      %v541 = vunpack.c.l.b16 %v413
      %v542 = vunpack.c.l.b16 %v414
      %v543 = vunpack.c.l.b16 %v415
      %v544 = vunpack.c.l.b16 %v416
      %v545 = vpack.c.b16 %v530, %v529
      %v546 = vpack.c.b16 %v532, %v531
      %v547 = vpack.c.b16 %v534, %v533
      %v548 = vpack.c.b16 %v536, %v535
      %v549 = vpack.c.b16 %v538, %v537
      %v550 = vpack.c.b16 %v540, %v539
      %v551 = vpack.c.b16 %v542, %v541
      %v552 = vpack.c.b16 %v544, %v543
      %561 = vmatprep.subr.bf16.mxu0 0
      %562 = vmatpush1.bf16.msra.mxu0 %v552
      %563 = vmatprep.subr.bf16.mxu0 0
      %564 = vmatpush1.bf16.msra.mxu0 %v551
      %565 = vmatprep.subr.bf16.mxu0 0
      %566 = vmatpush1.bf16.msra.mxu0 %v550
      %567 = vmatprep.subr.bf16.mxu0 0
      %568 = vmatpush1.bf16.msra.mxu0 %v549
      %569 = vmatprep.subr.bf16.mxu0 0
      %570 = vmatpush1.bf16.msra.mxu0 %v548
      %571 = vmatprep.subr.bf16.mxu0 0
      %572 = vmatpush1.bf16.msra.mxu0 %v547
      %573 = vmatprep.subr.bf16.mxu0 0
      %574 = vmatpush1.bf16.msra.mxu0 %v546
      %575 = vmatprep.subr.bf16.mxu0 0
      %576 = vmatpush1.bf16.msra.mxu0 %v545
      %577 = vmatprep.subr.bf16.mxu0 0
      %578 = vmatpush2.bf16.msra.mxu0 0
      %579 = vmatprep.subr.bf16.mxu0 0
      %580 = vmatpush2.bf16.msra.mxu0 0
      %581 = vmatprep.subr.bf16.mxu0 0
      %582 = vmatpush2.bf16.msra.mxu0 0
      %583 = vmatprep.subr.bf16.mxu0 0
      %584 = vmatpush2.bf16.msra.mxu0 0
      %585 = vmatprep.subr.bf16.mxu0 0
      %586 = vmatpush2.bf16.msra.mxu0 0
      %587 = vmatprep.subr.bf16.mxu0 0
      %588 = vmatpush2.bf16.msra.mxu0 0
      %589 = vmatprep.subr.bf16.mxu0 0
      %590 = vmatpush2.bf16.msra.mxu0 0
      %591 = vmatprep.subr.bf16.mxu0 0
      %592 = vmatpush2.bf16.msra.mxu0 0
      %593 = vmatprep.mubr.bf16.mxu0 0
      %594 = vmatmul.mubr.bf16.gmra.mxu0 %v481
      %v595 = vpop.f32.mrf.mxu0
      %v596 = vadd.f32 0.0, %v595
      %v597 = vpop.f32.mrf.mxu0
      %v598 = vpop.f32.mrf.mxu0
      %v599 = vadd.f32 0.0, %v598
      %v600 = vpop.f32.mrf.mxu0
      %601 = vmatprep.mubr.bf16.mxu0 0
      %602 = vmatmul.mubr.bf16.gmra.mxu0 %v482
      %v603 = vpop.f32.mrf.mxu0
      %v604 = vadd.f32 0.0, %v603
      %v605 = vpop.f32.mrf.mxu0
      %v606 = vpop.f32.mrf.mxu0
      %v607 = vadd.f32 0.0, %v606
      %v608 = vpop.f32.mrf.mxu0
      %609 = vmatprep.mubr.bf16.mxu0 0
      %610 = vmatmul.mubr.bf16.gmra.mxu0 %v483
      %v611 = vpop.f32.mrf.mxu0
      %v612 = vadd.f32 0.0, %v611
      %v613 = vpop.f32.mrf.mxu0
      %v614 = vpop.f32.mrf.mxu0
      %v615 = vadd.f32 0.0, %v614
      %v616 = vpop.f32.mrf.mxu0
      %617 = vmatprep.mubr.bf16.mxu0 0
      %618 = vmatmul.mubr.bf16.gmra.mxu0 %v484
      %v619 = vpop.f32.mrf.mxu0
      %v620 = vadd.f32 0.0, %v619
      %v621 = vpop.f32.mrf.mxu0
      %v622 = vpop.f32.mrf.mxu0
      %v623 = vadd.f32 0.0, %v622
      %v624 = vpop.f32.mrf.mxu0
      %625 = vmatprep.mubr.bf16.mxu0 0
      %626 = vmatmul.mubr.bf16.gmra.mxu0 %v485
      %v627 = vpop.f32.mrf.mxu0
      %v628 = vadd.f32 0.0, %v627
      %v629 = vpop.f32.mrf.mxu0
      %v630 = vpop.f32.mrf.mxu0
      %v631 = vadd.f32 0.0, %v630
      %v632 = vpop.f32.mrf.mxu0
      %633 = vmatprep.mubr.bf16.mxu0 0
      %634 = vmatmul.mubr.bf16.gmra.mxu0 %v486
      %v635 = vpop.f32.mrf.mxu0
      %v636 = vadd.f32 0.0, %v635
      %v637 = vpop.f32.mrf.mxu0
      %v638 = vpop.f32.mrf.mxu0
      %v639 = vadd.f32 0.0, %v638
      %v640 = vpop.f32.mrf.mxu0
      %641 = vmatprep.mubr.bf16.mxu0 0
      %642 = vmatmul.mubr.bf16.gmra.mxu0 %v487
      %v643 = vpop.f32.mrf.mxu0
      %v644 = vadd.f32 0.0, %v643
      %v645 = vpop.f32.mrf.mxu0
      %v646 = vpop.f32.mrf.mxu0
      %v647 = vadd.f32 0.0, %v646
      %v648 = vpop.f32.mrf.mxu0
      %649 = vmatprep.mubr.bf16.mxu0 0
      %650 = vmatmul.mubr.bf16.gmra.mxu0 %v488
      %v651 = vpop.f32.mrf.mxu0
      %v652 = vadd.f32 0.0, %v651
      %v653 = vpop.f32.mrf.mxu0
      %v654 = vpop.f32.mrf.mxu0
      %v655 = vadd.f32 0.0, %v654
      %v656 = vpop.f32.mrf.mxu0
      %657 = vmatprep.mubr.bf16.mxu0 0
      %658 = vmatmul.mubr.bf16.gmra.mxu0 %v489
      %v659 = vpop.f32.mrf.mxu0
      %v660 = vadd.f32 0.0, %v659
      %v661 = vpop.f32.mrf.mxu0
      %v662 = vpop.f32.mrf.mxu0
      %v663 = vadd.f32 0.0, %v662
      %v664 = vpop.f32.mrf.mxu0
      %665 = vmatprep.mubr.bf16.mxu0 0
      %666 = vmatmul.mubr.bf16.gmra.mxu0 %v490
      %v667 = vpop.f32.mrf.mxu0
      %v668 = vadd.f32 0.0, %v667
      %v669 = vpop.f32.mrf.mxu0
      %v670 = vpop.f32.mrf.mxu0
      %v671 = vadd.f32 0.0, %v670
      %v672 = vpop.f32.mrf.mxu0
      %673 = vmatprep.mubr.bf16.mxu0 0
      %674 = vmatmul.mubr.bf16.gmra.mxu0 %v491
      %v675 = vpop.f32.mrf.mxu0
      %v676 = vadd.f32 0.0, %v675
      %v677 = vpop.f32.mrf.mxu0
      %v678 = vpop.f32.mrf.mxu0
      %v679 = vadd.f32 0.0, %v678
      %v680 = vpop.f32.mrf.mxu0
      %681 = vmatprep.mubr.bf16.mxu0 0
      %682 = vmatmul.mubr.bf16.gmra.mxu0 %v492
      %v683 = vpop.f32.mrf.mxu0
      %v684 = vadd.f32 0.0, %v683
      %v685 = vpop.f32.mrf.mxu0
      %v686 = vpop.f32.mrf.mxu0
      %v687 = vadd.f32 0.0, %v686
      %v688 = vpop.f32.mrf.mxu0
      %689 = vmatprep.mubr.bf16.mxu0 0
      %690 = vmatmul.mubr.bf16.gmra.mxu0 %v493
      %v691 = vpop.f32.mrf.mxu0
      %v692 = vadd.f32 0.0, %v691
      %v693 = vpop.f32.mrf.mxu0
      %v694 = vpop.f32.mrf.mxu0
      %v695 = vadd.f32 0.0, %v694
      %v696 = vpop.f32.mrf.mxu0
      %697 = vmatprep.mubr.bf16.mxu0 0
      %698 = vmatmul.mubr.bf16.gmra.mxu0 %v494
      %v699 = vpop.f32.mrf.mxu0
      %v700 = vadd.f32 0.0, %v699
      %v701 = vpop.f32.mrf.mxu0
      %v702 = vpop.f32.mrf.mxu0
      %v703 = vadd.f32 0.0, %v702
      %v704 = vpop.f32.mrf.mxu0
      %705 = vmatprep.mubr.bf16.mxu0 0
      %706 = vmatmul.mubr.bf16.gmra.mxu0 %v495
      %v707 = vpop.f32.mrf.mxu0
      %v708 = vadd.f32 0.0, %v707
      %v709 = vpop.f32.mrf.mxu0
      %v710 = vpop.f32.mrf.mxu0
      %v711 = vadd.f32 0.0, %v710
      %v712 = vpop.f32.mrf.mxu0
      %713 = vmatprep.mubr.bf16.mxu0 0
      %714 = vmatmul.mubr.bf16.gmra.mxu0 %v496
      %v715 = vpop.f32.mrf.mxu0
      %v716 = vadd.f32 0.0, %v715
      %v717 = vpop.f32.mrf.mxu0
      %v718 = vpop.f32.mrf.mxu0
      %v719 = vadd.f32 0.0, %v718
      %v720 = vpop.f32.mrf.mxu0
      %721 = vdwg.mxu0
      %v722 = vadd.f32 %v337, %v596
      %v723 = vadd.f32 %v338, %v599
      %v724 = vadd.f32 %v339, %v604
      %v725 = vadd.f32 %v340, %v607
      %v726 = vadd.f32 %v341, %v612
      %v727 = vadd.f32 %v342, %v615
      %v728 = vadd.f32 %v343, %v620
      %v729 = vadd.f32 %v344, %v623
      %v730 = vadd.f32 %v345, %v628
      %v731 = vadd.f32 %v346, %v631
      %v732 = vadd.f32 %v347, %v636
      %v733 = vadd.f32 %v348, %v639
      %v734 = vadd.f32 %v349, %v644
      %v735 = vadd.f32 %v350, %v647
      %v736 = vadd.f32 %v351, %v652
      %v737 = vadd.f32 %v352, %v655
      %v738 = vadd.f32 %v353, %v660
      %v739 = vadd.f32 %v354, %v663
      %v740 = vadd.f32 %v355, %v668
      %v741 = vadd.f32 %v356, %v671
      %v742 = vadd.f32 %v357, %v676
      %v743 = vadd.f32 %v358, %v679
      %v744 = vadd.f32 %v359, %v684
      %v745 = vadd.f32 %v360, %v687
      %v746 = vadd.f32 %v361, %v692
      %v747 = vadd.f32 %v362, %v695
      %v748 = vadd.f32 %v363, %v700
      %v749 = vadd.f32 %v364, %v703
      %v750 = vadd.f32 %v365, %v708
      %v751 = vadd.f32 %v366, %v711
      %v752 = vadd.f32 %v367, %v716
      %v753 = vadd.f32 %v368, %v719
      %754 = vst [vmem:[#allocation2] sm:$0xff] %v722
      %755 = vst [vmem:[#allocation2 + $0x8] sm:$0xff] %v723
      %756 = vst [vmem:[#allocation2 + $0x10] sm:$0xff] %v724
      %757 = vst [vmem:[#allocation2 + $0x18] sm:$0xff] %v725
      %758 = vst [vmem:[#allocation2 + $0x20] sm:$0xff] %v726
      %759 = vst [vmem:[#allocation2 + $0x28] sm:$0xff] %v727
      %760 = vst [vmem:[#allocation2 + $0x30] sm:$0xff] %v728
      %761 = vst [vmem:[#allocation2 + $0x38] sm:$0xff] %v729
      %762 = vst [vmem:[#allocation2 + $0x40] sm:$0xff] %v730
      %763 = vst [vmem:[#allocation2 + $0x48] sm:$0xff] %v731
      %764 = vst [vmem:[#allocation2 + $0x50] sm:$0xff] %v732
      %765 = vst [vmem:[#allocation2 + $0x58] sm:$0xff] %v733
      %766 = vst [vmem:[#allocation2 + $0x60] sm:$0xff] %v734
      %767 = vst [vmem:[#allocation2 + $0x68] sm:$0xff] %v735
      %768 = vst [vmem:[#allocation2 + $0x70] sm:$0xff] %v736
      %769 = vst [vmem:[#allocation2 + $0x78] sm:$0xff] %v737
      %770 = vst [vmem:[#allocation2 + $0x80] sm:$0xff] %v738
      %771 = vst [vmem:[#allocation2 + $0x88] sm:$0xff] %v739
      %772 = vst [vmem:[#allocation2 + $0x90] sm:$0xff] %v740
      %773 = vst [vmem:[#allocation2 + $0x98] sm:$0xff] %v741
      %774 = vst [vmem:[#allocation2 + $0xa0] sm:$0xff] %v742
      %775 = vst [vmem:[#allocation2 + $0xa8] sm:$0xff] %v743
      %776 = vst [vmem:[#allocation2 + $0xb0] sm:$0xff] %v744
      %777 = vst [vmem:[#allocation2 + $0xb8] sm:$0xff] %v745
      %778 = vst [vmem:[#allocation2 + $0xc0] sm:$0xff] %v746
      %779 = vst [vmem:[#allocation2 + $0xc8] sm:$0xff] %v747
      %780 = vst [vmem:[#allocation2 + $0xd0] sm:$0xff] %v748
      %781 = vst [vmem:[#allocation2 + $0xd8] sm:$0xff] %v749
      %782 = vst [vmem:[#allocation2 + $0xe0] sm:$0xff] %v750
      %783 = vst [vmem:[#allocation2 + $0xe8] sm:$0xff] %v751
      %784 = vst [vmem:[#allocation2 + $0xf0] sm:$0xff] %v752
      %785 = vst [vmem:[#allocation2 + $0xf8] sm:$0xff] %v753
      // Predicated region
      $region41: #{neck_forward.46} parent=35 // pred_check
        %p786 = pneg %p301
      $region42: #{neck_forward.46} parent=35 // pred_check_branch
        %788 = sbr.rel (%p786) target = $region44
      $region43: #{neck_forward.46} parent=35 // pred_region
        %v789 = vld [vmem:[#allocation2] sm:$0xff]
        %v790 = vld [vmem:[#allocation2 + $0x8] sm:$0xff]
        %v791 = vld [vmem:[#allocation2 + $0x10] sm:$0xff]
        %v792 = vld [vmem:[#allocation2 + $0x18] sm:$0xff]
        %v793 = vld [vmem:[#allocation2 + $0x20] sm:$0xff]
        %v794 = vld [vmem:[#allocation2 + $0x28] sm:$0xff]
        %v795 = vld [vmem:[#allocation2 + $0x30] sm:$0xff]
        %v796 = vld [vmem:[#allocation2 + $0x38] sm:$0xff]
        %v797 = vld [vmem:[#allocation2 + $0x40] sm:$0xff]
        %v798 = vld [vmem:[#allocation2 + $0x48] sm:$0xff]
        %v799 = vld [vmem:[#allocation2 + $0x50] sm:$0xff]
        %v800 = vld [vmem:[#allocation2 + $0x58] sm:$0xff]
        %v801 = vld [vmem:[#allocation2 + $0x60] sm:$0xff]
        %v802 = vld [vmem:[#allocation2 + $0x68] sm:$0xff]
        %v803 = vld [vmem:[#allocation2 + $0x70] sm:$0xff]
        %v804 = vld [vmem:[#allocation2 + $0x78] sm:$0xff]
        %v805 = vld [vmem:[#allocation2 + $0x80] sm:$0xff]
        %v806 = vld [vmem:[#allocation2 + $0x88] sm:$0xff]
        %v807 = vld [vmem:[#allocation2 + $0x90] sm:$0xff]
        %v808 = vld [vmem:[#allocation2 + $0x98] sm:$0xff]
        %v809 = vld [vmem:[#allocation2 + $0xa0] sm:$0xff]
        %v810 = vld [vmem:[#allocation2 + $0xa8] sm:$0xff]
        %v811 = vld [vmem:[#allocation2 + $0xb0] sm:$0xff]
        %v812 = vld [vmem:[#allocation2 + $0xb8] sm:$0xff]
        %v813 = vld [vmem:[#allocation2 + $0xc0] sm:$0xff]
        %v814 = vld [vmem:[#allocation2 + $0xc8] sm:$0xff]
        %v815 = vld [vmem:[#allocation2 + $0xd0] sm:$0xff]
        %v816 = vld [vmem:[#allocation2 + $0xd8] sm:$0xff]
        %v817 = vld [vmem:[#allocation2 + $0xe0] sm:$0xff]
        %v818 = vld [vmem:[#allocation2 + $0xe8] sm:$0xff]
        %v819 = vld [vmem:[#allocation2 + $0xf0] sm:$0xff]
        %v820 = vld [vmem:[#allocation2 + $0xf8] sm:$0xff]
        %v821 = vld [vmem:[%s287] sm:$0x1]
        %v823 = vlaneseq
        %v824 = vshrl.u32 %v823, 7
        %v825 = vsub.s32 0, %v824
        %v826 = vrot.slane %v821, %v825
        %v828 = vmul.f32 %v789, %v826
        %v829 = vmul.f32 %v790, %v826
        %v830 = vmul.f32 %v791, %v826
        %v831 = vmul.f32 %v792, %v826
        %v832 = vmul.f32 %v793, %v826
        %v833 = vmul.f32 %v794, %v826
        %v834 = vmul.f32 %v795, %v826
        %v835 = vmul.f32 %v796, %v826
        %v836 = vmul.f32 %v797, %v826
        %v837 = vmul.f32 %v798, %v826
        %v838 = vmul.f32 %v799, %v826
        %v839 = vmul.f32 %v800, %v826
        %v840 = vmul.f32 %v801, %v826
        %v841 = vmul.f32 %v802, %v826
        %v842 = vmul.f32 %v803, %v826
        %v843 = vmul.f32 %v804, %v826
        %v844 = vmul.f32 %v805, %v826
        %v845 = vmul.f32 %v806, %v826
        %v846 = vmul.f32 %v807, %v826
        %v847 = vmul.f32 %v808, %v826
        %v848 = vmul.f32 %v809, %v826
        %v849 = vmul.f32 %v810, %v826
        %v850 = vmul.f32 %v811, %v826
        %v851 = vmul.f32 %v812, %v826
        %v852 = vmul.f32 %v813, %v826
        %v853 = vmul.f32 %v814, %v826
        %v854 = vmul.f32 %v815, %v826
        %v855 = vmul.f32 %v816, %v826
        %v856 = vmul.f32 %v817, %v826
        %v857 = vmul.f32 %v818, %v826
        %v858 = vmul.f32 %v819, %v826
        %v859 = vmul.f32 %v820, %v826
        %v860 = vld [vmem:[%s290] sm:$0x1]
        %v862 = vlaneseq
        %v863 = vshrl.u32 %v862, 7
        %v864 = vsub.s32 0, %v863
        %v865 = vrot.slane %v860, %v864
        %v867 = vadd.f32 %v828, %v865
        %v868 = vadd.f32 %v829, %v865
        %v869 = vadd.f32 %v830, %v865
        %v870 = vadd.f32 %v831, %v865
        %v871 = vadd.f32 %v832, %v865
        %v872 = vadd.f32 %v833, %v865
        %v873 = vadd.f32 %v834, %v865
        %v874 = vadd.f32 %v835, %v865
        %v875 = vadd.f32 %v836, %v865
        %v876 = vadd.f32 %v837, %v865
        %v877 = vadd.f32 %v838, %v865
        %v878 = vadd.f32 %v839, %v865
        %v879 = vadd.f32 %v840, %v865
        %v880 = vadd.f32 %v841, %v865
        %v881 = vadd.f32 %v842, %v865
        %v882 = vadd.f32 %v843, %v865
        %v883 = vadd.f32 %v844, %v865
        %v884 = vadd.f32 %v845, %v865
        %v885 = vadd.f32 %v846, %v865
        %v886 = vadd.f32 %v847, %v865
        %v887 = vadd.f32 %v848, %v865
        %v888 = vadd.f32 %v849, %v865
        %v889 = vadd.f32 %v850, %v865
        %v890 = vadd.f32 %v851, %v865
        %v891 = vadd.f32 %v852, %v865
        %v892 = vadd.f32 %v853, %v865
        %v893 = vadd.f32 %v854, %v865
        %v894 = vadd.f32 %v855, %v865
        %v895 = vadd.f32 %v856, %v865
        %v896 = vadd.f32 %v857, %v865
        %v897 = vadd.f32 %v858, %v865
        %v898 = vadd.f32 %v859, %v865
        %v899 = vxor.u32 %v867, 2147483648
        %v900 = vxor.u32 %v868, 2147483648
        %v901 = vxor.u32 %v869, 2147483648
        %v902 = vxor.u32 %v870, 2147483648
        %v903 = vxor.u32 %v871, 2147483648
        %v904 = vxor.u32 %v872, 2147483648
        %v905 = vxor.u32 %v873, 2147483648
        %v906 = vxor.u32 %v874, 2147483648
        %v907 = vxor.u32 %v875, 2147483648
        %v908 = vxor.u32 %v876, 2147483648
        %v909 = vxor.u32 %v877, 2147483648
        %v910 = vxor.u32 %v878, 2147483648
        %v911 = vxor.u32 %v879, 2147483648
        %v912 = vxor.u32 %v880, 2147483648
        %v913 = vxor.u32 %v881, 2147483648
        %v914 = vxor.u32 %v882, 2147483648
        %v915 = vxor.u32 %v883, 2147483648
        %v916 = vxor.u32 %v884, 2147483648
        %v917 = vxor.u32 %v885, 2147483648
        %v918 = vxor.u32 %v886, 2147483648
        %v919 = vxor.u32 %v887, 2147483648
        %v920 = vxor.u32 %v888, 2147483648
        %v921 = vxor.u32 %v889, 2147483648
        %v922 = vxor.u32 %v890, 2147483648
        %v923 = vxor.u32 %v891, 2147483648
        %v924 = vxor.u32 %v892, 2147483648
        %v925 = vxor.u32 %v893, 2147483648
        %v926 = vxor.u32 %v894, 2147483648
        %v927 = vxor.u32 %v895, 2147483648
        %v928 = vxor.u32 %v896, 2147483648
        %v929 = vxor.u32 %v897, 2147483648
        %v930 = vxor.u32 %v898, 2147483648
        %v931 = vmul.f32 %v899, 1.442695
        %v932 = vpow.pop %v931
        %v933 = vmul.f32 %v900, 1.442695
        %v934 = vpow.pop %v933
        %v935 = vmul.f32 %v901, 1.442695
        %v936 = vpow.pop %v935
        %v937 = vmul.f32 %v902, 1.442695
        %v938 = vpow.pop %v937
        %v939 = vmul.f32 %v903, 1.442695
        %v940 = vpow.pop %v939
        %v941 = vmul.f32 %v904, 1.442695
        %v942 = vpow.pop %v941
        %v943 = vmul.f32 %v905, 1.442695
        %v944 = vpow.pop %v943
        %v945 = vmul.f32 %v906, 1.442695
        %v946 = vpow.pop %v945
        %v947 = vmul.f32 %v907, 1.442695
        %v948 = vpow.pop %v947
        %v949 = vmul.f32 %v908, 1.442695
        %v950 = vpow.pop %v949
        %v951 = vmul.f32 %v909, 1.442695
        %v952 = vpow.pop %v951
        %v953 = vmul.f32 %v910, 1.442695
        %v954 = vpow.pop %v953
        %v955 = vmul.f32 %v911, 1.442695
        %v956 = vpow.pop %v955
        %v957 = vmul.f32 %v912, 1.442695
        %v958 = vpow.pop %v957
        %v959 = vmul.f32 %v913, 1.442695
        %v960 = vpow.pop %v959
        %v961 = vmul.f32 %v914, 1.442695
        %v962 = vpow.pop %v961
        %v963 = vmul.f32 %v915, 1.442695
        %v964 = vpow.pop %v963
        %v965 = vmul.f32 %v916, 1.442695
        %v966 = vpow.pop %v965
        %v967 = vmul.f32 %v917, 1.442695
        %v968 = vpow.pop %v967
        %v969 = vmul.f32 %v918, 1.442695
        %v970 = vpow.pop %v969
        %v971 = vmul.f32 %v919, 1.442695
        %v972 = vpow.pop %v971
        %v973 = vmul.f32 %v920, 1.442695
        %v974 = vpow.pop %v973
        %v975 = vmul.f32 %v921, 1.442695
        %v976 = vpow.pop %v975
        %v977 = vmul.f32 %v922, 1.442695
        %v978 = vpow.pop %v977
        %v979 = vmul.f32 %v923, 1.442695
        %v980 = vpow.pop %v979
        %v981 = vmul.f32 %v924, 1.442695
        %v982 = vpow.pop %v981
        %v983 = vmul.f32 %v925, 1.442695
        %v984 = vpow.pop %v983
        %v985 = vmul.f32 %v926, 1.442695
        %v986 = vpow.pop %v985
        %v987 = vmul.f32 %v927, 1.442695
        %v988 = vpow.pop %v987
        %v989 = vmul.f32 %v928, 1.442695
        %v990 = vpow.pop %v989
        %v991 = vmul.f32 %v929, 1.442695
        %v992 = vpow.pop %v991
        %v993 = vmul.f32 %v930, 1.442695
        %v994 = vpow.pop %v993
        %v995 = vadd.f32 %v932, 1.0
        %v996 = vadd.f32 %v934, 1.0
        %v997 = vadd.f32 %v936, 1.0
        %v998 = vadd.f32 %v938, 1.0
        %v999 = vadd.f32 %v940, 1.0
        %v1000 = vadd.f32 %v942, 1.0
        %v1001 = vadd.f32 %v944, 1.0
        %v1002 = vadd.f32 %v946, 1.0
        %v1003 = vadd.f32 %v948, 1.0
        %v1004 = vadd.f32 %v950, 1.0
        %v1005 = vadd.f32 %v952, 1.0
        %v1006 = vadd.f32 %v954, 1.0
        %v1007 = vadd.f32 %v956, 1.0
        %v1008 = vadd.f32 %v958, 1.0
        %v1009 = vadd.f32 %v960, 1.0
        %v1010 = vadd.f32 %v962, 1.0
        %v1011 = vadd.f32 %v964, 1.0
        %v1012 = vadd.f32 %v966, 1.0
        %v1013 = vadd.f32 %v968, 1.0
        %v1014 = vadd.f32 %v970, 1.0
        %v1015 = vadd.f32 %v972, 1.0
        %v1016 = vadd.f32 %v974, 1.0
        %v1017 = vadd.f32 %v976, 1.0
        %v1018 = vadd.f32 %v978, 1.0
        %v1019 = vadd.f32 %v980, 1.0
        %v1020 = vadd.f32 %v982, 1.0
        %v1021 = vadd.f32 %v984, 1.0
        %v1022 = vadd.f32 %v986, 1.0
        %v1023 = vadd.f32 %v988, 1.0
        %v1024 = vadd.f32 %v990, 1.0
        %v1025 = vadd.f32 %v992, 1.0
        %v1026 = vadd.f32 %v994, 1.0
        %v1027 = vrcp.pop %v995
        %v1028 = vmul.f32 1.0, %v1027
        %v1029 = vrcp.pop %v996
        %v1030 = vmul.f32 1.0, %v1029
        %v1031 = vrcp.pop %v997
        %v1032 = vmul.f32 1.0, %v1031
        %v1033 = vrcp.pop %v998
        %v1034 = vmul.f32 1.0, %v1033
        %v1035 = vrcp.pop %v999
        %v1036 = vmul.f32 1.0, %v1035
        %v1037 = vrcp.pop %v1000
        %v1038 = vmul.f32 1.0, %v1037
        %v1039 = vrcp.pop %v1001
        %v1040 = vmul.f32 1.0, %v1039
        %v1041 = vrcp.pop %v1002
        %v1042 = vmul.f32 1.0, %v1041
        %v1043 = vrcp.pop %v1003
        %v1044 = vmul.f32 1.0, %v1043
        %v1045 = vrcp.pop %v1004
        %v1046 = vmul.f32 1.0, %v1045
        %v1047 = vrcp.pop %v1005
        %v1048 = vmul.f32 1.0, %v1047
        %v1049 = vrcp.pop %v1006
        %v1050 = vmul.f32 1.0, %v1049
        %v1051 = vrcp.pop %v1007
        %v1052 = vmul.f32 1.0, %v1051
        %v1053 = vrcp.pop %v1008
        %v1054 = vmul.f32 1.0, %v1053
        %v1055 = vrcp.pop %v1009
        %v1056 = vmul.f32 1.0, %v1055
        %v1057 = vrcp.pop %v1010
        %v1058 = vmul.f32 1.0, %v1057
        %v1059 = vrcp.pop %v1011
        %v1060 = vmul.f32 1.0, %v1059
        %v1061 = vrcp.pop %v1012
        %v1062 = vmul.f32 1.0, %v1061
        %v1063 = vrcp.pop %v1013
        %v1064 = vmul.f32 1.0, %v1063
        %v1065 = vrcp.pop %v1014
        %v1066 = vmul.f32 1.0, %v1065
        %v1067 = vrcp.pop %v1015
        %v1068 = vmul.f32 1.0, %v1067
        %v1069 = vrcp.pop %v1016
        %v1070 = vmul.f32 1.0, %v1069
        %v1071 = vrcp.pop %v1017
        %v1072 = vmul.f32 1.0, %v1071
        %v1073 = vrcp.pop %v1018
        %v1074 = vmul.f32 1.0, %v1073
        %v1075 = vrcp.pop %v1019
        %v1076 = vmul.f32 1.0, %v1075
        %v1077 = vrcp.pop %v1020
        %v1078 = vmul.f32 1.0, %v1077
        %v1079 = vrcp.pop %v1021
        %v1080 = vmul.f32 1.0, %v1079
        %v1081 = vrcp.pop %v1022
        %v1082 = vmul.f32 1.0, %v1081
        %v1083 = vrcp.pop %v1023
        %v1084 = vmul.f32 1.0, %v1083
        %v1085 = vrcp.pop %v1024
        %v1086 = vmul.f32 1.0, %v1085
        %v1087 = vrcp.pop %v1025
        %v1088 = vmul.f32 1.0, %v1087
        %v1089 = vrcp.pop %v1026
        %v1090 = vmul.f32 1.0, %v1089
        %v1091 = vmul.f32 %v867, %v1028
        %v1092 = vmul.f32 %v868, %v1030
        %v1093 = vmul.f32 %v869, %v1032
        %v1094 = vmul.f32 %v870, %v1034
        %v1095 = vmul.f32 %v871, %v1036
        %v1096 = vmul.f32 %v872, %v1038
        %v1097 = vmul.f32 %v873, %v1040
        %v1098 = vmul.f32 %v874, %v1042
        %v1099 = vmul.f32 %v875, %v1044
        %v1100 = vmul.f32 %v876, %v1046
        %v1101 = vmul.f32 %v877, %v1048
        %v1102 = vmul.f32 %v878, %v1050
        %v1103 = vmul.f32 %v879, %v1052
        %v1104 = vmul.f32 %v880, %v1054
        %v1105 = vmul.f32 %v881, %v1056
        %v1106 = vmul.f32 %v882, %v1058
        %v1107 = vmul.f32 %v883, %v1060
        %v1108 = vmul.f32 %v884, %v1062
        %v1109 = vmul.f32 %v885, %v1064
        %v1110 = vmul.f32 %v886, %v1066
        %v1111 = vmul.f32 %v887, %v1068
        %v1112 = vmul.f32 %v888, %v1070
        %v1113 = vmul.f32 %v889, %v1072
        %v1114 = vmul.f32 %v890, %v1074
        %v1115 = vmul.f32 %v891, %v1076
        %v1116 = vmul.f32 %v892, %v1078
        %v1117 = vmul.f32 %v893, %v1080
        %v1118 = vmul.f32 %v894, %v1082
        %v1119 = vmul.f32 %v895, %v1084
        %v1120 = vmul.f32 %v896, %v1086
        %v1121 = vmul.f32 %v897, %v1088
        %v1122 = vmul.f32 %v898, %v1090
        %v1123 = vpack.c.bf16 %v1092, %v1091
        %v1124 = vpack.c.bf16 %v1094, %v1093
        %v1125 = vpack.c.bf16 %v1096, %v1095
        %v1126 = vpack.c.bf16 %v1098, %v1097
        %v1127 = vpack.c.bf16 %v1100, %v1099
        %v1128 = vpack.c.bf16 %v1102, %v1101
        %v1129 = vpack.c.bf16 %v1104, %v1103
        %v1130 = vpack.c.bf16 %v1106, %v1105
        %v1131 = vpack.c.bf16 %v1108, %v1107
        %v1132 = vpack.c.bf16 %v1110, %v1109
        %v1133 = vpack.c.bf16 %v1112, %v1111
        %v1134 = vpack.c.bf16 %v1114, %v1113
        %v1135 = vpack.c.bf16 %v1116, %v1115
        %v1136 = vpack.c.bf16 %v1118, %v1117
        %v1137 = vpack.c.bf16 %v1120, %v1119
        %v1138 = vpack.c.bf16 %v1122, %v1121
        %v1155 = vunpack.c.l.b16 %v1123
        %v1156 = vunpack.c.h.b16 %v1123
        %v1157 = vunpack.c.l.b16 %v1124
        %v1158 = vunpack.c.h.b16 %v1124
        %v1159 = vunpack.c.l.b16 %v1125
        %v1160 = vunpack.c.h.b16 %v1125
        %v1161 = vunpack.c.l.b16 %v1126
        %v1162 = vunpack.c.h.b16 %v1126
        %v1163 = vunpack.c.l.b16 %v1127
        %v1164 = vunpack.c.h.b16 %v1127
        %v1165 = vunpack.c.l.b16 %v1128
        %v1166 = vunpack.c.h.b16 %v1128
        %v1167 = vunpack.c.l.b16 %v1129
        %v1168 = vunpack.c.h.b16 %v1129
        %v1169 = vunpack.c.l.b16 %v1130
        %v1170 = vunpack.c.h.b16 %v1130
        %v1171 = vunpack.c.l.b16 %v1131
        %v1172 = vunpack.c.h.b16 %v1131
        %v1173 = vunpack.c.l.b16 %v1132
        %v1174 = vunpack.c.h.b16 %v1132
        %v1175 = vunpack.c.l.b16 %v1133
        %v1176 = vunpack.c.h.b16 %v1133
        %v1177 = vunpack.c.l.b16 %v1134
        %v1178 = vunpack.c.h.b16 %v1134
        %v1179 = vunpack.c.l.b16 %v1135
        %v1180 = vunpack.c.h.b16 %v1135
        %v1181 = vunpack.c.l.b16 %v1136
        %v1182 = vunpack.c.h.b16 %v1136
        %v1183 = vunpack.c.l.b16 %v1137
        %v1184 = vunpack.c.h.b16 %v1137
        %v1185 = vunpack.c.l.b16 %v1138
        %v1186 = vunpack.c.h.b16 %v1138
        %v1187 = vpack.c.b16 %v1155, %v1155
        %v1188 = vpack.c.b16 %v1156, %v1156
        %v1189 = vpack.c.b16 %v1157, %v1157
        %v1190 = vpack.c.b16 %v1158, %v1158
        %v1191 = vpack.c.b16 %v1159, %v1159
        %v1192 = vpack.c.b16 %v1160, %v1160
        %v1193 = vpack.c.b16 %v1161, %v1161
        %v1194 = vpack.c.b16 %v1162, %v1162
        %v1195 = vpack.c.b16 %v1163, %v1163
        %v1196 = vpack.c.b16 %v1164, %v1164
        %v1197 = vpack.c.b16 %v1165, %v1165
        %v1198 = vpack.c.b16 %v1166, %v1166
        %v1199 = vpack.c.b16 %v1167, %v1167
        %v1200 = vpack.c.b16 %v1168, %v1168
        %v1201 = vpack.c.b16 %v1169, %v1169
        %v1202 = vpack.c.b16 %v1170, %v1170
        %v1203 = vpack.c.b16 %v1171, %v1171
        %v1204 = vpack.c.b16 %v1172, %v1172
        %v1205 = vpack.c.b16 %v1173, %v1173
        %v1206 = vpack.c.b16 %v1174, %v1174
        %v1207 = vpack.c.b16 %v1175, %v1175
        %v1208 = vpack.c.b16 %v1176, %v1176
        %v1209 = vpack.c.b16 %v1177, %v1177
        %v1210 = vpack.c.b16 %v1178, %v1178
        %v1211 = vpack.c.b16 %v1179, %v1179
        %v1212 = vpack.c.b16 %v1180, %v1180
        %v1213 = vpack.c.b16 %v1181, %v1181
        %v1214 = vpack.c.b16 %v1182, %v1182
        %v1215 = vpack.c.b16 %v1183, %v1183
        %v1216 = vpack.c.b16 %v1184, %v1184
        %v1217 = vpack.c.b16 %v1185, %v1185
        %v1218 = vpack.c.b16 %v1186, %v1186
        %1251 = vst [vmem:[%s298] sm:$0xf] %v1187
        %1252 = vst [vmem:[%s298 + $0x4] sm:$0xf] %v1188
        %1253 = vst [vmem:[%s298 + $0x8] sm:$0xf] %v1189
        %1254 = vst [vmem:[%s298 + $0xc] sm:$0xf] %v1190
        %1255 = vst [vmem:[%s298 + $0x10] sm:$0xf] %v1191
        %1256 = vst [vmem:[%s298 + $0x14] sm:$0xf] %v1192
        %1257 = vst [vmem:[%s298 + $0x18] sm:$0xf] %v1193
        %1258 = vst [vmem:[%s298 + $0x1c] sm:$0xf] %v1194
        %1259 = vst [vmem:[%s298 + $0x20] sm:$0xf] %v1195
        %1260 = vst [vmem:[%s298 + $0x24] sm:$0xf] %v1196
        %1261 = vst [vmem:[%s298 + $0x28] sm:$0xf] %v1197
        %1262 = vst [vmem:[%s298 + $0x2c] sm:$0xf] %v1198
        %1263 = vst [vmem:[%s298 + $0x30] sm:$0xf] %v1199
        %1264 = vst [vmem:[%s298 + $0x34] sm:$0xf] %v1200
        %1265 = vst [vmem:[%s298 + $0x38] sm:$0xf] %v1201
        %1266 = vst [vmem:[%s298 + $0x3c] sm:$0xf] %v1202
        %1267 = vst [vmem:[%s298 + $0x40] sm:$0xf] %v1203
        %1268 = vst [vmem:[%s298 + $0x44] sm:$0xf] %v1204
        %1269 = vst [vmem:[%s298 + $0x48] sm:$0xf] %v1205
        %1270 = vst [vmem:[%s298 + $0x4c] sm:$0xf] %v1206
        %1271 = vst [vmem:[%s298 + $0x50] sm:$0xf] %v1207
        %1272 = vst [vmem:[%s298 + $0x54] sm:$0xf] %v1208
        %1273 = vst [vmem:[%s298 + $0x58] sm:$0xf] %v1209
        %1274 = vst [vmem:[%s298 + $0x5c] sm:$0xf] %v1210
        %1275 = vst [vmem:[%s298 + $0x60] sm:$0xf] %v1211
        %1276 = vst [vmem:[%s298 + $0x64] sm:$0xf] %v1212
        %1277 = vst [vmem:[%s298 + $0x68] sm:$0xf] %v1213
        %1278 = vst [vmem:[%s298 + $0x6c] sm:$0xf] %v1214
        %1279 = vst [vmem:[%s298 + $0x70] sm:$0xf] %v1215
        %1280 = vst [vmem:[%s298 + $0x74] sm:$0xf] %v1216
        %1281 = vst [vmem:[%s298 + $0x78] sm:$0xf] %v1217
        %1282 = vst [vmem:[%s298 + $0x7c] sm:$0xf] %v1218
      $region44: #{neck_forward.46} parent=35 // pred_fallthru
        _
      %s1283 = smul.u32 32, %s20
      %p1284 = scmp.lt.s32.totalorder %s1283, 63
      %s1285 = scalar_select %p1284, %s1283, 63
      %p1286 = scmp.lt.s32.totalorder %s21, 0
      %s1287 = scalar_select %p1286, %s21, 0
      %s1288 = sadd.s32 %s1287, %s1285
      %s1289 = smul.addr %s1288, 4
      %s1290 = scalar_lea.vmem %s4, %s1289
      // Predicated region
      $region45: #{neck_forward.46} parent=35 // pred_check
        %p1291 = pneg %p162
      $region46: #{neck_forward.46} parent=35 // pred_check_branch
        %1293 = sbr.rel (%p1291) target = $region48
      $region47: #{neck_forward.46} parent=35 // pred_region
        %s1294 = smul.u32 32, %s20
      $region48: #{neck_forward.46} parent=35 // pred_fallthru
        _
    $region36: #{neck_forward.46} parent=5 // pred_fallthru
      _
    %p1295 = scmp.le.s32.totalorder 2, %s10
    // Predicated region
    $region49: #{neck_forward.46} parent=5 // pred_check
      %p1296 = pneg %p1295
    $region50: #{neck_forward.46} parent=5 // pred_check_branch
      %1298 = sbr.rel (%p1296) target = $region52
    $region51: #{neck_forward.46} parent=5 // pred_region
      %s1299 = ssub.s32 %s10, 2
      // Predicated region
      $region53: #{neck_forward.46} parent=51 // pred_check
        %p1300 = pneg %p168
      $region54: #{neck_forward.46} parent=51 // pred_check_branch
        %1302 = sbr.rel (%p1300) target = $region56
      $region55: #{neck_forward.46} parent=51 // pred_region
        %s1303 = smul.u32 32, %s23
        %p1304 = scmp.lt.s32.totalorder %s1303, 63
        %s1305 = scalar_select %p1304, %s1303, 63
        %p1306 = scmp.lt.s32.totalorder %s24, 0
        %s1307 = scalar_select %p1306, %s24, 0
        %s1308 = sadd.s32 %s1307, %s1305
        %s1309 = smul.addr %s1308, 4
        %s1310 = scalar_lea.vmem %s4, %s1309
      $region56: #{neck_forward.46} parent=51 // pred_fallthru
        _
    $region52: #{neck_forward.46} parent=5 // pred_fallthru
      _
  $region6: #{neck_forward.46} parent=0 // loop_footer
    %s14 = sadd.s32 1, %s10
  $region7: #{neck_forward.46} parent=0 // loop_footer_branch
    %9 = sbr.rel target = $region3
  $region8: #{neck_forward.46} parent=0 // loop_exit
    _

// kernel: neck_forward.48
$region0: #{neck_forward.48}
  #allocation0 [shape = 'u32[]', space=smem, size = 0x4, offset = 0x4, fixed_abs, tag = 'smem constant byte address 0x4 - core index']
  #allocation1 [shape = 'u32[144,128]{1,0:T(1,128)}', space=vmem, size = 0x12000, scoped, tag = 'internal scratch']
  #allocation2 [shape = 'f32[256,128]{1,0:T(8,128)}', space=vmem, size = 0x20000, scoped, tag = 'scratch operand']
  %s0 = inlined_call_operand.vmem [shape: bf16[512,128], index: 0, kind: input, shape index: {}]
  %s1 = inlined_call_operand.vmem [shape: bf16[128,128], index: 1, kind: input, shape index: {}]
  %s2 = inlined_call_operand.vmem [shape: f32[1,128], index: 2, kind: input, shape index: {}]
  %s3 = inlined_call_operand.vmem [shape: f32[1,128], index: 3, kind: input, shape index: {}]
  %s4 = inlined_call_operand.vmem [shape: bf16[512,128], index: 4, kind: input, shape index: {}]
  %s5 = inlined_call_operand.vmem [shape: bf16[512,128], index: 5, kind: output, shape index: {}]
  %s6 = sld [smem:[#allocation0]]
  $region61: #{neck_forward.48} parent=0
    _
  %s8 = ssub.s32 1, %s6
  %s9 = scalar_select 0, %s8, %s6
  loop: start=0, step=1, limit=4
  $region2: #{neck_forward.48} parent=0 // loop_pre_header
    _
  $region3: #{neck_forward.48} parent=0 // loop_header
    %s11 = sphi 0, %s15
    %p12 = scmp.ge.s32.totalorder %s11, 4
    %s18 = sphi 0, %s37
    %s19 = sphi 0, %s33
    %s20 = sphi 0, %s29
    %s21 = sphi 0, %s18
    %s22 = sphi 0, %s19
    %s23 = sphi 0, %s20
    %s24 = sphi 0, %s21
    %s25 = sphi 0, %s22
    %s26 = sphi 0, %s23
    %s42 = sphi 0, %s44
    %s45 = sphi 0, %s42
    %s46 = sphi 0, %s45
    %s62 = sphi 0, %s46
    %s70 = sphi 0, %s72
    %s73 = sphi 0, %s70
    %s74 = sphi 0, %s73
    %s90 = sphi 0, %s74
    %s96 = sphi 0, %s98
    %s99 = sphi 0, %s96
    %s100 = sphi 0, %s99
    %s116 = sphi 0, %s100
    %s122 = sphi 0, %s124
    %s125 = sphi 0, %s122
    %s126 = sphi 0, %s125
    %s142 = sphi 0, %s126
    %s150 = sphi 0, %s152
    %s153 = sphi 0, %s150
    %s154 = sphi 0, %s153
    %s170 = sphi 0, %s154
    %s178 = sphi 0, %s180
    %s181 = sphi 0, %s178
    %s182 = sphi 0, %s181
    %s198 = sphi 0, %s182
  $region4: #{neck_forward.48} parent=0 // loop_header_branch
    %14 = sbr.rel (%p12) target = $region8
  $region5: #{neck_forward.48} parent=0 // loop_body
    %s16 = ssub.s32 %s11, 1
    %s17 = ssub.s32 %s11, 2
    %s27 = sadd.s32 1, %s20
    %p28 = scmp.ge.s32.totalorder %s27, 1
    %s29 = scalar_select %p28, 0, %s27
    %s30 = sadd.s32 1, %s19
    %s31 = scalar_select %p28, %s30, %s19
    %p32 = scmp.ge.s32.totalorder %s31, 1
    %s33 = scalar_select %p32, 0, %s31
    %s34 = sadd.s32 1, %s18
    %s35 = scalar_select %p32, %s34, %s18
    %p36 = scmp.ge.s32.totalorder %s35, 2
    %s37 = scalar_select %p36, 0, %s35
    %s38 = ssub.s32 %s18, %s37
    %s39 = ssub.s32 %s20, %s29
    %s40 = sor.u32 %s38, %s39
    %p41 = scmp.eq.s32.totalorder %s40, 0
    %s43 = sadd.s32 %s42, 1
    %s44 = scalar_select %p41, %s42, %s43
    %p47 = pneg %p41
    %p48 = scmp.eq.s32.totalorder %s11, 1
    %p49 = por %p47, %p48
    %p50 = scmp.ne.s32.totalorder %s42, %s45
    %p51 = scmp.eq.s32.totalorder %s11, 0
    %p52 = por %p50, %p51
    %p53 = scmp.ne.s32.totalorder %s42, %s45
    %p54 = scmp.eq.s32.totalorder %s16, 1
    %p55 = por %p53, %p54
    %p56 = scmp.ne.s32.totalorder %s45, %s46
    %p57 = scmp.eq.s32.totalorder %s16, 0
    %p58 = por %p56, %p57
    %p59 = scmp.ne.s32.totalorder %s45, %s46
    %p60 = scmp.eq.s32.totalorder %s17, 1
    %p61 = por %p59, %p60
    %p63 = scmp.ne.s32.totalorder %s46, %s62
    %p64 = scmp.eq.s32.totalorder %s17, 0
    %p65 = por %p63, %p64
    %s66 = ssub.s32 %s20, %s29
    %s67 = ssub.s32 %s19, %s33
    %s68 = sor.u32 %s66, %s67
    %p69 = scmp.eq.s32.totalorder %s68, 0
    %s71 = sadd.s32 %s70, 1
    %s72 = scalar_select %p69, %s70, %s71
    %p75 = pneg %p69
    %p76 = scmp.eq.s32.totalorder %s11, 1
    %p77 = por %p75, %p76
    %p78 = scmp.ne.s32.totalorder %s70, %s73
    %p79 = scmp.eq.s32.totalorder %s11, 0
    %p80 = por %p78, %p79
    %p81 = scmp.ne.s32.totalorder %s70, %s73
    %p82 = scmp.eq.s32.totalorder %s16, 1
    %p83 = por %p81, %p82
    %p84 = scmp.ne.s32.totalorder %s73, %s74
    %p85 = scmp.eq.s32.totalorder %s16, 0
    %p86 = por %p84, %p85
    %p87 = scmp.ne.s32.totalorder %s73, %s74
    %p88 = scmp.eq.s32.totalorder %s17, 1
    %p89 = por %p87, %p88
    %p91 = scmp.ne.s32.totalorder %s74, %s90
    %p92 = scmp.eq.s32.totalorder %s17, 0
    %p93 = por %p91, %p92
    %s94 = ssub.s32 %s19, %s33
    %p95 = scmp.eq.s32.totalorder %s94, 0
    %s97 = sadd.s32 %s96, 1
    %s98 = scalar_select %p95, %s96, %s97
    %p101 = pneg %p95
    %p102 = scmp.eq.s32.totalorder %s11, 1
    %p103 = por %p101, %p102
    %p104 = scmp.ne.s32.totalorder %s96, %s99
    %p105 = scmp.eq.s32.totalorder %s11, 0
    %p106 = por %p104, %p105
    %p107 = scmp.ne.s32.totalorder %s96, %s99
    %p108 = scmp.eq.s32.totalorder %s16, 1
    %p109 = por %p107, %p108
    %p110 = scmp.ne.s32.totalorder %s99, %s100
    %p111 = scmp.eq.s32.totalorder %s16, 0
    %p112 = por %p110, %p111
    %p113 = scmp.ne.s32.totalorder %s99, %s100
    %p114 = scmp.eq.s32.totalorder %s17, 1
    %p115 = por %p113, %p114
    %p117 = scmp.ne.s32.totalorder %s100, %s116
    %p118 = scmp.eq.s32.totalorder %s17, 0
    %p119 = por %p117, %p118
    %s120 = ssub.s32 %s19, %s33
    %p121 = scmp.eq.s32.totalorder %s120, 0
    %s123 = sadd.s32 %s122, 1
    %s124 = scalar_select %p121, %s122, %s123
    %p127 = pneg %p121
    %p128 = scmp.eq.s32.totalorder %s11, 1
    %p129 = por %p127, %p128
    %p130 = scmp.ne.s32.totalorder %s122, %s125
    %p131 = scmp.eq.s32.totalorder %s11, 0
    %p132 = por %p130, %p131
    %p133 = scmp.ne.s32.totalorder %s122, %s125
    %p134 = scmp.eq.s32.totalorder %s16, 1
    %p135 = por %p133, %p134
    %p136 = scmp.ne.s32.totalorder %s125, %s126
    %p137 = scmp.eq.s32.totalorder %s16, 0
    %p138 = por %p136, %p137
    %p139 = scmp.ne.s32.totalorder %s125, %s126
    %p140 = scmp.eq.s32.totalorder %s17, 1
    %p141 = por %p139, %p140
    %p143 = scmp.ne.s32.totalorder %s126, %s142
    %p144 = scmp.eq.s32.totalorder %s17, 0
    %p145 = por %p143, %p144
    %s146 = ssub.s32 %s18, %s37
    %s147 = ssub.s32 %s19, %s33
    %s148 = sor.u32 %s146, %s147
    %p149 = scmp.eq.s32.totalorder %s148, 0
    %s151 = sadd.s32 %s150, 1
    %s152 = scalar_select %p149, %s150, %s151
    %p155 = pneg %p149
    %p156 = scmp.eq.s32.totalorder %s11, 1
    %p157 = por %p155, %p156
    %p158 = scmp.ne.s32.totalorder %s150, %s153
    %p159 = scmp.eq.s32.totalorder %s11, 0
    %p160 = por %p158, %p159
    %p161 = scmp.ne.s32.totalorder %s150, %s153
    %p162 = scmp.eq.s32.totalorder %s16, 1
    %p163 = por %p161, %p162
    %p164 = scmp.ne.s32.totalorder %s153, %s154
    %p165 = scmp.eq.s32.totalorder %s16, 0
    %p166 = por %p164, %p165
    %p167 = scmp.ne.s32.totalorder %s153, %s154
    %p168 = scmp.eq.s32.totalorder %s17, 1
    %p169 = por %p167, %p168
    %p171 = scmp.ne.s32.totalorder %s154, %s170
    %p172 = scmp.eq.s32.totalorder %s17, 0
    %p173 = por %p171, %p172
    %s174 = ssub.s32 %s18, %s37
    %s175 = ssub.s32 %s19, %s33
    %s176 = sor.u32 %s174, %s175
    %p177 = scmp.eq.s32.totalorder %s176, 0
    %s179 = sadd.s32 %s178, 1
    %s180 = scalar_select %p177, %s178, %s179
    %p183 = pneg %p177
    %p184 = scmp.eq.s32.totalorder %s11, 1
    %p185 = por %p183, %p184
    %p186 = scmp.ne.s32.totalorder %s178, %s181
    %p187 = scmp.eq.s32.totalorder %s11, 0
    %p188 = por %p186, %p187
    %p189 = scmp.ne.s32.totalorder %s178, %s181
    %p190 = scmp.eq.s32.totalorder %s16, 1
    %p191 = por %p189, %p190
    %p192 = scmp.ne.s32.totalorder %s181, %s182
    %p193 = scmp.eq.s32.totalorder %s16, 0
    %p194 = por %p192, %p193
    %p195 = scmp.ne.s32.totalorder %s181, %s182
    %p196 = scmp.eq.s32.totalorder %s17, 1
    %p197 = por %p195, %p196
    %p199 = scmp.ne.s32.totalorder %s182, %s198
    %p200 = scmp.eq.s32.totalorder %s17, 0
    %p201 = por %p199, %p200
    %p202 = scmp.le.s32.totalorder 1, %s11
    %p203 = scmp.lt.s32.totalorder %s11, 3
    %p204 = pnand %p202, %p203
    %p205 = pneg %p204
    // Predicated region
    $region9: #{neck_forward.48} parent=5 // pred_check
      _
    $region10: #{neck_forward.48} parent=5 // pred_check_branch
      %207 = sbr.rel (%p204) target = $region12
    $region11: #{neck_forward.48} parent=5 // pred_region
      %s208 = ssub.s32 %s11, 1
      // Predicated region
      $region13: #{neck_forward.48} parent=11 // pred_check
        %p209 = pneg %p86
      $region14: #{neck_forward.48} parent=11 // pred_check_branch
        %211 = sbr.rel (%p209) target = $region16
      $region15: #{neck_forward.48} parent=11 // pred_region
        %s212 = smul.u32 16, %s23
        %p213 = scmp.lt.s32.totalorder %s212, 15
        %s214 = scalar_select %p213, %s212, 15
        %p215 = scmp.lt.s32.totalorder %s22, 0
        %s216 = scalar_select %p215, %s22, 0
        %s217 = sadd.s32 %s216, %s214
        %s218 = smul.addr %s217, 4
        %s219 = scalar_lea.vmem %s1, %s218
        %s220 = smul.u32 16, %s23
      $region16: #{neck_forward.48} parent=11 // pred_fallthru
        _
      // Predicated region
      $region17: #{neck_forward.48} parent=11 // pred_check
        %p221 = pneg %p112
      $region18: #{neck_forward.48} parent=11 // pred_check_branch
        %223 = sbr.rel (%p221) target = $region20
      $region19: #{neck_forward.48} parent=11 // pred_region
        %p224 = scmp.lt.s32.totalorder %s22, 0
        %s225 = scalar_select %p224, %s22, 0
        %s226 = scalar_lea.vmem %s2, %s225
      $region20: #{neck_forward.48} parent=11 // pred_fallthru
        _
      // Predicated region
      $region21: #{neck_forward.48} parent=11 // pred_check
        %p227 = pneg %p138
      $region22: #{neck_forward.48} parent=11 // pred_check_branch
        %229 = sbr.rel (%p227) target = $region24
      $region23: #{neck_forward.48} parent=11 // pred_region
        %p230 = scmp.lt.s32.totalorder %s22, 0
        %s231 = scalar_select %p230, %s22, 0
        %s232 = scalar_lea.vmem %s3, %s231
      $region24: #{neck_forward.48} parent=11 // pred_fallthru
        _
    $region12: #{neck_forward.48} parent=5 // pred_fallthru
      _
    %p233 = scmp.lt.s32.totalorder %s11, 2
    // Predicated region
    $region25: #{neck_forward.48} parent=5 // pred_check
      %p234 = pneg %p233
    $region26: #{neck_forward.48} parent=5 // pred_check_branch
      %236 = sbr.rel (%p234) target = $region28
    $region27: #{neck_forward.48} parent=5 // pred_region
      // Predicated region
      $region29: #{neck_forward.48} parent=27 // pred_check
        %p237 = pneg %p52
      $region30: #{neck_forward.48} parent=27 // pred_check_branch
        %239 = sbr.rel (%p237) target = $region32
      $region31: #{neck_forward.48} parent=27 // pred_region
        %s240 = smul.u32 32, %s18
        %p241 = scmp.lt.s32.totalorder %s240, 63
        %s242 = scalar_select %p241, %s240, 63
        %p243 = scmp.lt.s32.totalorder %s20, 0
        %s244 = scalar_select %p243, %s20, 0
        %s245 = sadd.s32 %s244, %s242
        %s246 = smul.addr %s245, 4
        %s247 = scalar_lea.vmem %s0, %s246
        %s248 = smul.u32 32, %s18
      $region32: #{neck_forward.48} parent=27 // pred_fallthru
        _
      // Predicated region
      $region33: #{neck_forward.48} parent=27 // pred_check
        %p249 = pneg %p160
      $region34: #{neck_forward.48} parent=27 // pred_check_branch
        %251 = sbr.rel (%p249) target = $region36
      $region35: #{neck_forward.48} parent=27 // pred_region
        %s252 = smul.u32 32, %s18
        %p253 = scmp.lt.s32.totalorder %s252, 63
        %s254 = scalar_select %p253, %s252, 63
        %p255 = scmp.lt.s32.totalorder %s19, 0
        %s256 = scalar_select %p255, %s19, 0
        %s257 = sadd.s32 %s256, %s254
        %s258 = smul.addr %s257, 4
        %s259 = scalar_lea.vmem %s4, %s258
        %s260 = smul.u32 32, %s18
      $region36: #{neck_forward.48} parent=27 // pred_fallthru
        _
    $region28: #{neck_forward.48} parent=5 // pred_fallthru
      _
    %p261 = scmp.le.s32.totalorder 1, %s11
    %p262 = scmp.lt.s32.totalorder %s11, 3
    %p263 = pnand %p261, %p262
    %p264 = pneg %p263
    // Predicated region
    $region37: #{neck_forward.48} parent=5 // pred_check
      _
    $region38: #{neck_forward.48} parent=5 // pred_check_branch
      %266 = sbr.rel (%p263) target = $region40
    $region39: #{neck_forward.48} parent=5 // pred_region
      %s267 = ssub.s32 %s11, 1
      %s268 = smul.u32 32, %s21
      %p269 = scmp.lt.s32.totalorder %s268, 63
      %s270 = scalar_select %p269, %s268, 63
      %p271 = scmp.lt.s32.totalorder %s23, 0
      %s272 = scalar_select %p271, %s23, 0
      %s273 = sadd.s32 %s272, %s270
      %s274 = smul.addr %s273, 4
      %s275 = scalar_lea.vmem %s0, %s274
      %p276 = pneg %p58
      %p277 = pneg %p55
      %s278 = smul.u32 16, %s23
      %p279 = scmp.lt.s32.totalorder %s278, 15
      %s280 = scalar_select %p279, %s278, 15
      %p281 = scmp.lt.s32.totalorder %s22, 0
      %s282 = scalar_select %p281, %s22, 0
      %s283 = sadd.s32 %s282, %s280
      %s284 = smul.addr %s283, 4
      %s285 = scalar_lea.vmem %s1, %s284
      %p286 = pneg %p86
      %p287 = pneg %p83
      %p288 = scmp.lt.s32.totalorder %s22, 0
      %s289 = scalar_select %p288, %s22, 0
      %s290 = scalar_lea.vmem %s2, %s289
      %p291 = pneg %p112
      %p292 = pneg %p109
      %p293 = scmp.lt.s32.totalorder %s22, 0
      %s294 = scalar_select %p293, %s22, 0
      %s295 = scalar_lea.vmem %s3, %s294
      %p296 = pneg %p138
      %p297 = pneg %p135
      %s298 = smul.u32 32, %s21
      %p299 = scmp.lt.s32.totalorder %s298, 63
      %s300 = scalar_select %p299, %s298, 63
      %p301 = scmp.lt.s32.totalorder %s22, 0
      %s302 = scalar_select %p301, %s22, 0
      %s303 = sadd.s32 %s302, %s300
      %s304 = smul.addr %s303, 4
      %s305 = scalar_lea.vmem %s4, %s304
      %p306 = pneg %p166
      %p307 = pneg %p163
      %p308 = pneg %p194
      %p309 = pneg %p191
      %s310 = smul.u32 32, %s21
      %p311 = scmp.lt.s32.totalorder %s310, 63
      %s312 = scalar_select %p311, %s310, 63
      %p313 = scmp.lt.s32.totalorder %s22, 0
      %s314 = scalar_select %p313, %s22, 0
      %s315 = sadd.s32 %s314, %s312
      %s316 = smul.addr %s315, 4
      %s317 = scalar_lea.vmem %s5, %s316
      %s318 = smul.u32 32, %s21
      %p319 = scmp.lt.s32.totalorder %s318, 63
      %s320 = scalar_select %p319, %s318, 63
      %p321 = scmp.lt.s32.totalorder %s23, 0
      %s322 = scalar_select %p321, %s23, 0
      %s323 = sadd.s32 %s322, %s320
      %s324 = smul.addr %s323, 4
      %s325 = scalar_lea.vmem %s0, %s324
      %s326 = smul.u32 32, %s21
      %s327 = smul.u32 16, %s23
      %p328 = scmp.lt.s32.totalorder %s327, 15
      %s329 = scalar_select %p328, %s327, 15
      %p330 = scmp.lt.s32.totalorder %s22, 0
      %s331 = scalar_select %p330, %s22, 0
      %s332 = sadd.s32 %s331, %s329
      %s333 = smul.addr %s332, 4
      %s334 = scalar_lea.vmem %s1, %s333
      %s335 = smul.u32 16, %s23
      %p336 = scmp.lt.s32.totalorder %s22, 0
      %s337 = scalar_select %p336, %s22, 0
      %s338 = scalar_lea.vmem %s2, %s337
      %p339 = scmp.lt.s32.totalorder %s22, 0
      %s340 = scalar_select %p339, %s22, 0
      %s341 = scalar_lea.vmem %s3, %s340
      %s342 = smul.u32 32, %s21
      %p343 = scmp.lt.s32.totalorder %s342, 63
      %s344 = scalar_select %p343, %s342, 63
      %p345 = scmp.lt.s32.totalorder %s22, 0
      %s346 = scalar_select %p345, %s22, 0
      %s347 = sadd.s32 %s346, %s344
      %s348 = smul.addr %s347, 4
      %s349 = scalar_lea.vmem %s4, %s348
      %s350 = smul.u32 32, %s21
      %s351 = smul.u32 32, %s21
      %p352 = scmp.lt.s32.totalorder %s351, 63
      %s353 = scalar_select %p352, %s351, 63
      %p354 = scmp.lt.s32.totalorder %s22, 0
      %s355 = scalar_select %p354, %s22, 0
      %s356 = sadd.s32 %s355, %s353
      %s357 = smul.addr %s356, 4
      %s358 = scalar_lea.vmem %s5, %s357
      %s359 = smul.u32 32, %s21
      %p361 = scmp.eq.s32.totalorder %s23, 0
      // Predicated region
      $region41: #{neck_forward.48} parent=39 // pred_check
        %p362 = pneg %p361
      $region42: #{neck_forward.48} parent=39 // pred_check_branch
        %364 = sbr.rel (%p362) target = $region44
      $region43: #{neck_forward.48} parent=39 // pred_region
        %365 = vst [vmem:[#allocation2] sm:$0xff] 0.0
        %366 = vst [vmem:[#allocation2 + $0x8] sm:$0xff] 0.0
        %367 = vst [vmem:[#allocation2 + $0x10] sm:$0xff] 0.0
        %368 = vst [vmem:[#allocation2 + $0x18] sm:$0xff] 0.0
        %369 = vst [vmem:[#allocation2 + $0x20] sm:$0xff] 0.0
        %370 = vst [vmem:[#allocation2 + $0x28] sm:$0xff] 0.0
        %371 = vst [vmem:[#allocation2 + $0x30] sm:$0xff] 0.0
        %372 = vst [vmem:[#allocation2 + $0x38] sm:$0xff] 0.0
        %373 = vst [vmem:[#allocation2 + $0x40] sm:$0xff] 0.0
        %374 = vst [vmem:[#allocation2 + $0x48] sm:$0xff] 0.0
        %375 = vst [vmem:[#allocation2 + $0x50] sm:$0xff] 0.0
        %376 = vst [vmem:[#allocation2 + $0x58] sm:$0xff] 0.0
        %377 = vst [vmem:[#allocation2 + $0x60] sm:$0xff] 0.0
        %378 = vst [vmem:[#allocation2 + $0x68] sm:$0xff] 0.0
        %379 = vst [vmem:[#allocation2 + $0x70] sm:$0xff] 0.0
        %380 = vst [vmem:[#allocation2 + $0x78] sm:$0xff] 0.0
        %381 = vst [vmem:[#allocation2 + $0x80] sm:$0xff] 0.0
        %382 = vst [vmem:[#allocation2 + $0x88] sm:$0xff] 0.0
        %383 = vst [vmem:[#allocation2 + $0x90] sm:$0xff] 0.0
        %384 = vst [vmem:[#allocation2 + $0x98] sm:$0xff] 0.0
        %385 = vst [vmem:[#allocation2 + $0xa0] sm:$0xff] 0.0
        %386 = vst [vmem:[#allocation2 + $0xa8] sm:$0xff] 0.0
        %387 = vst [vmem:[#allocation2 + $0xb0] sm:$0xff] 0.0
        %388 = vst [vmem:[#allocation2 + $0xb8] sm:$0xff] 0.0
        %389 = vst [vmem:[#allocation2 + $0xc0] sm:$0xff] 0.0
        %390 = vst [vmem:[#allocation2 + $0xc8] sm:$0xff] 0.0
        %391 = vst [vmem:[#allocation2 + $0xd0] sm:$0xff] 0.0
        %392 = vst [vmem:[#allocation2 + $0xd8] sm:$0xff] 0.0
        %393 = vst [vmem:[#allocation2 + $0xe0] sm:$0xff] 0.0
        %394 = vst [vmem:[#allocation2 + $0xe8] sm:$0xff] 0.0
        %395 = vst [vmem:[#allocation2 + $0xf0] sm:$0xff] 0.0
        %396 = vst [vmem:[#allocation2 + $0xf8] sm:$0xff] 0.0
      $region44: #{neck_forward.48} parent=39 // pred_fallthru
        _
      %v397 = vld [vmem:[#allocation2] sm:$0xff]
      %v398 = vld [vmem:[#allocation2 + $0x8] sm:$0xff]
      %v399 = vld [vmem:[#allocation2 + $0x10] sm:$0xff]
      %v400 = vld [vmem:[#allocation2 + $0x18] sm:$0xff]
      %v401 = vld [vmem:[#allocation2 + $0x20] sm:$0xff]
      %v402 = vld [vmem:[#allocation2 + $0x28] sm:$0xff]
      %v403 = vld [vmem:[#allocation2 + $0x30] sm:$0xff]
      %v404 = vld [vmem:[#allocation2 + $0x38] sm:$0xff]
      %v405 = vld [vmem:[#allocation2 + $0x40] sm:$0xff]
      %v406 = vld [vmem:[#allocation2 + $0x48] sm:$0xff]
      %v407 = vld [vmem:[#allocation2 + $0x50] sm:$0xff]
      %v408 = vld [vmem:[#allocation2 + $0x58] sm:$0xff]
      %v409 = vld [vmem:[#allocation2 + $0x60] sm:$0xff]
      %v410 = vld [vmem:[#allocation2 + $0x68] sm:$0xff]
      %v411 = vld [vmem:[#allocation2 + $0x70] sm:$0xff]
      %v412 = vld [vmem:[#allocation2 + $0x78] sm:$0xff]
      %v413 = vld [vmem:[#allocation2 + $0x80] sm:$0xff]
      %v414 = vld [vmem:[#allocation2 + $0x88] sm:$0xff]
      %v415 = vld [vmem:[#allocation2 + $0x90] sm:$0xff]
      %v416 = vld [vmem:[#allocation2 + $0x98] sm:$0xff]
      %v417 = vld [vmem:[#allocation2 + $0xa0] sm:$0xff]
      %v418 = vld [vmem:[#allocation2 + $0xa8] sm:$0xff]
      %v419 = vld [vmem:[#allocation2 + $0xb0] sm:$0xff]
      %v420 = vld [vmem:[#allocation2 + $0xb8] sm:$0xff]
      %v421 = vld [vmem:[#allocation2 + $0xc0] sm:$0xff]
      %v422 = vld [vmem:[#allocation2 + $0xc8] sm:$0xff]
      %v423 = vld [vmem:[#allocation2 + $0xd0] sm:$0xff]
      %v424 = vld [vmem:[#allocation2 + $0xd8] sm:$0xff]
      %v425 = vld [vmem:[#allocation2 + $0xe0] sm:$0xff]
      %v426 = vld [vmem:[#allocation2 + $0xe8] sm:$0xff]
      %v427 = vld [vmem:[#allocation2 + $0xf0] sm:$0xff]
      %v428 = vld [vmem:[#allocation2 + $0xf8] sm:$0xff]
      %v429 = vld [vmem:[%s325] sm:$0xf]
      %v430 = vld [vmem:[%s325 + $0x4] sm:$0xf]
      %v431 = vld [vmem:[%s325 + $0x8] sm:$0xf]
      %v432 = vld [vmem:[%s325 + $0xc] sm:$0xf]
      %v433 = vld [vmem:[%s325 + $0x10] sm:$0xf]
      %v434 = vld [vmem:[%s325 + $0x14] sm:$0xf]
      %v435 = vld [vmem:[%s325 + $0x18] sm:$0xf]
      %v436 = vld [vmem:[%s325 + $0x1c] sm:$0xf]
      %v437 = vld [vmem:[%s325 + $0x20] sm:$0xf]
      %v438 = vld [vmem:[%s325 + $0x24] sm:$0xf]
      %v439 = vld [vmem:[%s325 + $0x28] sm:$0xf]
      %v440 = vld [vmem:[%s325 + $0x2c] sm:$0xf]
      %v441 = vld [vmem:[%s325 + $0x30] sm:$0xf]
      %v442 = vld [vmem:[%s325 + $0x34] sm:$0xf]
      %v443 = vld [vmem:[%s325 + $0x38] sm:$0xf]
      %v444 = vld [vmem:[%s325 + $0x3c] sm:$0xf]
      %v445 = vld [vmem:[%s325 + $0x40] sm:$0xf]
      %v446 = vld [vmem:[%s325 + $0x44] sm:$0xf]
      %v447 = vld [vmem:[%s325 + $0x48] sm:$0xf]
      %v448 = vld [vmem:[%s325 + $0x4c] sm:$0xf]
      %v449 = vld [vmem:[%s325 + $0x50] sm:$0xf]
      %v450 = vld [vmem:[%s325 + $0x54] sm:$0xf]
      %v451 = vld [vmem:[%s325 + $0x58] sm:$0xf]
      %v452 = vld [vmem:[%s325 + $0x5c] sm:$0xf]
      %v453 = vld [vmem:[%s325 + $0x60] sm:$0xf]
      %v454 = vld [vmem:[%s325 + $0x64] sm:$0xf]
      %v455 = vld [vmem:[%s325 + $0x68] sm:$0xf]
      %v456 = vld [vmem:[%s325 + $0x6c] sm:$0xf]
      %v457 = vld [vmem:[%s325 + $0x70] sm:$0xf]
      %v458 = vld [vmem:[%s325 + $0x74] sm:$0xf]
      %v459 = vld [vmem:[%s325 + $0x78] sm:$0xf]
      %v460 = vld [vmem:[%s325 + $0x7c] sm:$0xf]
      %v461 = vld [vmem:[%s334] sm:$0xf]
      %v462 = vld [vmem:[%s334 + $0x4] sm:$0xf]
      %v463 = vld [vmem:[%s334 + $0x8] sm:$0xf]
      %v464 = vld [vmem:[%s334 + $0xc] sm:$0xf]
      %v465 = vld [vmem:[%s334 + $0x10] sm:$0xf]
      %v466 = vld [vmem:[%s334 + $0x14] sm:$0xf]
      %v467 = vld [vmem:[%s334 + $0x18] sm:$0xf]
      %v468 = vld [vmem:[%s334 + $0x1c] sm:$0xf]
      %v469 = vld [vmem:[%s334 + $0x20] sm:$0xf]
      %v470 = vld [vmem:[%s334 + $0x24] sm:$0xf]
      %v471 = vld [vmem:[%s334 + $0x28] sm:$0xf]
      %v472 = vld [vmem:[%s334 + $0x2c] sm:$0xf]
      %v473 = vld [vmem:[%s334 + $0x30] sm:$0xf]
      %v474 = vld [vmem:[%s334 + $0x34] sm:$0xf]
      %v475 = vld [vmem:[%s334 + $0x38] sm:$0xf]
      %v476 = vld [vmem:[%s334 + $0x3c] sm:$0xf]
      %v509 = vunpack.c.l.b16 %v429
      %v510 = vunpack.c.l.b16 %v430
      %v511 = vunpack.c.l.b16 %v431
      %v512 = vunpack.c.l.b16 %v432
      %v513 = vunpack.c.l.b16 %v433
      %v514 = vunpack.c.l.b16 %v434
      %v515 = vunpack.c.l.b16 %v435
      %v516 = vunpack.c.l.b16 %v436
      %v517 = vunpack.c.l.b16 %v437
      %v518 = vunpack.c.l.b16 %v438
      %v519 = vunpack.c.l.b16 %v439
      %v520 = vunpack.c.l.b16 %v440
      %v521 = vunpack.c.l.b16 %v441
      %v522 = vunpack.c.l.b16 %v442
      %v523 = vunpack.c.l.b16 %v443
      %v524 = vunpack.c.l.b16 %v444
      %v525 = vunpack.c.l.b16 %v445
      %v526 = vunpack.c.l.b16 %v446
      %v527 = vunpack.c.l.b16 %v447
      %v528 = vunpack.c.l.b16 %v448
      %v529 = vunpack.c.l.b16 %v449
      %v530 = vunpack.c.l.b16 %v450
      %v531 = vunpack.c.l.b16 %v451
      %v532 = vunpack.c.l.b16 %v452
      %v533 = vunpack.c.l.b16 %v453
      %v534 = vunpack.c.l.b16 %v454
      %v535 = vunpack.c.l.b16 %v455
      %v536 = vunpack.c.l.b16 %v456
      %v537 = vunpack.c.l.b16 %v457
      %v538 = vunpack.c.l.b16 %v458
      %v539 = vunpack.c.l.b16 %v459
      %v540 = vunpack.c.l.b16 %v460
      %v541 = vpack.c.b16 %v510, %v509
      %v542 = vpack.c.b16 %v512, %v511
      %v543 = vpack.c.b16 %v514, %v513
      %v544 = vpack.c.b16 %v516, %v515
      %v545 = vpack.c.b16 %v518, %v517
      %v546 = vpack.c.b16 %v520, %v519
      %v547 = vpack.c.b16 %v522, %v521
      %v548 = vpack.c.b16 %v524, %v523
      %v549 = vpack.c.b16 %v526, %v525
      %v550 = vpack.c.b16 %v528, %v527
      %v551 = vpack.c.b16 %v530, %v529
      %v552 = vpack.c.b16 %v532, %v531
      %v553 = vpack.c.b16 %v534, %v533
      %v554 = vpack.c.b16 %v536, %v535
      %v555 = vpack.c.b16 %v538, %v537
      %v556 = vpack.c.b16 %v540, %v539
      %v589 = vunpack.c.l.b16 %v461
      %v590 = vunpack.c.l.b16 %v462
      %v591 = vunpack.c.l.b16 %v463
      %v592 = vunpack.c.l.b16 %v464
      %v593 = vunpack.c.l.b16 %v465
      %v594 = vunpack.c.l.b16 %v466
      %v595 = vunpack.c.l.b16 %v467
      %v596 = vunpack.c.l.b16 %v468
      %v597 = vunpack.c.l.b16 %v469
      %v598 = vunpack.c.l.b16 %v470
      %v599 = vunpack.c.l.b16 %v471
      %v600 = vunpack.c.l.b16 %v472
      %v601 = vunpack.c.l.b16 %v473
      %v602 = vunpack.c.l.b16 %v474
      %v603 = vunpack.c.l.b16 %v475
      %v604 = vunpack.c.l.b16 %v476
      %v605 = vpack.c.b16 %v590, %v589
      %v606 = vpack.c.b16 %v592, %v591
      %v607 = vpack.c.b16 %v594, %v593
      %v608 = vpack.c.b16 %v596, %v595
      %v609 = vpack.c.b16 %v598, %v597
      %v610 = vpack.c.b16 %v600, %v599
      %v611 = vpack.c.b16 %v602, %v601
      %v612 = vpack.c.b16 %v604, %v603
      %621 = vmatprep.subr.bf16.mxu0 0
      %622 = vmatpush1.bf16.msra.mxu0 %v612
      %623 = vmatprep.subr.bf16.mxu0 0
      %624 = vmatpush1.bf16.msra.mxu0 %v611
      %625 = vmatprep.subr.bf16.mxu0 0
      %626 = vmatpush1.bf16.msra.mxu0 %v610
      %627 = vmatprep.subr.bf16.mxu0 0
      %628 = vmatpush1.bf16.msra.mxu0 %v609
      %629 = vmatprep.subr.bf16.mxu0 0
      %630 = vmatpush1.bf16.msra.mxu0 %v608
      %631 = vmatprep.subr.bf16.mxu0 0
      %632 = vmatpush1.bf16.msra.mxu0 %v607
      %633 = vmatprep.subr.bf16.mxu0 0
      %634 = vmatpush1.bf16.msra.mxu0 %v606
      %635 = vmatprep.subr.bf16.mxu0 0
      %636 = vmatpush1.bf16.msra.mxu0 %v605
      %637 = vmatprep.subr.bf16.mxu0 0
      %638 = vmatpush2.bf16.msra.mxu0 0
      %639 = vmatprep.subr.bf16.mxu0 0
      %640 = vmatpush2.bf16.msra.mxu0 0
      %641 = vmatprep.subr.bf16.mxu0 0
      %642 = vmatpush2.bf16.msra.mxu0 0
      %643 = vmatprep.subr.bf16.mxu0 0
      %644 = vmatpush2.bf16.msra.mxu0 0
      %645 = vmatprep.subr.bf16.mxu0 0
      %646 = vmatpush2.bf16.msra.mxu0 0
      %647 = vmatprep.subr.bf16.mxu0 0
      %648 = vmatpush2.bf16.msra.mxu0 0
      %649 = vmatprep.subr.bf16.mxu0 0
      %650 = vmatpush2.bf16.msra.mxu0 0
      %651 = vmatprep.subr.bf16.mxu0 0
      %652 = vmatpush2.bf16.msra.mxu0 0
      %653 = vmatprep.mubr.bf16.mxu0 0
      %654 = vmatmul.mubr.bf16.gmra.mxu0 %v541
      %v655 = vpop.f32.mrf.mxu0
      %v656 = vadd.f32 0.0, %v655
      %v657 = vpop.f32.mrf.mxu0
      %v658 = vpop.f32.mrf.mxu0
      %v659 = vadd.f32 0.0, %v658
      %v660 = vpop.f32.mrf.mxu0
      %661 = vmatprep.mubr.bf16.mxu0 0
      %662 = vmatmul.mubr.bf16.gmra.mxu0 %v542
      %v663 = vpop.f32.mrf.mxu0
      %v664 = vadd.f32 0.0, %v663
      %v665 = vpop.f32.mrf.mxu0
      %v666 = vpop.f32.mrf.mxu0
      %v667 = vadd.f32 0.0, %v666
      %v668 = vpop.f32.mrf.mxu0
      %669 = vmatprep.mubr.bf16.mxu0 0
      %670 = vmatmul.mubr.bf16.gmra.mxu0 %v543
      %v671 = vpop.f32.mrf.mxu0
      %v672 = vadd.f32 0.0, %v671
      %v673 = vpop.f32.mrf.mxu0
      %v674 = vpop.f32.mrf.mxu0
      %v675 = vadd.f32 0.0, %v674
      %v676 = vpop.f32.mrf.mxu0
      %677 = vmatprep.mubr.bf16.mxu0 0
      %678 = vmatmul.mubr.bf16.gmra.mxu0 %v544
      %v679 = vpop.f32.mrf.mxu0
      %v680 = vadd.f32 0.0, %v679
      %v681 = vpop.f32.mrf.mxu0
      %v682 = vpop.f32.mrf.mxu0
      %v683 = vadd.f32 0.0, %v682
      %v684 = vpop.f32.mrf.mxu0
      %685 = vmatprep.mubr.bf16.mxu0 0
      %686 = vmatmul.mubr.bf16.gmra.mxu0 %v545
      %v687 = vpop.f32.mrf.mxu0
      %v688 = vadd.f32 0.0, %v687
      %v689 = vpop.f32.mrf.mxu0
      %v690 = vpop.f32.mrf.mxu0
      %v691 = vadd.f32 0.0, %v690
      %v692 = vpop.f32.mrf.mxu0
      %693 = vmatprep.mubr.bf16.mxu0 0
      %694 = vmatmul.mubr.bf16.gmra.mxu0 %v546
      %v695 = vpop.f32.mrf.mxu0
      %v696 = vadd.f32 0.0, %v695
      %v697 = vpop.f32.mrf.mxu0
      %v698 = vpop.f32.mrf.mxu0
      %v699 = vadd.f32 0.0, %v698
      %v700 = vpop.f32.mrf.mxu0
      %701 = vmatprep.mubr.bf16.mxu0 0
      %702 = vmatmul.mubr.bf16.gmra.mxu0 %v547
      %v703 = vpop.f32.mrf.mxu0
      %v704 = vadd.f32 0.0, %v703
      %v705 = vpop.f32.mrf.mxu0
      %v706 = vpop.f32.mrf.mxu0
      %v707 = vadd.f32 0.0, %v706
      %v708 = vpop.f32.mrf.mxu0
      %709 = vmatprep.mubr.bf16.mxu0 0
      %710 = vmatmul.mubr.bf16.gmra.mxu0 %v548
      %v711 = vpop.f32.mrf.mxu0
      %v712 = vadd.f32 0.0, %v711
      %v713 = vpop.f32.mrf.mxu0
      %v714 = vpop.f32.mrf.mxu0
      %v715 = vadd.f32 0.0, %v714
      %v716 = vpop.f32.mrf.mxu0
      %717 = vmatprep.mubr.bf16.mxu0 0
      %718 = vmatmul.mubr.bf16.gmra.mxu0 %v549
      %v719 = vpop.f32.mrf.mxu0
      %v720 = vadd.f32 0.0, %v719
      %v721 = vpop.f32.mrf.mxu0
      %v722 = vpop.f32.mrf.mxu0
      %v723 = vadd.f32 0.0, %v722
      %v724 = vpop.f32.mrf.mxu0
      %725 = vmatprep.mubr.bf16.mxu0 0
      %726 = vmatmul.mubr.bf16.gmra.mxu0 %v550
      %v727 = vpop.f32.mrf.mxu0
      %v728 = vadd.f32 0.0, %v727
      %v729 = vpop.f32.mrf.mxu0
      %v730 = vpop.f32.mrf.mxu0
      %v731 = vadd.f32 0.0, %v730
      %v732 = vpop.f32.mrf.mxu0
      %733 = vmatprep.mubr.bf16.mxu0 0
      %734 = vmatmul.mubr.bf16.gmra.mxu0 %v551
      %v735 = vpop.f32.mrf.mxu0
      %v736 = vadd.f32 0.0, %v735
      %v737 = vpop.f32.mrf.mxu0
      %v738 = vpop.f32.mrf.mxu0
      %v739 = vadd.f32 0.0, %v738
      %v740 = vpop.f32.mrf.mxu0
      %741 = vmatprep.mubr.bf16.mxu0 0
      %742 = vmatmul.mubr.bf16.gmra.mxu0 %v552
      %v743 = vpop.f32.mrf.mxu0
      %v744 = vadd.f32 0.0, %v743
      %v745 = vpop.f32.mrf.mxu0
      %v746 = vpop.f32.mrf.mxu0
      %v747 = vadd.f32 0.0, %v746
      %v748 = vpop.f32.mrf.mxu0
      %749 = vmatprep.mubr.bf16.mxu0 0
      %750 = vmatmul.mubr.bf16.gmra.mxu0 %v553
      %v751 = vpop.f32.mrf.mxu0
      %v752 = vadd.f32 0.0, %v751
      %v753 = vpop.f32.mrf.mxu0
      %v754 = vpop.f32.mrf.mxu0
      %v755 = vadd.f32 0.0, %v754
      %v756 = vpop.f32.mrf.mxu0
      %757 = vmatprep.mubr.bf16.mxu0 0
      %758 = vmatmul.mubr.bf16.gmra.mxu0 %v554
      %v759 = vpop.f32.mrf.mxu0
      %v760 = vadd.f32 0.0, %v759
      %v761 = vpop.f32.mrf.mxu0
      %v762 = vpop.f32.mrf.mxu0
      %v763 = vadd.f32 0.0, %v762
      %v764 = vpop.f32.mrf.mxu0
      %765 = vmatprep.mubr.bf16.mxu0 0
      %766 = vmatmul.mubr.bf16.gmra.mxu0 %v555
      %v767 = vpop.f32.mrf.mxu0
      %v768 = vadd.f32 0.0, %v767
      %v769 = vpop.f32.mrf.mxu0
      %v770 = vpop.f32.mrf.mxu0
      %v771 = vadd.f32 0.0, %v770
      %v772 = vpop.f32.mrf.mxu0
      %773 = vmatprep.mubr.bf16.mxu0 0
      %774 = vmatmul.mubr.bf16.gmra.mxu0 %v556
      %v775 = vpop.f32.mrf.mxu0
      %v776 = vadd.f32 0.0, %v775
      %v777 = vpop.f32.mrf.mxu0
      %v778 = vpop.f32.mrf.mxu0
      %v779 = vadd.f32 0.0, %v778
      %v780 = vpop.f32.mrf.mxu0
      %781 = vdwg.mxu0
      %v782 = vadd.f32 %v397, %v656
      %v783 = vadd.f32 %v398, %v659
      %v784 = vadd.f32 %v399, %v664
      %v785 = vadd.f32 %v400, %v667
      %v786 = vadd.f32 %v401, %v672
      %v787 = vadd.f32 %v402, %v675
      %v788 = vadd.f32 %v403, %v680
      %v789 = vadd.f32 %v404, %v683
      %v790 = vadd.f32 %v405, %v688
      %v791 = vadd.f32 %v406, %v691
      %v792 = vadd.f32 %v407, %v696
      %v793 = vadd.f32 %v408, %v699
      %v794 = vadd.f32 %v409, %v704
      %v795 = vadd.f32 %v410, %v707
      %v796 = vadd.f32 %v411, %v712
      %v797 = vadd.f32 %v412, %v715
      %v798 = vadd.f32 %v413, %v720
      %v799 = vadd.f32 %v414, %v723
      %v800 = vadd.f32 %v415, %v728
      %v801 = vadd.f32 %v416, %v731
      %v802 = vadd.f32 %v417, %v736
      %v803 = vadd.f32 %v418, %v739
      %v804 = vadd.f32 %v419, %v744
      %v805 = vadd.f32 %v420, %v747
      %v806 = vadd.f32 %v421, %v752
      %v807 = vadd.f32 %v422, %v755
      %v808 = vadd.f32 %v423, %v760
      %v809 = vadd.f32 %v424, %v763
      %v810 = vadd.f32 %v425, %v768
      %v811 = vadd.f32 %v426, %v771
      %v812 = vadd.f32 %v427, %v776
      %v813 = vadd.f32 %v428, %v779
      %814 = vst [vmem:[#allocation2] sm:$0xff] %v782
      %815 = vst [vmem:[#allocation2 + $0x8] sm:$0xff] %v783
      %816 = vst [vmem:[#allocation2 + $0x10] sm:$0xff] %v784
      %817 = vst [vmem:[#allocation2 + $0x18] sm:$0xff] %v785
      %818 = vst [vmem:[#allocation2 + $0x20] sm:$0xff] %v786
      %819 = vst [vmem:[#allocation2 + $0x28] sm:$0xff] %v787
      %820 = vst [vmem:[#allocation2 + $0x30] sm:$0xff] %v788
      %821 = vst [vmem:[#allocation2 + $0x38] sm:$0xff] %v789
      %822 = vst [vmem:[#allocation2 + $0x40] sm:$0xff] %v790
      %823 = vst [vmem:[#allocation2 + $0x48] sm:$0xff] %v791
      %824 = vst [vmem:[#allocation2 + $0x50] sm:$0xff] %v792
      %825 = vst [vmem:[#allocation2 + $0x58] sm:$0xff] %v793
      %826 = vst [vmem:[#allocation2 + $0x60] sm:$0xff] %v794
      %827 = vst [vmem:[#allocation2 + $0x68] sm:$0xff] %v795
      %828 = vst [vmem:[#allocation2 + $0x70] sm:$0xff] %v796
      %829 = vst [vmem:[#allocation2 + $0x78] sm:$0xff] %v797
      %830 = vst [vmem:[#allocation2 + $0x80] sm:$0xff] %v798
      %831 = vst [vmem:[#allocation2 + $0x88] sm:$0xff] %v799
      %832 = vst [vmem:[#allocation2 + $0x90] sm:$0xff] %v800
      %833 = vst [vmem:[#allocation2 + $0x98] sm:$0xff] %v801
      %834 = vst [vmem:[#allocation2 + $0xa0] sm:$0xff] %v802
      %835 = vst [vmem:[#allocation2 + $0xa8] sm:$0xff] %v803
      %836 = vst [vmem:[#allocation2 + $0xb0] sm:$0xff] %v804
      %837 = vst [vmem:[#allocation2 + $0xb8] sm:$0xff] %v805
      %838 = vst [vmem:[#allocation2 + $0xc0] sm:$0xff] %v806
      %839 = vst [vmem:[#allocation2 + $0xc8] sm:$0xff] %v807
      %840 = vst [vmem:[#allocation2 + $0xd0] sm:$0xff] %v808
      %841 = vst [vmem:[#allocation2 + $0xd8] sm:$0xff] %v809
      %842 = vst [vmem:[#allocation2 + $0xe0] sm:$0xff] %v810
      %843 = vst [vmem:[#allocation2 + $0xe8] sm:$0xff] %v811
      %844 = vst [vmem:[#allocation2 + $0xf0] sm:$0xff] %v812
      %845 = vst [vmem:[#allocation2 + $0xf8] sm:$0xff] %v813
      // Predicated region
      $region45: #{neck_forward.48} parent=39 // pred_check
        %p846 = pneg %p361
      $region46: #{neck_forward.48} parent=39 // pred_check_branch
        %848 = sbr.rel (%p846) target = $region48
      $region47: #{neck_forward.48} parent=39 // pred_region
        %v849 = vld [vmem:[#allocation2] sm:$0xff]
        %v850 = vld [vmem:[#allocation2 + $0x8] sm:$0xff]
        %v851 = vld [vmem:[#allocation2 + $0x10] sm:$0xff]
        %v852 = vld [vmem:[#allocation2 + $0x18] sm:$0xff]
        %v853 = vld [vmem:[#allocation2 + $0x20] sm:$0xff]
        %v854 = vld [vmem:[#allocation2 + $0x28] sm:$0xff]
        %v855 = vld [vmem:[#allocation2 + $0x30] sm:$0xff]
        %v856 = vld [vmem:[#allocation2 + $0x38] sm:$0xff]
        %v857 = vld [vmem:[#allocation2 + $0x40] sm:$0xff]
        %v858 = vld [vmem:[#allocation2 + $0x48] sm:$0xff]
        %v859 = vld [vmem:[#allocation2 + $0x50] sm:$0xff]
        %v860 = vld [vmem:[#allocation2 + $0x58] sm:$0xff]
        %v861 = vld [vmem:[#allocation2 + $0x60] sm:$0xff]
        %v862 = vld [vmem:[#allocation2 + $0x68] sm:$0xff]
        %v863 = vld [vmem:[#allocation2 + $0x70] sm:$0xff]
        %v864 = vld [vmem:[#allocation2 + $0x78] sm:$0xff]
        %v865 = vld [vmem:[#allocation2 + $0x80] sm:$0xff]
        %v866 = vld [vmem:[#allocation2 + $0x88] sm:$0xff]
        %v867 = vld [vmem:[#allocation2 + $0x90] sm:$0xff]
        %v868 = vld [vmem:[#allocation2 + $0x98] sm:$0xff]
        %v869 = vld [vmem:[#allocation2 + $0xa0] sm:$0xff]
        %v870 = vld [vmem:[#allocation2 + $0xa8] sm:$0xff]
        %v871 = vld [vmem:[#allocation2 + $0xb0] sm:$0xff]
        %v872 = vld [vmem:[#allocation2 + $0xb8] sm:$0xff]
        %v873 = vld [vmem:[#allocation2 + $0xc0] sm:$0xff]
        %v874 = vld [vmem:[#allocation2 + $0xc8] sm:$0xff]
        %v875 = vld [vmem:[#allocation2 + $0xd0] sm:$0xff]
        %v876 = vld [vmem:[#allocation2 + $0xd8] sm:$0xff]
        %v877 = vld [vmem:[#allocation2 + $0xe0] sm:$0xff]
        %v878 = vld [vmem:[#allocation2 + $0xe8] sm:$0xff]
        %v879 = vld [vmem:[#allocation2 + $0xf0] sm:$0xff]
        %v880 = vld [vmem:[#allocation2 + $0xf8] sm:$0xff]
        %v881 = vld [vmem:[%s338] sm:$0x1]
        %v883 = vlaneseq
        %v884 = vshrl.u32 %v883, 7
        %v885 = vsub.s32 0, %v884
        %v886 = vrot.slane %v881, %v885
        %v888 = vmul.f32 %v849, %v886
        %v889 = vmul.f32 %v850, %v886
        %v890 = vmul.f32 %v851, %v886
        %v891 = vmul.f32 %v852, %v886
        %v892 = vmul.f32 %v853, %v886
        %v893 = vmul.f32 %v854, %v886
        %v894 = vmul.f32 %v855, %v886
        %v895 = vmul.f32 %v856, %v886
        %v896 = vmul.f32 %v857, %v886
        %v897 = vmul.f32 %v858, %v886
        %v898 = vmul.f32 %v859, %v886
        %v899 = vmul.f32 %v860, %v886
        %v900 = vmul.f32 %v861, %v886
        %v901 = vmul.f32 %v862, %v886
        %v902 = vmul.f32 %v863, %v886
        %v903 = vmul.f32 %v864, %v886
        %v904 = vmul.f32 %v865, %v886
        %v905 = vmul.f32 %v866, %v886
        %v906 = vmul.f32 %v867, %v886
        %v907 = vmul.f32 %v868, %v886
        %v908 = vmul.f32 %v869, %v886
        %v909 = vmul.f32 %v870, %v886
        %v910 = vmul.f32 %v871, %v886
        %v911 = vmul.f32 %v872, %v886
        %v912 = vmul.f32 %v873, %v886
        %v913 = vmul.f32 %v874, %v886
        %v914 = vmul.f32 %v875, %v886
        %v915 = vmul.f32 %v876, %v886
        %v916 = vmul.f32 %v877, %v886
        %v917 = vmul.f32 %v878, %v886
        %v918 = vmul.f32 %v879, %v886
        %v919 = vmul.f32 %v880, %v886
        %v920 = vld [vmem:[%s341] sm:$0x1]
        %v922 = vlaneseq
        %v923 = vshrl.u32 %v922, 7
        %v924 = vsub.s32 0, %v923
        %v925 = vrot.slane %v920, %v924
        %v927 = vadd.f32 %v888, %v925
        %v928 = vadd.f32 %v889, %v925
        %v929 = vadd.f32 %v890, %v925
        %v930 = vadd.f32 %v891, %v925
        %v931 = vadd.f32 %v892, %v925
        %v932 = vadd.f32 %v893, %v925
        %v933 = vadd.f32 %v894, %v925
        %v934 = vadd.f32 %v895, %v925
        %v935 = vadd.f32 %v896, %v925
        %v936 = vadd.f32 %v897, %v925
        %v937 = vadd.f32 %v898, %v925
        %v938 = vadd.f32 %v899, %v925
        %v939 = vadd.f32 %v900, %v925
        %v940 = vadd.f32 %v901, %v925
        %v941 = vadd.f32 %v902, %v925
        %v942 = vadd.f32 %v903, %v925
        %v943 = vadd.f32 %v904, %v925
        %v944 = vadd.f32 %v905, %v925
        %v945 = vadd.f32 %v906, %v925
        %v946 = vadd.f32 %v907, %v925
        %v947 = vadd.f32 %v908, %v925
        %v948 = vadd.f32 %v909, %v925
        %v949 = vadd.f32 %v910, %v925
        %v950 = vadd.f32 %v911, %v925
        %v951 = vadd.f32 %v912, %v925
        %v952 = vadd.f32 %v913, %v925
        %v953 = vadd.f32 %v914, %v925
        %v954 = vadd.f32 %v915, %v925
        %v955 = vadd.f32 %v916, %v925
        %v956 = vadd.f32 %v917, %v925
        %v957 = vadd.f32 %v918, %v925
        %v958 = vadd.f32 %v919, %v925
        %v959 = vxor.u32 %v927, 2147483648
        %v960 = vxor.u32 %v928, 2147483648
        %v961 = vxor.u32 %v929, 2147483648
        %v962 = vxor.u32 %v930, 2147483648
        %v963 = vxor.u32 %v931, 2147483648
        %v964 = vxor.u32 %v932, 2147483648
        %v965 = vxor.u32 %v933, 2147483648
        %v966 = vxor.u32 %v934, 2147483648
        %v967 = vxor.u32 %v935, 2147483648
        %v968 = vxor.u32 %v936, 2147483648
        %v969 = vxor.u32 %v937, 2147483648
        %v970 = vxor.u32 %v938, 2147483648
        %v971 = vxor.u32 %v939, 2147483648
        %v972 = vxor.u32 %v940, 2147483648
        %v973 = vxor.u32 %v941, 2147483648
        %v974 = vxor.u32 %v942, 2147483648
        %v975 = vxor.u32 %v943, 2147483648
        %v976 = vxor.u32 %v944, 2147483648
        %v977 = vxor.u32 %v945, 2147483648
        %v978 = vxor.u32 %v946, 2147483648
        %v979 = vxor.u32 %v947, 2147483648
        %v980 = vxor.u32 %v948, 2147483648
        %v981 = vxor.u32 %v949, 2147483648
        %v982 = vxor.u32 %v950, 2147483648
        %v983 = vxor.u32 %v951, 2147483648
        %v984 = vxor.u32 %v952, 2147483648
        %v985 = vxor.u32 %v953, 2147483648
        %v986 = vxor.u32 %v954, 2147483648
        %v987 = vxor.u32 %v955, 2147483648
        %v988 = vxor.u32 %v956, 2147483648
        %v989 = vxor.u32 %v957, 2147483648
        %v990 = vxor.u32 %v958, 2147483648
        %v991 = vmul.f32 %v959, 1.442695
        %v992 = vpow.pop %v991
        %v993 = vmul.f32 %v960, 1.442695
        %v994 = vpow.pop %v993
        %v995 = vmul.f32 %v961, 1.442695
        %v996 = vpow.pop %v995
        %v997 = vmul.f32 %v962, 1.442695
        %v998 = vpow.pop %v997
        %v999 = vmul.f32 %v963, 1.442695
        %v1000 = vpow.pop %v999
        %v1001 = vmul.f32 %v964, 1.442695
        %v1002 = vpow.pop %v1001
        %v1003 = vmul.f32 %v965, 1.442695
        %v1004 = vpow.pop %v1003
        %v1005 = vmul.f32 %v966, 1.442695
        %v1006 = vpow.pop %v1005
        %v1007 = vmul.f32 %v967, 1.442695
        %v1008 = vpow.pop %v1007
        %v1009 = vmul.f32 %v968, 1.442695
        %v1010 = vpow.pop %v1009
        %v1011 = vmul.f32 %v969, 1.442695
        %v1012 = vpow.pop %v1011
        %v1013 = vmul.f32 %v970, 1.442695
        %v1014 = vpow.pop %v1013
        %v1015 = vmul.f32 %v971, 1.442695
        %v1016 = vpow.pop %v1015
        %v1017 = vmul.f32 %v972, 1.442695
        %v1018 = vpow.pop %v1017
        %v1019 = vmul.f32 %v973, 1.442695
        %v1020 = vpow.pop %v1019
        %v1021 = vmul.f32 %v974, 1.442695
        %v1022 = vpow.pop %v1021
        %v1023 = vmul.f32 %v975, 1.442695
        %v1024 = vpow.pop %v1023
        %v1025 = vmul.f32 %v976, 1.442695
        %v1026 = vpow.pop %v1025
        %v1027 = vmul.f32 %v977, 1.442695
        %v1028 = vpow.pop %v1027
        %v1029 = vmul.f32 %v978, 1.442695
        %v1030 = vpow.pop %v1029
        %v1031 = vmul.f32 %v979, 1.442695
        %v1032 = vpow.pop %v1031
        %v1033 = vmul.f32 %v980, 1.442695
        %v1034 = vpow.pop %v1033
        %v1035 = vmul.f32 %v981, 1.442695
        %v1036 = vpow.pop %v1035
        %v1037 = vmul.f32 %v982, 1.442695
        %v1038 = vpow.pop %v1037
        %v1039 = vmul.f32 %v983, 1.442695
        %v1040 = vpow.pop %v1039
        %v1041 = vmul.f32 %v984, 1.442695
        %v1042 = vpow.pop %v1041
        %v1043 = vmul.f32 %v985, 1.442695
        %v1044 = vpow.pop %v1043
        %v1045 = vmul.f32 %v986, 1.442695
        %v1046 = vpow.pop %v1045
        %v1047 = vmul.f32 %v987, 1.442695
        %v1048 = vpow.pop %v1047
        %v1049 = vmul.f32 %v988, 1.442695
        %v1050 = vpow.pop %v1049
        %v1051 = vmul.f32 %v989, 1.442695
        %v1052 = vpow.pop %v1051
        %v1053 = vmul.f32 %v990, 1.442695
        %v1054 = vpow.pop %v1053
        %v1055 = vadd.f32 %v992, 1.0
        %v1056 = vadd.f32 %v994, 1.0
        %v1057 = vadd.f32 %v996, 1.0
        %v1058 = vadd.f32 %v998, 1.0
        %v1059 = vadd.f32 %v1000, 1.0
        %v1060 = vadd.f32 %v1002, 1.0
        %v1061 = vadd.f32 %v1004, 1.0
        %v1062 = vadd.f32 %v1006, 1.0
        %v1063 = vadd.f32 %v1008, 1.0
        %v1064 = vadd.f32 %v1010, 1.0
        %v1065 = vadd.f32 %v1012, 1.0
        %v1066 = vadd.f32 %v1014, 1.0
        %v1067 = vadd.f32 %v1016, 1.0
        %v1068 = vadd.f32 %v1018, 1.0
        %v1069 = vadd.f32 %v1020, 1.0
        %v1070 = vadd.f32 %v1022, 1.0
        %v1071 = vadd.f32 %v1024, 1.0
        %v1072 = vadd.f32 %v1026, 1.0
        %v1073 = vadd.f32 %v1028, 1.0
        %v1074 = vadd.f32 %v1030, 1.0
        %v1075 = vadd.f32 %v1032, 1.0
        %v1076 = vadd.f32 %v1034, 1.0
        %v1077 = vadd.f32 %v1036, 1.0
        %v1078 = vadd.f32 %v1038, 1.0
        %v1079 = vadd.f32 %v1040, 1.0
        %v1080 = vadd.f32 %v1042, 1.0
        %v1081 = vadd.f32 %v1044, 1.0
        %v1082 = vadd.f32 %v1046, 1.0
        %v1083 = vadd.f32 %v1048, 1.0
        %v1084 = vadd.f32 %v1050, 1.0
        %v1085 = vadd.f32 %v1052, 1.0
        %v1086 = vadd.f32 %v1054, 1.0
        %v1087 = vrcp.pop %v1055
        %v1088 = vmul.f32 1.0, %v1087
        %v1089 = vrcp.pop %v1056
        %v1090 = vmul.f32 1.0, %v1089
        %v1091 = vrcp.pop %v1057
        %v1092 = vmul.f32 1.0, %v1091
        %v1093 = vrcp.pop %v1058
        %v1094 = vmul.f32 1.0, %v1093
        %v1095 = vrcp.pop %v1059
        %v1096 = vmul.f32 1.0, %v1095
        %v1097 = vrcp.pop %v1060
        %v1098 = vmul.f32 1.0, %v1097
        %v1099 = vrcp.pop %v1061
        %v1100 = vmul.f32 1.0, %v1099
        %v1101 = vrcp.pop %v1062
        %v1102 = vmul.f32 1.0, %v1101
        %v1103 = vrcp.pop %v1063
        %v1104 = vmul.f32 1.0, %v1103
        %v1105 = vrcp.pop %v1064
        %v1106 = vmul.f32 1.0, %v1105
        %v1107 = vrcp.pop %v1065
        %v1108 = vmul.f32 1.0, %v1107
        %v1109 = vrcp.pop %v1066
        %v1110 = vmul.f32 1.0, %v1109
        %v1111 = vrcp.pop %v1067
        %v1112 = vmul.f32 1.0, %v1111
        %v1113 = vrcp.pop %v1068
        %v1114 = vmul.f32 1.0, %v1113
        %v1115 = vrcp.pop %v1069
        %v1116 = vmul.f32 1.0, %v1115
        %v1117 = vrcp.pop %v1070
        %v1118 = vmul.f32 1.0, %v1117
        %v1119 = vrcp.pop %v1071
        %v1120 = vmul.f32 1.0, %v1119
        %v1121 = vrcp.pop %v1072
        %v1122 = vmul.f32 1.0, %v1121
        %v1123 = vrcp.pop %v1073
        %v1124 = vmul.f32 1.0, %v1123
        %v1125 = vrcp.pop %v1074
        %v1126 = vmul.f32 1.0, %v1125
        %v1127 = vrcp.pop %v1075
        %v1128 = vmul.f32 1.0, %v1127
        %v1129 = vrcp.pop %v1076
        %v1130 = vmul.f32 1.0, %v1129
        %v1131 = vrcp.pop %v1077
        %v1132 = vmul.f32 1.0, %v1131
        %v1133 = vrcp.pop %v1078
        %v1134 = vmul.f32 1.0, %v1133
        %v1135 = vrcp.pop %v1079
        %v1136 = vmul.f32 1.0, %v1135
        %v1137 = vrcp.pop %v1080
        %v1138 = vmul.f32 1.0, %v1137
        %v1139 = vrcp.pop %v1081
        %v1140 = vmul.f32 1.0, %v1139
        %v1141 = vrcp.pop %v1082
        %v1142 = vmul.f32 1.0, %v1141
        %v1143 = vrcp.pop %v1083
        %v1144 = vmul.f32 1.0, %v1143
        %v1145 = vrcp.pop %v1084
        %v1146 = vmul.f32 1.0, %v1145
        %v1147 = vrcp.pop %v1085
        %v1148 = vmul.f32 1.0, %v1147
        %v1149 = vrcp.pop %v1086
        %v1150 = vmul.f32 1.0, %v1149
        %v1151 = vmul.f32 %v927, %v1088
        %v1152 = vmul.f32 %v928, %v1090
        %v1153 = vmul.f32 %v929, %v1092
        %v1154 = vmul.f32 %v930, %v1094
        %v1155 = vmul.f32 %v931, %v1096
        %v1156 = vmul.f32 %v932, %v1098
        %v1157 = vmul.f32 %v933, %v1100
        %v1158 = vmul.f32 %v934, %v1102
        %v1159 = vmul.f32 %v935, %v1104
        %v1160 = vmul.f32 %v936, %v1106
        %v1161 = vmul.f32 %v937, %v1108
        %v1162 = vmul.f32 %v938, %v1110
        %v1163 = vmul.f32 %v939, %v1112
        %v1164 = vmul.f32 %v940, %v1114
        %v1165 = vmul.f32 %v941, %v1116
        %v1166 = vmul.f32 %v942, %v1118
        %v1167 = vmul.f32 %v943, %v1120
        %v1168 = vmul.f32 %v944, %v1122
        %v1169 = vmul.f32 %v945, %v1124
        %v1170 = vmul.f32 %v946, %v1126
        %v1171 = vmul.f32 %v947, %v1128
        %v1172 = vmul.f32 %v948, %v1130
        %v1173 = vmul.f32 %v949, %v1132
        %v1174 = vmul.f32 %v950, %v1134
        %v1175 = vmul.f32 %v951, %v1136
        %v1176 = vmul.f32 %v952, %v1138
        %v1177 = vmul.f32 %v953, %v1140
        %v1178 = vmul.f32 %v954, %v1142
        %v1179 = vmul.f32 %v955, %v1144
        %v1180 = vmul.f32 %v956, %v1146
        %v1181 = vmul.f32 %v957, %v1148
        %v1182 = vmul.f32 %v958, %v1150
        %v1183 = vld [vmem:[%s349] sm:$0xf]
        %v1184 = vld [vmem:[%s349 + $0x4] sm:$0xf]
        %v1185 = vld [vmem:[%s349 + $0x8] sm:$0xf]
        %v1186 = vld [vmem:[%s349 + $0xc] sm:$0xf]
        %v1187 = vld [vmem:[%s349 + $0x10] sm:$0xf]
        %v1188 = vld [vmem:[%s349 + $0x14] sm:$0xf]
        %v1189 = vld [vmem:[%s349 + $0x18] sm:$0xf]
        %v1190 = vld [vmem:[%s349 + $0x1c] sm:$0xf]
        %v1191 = vld [vmem:[%s349 + $0x20] sm:$0xf]
        %v1192 = vld [vmem:[%s349 + $0x24] sm:$0xf]
        %v1193 = vld [vmem:[%s349 + $0x28] sm:$0xf]
        %v1194 = vld [vmem:[%s349 + $0x2c] sm:$0xf]
        %v1195 = vld [vmem:[%s349 + $0x30] sm:$0xf]
        %v1196 = vld [vmem:[%s349 + $0x34] sm:$0xf]
        %v1197 = vld [vmem:[%s349 + $0x38] sm:$0xf]
        %v1198 = vld [vmem:[%s349 + $0x3c] sm:$0xf]
        %v1199 = vld [vmem:[%s349 + $0x40] sm:$0xf]
        %v1200 = vld [vmem:[%s349 + $0x44] sm:$0xf]
        %v1201 = vld [vmem:[%s349 + $0x48] sm:$0xf]
        %v1202 = vld [vmem:[%s349 + $0x4c] sm:$0xf]
        %v1203 = vld [vmem:[%s349 + $0x50] sm:$0xf]
        %v1204 = vld [vmem:[%s349 + $0x54] sm:$0xf]
        %v1205 = vld [vmem:[%s349 + $0x58] sm:$0xf]
        %v1206 = vld [vmem:[%s349 + $0x5c] sm:$0xf]
        %v1207 = vld [vmem:[%s349 + $0x60] sm:$0xf]
        %v1208 = vld [vmem:[%s349 + $0x64] sm:$0xf]
        %v1209 = vld [vmem:[%s349 + $0x68] sm:$0xf]
        %v1210 = vld [vmem:[%s349 + $0x6c] sm:$0xf]
        %v1211 = vld [vmem:[%s349 + $0x70] sm:$0xf]
        %v1212 = vld [vmem:[%s349 + $0x74] sm:$0xf]
        %v1213 = vld [vmem:[%s349 + $0x78] sm:$0xf]
        %v1214 = vld [vmem:[%s349 + $0x7c] sm:$0xf]
        %v1215 = vunpack.c.l.bf16 %v1183
        %v1216 = vunpack.c.l.bf16 %v1184
        %v1217 = vunpack.c.l.bf16 %v1185
        %v1218 = vunpack.c.l.bf16 %v1186
        %v1219 = vunpack.c.l.bf16 %v1187
        %v1220 = vunpack.c.l.bf16 %v1188
        %v1221 = vunpack.c.l.bf16 %v1189
        %v1222 = vunpack.c.l.bf16 %v1190
        %v1223 = vunpack.c.l.bf16 %v1191
        %v1224 = vunpack.c.l.bf16 %v1192
        %v1225 = vunpack.c.l.bf16 %v1193
        %v1226 = vunpack.c.l.bf16 %v1194
        %v1227 = vunpack.c.l.bf16 %v1195
        %v1228 = vunpack.c.l.bf16 %v1196
        %v1229 = vunpack.c.l.bf16 %v1197
        %v1230 = vunpack.c.l.bf16 %v1198
        %v1231 = vunpack.c.l.bf16 %v1199
        %v1232 = vunpack.c.l.bf16 %v1200
        %v1233 = vunpack.c.l.bf16 %v1201
        %v1234 = vunpack.c.l.bf16 %v1202
        %v1235 = vunpack.c.l.bf16 %v1203
        %v1236 = vunpack.c.l.bf16 %v1204
        %v1237 = vunpack.c.l.bf16 %v1205
        %v1238 = vunpack.c.l.bf16 %v1206
        %v1239 = vunpack.c.l.bf16 %v1207
        %v1240 = vunpack.c.l.bf16 %v1208
        %v1241 = vunpack.c.l.bf16 %v1209
        %v1242 = vunpack.c.l.bf16 %v1210
        %v1243 = vunpack.c.l.bf16 %v1211
        %v1244 = vunpack.c.l.bf16 %v1212
        %v1245 = vunpack.c.l.bf16 %v1213
        %v1246 = vunpack.c.l.bf16 %v1214
        %v1247 = vadd.f32 %v1151, %v1215
        %v1248 = vadd.f32 %v1152, %v1216
        %v1249 = vadd.f32 %v1153, %v1217
        %v1250 = vadd.f32 %v1154, %v1218
        %v1251 = vadd.f32 %v1155, %v1219
        %v1252 = vadd.f32 %v1156, %v1220
        %v1253 = vadd.f32 %v1157, %v1221
        %v1254 = vadd.f32 %v1158, %v1222
        %v1255 = vadd.f32 %v1159, %v1223
        %v1256 = vadd.f32 %v1160, %v1224
        %v1257 = vadd.f32 %v1161, %v1225
        %v1258 = vadd.f32 %v1162, %v1226
        %v1259 = vadd.f32 %v1163, %v1227
        %v1260 = vadd.f32 %v1164, %v1228
        %v1261 = vadd.f32 %v1165, %v1229
        %v1262 = vadd.f32 %v1166, %v1230
        %v1263 = vadd.f32 %v1167, %v1231
        %v1264 = vadd.f32 %v1168, %v1232
        %v1265 = vadd.f32 %v1169, %v1233
        %v1266 = vadd.f32 %v1170, %v1234
        %v1267 = vadd.f32 %v1171, %v1235
        %v1268 = vadd.f32 %v1172, %v1236
        %v1269 = vadd.f32 %v1173, %v1237
        %v1270 = vadd.f32 %v1174, %v1238
        %v1271 = vadd.f32 %v1175, %v1239
        %v1272 = vadd.f32 %v1176, %v1240
        %v1273 = vadd.f32 %v1177, %v1241
        %v1274 = vadd.f32 %v1178, %v1242
        %v1275 = vadd.f32 %v1179, %v1243
        %v1276 = vadd.f32 %v1180, %v1244
        %v1277 = vadd.f32 %v1181, %v1245
        %v1278 = vadd.f32 %v1182, %v1246
        %v1279 = vpack.c.bf16 %v1248, %v1247
        %v1280 = vpack.c.bf16 %v1250, %v1249
        %v1281 = vpack.c.bf16 %v1252, %v1251
        %v1282 = vpack.c.bf16 %v1254, %v1253
        %v1283 = vpack.c.bf16 %v1256, %v1255
        %v1284 = vpack.c.bf16 %v1258, %v1257
        %v1285 = vpack.c.bf16 %v1260, %v1259
        %v1286 = vpack.c.bf16 %v1262, %v1261
        %v1287 = vpack.c.bf16 %v1264, %v1263
        %v1288 = vpack.c.bf16 %v1266, %v1265
        %v1289 = vpack.c.bf16 %v1268, %v1267
        %v1290 = vpack.c.bf16 %v1270, %v1269
        %v1291 = vpack.c.bf16 %v1272, %v1271
        %v1292 = vpack.c.bf16 %v1274, %v1273
        %v1293 = vpack.c.bf16 %v1276, %v1275
        %v1294 = vpack.c.bf16 %v1278, %v1277
        %v1311 = vunpack.c.l.b16 %v1279
        %v1312 = vunpack.c.h.b16 %v1279
        %v1313 = vunpack.c.l.b16 %v1280
        %v1314 = vunpack.c.h.b16 %v1280
        %v1315 = vunpack.c.l.b16 %v1281
        %v1316 = vunpack.c.h.b16 %v1281
        %v1317 = vunpack.c.l.b16 %v1282
        %v1318 = vunpack.c.h.b16 %v1282
        %v1319 = vunpack.c.l.b16 %v1283
        %v1320 = vunpack.c.h.b16 %v1283
        %v1321 = vunpack.c.l.b16 %v1284
        %v1322 = vunpack.c.h.b16 %v1284
        %v1323 = vunpack.c.l.b16 %v1285
        %v1324 = vunpack.c.h.b16 %v1285
        %v1325 = vunpack.c.l.b16 %v1286
        %v1326 = vunpack.c.h.b16 %v1286
        %v1327 = vunpack.c.l.b16 %v1287
        %v1328 = vunpack.c.h.b16 %v1287
        %v1329 = vunpack.c.l.b16 %v1288
        %v1330 = vunpack.c.h.b16 %v1288
        %v1331 = vunpack.c.l.b16 %v1289
        %v1332 = vunpack.c.h.b16 %v1289
        %v1333 = vunpack.c.l.b16 %v1290
        %v1334 = vunpack.c.h.b16 %v1290
        %v1335 = vunpack.c.l.b16 %v1291
        %v1336 = vunpack.c.h.b16 %v1291
        %v1337 = vunpack.c.l.b16 %v1292
        %v1338 = vunpack.c.h.b16 %v1292
        %v1339 = vunpack.c.l.b16 %v1293
        %v1340 = vunpack.c.h.b16 %v1293
        %v1341 = vunpack.c.l.b16 %v1294
        %v1342 = vunpack.c.h.b16 %v1294
        %v1343 = vpack.c.b16 %v1311, %v1311
        %v1344 = vpack.c.b16 %v1312, %v1312
        %v1345 = vpack.c.b16 %v1313, %v1313
        %v1346 = vpack.c.b16 %v1314, %v1314
        %v1347 = vpack.c.b16 %v1315, %v1315
        %v1348 = vpack.c.b16 %v1316, %v1316
        %v1349 = vpack.c.b16 %v1317, %v1317
        %v1350 = vpack.c.b16 %v1318, %v1318
        %v1351 = vpack.c.b16 %v1319, %v1319
        %v1352 = vpack.c.b16 %v1320, %v1320
        %v1353 = vpack.c.b16 %v1321, %v1321
        %v1354 = vpack.c.b16 %v1322, %v1322
        %v1355 = vpack.c.b16 %v1323, %v1323
        %v1356 = vpack.c.b16 %v1324, %v1324
        %v1357 = vpack.c.b16 %v1325, %v1325
        %v1358 = vpack.c.b16 %v1326, %v1326
        %v1359 = vpack.c.b16 %v1327, %v1327
        %v1360 = vpack.c.b16 %v1328, %v1328
        %v1361 = vpack.c.b16 %v1329, %v1329
        %v1362 = vpack.c.b16 %v1330, %v1330
        %v1363 = vpack.c.b16 %v1331, %v1331
        %v1364 = vpack.c.b16 %v1332, %v1332
        %v1365 = vpack.c.b16 %v1333, %v1333
        %v1366 = vpack.c.b16 %v1334, %v1334
        %v1367 = vpack.c.b16 %v1335, %v1335
        %v1368 = vpack.c.b16 %v1336, %v1336
        %v1369 = vpack.c.b16 %v1337, %v1337
        %v1370 = vpack.c.b16 %v1338, %v1338
        %v1371 = vpack.c.b16 %v1339, %v1339
        %v1372 = vpack.c.b16 %v1340, %v1340
        %v1373 = vpack.c.b16 %v1341, %v1341
        %v1374 = vpack.c.b16 %v1342, %v1342
        %1407 = vst [vmem:[%s358] sm:$0xf] %v1343
        %1408 = vst [vmem:[%s358 + $0x4] sm:$0xf] %v1344
        %1409 = vst [vmem:[%s358 + $0x8] sm:$0xf] %v1345
        %1410 = vst [vmem:[%s358 + $0xc] sm:$0xf] %v1346
        %1411 = vst [vmem:[%s358 + $0x10] sm:$0xf] %v1347
        %1412 = vst [vmem:[%s358 + $0x14] sm:$0xf] %v1348
        %1413 = vst [vmem:[%s358 + $0x18] sm:$0xf] %v1349
        %1414 = vst [vmem:[%s358 + $0x1c] sm:$0xf] %v1350
        %1415 = vst [vmem:[%s358 + $0x20] sm:$0xf] %v1351
        %1416 = vst [vmem:[%s358 + $0x24] sm:$0xf] %v1352
        %1417 = vst [vmem:[%s358 + $0x28] sm:$0xf] %v1353
        %1418 = vst [vmem:[%s358 + $0x2c] sm:$0xf] %v1354
        %1419 = vst [vmem:[%s358 + $0x30] sm:$0xf] %v1355
        %1420 = vst [vmem:[%s358 + $0x34] sm:$0xf] %v1356
        %1421 = vst [vmem:[%s358 + $0x38] sm:$0xf] %v1357
        %1422 = vst [vmem:[%s358 + $0x3c] sm:$0xf] %v1358
        %1423 = vst [vmem:[%s358 + $0x40] sm:$0xf] %v1359
        %1424 = vst [vmem:[%s358 + $0x44] sm:$0xf] %v1360
        %1425 = vst [vmem:[%s358 + $0x48] sm:$0xf] %v1361
        %1426 = vst [vmem:[%s358 + $0x4c] sm:$0xf] %v1362
        %1427 = vst [vmem:[%s358 + $0x50] sm:$0xf] %v1363
        %1428 = vst [vmem:[%s358 + $0x54] sm:$0xf] %v1364
        %1429 = vst [vmem:[%s358 + $0x58] sm:$0xf] %v1365
        %1430 = vst [vmem:[%s358 + $0x5c] sm:$0xf] %v1366
        %1431 = vst [vmem:[%s358 + $0x60] sm:$0xf] %v1367
        %1432 = vst [vmem:[%s358 + $0x64] sm:$0xf] %v1368
        %1433 = vst [vmem:[%s358 + $0x68] sm:$0xf] %v1369
        %1434 = vst [vmem:[%s358 + $0x6c] sm:$0xf] %v1370
        %1435 = vst [vmem:[%s358 + $0x70] sm:$0xf] %v1371
        %1436 = vst [vmem:[%s358 + $0x74] sm:$0xf] %v1372
        %1437 = vst [vmem:[%s358 + $0x78] sm:$0xf] %v1373
        %1438 = vst [vmem:[%s358 + $0x7c] sm:$0xf] %v1374
      $region48: #{neck_forward.48} parent=39 // pred_fallthru
        _
      %s1439 = smul.u32 32, %s21
      %p1440 = scmp.lt.s32.totalorder %s1439, 63
      %s1441 = scalar_select %p1440, %s1439, 63
      %p1442 = scmp.lt.s32.totalorder %s22, 0
      %s1443 = scalar_select %p1442, %s22, 0
      %s1444 = sadd.s32 %s1443, %s1441
      %s1445 = smul.addr %s1444, 4
      %s1446 = scalar_lea.vmem %s5, %s1445
      // Predicated region
      $region49: #{neck_forward.48} parent=39 // pred_check
        %p1447 = pneg %p191
      $region50: #{neck_forward.48} parent=39 // pred_check_branch
        %1449 = sbr.rel (%p1447) target = $region52
      $region51: #{neck_forward.48} parent=39 // pred_region
        %s1450 = smul.u32 32, %s21
      $region52: #{neck_forward.48} parent=39 // pred_fallthru
        _
    $region40: #{neck_forward.48} parent=5 // pred_fallthru
      _
    %p1451 = scmp.le.s32.totalorder 2, %s11
    // Predicated region
    $region53: #{neck_forward.48} parent=5 // pred_check
      %p1452 = pneg %p1451
    $region54: #{neck_forward.48} parent=5 // pred_check_branch
      %1454 = sbr.rel (%p1452) target = $region56
    $region55: #{neck_forward.48} parent=5 // pred_region
      %s1455 = ssub.s32 %s11, 2
      // Predicated region
      $region57: #{neck_forward.48} parent=55 // pred_check
        %p1456 = pneg %p197
      $region58: #{neck_forward.48} parent=55 // pred_check_branch
        %1458 = sbr.rel (%p1456) target = $region60
      $region59: #{neck_forward.48} parent=55 // pred_region
        %s1459 = smul.u32 32, %s24
        %p1460 = scmp.lt.s32.totalorder %s1459, 63
        %s1461 = scalar_select %p1460, %s1459, 63
        %p1462 = scmp.lt.s32.totalorder %s25, 0
        %s1463 = scalar_select %p1462, %s25, 0
        %s1464 = sadd.s32 %s1463, %s1461
        %s1465 = smul.addr %s1464, 4
        %s1466 = scalar_lea.vmem %s5, %s1465
      $region60: #{neck_forward.48} parent=55 // pred_fallthru
        _
    $region56: #{neck_forward.48} parent=5 // pred_fallthru
      _
  $region6: #{neck_forward.48} parent=0 // loop_footer
    %s15 = sadd.s32 1, %s11
  $region7: #{neck_forward.48} parent=0 // loop_footer_branch
    %10 = sbr.rel target = $region3
  $region8: #{neck_forward.48} parent=0 // loop_exit
    _

// kernel: neck_forward.54
$region0: #{neck_forward.54}
  #allocation0 [shape = 'u32[]', space=smem, size = 0x4, offset = 0x4, fixed_abs, tag = 'smem constant byte address 0x4 - core index']
  #allocation1 [shape = 'u32[144,128]{1,0:T(1,128)}', space=vmem, size = 0x12000, scoped, tag = 'internal scratch']
  #allocation2 [shape = 'f32[128,128]{1,0:T(8,128)}', space=vmem, size = 0x10000, scoped, tag = 'scratch operand']
  %s0 = inlined_call_operand.vmem [shape: bf16[128,256], index: 0, kind: input, shape index: {}]
  %s1 = inlined_call_operand.vmem [shape: bf16[256,128], index: 1, kind: input, shape index: {}]
  %s2 = inlined_call_operand.vmem [shape: f32[1,128], index: 2, kind: input, shape index: {}]
  %s3 = inlined_call_operand.vmem [shape: f32[1,128], index: 3, kind: input, shape index: {}]
  %s4 = inlined_call_operand.vmem [shape: bf16[128,128], index: 4, kind: output, shape index: {}]
  %s5 = sld [smem:[#allocation0]]
  $region34: #{neck_forward.54} parent=0
    _
  %s7 = ssub.s32 1, %s5
  %s8 = scalar_select 0, %s7, %s5
  // Predicated region
  $region2: #{neck_forward.54} parent=0 // pred_check
    _
  $region3: #{neck_forward.54} parent=0 // pred_check_branch
    %10 = sbr.rel (0) target = $region5
  $region4: #{neck_forward.54} parent=0 // pred_region
    _
  $region5: #{neck_forward.54} parent=0 // pred_fallthru
    _
  // Predicated region
  $region6: #{neck_forward.54} parent=0 // pred_check
    _
  $region7: #{neck_forward.54} parent=0 // pred_check_branch
    %12 = sbr.rel (0) target = $region9
  $region8: #{neck_forward.54} parent=0 // pred_region
    _
  $region9: #{neck_forward.54} parent=0 // pred_fallthru
    _
  // Predicated region
  $region10: #{neck_forward.54} parent=0 // pred_check
    _
  $region11: #{neck_forward.54} parent=0 // pred_check_branch
    %14 = sbr.rel (0) target = $region13
  $region12: #{neck_forward.54} parent=0 // pred_region
    _
  $region13: #{neck_forward.54} parent=0 // pred_fallthru
    _
  // Predicated region
  $region14: #{neck_forward.54} parent=0 // pred_check
    _
  $region15: #{neck_forward.54} parent=0 // pred_check_branch
    %16 = sbr.rel (0) target = $region17
  $region16: #{neck_forward.54} parent=0 // pred_region
    _
  $region17: #{neck_forward.54} parent=0 // pred_fallthru
    _
  %p18 = scmp.eq.s32.totalorder 0, 0
  // Predicated region
  $region18: #{neck_forward.54} parent=0 // pred_check
    %p19 = pneg %p18
  $region19: #{neck_forward.54} parent=0 // pred_check_branch
    %21 = sbr.rel (%p19) target = $region21
  $region20: #{neck_forward.54} parent=0 // pred_region
    %22 = vst [vmem:[#allocation2] sm:$0xff] 0.0
    %23 = vst [vmem:[#allocation2 + $0x8] sm:$0xff] 0.0
    %24 = vst [vmem:[#allocation2 + $0x10] sm:$0xff] 0.0
    %25 = vst [vmem:[#allocation2 + $0x18] sm:$0xff] 0.0
    %26 = vst [vmem:[#allocation2 + $0x20] sm:$0xff] 0.0
    %27 = vst [vmem:[#allocation2 + $0x28] sm:$0xff] 0.0
    %28 = vst [vmem:[#allocation2 + $0x30] sm:$0xff] 0.0
    %29 = vst [vmem:[#allocation2 + $0x38] sm:$0xff] 0.0
    %30 = vst [vmem:[#allocation2 + $0x40] sm:$0xff] 0.0
    %31 = vst [vmem:[#allocation2 + $0x48] sm:$0xff] 0.0
    %32 = vst [vmem:[#allocation2 + $0x50] sm:$0xff] 0.0
    %33 = vst [vmem:[#allocation2 + $0x58] sm:$0xff] 0.0
    %34 = vst [vmem:[#allocation2 + $0x60] sm:$0xff] 0.0
    %35 = vst [vmem:[#allocation2 + $0x68] sm:$0xff] 0.0
    %36 = vst [vmem:[#allocation2 + $0x70] sm:$0xff] 0.0
    %37 = vst [vmem:[#allocation2 + $0x78] sm:$0xff] 0.0
  $region21: #{neck_forward.54} parent=0 // pred_fallthru
    _
  %v38 = vld [vmem:[#allocation2] sm:$0xff]
  %v39 = vld [vmem:[#allocation2 + $0x8] sm:$0xff]
  %v40 = vld [vmem:[#allocation2 + $0x10] sm:$0xff]
  %v41 = vld [vmem:[#allocation2 + $0x18] sm:$0xff]
  %v42 = vld [vmem:[#allocation2 + $0x20] sm:$0xff]
  %v43 = vld [vmem:[#allocation2 + $0x28] sm:$0xff]
  %v44 = vld [vmem:[#allocation2 + $0x30] sm:$0xff]
  %v45 = vld [vmem:[#allocation2 + $0x38] sm:$0xff]
  %v46 = vld [vmem:[#allocation2 + $0x40] sm:$0xff]
  %v47 = vld [vmem:[#allocation2 + $0x48] sm:$0xff]
  %v48 = vld [vmem:[#allocation2 + $0x50] sm:$0xff]
  %v49 = vld [vmem:[#allocation2 + $0x58] sm:$0xff]
  %v50 = vld [vmem:[#allocation2 + $0x60] sm:$0xff]
  %v51 = vld [vmem:[#allocation2 + $0x68] sm:$0xff]
  %v52 = vld [vmem:[#allocation2 + $0x70] sm:$0xff]
  %v53 = vld [vmem:[#allocation2 + $0x78] sm:$0xff]
  %v54 = vld [vmem:[%s0] sm:$0xff]
  %v55 = vld [vmem:[%s0 + $0x8] sm:$0xff]
  %v56 = vld [vmem:[%s0 + $0x10] sm:$0xff]
  %v57 = vld [vmem:[%s0 + $0x18] sm:$0xff]
  %v58 = vld [vmem:[%s0 + $0x20] sm:$0xff]
  %v59 = vld [vmem:[%s0 + $0x28] sm:$0xff]
  %v60 = vld [vmem:[%s0 + $0x30] sm:$0xff]
  %v61 = vld [vmem:[%s0 + $0x38] sm:$0xff]
  %v62 = vld [vmem:[%s0 + $0x40] sm:$0xff]
  %v63 = vld [vmem:[%s0 + $0x48] sm:$0xff]
  %v64 = vld [vmem:[%s0 + $0x50] sm:$0xff]
  %v65 = vld [vmem:[%s0 + $0x58] sm:$0xff]
  %v66 = vld [vmem:[%s0 + $0x60] sm:$0xff]
  %v67 = vld [vmem:[%s0 + $0x68] sm:$0xff]
  %v68 = vld [vmem:[%s0 + $0x70] sm:$0xff]
  %v69 = vld [vmem:[%s0 + $0x78] sm:$0xff]
  %v70 = vld [vmem:[%s1] sm:$0xf]
  %v71 = vld [vmem:[%s1 + $0x4] sm:$0xf]
  %v72 = vld [vmem:[%s1 + $0x8] sm:$0xf]
  %v73 = vld [vmem:[%s1 + $0xc] sm:$0xf]
  %v74 = vld [vmem:[%s1 + $0x10] sm:$0xf]
  %v75 = vld [vmem:[%s1 + $0x14] sm:$0xf]
  %v76 = vld [vmem:[%s1 + $0x18] sm:$0xf]
  %v77 = vld [vmem:[%s1 + $0x1c] sm:$0xf]
  %v78 = vld [vmem:[%s1 + $0x20] sm:$0xf]
  %v79 = vld [vmem:[%s1 + $0x24] sm:$0xf]
  %v80 = vld [vmem:[%s1 + $0x28] sm:$0xf]
  %v81 = vld [vmem:[%s1 + $0x2c] sm:$0xf]
  %v82 = vld [vmem:[%s1 + $0x30] sm:$0xf]
  %v83 = vld [vmem:[%s1 + $0x34] sm:$0xf]
  %v84 = vld [vmem:[%s1 + $0x38] sm:$0xf]
  %v85 = vld [vmem:[%s1 + $0x3c] sm:$0xf]
  %v86 = vld [vmem:[%s1 + $0x40] sm:$0xf]
  %v87 = vld [vmem:[%s1 + $0x44] sm:$0xf]
  %v88 = vld [vmem:[%s1 + $0x48] sm:$0xf]
  %v89 = vld [vmem:[%s1 + $0x4c] sm:$0xf]
  %v90 = vld [vmem:[%s1 + $0x50] sm:$0xf]
  %v91 = vld [vmem:[%s1 + $0x54] sm:$0xf]
  %v92 = vld [vmem:[%s1 + $0x58] sm:$0xf]
  %v93 = vld [vmem:[%s1 + $0x5c] sm:$0xf]
  %v94 = vld [vmem:[%s1 + $0x60] sm:$0xf]
  %v95 = vld [vmem:[%s1 + $0x64] sm:$0xf]
  %v96 = vld [vmem:[%s1 + $0x68] sm:$0xf]
  %v97 = vld [vmem:[%s1 + $0x6c] sm:$0xf]
  %v98 = vld [vmem:[%s1 + $0x70] sm:$0xf]
  %v99 = vld [vmem:[%s1 + $0x74] sm:$0xf]
  %v100 = vld [vmem:[%s1 + $0x78] sm:$0xf]
  %v101 = vld [vmem:[%s1 + $0x7c] sm:$0xf]
  %v118 = vunpack.c.l.b16 %v54
  %v119 = vunpack.c.h.b16 %v54
  %v120 = vunpack.c.l.b16 %v55
  %v121 = vunpack.c.h.b16 %v55
  %v122 = vunpack.c.l.b16 %v56
  %v123 = vunpack.c.h.b16 %v56
  %v124 = vunpack.c.l.b16 %v57
  %v125 = vunpack.c.h.b16 %v57
  %v126 = vunpack.c.l.b16 %v58
  %v127 = vunpack.c.h.b16 %v58
  %v128 = vunpack.c.l.b16 %v59
  %v129 = vunpack.c.h.b16 %v59
  %v130 = vunpack.c.l.b16 %v60
  %v131 = vunpack.c.h.b16 %v60
  %v132 = vunpack.c.l.b16 %v61
  %v133 = vunpack.c.h.b16 %v61
  %v134 = vunpack.c.l.b16 %v62
  %v135 = vunpack.c.h.b16 %v62
  %v136 = vunpack.c.l.b16 %v63
  %v137 = vunpack.c.h.b16 %v63
  %v138 = vunpack.c.l.b16 %v64
  %v139 = vunpack.c.h.b16 %v64
  %v140 = vunpack.c.l.b16 %v65
  %v141 = vunpack.c.h.b16 %v65
  %v142 = vunpack.c.l.b16 %v66
  %v143 = vunpack.c.h.b16 %v66
  %v144 = vunpack.c.l.b16 %v67
  %v145 = vunpack.c.h.b16 %v67
  %v146 = vunpack.c.l.b16 %v68
  %v147 = vunpack.c.h.b16 %v68
  %v148 = vunpack.c.l.b16 %v69
  %v149 = vunpack.c.h.b16 %v69
  %v150 = vpack.c.b16 %v120, %v118
  %v151 = vpack.c.b16 %v121, %v119
  %v152 = vpack.c.b16 %v124, %v122
  %v153 = vpack.c.b16 %v125, %v123
  %v154 = vpack.c.b16 %v128, %v126
  %v155 = vpack.c.b16 %v129, %v127
  %v156 = vpack.c.b16 %v132, %v130
  %v157 = vpack.c.b16 %v133, %v131
  %v158 = vpack.c.b16 %v136, %v134
  %v159 = vpack.c.b16 %v137, %v135
  %v160 = vpack.c.b16 %v140, %v138
  %v161 = vpack.c.b16 %v141, %v139
  %v162 = vpack.c.b16 %v144, %v142
  %v163 = vpack.c.b16 %v145, %v143
  %v164 = vpack.c.b16 %v148, %v146
  %v165 = vpack.c.b16 %v149, %v147
  %v214 = vunpack.c.l.b16 %v70
  %v215 = vunpack.c.l.b16 %v71
  %v216 = vunpack.c.l.b16 %v72
  %v217 = vunpack.c.l.b16 %v73
  %v218 = vunpack.c.l.b16 %v74
  %v219 = vunpack.c.l.b16 %v75
  %v220 = vunpack.c.l.b16 %v76
  %v221 = vunpack.c.l.b16 %v77
  %v222 = vunpack.c.l.b16 %v78
  %v223 = vunpack.c.l.b16 %v79
  %v224 = vunpack.c.l.b16 %v80
  %v225 = vunpack.c.l.b16 %v81
  %v226 = vunpack.c.l.b16 %v82
  %v227 = vunpack.c.l.b16 %v83
  %v228 = vunpack.c.l.b16 %v84
  %v229 = vunpack.c.l.b16 %v85
  %v230 = vunpack.c.l.b16 %v86
  %v231 = vunpack.c.l.b16 %v87
  %v232 = vunpack.c.l.b16 %v88
  %v233 = vunpack.c.l.b16 %v89
  %v234 = vunpack.c.l.b16 %v90
  %v235 = vunpack.c.l.b16 %v91
  %v236 = vunpack.c.l.b16 %v92
  %v237 = vunpack.c.l.b16 %v93
  %v238 = vunpack.c.l.b16 %v94
  %v239 = vunpack.c.l.b16 %v95
  %v240 = vunpack.c.l.b16 %v96
  %v241 = vunpack.c.l.b16 %v97
  %v242 = vunpack.c.l.b16 %v98
  %v243 = vunpack.c.l.b16 %v99
  %v244 = vunpack.c.l.b16 %v100
  %v245 = vunpack.c.l.b16 %v101
  %v246 = vpack.c.b16 %v215, %v214
  %v247 = vpack.c.b16 %v217, %v216
  %v248 = vpack.c.b16 %v219, %v218
  %v249 = vpack.c.b16 %v221, %v220
  %v250 = vpack.c.b16 %v223, %v222
  %v251 = vpack.c.b16 %v225, %v224
  %v252 = vpack.c.b16 %v227, %v226
  %v253 = vpack.c.b16 %v229, %v228
  %v254 = vpack.c.b16 %v231, %v230
  %v255 = vpack.c.b16 %v233, %v232
  %v256 = vpack.c.b16 %v235, %v234
  %v257 = vpack.c.b16 %v237, %v236
  %v258 = vpack.c.b16 %v239, %v238
  %v259 = vpack.c.b16 %v241, %v240
  %v260 = vpack.c.b16 %v243, %v242
  %v261 = vpack.c.b16 %v245, %v244
  %278 = vmatprep.subr.bf16.mxu0 0
  %279 = vmatpush1.bf16.msra.mxu0 %v253
  %280 = vmatprep.subr.bf16.mxu0 0
  %281 = vmatpush1.bf16.msra.mxu0 %v252
  %282 = vmatprep.subr.bf16.mxu0 0
  %283 = vmatpush1.bf16.msra.mxu0 %v251
  %284 = vmatprep.subr.bf16.mxu0 0
  %285 = vmatpush1.bf16.msra.mxu0 %v250
  %286 = vmatprep.subr.bf16.mxu0 0
  %287 = vmatpush1.bf16.msra.mxu0 %v249
  %288 = vmatprep.subr.bf16.mxu0 0
  %289 = vmatpush1.bf16.msra.mxu0 %v248
  %290 = vmatprep.subr.bf16.mxu0 0
  %291 = vmatpush1.bf16.msra.mxu0 %v247
  %292 = vmatprep.subr.bf16.mxu0 0
  %293 = vmatpush1.bf16.msra.mxu0 %v246
  %294 = vmatprep.subr.bf16.mxu0 0
  %295 = vmatpush2.bf16.msra.mxu0 %v261
  %296 = vmatprep.subr.bf16.mxu0 0
  %297 = vmatpush2.bf16.msra.mxu0 %v260
  %298 = vmatprep.subr.bf16.mxu0 0
  %299 = vmatpush2.bf16.msra.mxu0 %v259
  %300 = vmatprep.subr.bf16.mxu0 0
  %301 = vmatpush2.bf16.msra.mxu0 %v258
  %302 = vmatprep.subr.bf16.mxu0 0
  %303 = vmatpush2.bf16.msra.mxu0 %v257
  %304 = vmatprep.subr.bf16.mxu0 0
  %305 = vmatpush2.bf16.msra.mxu0 %v256
  %306 = vmatprep.subr.bf16.mxu0 0
  %307 = vmatpush2.bf16.msra.mxu0 %v255
  %308 = vmatprep.subr.bf16.mxu0 0
  %309 = vmatpush2.bf16.msra.mxu0 %v254
  %310 = vmatprep.mubr.bf16.mxu0 %v151
  %311 = vmatmul.mubr.bf16.gmra.mxu0 %v150
  %v312 = vpop.f32.mrf.mxu0
  %v313 = vadd.f32 0.0, %v312
  %v314 = vpop.f32.mrf.mxu0
  %v315 = vpop.f32.mrf.mxu0
  %v316 = vadd.f32 0.0, %v315
  %v317 = vpop.f32.mrf.mxu0
  %318 = vmatprep.mubr.bf16.mxu0 %v153
  %319 = vmatmul.mubr.bf16.gmra.mxu0 %v152
  %v320 = vpop.f32.mrf.mxu0
  %v321 = vadd.f32 0.0, %v320
  %v322 = vpop.f32.mrf.mxu0
  %v323 = vpop.f32.mrf.mxu0
  %v324 = vadd.f32 0.0, %v323
  %v325 = vpop.f32.mrf.mxu0
  %326 = vmatprep.mubr.bf16.mxu0 %v155
  %327 = vmatmul.mubr.bf16.gmra.mxu0 %v154
  %v328 = vpop.f32.mrf.mxu0
  %v329 = vadd.f32 0.0, %v328
  %v330 = vpop.f32.mrf.mxu0
  %v331 = vpop.f32.mrf.mxu0
  %v332 = vadd.f32 0.0, %v331
  %v333 = vpop.f32.mrf.mxu0
  %334 = vmatprep.mubr.bf16.mxu0 %v157
  %335 = vmatmul.mubr.bf16.gmra.mxu0 %v156
  %v336 = vpop.f32.mrf.mxu0
  %v337 = vadd.f32 0.0, %v336
  %v338 = vpop.f32.mrf.mxu0
  %v339 = vpop.f32.mrf.mxu0
  %v340 = vadd.f32 0.0, %v339
  %v341 = vpop.f32.mrf.mxu0
  %342 = vmatprep.mubr.bf16.mxu0 %v159
  %343 = vmatmul.mubr.bf16.gmra.mxu0 %v158
  %v344 = vpop.f32.mrf.mxu0
  %v345 = vadd.f32 0.0, %v344
  %v346 = vpop.f32.mrf.mxu0
  %v347 = vpop.f32.mrf.mxu0
  %v348 = vadd.f32 0.0, %v347
  %v349 = vpop.f32.mrf.mxu0
  %350 = vmatprep.mubr.bf16.mxu0 %v161
  %351 = vmatmul.mubr.bf16.gmra.mxu0 %v160
  %v352 = vpop.f32.mrf.mxu0
  %v353 = vadd.f32 0.0, %v352
  %v354 = vpop.f32.mrf.mxu0
  %v355 = vpop.f32.mrf.mxu0
  %v356 = vadd.f32 0.0, %v355
  %v357 = vpop.f32.mrf.mxu0
  %358 = vmatprep.mubr.bf16.mxu0 %v163
  %359 = vmatmul.mubr.bf16.gmra.mxu0 %v162
  %v360 = vpop.f32.mrf.mxu0
  %v361 = vadd.f32 0.0, %v360
  %v362 = vpop.f32.mrf.mxu0
  %v363 = vpop.f32.mrf.mxu0
  %v364 = vadd.f32 0.0, %v363
  %v365 = vpop.f32.mrf.mxu0
  %366 = vmatprep.mubr.bf16.mxu0 %v165
  %367 = vmatmul.mubr.bf16.gmra.mxu0 %v164
  %v368 = vpop.f32.mrf.mxu0
  %v369 = vadd.f32 0.0, %v368
  %v370 = vpop.f32.mrf.mxu0
  %v371 = vpop.f32.mrf.mxu0
  %v372 = vadd.f32 0.0, %v371
  %v373 = vpop.f32.mrf.mxu0
  %374 = vdwg.mxu0
  %v375 = vadd.f32 %v38, %v313
  %v376 = vadd.f32 %v39, %v316
  %v377 = vadd.f32 %v40, %v321
  %v378 = vadd.f32 %v41, %v324
  %v379 = vadd.f32 %v42, %v329
  %v380 = vadd.f32 %v43, %v332
  %v381 = vadd.f32 %v44, %v337
  %v382 = vadd.f32 %v45, %v340
  %v383 = vadd.f32 %v46, %v345
  %v384 = vadd.f32 %v47, %v348
  %v385 = vadd.f32 %v48, %v353
  %v386 = vadd.f32 %v49, %v356
  %v387 = vadd.f32 %v50, %v361
  %v388 = vadd.f32 %v51, %v364
  %v389 = vadd.f32 %v52, %v369
  %v390 = vadd.f32 %v53, %v372
  %391 = vst [vmem:[#allocation2] sm:$0xff] %v375
  %392 = vst [vmem:[#allocation2 + $0x8] sm:$0xff] %v376
  %393 = vst [vmem:[#allocation2 + $0x10] sm:$0xff] %v377
  %394 = vst [vmem:[#allocation2 + $0x18] sm:$0xff] %v378
  %395 = vst [vmem:[#allocation2 + $0x20] sm:$0xff] %v379
  %396 = vst [vmem:[#allocation2 + $0x28] sm:$0xff] %v380
  %397 = vst [vmem:[#allocation2 + $0x30] sm:$0xff] %v381
  %398 = vst [vmem:[#allocation2 + $0x38] sm:$0xff] %v382
  %399 = vst [vmem:[#allocation2 + $0x40] sm:$0xff] %v383
  %400 = vst [vmem:[#allocation2 + $0x48] sm:$0xff] %v384
  %401 = vst [vmem:[#allocation2 + $0x50] sm:$0xff] %v385
  %402 = vst [vmem:[#allocation2 + $0x58] sm:$0xff] %v386
  %403 = vst [vmem:[#allocation2 + $0x60] sm:$0xff] %v387
  %404 = vst [vmem:[#allocation2 + $0x68] sm:$0xff] %v388
  %405 = vst [vmem:[#allocation2 + $0x70] sm:$0xff] %v389
  %406 = vst [vmem:[#allocation2 + $0x78] sm:$0xff] %v390
  // Predicated region
  $region22: #{neck_forward.54} parent=0 // pred_check
    %p407 = pneg %p18
  $region23: #{neck_forward.54} parent=0 // pred_check_branch
    %409 = sbr.rel (%p407) target = $region25
  $region24: #{neck_forward.54} parent=0 // pred_region
    %v410 = vld [vmem:[#allocation2] sm:$0xff]
    %v411 = vld [vmem:[#allocation2 + $0x8] sm:$0xff]
    %v412 = vld [vmem:[#allocation2 + $0x10] sm:$0xff]
    %v413 = vld [vmem:[#allocation2 + $0x18] sm:$0xff]
    %v414 = vld [vmem:[#allocation2 + $0x20] sm:$0xff]
    %v415 = vld [vmem:[#allocation2 + $0x28] sm:$0xff]
    %v416 = vld [vmem:[#allocation2 + $0x30] sm:$0xff]
    %v417 = vld [vmem:[#allocation2 + $0x38] sm:$0xff]
    %v418 = vld [vmem:[#allocation2 + $0x40] sm:$0xff]
    %v419 = vld [vmem:[#allocation2 + $0x48] sm:$0xff]
    %v420 = vld [vmem:[#allocation2 + $0x50] sm:$0xff]
    %v421 = vld [vmem:[#allocation2 + $0x58] sm:$0xff]
    %v422 = vld [vmem:[#allocation2 + $0x60] sm:$0xff]
    %v423 = vld [vmem:[#allocation2 + $0x68] sm:$0xff]
    %v424 = vld [vmem:[#allocation2 + $0x70] sm:$0xff]
    %v425 = vld [vmem:[#allocation2 + $0x78] sm:$0xff]
    %v426 = vld [vmem:[%s2] sm:$0x1]
    %v428 = vlaneseq
    %v429 = vshrl.u32 %v428, 7
    %v430 = vsub.s32 0, %v429
    %v431 = vrot.slane %v426, %v430
    %v433 = vmul.f32 %v410, %v431
    %v434 = vmul.f32 %v411, %v431
    %v435 = vmul.f32 %v412, %v431
    %v436 = vmul.f32 %v413, %v431
    %v437 = vmul.f32 %v414, %v431
    %v438 = vmul.f32 %v415, %v431
    %v439 = vmul.f32 %v416, %v431
    %v440 = vmul.f32 %v417, %v431
    %v441 = vmul.f32 %v418, %v431
    %v442 = vmul.f32 %v419, %v431
    %v443 = vmul.f32 %v420, %v431
    %v444 = vmul.f32 %v421, %v431
    %v445 = vmul.f32 %v422, %v431
    %v446 = vmul.f32 %v423, %v431
    %v447 = vmul.f32 %v424, %v431
    %v448 = vmul.f32 %v425, %v431
    %v449 = vld [vmem:[%s3] sm:$0x1]
    %v451 = vlaneseq
    %v452 = vshrl.u32 %v451, 7
    %v453 = vsub.s32 0, %v452
    %v454 = vrot.slane %v449, %v453
    %v456 = vadd.f32 %v433, %v454
    %v457 = vadd.f32 %v434, %v454
    %v458 = vadd.f32 %v435, %v454
    %v459 = vadd.f32 %v436, %v454
    %v460 = vadd.f32 %v437, %v454
    %v461 = vadd.f32 %v438, %v454
    %v462 = vadd.f32 %v439, %v454
    %v463 = vadd.f32 %v440, %v454
    %v464 = vadd.f32 %v441, %v454
    %v465 = vadd.f32 %v442, %v454
    %v466 = vadd.f32 %v443, %v454
    %v467 = vadd.f32 %v444, %v454
    %v468 = vadd.f32 %v445, %v454
    %v469 = vadd.f32 %v446, %v454
    %v470 = vadd.f32 %v447, %v454
    %v471 = vadd.f32 %v448, %v454
    %v472 = vpack.c.bf16 %v457, %v456
    %v473 = vpack.c.bf16 %v459, %v458
    %v474 = vpack.c.bf16 %v461, %v460
    %v475 = vpack.c.bf16 %v463, %v462
    %v476 = vpack.c.bf16 %v465, %v464
    %v477 = vpack.c.bf16 %v467, %v466
    %v478 = vpack.c.bf16 %v469, %v468
    %v479 = vpack.c.bf16 %v471, %v470
    %v488 = vunpack.c.l.b16 %v472
    %v489 = vunpack.c.h.b16 %v472
    %v490 = vunpack.c.l.b16 %v473
    %v491 = vunpack.c.h.b16 %v473
    %v492 = vunpack.c.l.b16 %v474
    %v493 = vunpack.c.h.b16 %v474
    %v494 = vunpack.c.l.b16 %v475
    %v495 = vunpack.c.h.b16 %v475
    %v496 = vunpack.c.l.b16 %v476
    %v497 = vunpack.c.h.b16 %v476
    %v498 = vunpack.c.l.b16 %v477
    %v499 = vunpack.c.h.b16 %v477
    %v500 = vunpack.c.l.b16 %v478
    %v501 = vunpack.c.h.b16 %v478
    %v502 = vunpack.c.l.b16 %v479
    %v503 = vunpack.c.h.b16 %v479
    %v504 = vpack.c.b16 %v488, %v488
    %v505 = vpack.c.b16 %v489, %v489
    %v506 = vpack.c.b16 %v490, %v490
    %v507 = vpack.c.b16 %v491, %v491
    %v508 = vpack.c.b16 %v492, %v492
    %v509 = vpack.c.b16 %v493, %v493
    %v510 = vpack.c.b16 %v494, %v494
    %v511 = vpack.c.b16 %v495, %v495
    %v512 = vpack.c.b16 %v496, %v496
    %v513 = vpack.c.b16 %v497, %v497
    %v514 = vpack.c.b16 %v498, %v498
    %v515 = vpack.c.b16 %v499, %v499
    %v516 = vpack.c.b16 %v500, %v500
    %v517 = vpack.c.b16 %v501, %v501
    %v518 = vpack.c.b16 %v502, %v502
    %v519 = vpack.c.b16 %v503, %v503
    %536 = vst [vmem:[%s4] sm:$0xf] %v504
    %537 = vst [vmem:[%s4 + $0x4] sm:$0xf] %v505
    %538 = vst [vmem:[%s4 + $0x8] sm:$0xf] %v506
    %539 = vst [vmem:[%s4 + $0xc] sm:$0xf] %v507
    %540 = vst [vmem:[%s4 + $0x10] sm:$0xf] %v508
    %541 = vst [vmem:[%s4 + $0x14] sm:$0xf] %v509
    %542 = vst [vmem:[%s4 + $0x18] sm:$0xf] %v510
    %543 = vst [vmem:[%s4 + $0x1c] sm:$0xf] %v511
    %544 = vst [vmem:[%s4 + $0x20] sm:$0xf] %v512
    %545 = vst [vmem:[%s4 + $0x24] sm:$0xf] %v513
    %546 = vst [vmem:[%s4 + $0x28] sm:$0xf] %v514
    %547 = vst [vmem:[%s4 + $0x2c] sm:$0xf] %v515
    %548 = vst [vmem:[%s4 + $0x30] sm:$0xf] %v516
    %549 = vst [vmem:[%s4 + $0x34] sm:$0xf] %v517
    %550 = vst [vmem:[%s4 + $0x38] sm:$0xf] %v518
    %551 = vst [vmem:[%s4 + $0x3c] sm:$0xf] %v519
  $region25: #{neck_forward.54} parent=0 // pred_fallthru
    _
  // Predicated region
  $region26: #{neck_forward.54} parent=0 // pred_check
    _
  $region27: #{neck_forward.54} parent=0 // pred_check_branch
    %553 = sbr.rel (0) target = $region29
  $region28: #{neck_forward.54} parent=0 // pred_region
    _
  $region29: #{neck_forward.54} parent=0 // pred_fallthru
    _
  // Predicated region
  $region30: #{neck_forward.54} parent=0 // pred_check
    _
  $region31: #{neck_forward.54} parent=0 // pred_check_branch
    %555 = sbr.rel (0) target = $region33
  $region32: #{neck_forward.54} parent=0 // pred_region
    _
  $region33: #{neck_forward.54} parent=0 // pred_fallthru
    _

// kernel: neck_forward.63
$region0: #{neck_forward.63}
  #allocation0 [shape = 'u32[]', space=smem, size = 0x4, offset = 0x4, fixed_abs, tag = 'smem constant byte address 0x4 - core index']
  #allocation1 [shape = 'u32[144,128]{1,0:T(1,128)}', space=vmem, size = 0x12000, scoped, tag = 'internal scratch']
  #allocation2 [shape = 'f32[32,128]{1,0:T(8,128)}', space=vmem, size = 0x4000, scoped, tag = 'scratch operand']
  %s0 = inlined_call_operand.vmem [shape: bf16[32,384], index: 0, kind: input, shape index: {}]
  %s1 = inlined_call_operand.vmem [shape: bf16[384,128], index: 1, kind: input, shape index: {}]
  %s2 = inlined_call_operand.vmem [shape: f32[1,128], index: 2, kind: input, shape index: {}]
  %s3 = inlined_call_operand.vmem [shape: f32[1,128], index: 3, kind: input, shape index: {}]
  %s4 = inlined_call_operand.vmem [shape: bf16[32,128], index: 4, kind: output, shape index: {}]
  %s5 = sld [smem:[#allocation0]]
  $region34: #{neck_forward.63} parent=0
    _
  %s7 = ssub.s32 1, %s5
  %s8 = scalar_select 0, %s7, %s5
  // Predicated region
  $region2: #{neck_forward.63} parent=0 // pred_check
    _
  $region3: #{neck_forward.63} parent=0 // pred_check_branch
    %10 = sbr.rel (0) target = $region5
  $region4: #{neck_forward.63} parent=0 // pred_region
    _
  $region5: #{neck_forward.63} parent=0 // pred_fallthru
    _
  // Predicated region
  $region6: #{neck_forward.63} parent=0 // pred_check
    _
  $region7: #{neck_forward.63} parent=0 // pred_check_branch
    %12 = sbr.rel (0) target = $region9
  $region8: #{neck_forward.63} parent=0 // pred_region
    _
  $region9: #{neck_forward.63} parent=0 // pred_fallthru
    _
  // Predicated region
  $region10: #{neck_forward.63} parent=0 // pred_check
    _
  $region11: #{neck_forward.63} parent=0 // pred_check_branch
    %14 = sbr.rel (0) target = $region13
  $region12: #{neck_forward.63} parent=0 // pred_region
    _
  $region13: #{neck_forward.63} parent=0 // pred_fallthru
    _
  // Predicated region
  $region14: #{neck_forward.63} parent=0 // pred_check
    _
  $region15: #{neck_forward.63} parent=0 // pred_check_branch
    %16 = sbr.rel (0) target = $region17
  $region16: #{neck_forward.63} parent=0 // pred_region
    _
  $region17: #{neck_forward.63} parent=0 // pred_fallthru
    _
  %p18 = scmp.eq.s32.totalorder 0, 0
  // Predicated region
  $region18: #{neck_forward.63} parent=0 // pred_check
    %p19 = pneg %p18
  $region19: #{neck_forward.63} parent=0 // pred_check_branch
    %21 = sbr.rel (%p19) target = $region21
  $region20: #{neck_forward.63} parent=0 // pred_region
    %22 = vst [vmem:[#allocation2] sm:$0xff] 0.0
    %23 = vst [vmem:[#allocation2 + $0x8] sm:$0xff] 0.0
    %24 = vst [vmem:[#allocation2 + $0x10] sm:$0xff] 0.0
    %25 = vst [vmem:[#allocation2 + $0x18] sm:$0xff] 0.0
  $region21: #{neck_forward.63} parent=0 // pred_fallthru
    _
  %v26 = vld [vmem:[#allocation2] sm:$0xff]
  %v27 = vld [vmem:[#allocation2 + $0x8] sm:$0xff]
  %v28 = vld [vmem:[#allocation2 + $0x10] sm:$0xff]
  %v29 = vld [vmem:[#allocation2 + $0x18] sm:$0xff]
  %v30 = vld [vmem:[%s0] sm:$0xff]
  %v31 = vld [vmem:[%s0 + $0x8] sm:$0xf]
  %v32 = vld [vmem:[%s0 + $0xc] sm:$0xff]
  %v33 = vld [vmem:[%s0 + $0x14] sm:$0xf]
  %v34 = vld [vmem:[%s0 + $0x18] sm:$0xff]
  %v35 = vld [vmem:[%s0 + $0x20] sm:$0xf]
  %v36 = vld [vmem:[%s0 + $0x24] sm:$0xff]
  %v37 = vld [vmem:[%s0 + $0x2c] sm:$0xf]
  %v38 = vld [vmem:[%s1] sm:$0xf]
  %v39 = vld [vmem:[%s1 + $0x4] sm:$0xf]
  %v40 = vld [vmem:[%s1 + $0x8] sm:$0xf]
  %v41 = vld [vmem:[%s1 + $0xc] sm:$0xf]
  %v42 = vld [vmem:[%s1 + $0x10] sm:$0xf]
  %v43 = vld [vmem:[%s1 + $0x14] sm:$0xf]
  %v44 = vld [vmem:[%s1 + $0x18] sm:$0xf]
  %v45 = vld [vmem:[%s1 + $0x1c] sm:$0xf]
  %v46 = vld [vmem:[%s1 + $0x20] sm:$0xf]
  %v47 = vld [vmem:[%s1 + $0x24] sm:$0xf]
  %v48 = vld [vmem:[%s1 + $0x28] sm:$0xf]
  %v49 = vld [vmem:[%s1 + $0x2c] sm:$0xf]
  %v50 = vld [vmem:[%s1 + $0x30] sm:$0xf]
  %v51 = vld [vmem:[%s1 + $0x34] sm:$0xf]
  %v52 = vld [vmem:[%s1 + $0x38] sm:$0xf]
  %v53 = vld [vmem:[%s1 + $0x3c] sm:$0xf]
  %v54 = vld [vmem:[%s1 + $0x40] sm:$0xf]
  %v55 = vld [vmem:[%s1 + $0x44] sm:$0xf]
  %v56 = vld [vmem:[%s1 + $0x48] sm:$0xf]
  %v57 = vld [vmem:[%s1 + $0x4c] sm:$0xf]
  %v58 = vld [vmem:[%s1 + $0x50] sm:$0xf]
  %v59 = vld [vmem:[%s1 + $0x54] sm:$0xf]
  %v60 = vld [vmem:[%s1 + $0x58] sm:$0xf]
  %v61 = vld [vmem:[%s1 + $0x5c] sm:$0xf]
  %v62 = vld [vmem:[%s1 + $0x60] sm:$0xf]
  %v63 = vld [vmem:[%s1 + $0x64] sm:$0xf]
  %v64 = vld [vmem:[%s1 + $0x68] sm:$0xf]
  %v65 = vld [vmem:[%s1 + $0x6c] sm:$0xf]
  %v66 = vld [vmem:[%s1 + $0x70] sm:$0xf]
  %v67 = vld [vmem:[%s1 + $0x74] sm:$0xf]
  %v68 = vld [vmem:[%s1 + $0x78] sm:$0xf]
  %v69 = vld [vmem:[%s1 + $0x7c] sm:$0xf]
  %v70 = vld [vmem:[%s1 + $0x80] sm:$0xf]
  %v71 = vld [vmem:[%s1 + $0x84] sm:$0xf]
  %v72 = vld [vmem:[%s1 + $0x88] sm:$0xf]
  %v73 = vld [vmem:[%s1 + $0x8c] sm:$0xf]
  %v74 = vld [vmem:[%s1 + $0x90] sm:$0xf]
  %v75 = vld [vmem:[%s1 + $0x94] sm:$0xf]
  %v76 = vld [vmem:[%s1 + $0x98] sm:$0xf]
  %v77 = vld [vmem:[%s1 + $0x9c] sm:$0xf]
  %v78 = vld [vmem:[%s1 + $0xa0] sm:$0xf]
  %v79 = vld [vmem:[%s1 + $0xa4] sm:$0xf]
  %v80 = vld [vmem:[%s1 + $0xa8] sm:$0xf]
  %v81 = vld [vmem:[%s1 + $0xac] sm:$0xf]
  %v82 = vld [vmem:[%s1 + $0xb0] sm:$0xf]
  %v83 = vld [vmem:[%s1 + $0xb4] sm:$0xf]
  %v84 = vld [vmem:[%s1 + $0xb8] sm:$0xf]
  %v85 = vld [vmem:[%s1 + $0xbc] sm:$0xf]
  %v94 = vunpack.c.l.b16 %v30
  %v95 = vunpack.c.h.b16 %v30
  %v96 = vunpack.c.l.b16 %v31
  %v97 = vunpack.c.l.b16 %v32
  %v98 = vunpack.c.h.b16 %v32
  %v99 = vunpack.c.l.b16 %v33
  %v100 = vunpack.c.l.b16 %v34
  %v101 = vunpack.c.h.b16 %v34
  %v102 = vunpack.c.l.b16 %v35
  %v103 = vunpack.c.l.b16 %v36
  %v104 = vunpack.c.h.b16 %v36
  %v105 = vunpack.c.l.b16 %v37
  %v106 = vpack.c.b16 %v97, %v94
  %v107 = vpack.c.b16 %v98, %v95
  %v108 = vpack.c.b16 %v99, %v96
  %v109 = vpack.c.b16 %v103, %v100
  %v110 = vpack.c.b16 %v104, %v101
  %v111 = vpack.c.b16 %v105, %v102
  %v166 = vunpack.c.l.b16 %v38
  %v167 = vunpack.c.l.b16 %v39
  %v168 = vunpack.c.l.b16 %v40
  %v169 = vunpack.c.l.b16 %v41
  %v170 = vunpack.c.l.b16 %v42
  %v171 = vunpack.c.l.b16 %v43
  %v172 = vunpack.c.l.b16 %v44
  %v173 = vunpack.c.l.b16 %v45
  %v174 = vunpack.c.l.b16 %v46
  %v175 = vunpack.c.l.b16 %v47
  %v176 = vunpack.c.l.b16 %v48
  %v177 = vunpack.c.l.b16 %v49
  %v178 = vunpack.c.l.b16 %v50
  %v179 = vunpack.c.l.b16 %v51
  %v180 = vunpack.c.l.b16 %v52
  %v181 = vunpack.c.l.b16 %v53
  %v182 = vunpack.c.l.b16 %v54
  %v183 = vunpack.c.l.b16 %v55
  %v184 = vunpack.c.l.b16 %v56
  %v185 = vunpack.c.l.b16 %v57
  %v186 = vunpack.c.l.b16 %v58
  %v187 = vunpack.c.l.b16 %v59
  %v188 = vunpack.c.l.b16 %v60
  %v189 = vunpack.c.l.b16 %v61
  %v190 = vunpack.c.l.b16 %v62
  %v191 = vunpack.c.l.b16 %v63
  %v192 = vunpack.c.l.b16 %v64
  %v193 = vunpack.c.l.b16 %v65
  %v194 = vunpack.c.l.b16 %v66
  %v195 = vunpack.c.l.b16 %v67
  %v196 = vunpack.c.l.b16 %v68
  %v197 = vunpack.c.l.b16 %v69
  %v198 = vunpack.c.l.b16 %v70
  %v199 = vunpack.c.l.b16 %v71
  %v200 = vunpack.c.l.b16 %v72
  %v201 = vunpack.c.l.b16 %v73
  %v202 = vunpack.c.l.b16 %v74
  %v203 = vunpack.c.l.b16 %v75
  %v204 = vunpack.c.l.b16 %v76
  %v205 = vunpack.c.l.b16 %v77
  %v206 = vunpack.c.l.b16 %v78
  %v207 = vunpack.c.l.b16 %v79
  %v208 = vunpack.c.l.b16 %v80
  %v209 = vunpack.c.l.b16 %v81
  %v210 = vunpack.c.l.b16 %v82
  %v211 = vunpack.c.l.b16 %v83
  %v212 = vunpack.c.l.b16 %v84
  %v213 = vunpack.c.l.b16 %v85
  %v214 = vpack.c.b16 %v167, %v166
  %v215 = vpack.c.b16 %v169, %v168
  %v216 = vpack.c.b16 %v171, %v170
  %v217 = vpack.c.b16 %v173, %v172
  %v218 = vpack.c.b16 %v175, %v174
  %v219 = vpack.c.b16 %v177, %v176
  %v220 = vpack.c.b16 %v179, %v178
  %v221 = vpack.c.b16 %v181, %v180
  %v222 = vpack.c.b16 %v183, %v182
  %v223 = vpack.c.b16 %v185, %v184
  %v224 = vpack.c.b16 %v187, %v186
  %v225 = vpack.c.b16 %v189, %v188
  %v226 = vpack.c.b16 %v191, %v190
  %v227 = vpack.c.b16 %v193, %v192
  %v228 = vpack.c.b16 %v195, %v194
  %v229 = vpack.c.b16 %v197, %v196
  %v230 = vpack.c.b16 %v199, %v198
  %v231 = vpack.c.b16 %v201, %v200
  %v232 = vpack.c.b16 %v203, %v202
  %v233 = vpack.c.b16 %v205, %v204
  %v234 = vpack.c.b16 %v207, %v206
  %v235 = vpack.c.b16 %v209, %v208
  %v236 = vpack.c.b16 %v211, %v210
  %v237 = vpack.c.b16 %v213, %v212
  %262 = vmatprep.subr.bf16.mxu0 0
  %263 = vmatpush1.bf16.msra.mxu0 %v221
  %264 = vmatprep.subr.bf16.mxu0 0
  %265 = vmatpush1.bf16.msra.mxu0 %v220
  %266 = vmatprep.subr.bf16.mxu0 0
  %267 = vmatpush1.bf16.msra.mxu0 %v219
  %268 = vmatprep.subr.bf16.mxu0 0
  %269 = vmatpush1.bf16.msra.mxu0 %v218
  %270 = vmatprep.subr.bf16.mxu0 0
  %271 = vmatpush1.bf16.msra.mxu0 %v217
  %272 = vmatprep.subr.bf16.mxu0 0
  %273 = vmatpush1.bf16.msra.mxu0 %v216
  %274 = vmatprep.subr.bf16.mxu0 0
  %275 = vmatpush1.bf16.msra.mxu0 %v215
  %276 = vmatprep.subr.bf16.mxu0 0
  %277 = vmatpush1.bf16.msra.mxu0 %v214
  %278 = vmatprep.subr.bf16.mxu0 0
  %279 = vmatpush2.bf16.msra.mxu0 %v229
  %280 = vmatprep.subr.bf16.mxu0 0
  %281 = vmatpush2.bf16.msra.mxu0 %v228
  %282 = vmatprep.subr.bf16.mxu0 0
  %283 = vmatpush2.bf16.msra.mxu0 %v227
  %284 = vmatprep.subr.bf16.mxu0 0
  %285 = vmatpush2.bf16.msra.mxu0 %v226
  %286 = vmatprep.subr.bf16.mxu0 0
  %287 = vmatpush2.bf16.msra.mxu0 %v225
  %288 = vmatprep.subr.bf16.mxu0 0
  %289 = vmatpush2.bf16.msra.mxu0 %v224
  %290 = vmatprep.subr.bf16.mxu0 0
  %291 = vmatpush2.bf16.msra.mxu0 %v223
  %292 = vmatprep.subr.bf16.mxu0 0
  %293 = vmatpush2.bf16.msra.mxu0 %v222
  %294 = vmatprep.mubr.bf16.mxu0 %v107
  %295 = vmatmul.mubr.bf16.gmra.mxu0 %v106
  %v296 = vpop.f32.mrf.mxu0
  %v297 = vadd.f32 0.0, %v296
  %v298 = vpop.f32.mrf.mxu0
  %v299 = vpop.f32.mrf.mxu0
  %v300 = vadd.f32 0.0, %v299
  %v301 = vpop.f32.mrf.mxu0
  %302 = vmatprep.mubr.bf16.mxu0 %v110
  %303 = vmatmul.mubr.bf16.gmra.mxu0 %v109
  %v304 = vpop.f32.mrf.mxu0
  %v305 = vadd.f32 0.0, %v304
  %v306 = vpop.f32.mrf.mxu0
  %v307 = vpop.f32.mrf.mxu0
  %v308 = vadd.f32 0.0, %v307
  %v309 = vpop.f32.mrf.mxu0
  %310 = vdwg.mxu0
  %311 = vmatprep.subr.bf16.mxu0 0
  %312 = vmatpush1.bf16.msra.mxu0 %v237
  %313 = vmatprep.subr.bf16.mxu0 0
  %314 = vmatpush1.bf16.msra.mxu0 %v236
  %315 = vmatprep.subr.bf16.mxu0 0
  %316 = vmatpush1.bf16.msra.mxu0 %v235
  %317 = vmatprep.subr.bf16.mxu0 0
  %318 = vmatpush1.bf16.msra.mxu0 %v234
  %319 = vmatprep.subr.bf16.mxu0 0
  %320 = vmatpush1.bf16.msra.mxu0 %v233
  %321 = vmatprep.subr.bf16.mxu0 0
  %322 = vmatpush1.bf16.msra.mxu0 %v232
  %323 = vmatprep.subr.bf16.mxu0 0
  %324 = vmatpush1.bf16.msra.mxu0 %v231
  %325 = vmatprep.subr.bf16.mxu0 0
  %326 = vmatpush1.bf16.msra.mxu0 %v230
  %327 = vmatprep.subr.bf16.mxu0 0
  %328 = vmatpush2.bf16.msra.mxu0 0
  %329 = vmatprep.subr.bf16.mxu0 0
  %330 = vmatpush2.bf16.msra.mxu0 0
  %331 = vmatprep.subr.bf16.mxu0 0
  %332 = vmatpush2.bf16.msra.mxu0 0
  %333 = vmatprep.subr.bf16.mxu0 0
  %334 = vmatpush2.bf16.msra.mxu0 0
  %335 = vmatprep.subr.bf16.mxu0 0
  %336 = vmatpush2.bf16.msra.mxu0 0
  %337 = vmatprep.subr.bf16.mxu0 0
  %338 = vmatpush2.bf16.msra.mxu0 0
  %339 = vmatprep.subr.bf16.mxu0 0
  %340 = vmatpush2.bf16.msra.mxu0 0
  %341 = vmatprep.subr.bf16.mxu0 0
  %342 = vmatpush2.bf16.msra.mxu0 0
  %343 = vmatprep.mubr.bf16.mxu0 0
  %344 = vmatmul.mubr.bf16.gmra.mxu0 %v108
  %v345 = vpop.f32.mrf.mxu0
  %v346 = vadd.f32 %v297, %v345
  %v347 = vpop.f32.mrf.mxu0
  %v348 = vpop.f32.mrf.mxu0
  %v349 = vadd.f32 %v300, %v348
  %v350 = vpop.f32.mrf.mxu0
  %351 = vmatprep.mubr.bf16.mxu0 0
  %352 = vmatmul.mubr.bf16.gmra.mxu0 %v111
  %v353 = vpop.f32.mrf.mxu0
  %v354 = vadd.f32 %v305, %v353
  %v355 = vpop.f32.mrf.mxu0
  %v356 = vpop.f32.mrf.mxu0
  %v357 = vadd.f32 %v308, %v356
  %v358 = vpop.f32.mrf.mxu0
  %359 = vdwg.mxu0
  %v360 = vadd.f32 %v26, %v346
  %v361 = vadd.f32 %v27, %v349
  %v362 = vadd.f32 %v28, %v354
  %v363 = vadd.f32 %v29, %v357
  %364 = vst [vmem:[#allocation2] sm:$0xff] %v360
  %365 = vst [vmem:[#allocation2 + $0x8] sm:$0xff] %v361
  %366 = vst [vmem:[#allocation2 + $0x10] sm:$0xff] %v362
  %367 = vst [vmem:[#allocation2 + $0x18] sm:$0xff] %v363
  // Predicated region
  $region22: #{neck_forward.63} parent=0 // pred_check
    %p368 = pneg %p18
  $region23: #{neck_forward.63} parent=0 // pred_check_branch
    %370 = sbr.rel (%p368) target = $region25
  $region24: #{neck_forward.63} parent=0 // pred_region
    %v371 = vld [vmem:[#allocation2] sm:$0xff]
    %v372 = vld [vmem:[#allocation2 + $0x8] sm:$0xff]
    %v373 = vld [vmem:[#allocation2 + $0x10] sm:$0xff]
    %v374 = vld [vmem:[#allocation2 + $0x18] sm:$0xff]
    %v375 = vld [vmem:[%s2] sm:$0x1]
    %v377 = vlaneseq
    %v378 = vshrl.u32 %v377, 7
    %v379 = vsub.s32 0, %v378
    %v380 = vrot.slane %v375, %v379
    %v382 = vmul.f32 %v371, %v380
    %v383 = vmul.f32 %v372, %v380
    %v384 = vmul.f32 %v373, %v380
    %v385 = vmul.f32 %v374, %v380
    %v386 = vld [vmem:[%s3] sm:$0x1]
    %v388 = vlaneseq
    %v389 = vshrl.u32 %v388, 7
    %v390 = vsub.s32 0, %v389
    %v391 = vrot.slane %v386, %v390
    %v393 = vadd.f32 %v382, %v391
    %v394 = vadd.f32 %v383, %v391
    %v395 = vadd.f32 %v384, %v391
    %v396 = vadd.f32 %v385, %v391
    %v397 = vpack.c.bf16 %v394, %v393
    %v398 = vpack.c.bf16 %v396, %v395
    %v401 = vunpack.c.l.b16 %v397
    %v402 = vunpack.c.h.b16 %v397
    %v403 = vunpack.c.l.b16 %v398
    %v404 = vunpack.c.h.b16 %v398
    %v405 = vpack.c.b16 %v401, %v401
    %v406 = vpack.c.b16 %v402, %v402
    %v407 = vpack.c.b16 %v403, %v403
    %v408 = vpack.c.b16 %v404, %v404
    %413 = vst [vmem:[%s4] sm:$0xf] %v405
    %414 = vst [vmem:[%s4 + $0x4] sm:$0xf] %v406
    %415 = vst [vmem:[%s4 + $0x8] sm:$0xf] %v407
    %416 = vst [vmem:[%s4 + $0xc] sm:$0xf] %v408
  $region25: #{neck_forward.63} parent=0 // pred_fallthru
    _
  // Predicated region
  $region26: #{neck_forward.63} parent=0 // pred_check
    _
  $region27: #{neck_forward.63} parent=0 // pred_check_branch
    %418 = sbr.rel (0) target = $region29
  $region28: #{neck_forward.63} parent=0 // pred_region
    _
  $region29: #{neck_forward.63} parent=0 // pred_fallthru
    _
  // Predicated region
  $region30: #{neck_forward.63} parent=0 // pred_check
    _
  $region31: #{neck_forward.63} parent=0 // pred_check_branch
    %420 = sbr.rel (0) target = $region33
  $region32: #{neck_forward.63} parent=0 // pred_region
    _
  $region33: #{neck_forward.63} parent=0 // pred_fallthru
    _

// kernel: neck_forward.64
$region0: #{neck_forward.64}
  #allocation0 [shape = 'u32[]', space=smem, size = 0x4, offset = 0x4, fixed_abs, tag = 'smem constant byte address 0x4 - core index']
  #allocation1 [shape = 'u32[144,128]{1,0:T(1,128)}', space=vmem, size = 0x12000, scoped, tag = 'internal scratch']
  #allocation2 [shape = 'f32[32,128]{1,0:T(8,128)}', space=vmem, size = 0x4000, scoped, tag = 'scratch operand']
  %s0 = inlined_call_operand.vmem [shape: bf16[32,128], index: 0, kind: input, shape index: {}]
  %s1 = inlined_call_operand.vmem [shape: bf16[128,128], index: 1, kind: input, shape index: {}]
  %s2 = inlined_call_operand.vmem [shape: f32[1,128], index: 2, kind: input, shape index: {}]
  %s3 = inlined_call_operand.vmem [shape: f32[1,128], index: 3, kind: input, shape index: {}]
  %s4 = inlined_call_operand.vmem [shape: bf16[32,128], index: 4, kind: output, shape index: {}]
  %s5 = sld [smem:[#allocation0]]
  $region34: #{neck_forward.64} parent=0
    _
  %s7 = ssub.s32 1, %s5
  %s8 = scalar_select 0, %s7, %s5
  // Predicated region
  $region2: #{neck_forward.64} parent=0 // pred_check
    _
  $region3: #{neck_forward.64} parent=0 // pred_check_branch
    %10 = sbr.rel (0) target = $region5
  $region4: #{neck_forward.64} parent=0 // pred_region
    _
  $region5: #{neck_forward.64} parent=0 // pred_fallthru
    _
  // Predicated region
  $region6: #{neck_forward.64} parent=0 // pred_check
    _
  $region7: #{neck_forward.64} parent=0 // pred_check_branch
    %12 = sbr.rel (0) target = $region9
  $region8: #{neck_forward.64} parent=0 // pred_region
    _
  $region9: #{neck_forward.64} parent=0 // pred_fallthru
    _
  // Predicated region
  $region10: #{neck_forward.64} parent=0 // pred_check
    _
  $region11: #{neck_forward.64} parent=0 // pred_check_branch
    %14 = sbr.rel (0) target = $region13
  $region12: #{neck_forward.64} parent=0 // pred_region
    _
  $region13: #{neck_forward.64} parent=0 // pred_fallthru
    _
  // Predicated region
  $region14: #{neck_forward.64} parent=0 // pred_check
    _
  $region15: #{neck_forward.64} parent=0 // pred_check_branch
    %16 = sbr.rel (0) target = $region17
  $region16: #{neck_forward.64} parent=0 // pred_region
    _
  $region17: #{neck_forward.64} parent=0 // pred_fallthru
    _
  %p18 = scmp.eq.s32.totalorder 0, 0
  // Predicated region
  $region18: #{neck_forward.64} parent=0 // pred_check
    %p19 = pneg %p18
  $region19: #{neck_forward.64} parent=0 // pred_check_branch
    %21 = sbr.rel (%p19) target = $region21
  $region20: #{neck_forward.64} parent=0 // pred_region
    %22 = vst [vmem:[#allocation2] sm:$0xff] 0.0
    %23 = vst [vmem:[#allocation2 + $0x8] sm:$0xff] 0.0
    %24 = vst [vmem:[#allocation2 + $0x10] sm:$0xff] 0.0
    %25 = vst [vmem:[#allocation2 + $0x18] sm:$0xff] 0.0
  $region21: #{neck_forward.64} parent=0 // pred_fallthru
    _
  %v26 = vld [vmem:[#allocation2] sm:$0xff]
  %v27 = vld [vmem:[#allocation2 + $0x8] sm:$0xff]
  %v28 = vld [vmem:[#allocation2 + $0x10] sm:$0xff]
  %v29 = vld [vmem:[#allocation2 + $0x18] sm:$0xff]
  %v30 = vld [vmem:[%s0] sm:$0xf]
  %v31 = vld [vmem:[%s0 + $0x4] sm:$0xf]
  %v32 = vld [vmem:[%s0 + $0x8] sm:$0xf]
  %v33 = vld [vmem:[%s0 + $0xc] sm:$0xf]
  %v34 = vld [vmem:[%s1] sm:$0xf]
  %v35 = vld [vmem:[%s1 + $0x4] sm:$0xf]
  %v36 = vld [vmem:[%s1 + $0x8] sm:$0xf]
  %v37 = vld [vmem:[%s1 + $0xc] sm:$0xf]
  %v38 = vld [vmem:[%s1 + $0x10] sm:$0xf]
  %v39 = vld [vmem:[%s1 + $0x14] sm:$0xf]
  %v40 = vld [vmem:[%s1 + $0x18] sm:$0xf]
  %v41 = vld [vmem:[%s1 + $0x1c] sm:$0xf]
  %v42 = vld [vmem:[%s1 + $0x20] sm:$0xf]
  %v43 = vld [vmem:[%s1 + $0x24] sm:$0xf]
  %v44 = vld [vmem:[%s1 + $0x28] sm:$0xf]
  %v45 = vld [vmem:[%s1 + $0x2c] sm:$0xf]
  %v46 = vld [vmem:[%s1 + $0x30] sm:$0xf]
  %v47 = vld [vmem:[%s1 + $0x34] sm:$0xf]
  %v48 = vld [vmem:[%s1 + $0x38] sm:$0xf]
  %v49 = vld [vmem:[%s1 + $0x3c] sm:$0xf]
  %v54 = vunpack.c.l.b16 %v30
  %v55 = vunpack.c.l.b16 %v31
  %v56 = vunpack.c.l.b16 %v32
  %v57 = vunpack.c.l.b16 %v33
  %v58 = vpack.c.b16 %v55, %v54
  %v59 = vpack.c.b16 %v57, %v56
  %v78 = vunpack.c.l.b16 %v34
  %v79 = vunpack.c.l.b16 %v35
  %v80 = vunpack.c.l.b16 %v36
  %v81 = vunpack.c.l.b16 %v37
  %v82 = vunpack.c.l.b16 %v38
  %v83 = vunpack.c.l.b16 %v39
  %v84 = vunpack.c.l.b16 %v40
  %v85 = vunpack.c.l.b16 %v41
  %v86 = vunpack.c.l.b16 %v42
  %v87 = vunpack.c.l.b16 %v43
  %v88 = vunpack.c.l.b16 %v44
  %v89 = vunpack.c.l.b16 %v45
  %v90 = vunpack.c.l.b16 %v46
  %v91 = vunpack.c.l.b16 %v47
  %v92 = vunpack.c.l.b16 %v48
  %v93 = vunpack.c.l.b16 %v49
  %v94 = vpack.c.b16 %v79, %v78
  %v95 = vpack.c.b16 %v81, %v80
  %v96 = vpack.c.b16 %v83, %v82
  %v97 = vpack.c.b16 %v85, %v84
  %v98 = vpack.c.b16 %v87, %v86
  %v99 = vpack.c.b16 %v89, %v88
  %v100 = vpack.c.b16 %v91, %v90
  %v101 = vpack.c.b16 %v93, %v92
  %110 = vmatprep.subr.bf16.mxu0 0
  %111 = vmatpush1.bf16.msra.mxu0 %v101
  %112 = vmatprep.subr.bf16.mxu0 0
  %113 = vmatpush1.bf16.msra.mxu0 %v100
  %114 = vmatprep.subr.bf16.mxu0 0
  %115 = vmatpush1.bf16.msra.mxu0 %v99
  %116 = vmatprep.subr.bf16.mxu0 0
  %117 = vmatpush1.bf16.msra.mxu0 %v98
  %118 = vmatprep.subr.bf16.mxu0 0
  %119 = vmatpush1.bf16.msra.mxu0 %v97
  %120 = vmatprep.subr.bf16.mxu0 0
  %121 = vmatpush1.bf16.msra.mxu0 %v96
  %122 = vmatprep.subr.bf16.mxu0 0
  %123 = vmatpush1.bf16.msra.mxu0 %v95
  %124 = vmatprep.subr.bf16.mxu0 0
  %125 = vmatpush1.bf16.msra.mxu0 %v94
  %126 = vmatprep.subr.bf16.mxu0 0
  %127 = vmatpush2.bf16.msra.mxu0 0
  %128 = vmatprep.subr.bf16.mxu0 0
  %129 = vmatpush2.bf16.msra.mxu0 0
  %130 = vmatprep.subr.bf16.mxu0 0
  %131 = vmatpush2.bf16.msra.mxu0 0
  %132 = vmatprep.subr.bf16.mxu0 0
  %133 = vmatpush2.bf16.msra.mxu0 0
  %134 = vmatprep.subr.bf16.mxu0 0
  %135 = vmatpush2.bf16.msra.mxu0 0
  %136 = vmatprep.subr.bf16.mxu0 0
  %137 = vmatpush2.bf16.msra.mxu0 0
  %138 = vmatprep.subr.bf16.mxu0 0
  %139 = vmatpush2.bf16.msra.mxu0 0
  %140 = vmatprep.subr.bf16.mxu0 0
  %141 = vmatpush2.bf16.msra.mxu0 0
  %142 = vmatprep.mubr.bf16.mxu0 0
  %143 = vmatmul.mubr.bf16.gmra.mxu0 %v58
  %v144 = vpop.f32.mrf.mxu0
  %v145 = vadd.f32 0.0, %v144
  %v146 = vpop.f32.mrf.mxu0
  %v147 = vpop.f32.mrf.mxu0
  %v148 = vadd.f32 0.0, %v147
  %v149 = vpop.f32.mrf.mxu0
  %150 = vmatprep.mubr.bf16.mxu0 0
  %151 = vmatmul.mubr.bf16.gmra.mxu0 %v59
  %v152 = vpop.f32.mrf.mxu0
  %v153 = vadd.f32 0.0, %v152
  %v154 = vpop.f32.mrf.mxu0
  %v155 = vpop.f32.mrf.mxu0
  %v156 = vadd.f32 0.0, %v155
  %v157 = vpop.f32.mrf.mxu0
  %158 = vdwg.mxu0
  %v159 = vadd.f32 %v26, %v145
  %v160 = vadd.f32 %v27, %v148
  %v161 = vadd.f32 %v28, %v153
  %v162 = vadd.f32 %v29, %v156
  %163 = vst [vmem:[#allocation2] sm:$0xff] %v159
  %164 = vst [vmem:[#allocation2 + $0x8] sm:$0xff] %v160
  %165 = vst [vmem:[#allocation2 + $0x10] sm:$0xff] %v161
  %166 = vst [vmem:[#allocation2 + $0x18] sm:$0xff] %v162
  // Predicated region
  $region22: #{neck_forward.64} parent=0 // pred_check
    %p167 = pneg %p18
  $region23: #{neck_forward.64} parent=0 // pred_check_branch
    %169 = sbr.rel (%p167) target = $region25
  $region24: #{neck_forward.64} parent=0 // pred_region
    %v170 = vld [vmem:[#allocation2] sm:$0xff]
    %v171 = vld [vmem:[#allocation2 + $0x8] sm:$0xff]
    %v172 = vld [vmem:[#allocation2 + $0x10] sm:$0xff]
    %v173 = vld [vmem:[#allocation2 + $0x18] sm:$0xff]
    %v174 = vld [vmem:[%s2] sm:$0x1]
    %v176 = vlaneseq
    %v177 = vshrl.u32 %v176, 7
    %v178 = vsub.s32 0, %v177
    %v179 = vrot.slane %v174, %v178
    %v181 = vmul.f32 %v170, %v179
    %v182 = vmul.f32 %v171, %v179
    %v183 = vmul.f32 %v172, %v179
    %v184 = vmul.f32 %v173, %v179
    %v185 = vld [vmem:[%s3] sm:$0x1]
    %v187 = vlaneseq
    %v188 = vshrl.u32 %v187, 7
    %v189 = vsub.s32 0, %v188
    %v190 = vrot.slane %v185, %v189
    %v192 = vadd.f32 %v181, %v190
    %v193 = vadd.f32 %v182, %v190
    %v194 = vadd.f32 %v183, %v190
    %v195 = vadd.f32 %v184, %v190
    %v196 = vxor.u32 %v192, 2147483648
    %v197 = vxor.u32 %v193, 2147483648
    %v198 = vxor.u32 %v194, 2147483648
    %v199 = vxor.u32 %v195, 2147483648
    %v200 = vmul.f32 %v196, 1.442695
    %v201 = vpow.pop %v200
    %v202 = vmul.f32 %v197, 1.442695
    %v203 = vpow.pop %v202
    %v204 = vmul.f32 %v198, 1.442695
    %v205 = vpow.pop %v204
    %v206 = vmul.f32 %v199, 1.442695
    %v207 = vpow.pop %v206
    %v208 = vadd.f32 %v201, 1.0
    %v209 = vadd.f32 %v203, 1.0
    %v210 = vadd.f32 %v205, 1.0
    %v211 = vadd.f32 %v207, 1.0
    %v212 = vrcp.pop %v208
    %v213 = vmul.f32 1.0, %v212
    %v214 = vrcp.pop %v209
    %v215 = vmul.f32 1.0, %v214
    %v216 = vrcp.pop %v210
    %v217 = vmul.f32 1.0, %v216
    %v218 = vrcp.pop %v211
    %v219 = vmul.f32 1.0, %v218
    %v220 = vmul.f32 %v192, %v213
    %v221 = vmul.f32 %v193, %v215
    %v222 = vmul.f32 %v194, %v217
    %v223 = vmul.f32 %v195, %v219
    %v224 = vpack.c.bf16 %v221, %v220
    %v225 = vpack.c.bf16 %v223, %v222
    %v228 = vunpack.c.l.b16 %v224
    %v229 = vunpack.c.h.b16 %v224
    %v230 = vunpack.c.l.b16 %v225
    %v231 = vunpack.c.h.b16 %v225
    %v232 = vpack.c.b16 %v228, %v228
    %v233 = vpack.c.b16 %v229, %v229
    %v234 = vpack.c.b16 %v230, %v230
    %v235 = vpack.c.b16 %v231, %v231
    %240 = vst [vmem:[%s4] sm:$0xf] %v232
    %241 = vst [vmem:[%s4 + $0x4] sm:$0xf] %v233
    %242 = vst [vmem:[%s4 + $0x8] sm:$0xf] %v234
    %243 = vst [vmem:[%s4 + $0xc] sm:$0xf] %v235
  $region25: #{neck_forward.64} parent=0 // pred_fallthru
    _
  // Predicated region
  $region26: #{neck_forward.64} parent=0 // pred_check
    _
  $region27: #{neck_forward.64} parent=0 // pred_check_branch
    %245 = sbr.rel (0) target = $region29
  $region28: #{neck_forward.64} parent=0 // pred_region
    _
  $region29: #{neck_forward.64} parent=0 // pred_fallthru
    _
  // Predicated region
  $region30: #{neck_forward.64} parent=0 // pred_check
    _
  $region31: #{neck_forward.64} parent=0 // pred_check_branch
    %247 = sbr.rel (0) target = $region33
  $region32: #{neck_forward.64} parent=0 // pred_region
    _
  $region33: #{neck_forward.64} parent=0 // pred_fallthru
    _

// kernel: neck_forward.66
$region0: #{neck_forward.66}
  #allocation0 [shape = 'u32[]', space=smem, size = 0x4, offset = 0x4, fixed_abs, tag = 'smem constant byte address 0x4 - core index']
  #allocation1 [shape = 'u32[144,128]{1,0:T(1,128)}', space=vmem, size = 0x12000, scoped, tag = 'internal scratch']
  #allocation2 [shape = 'f32[32,128]{1,0:T(8,128)}', space=vmem, size = 0x4000, scoped, tag = 'scratch operand']
  %s0 = inlined_call_operand.vmem [shape: bf16[32,384], index: 0, kind: input, shape index: {}]
  %s1 = inlined_call_operand.vmem [shape: bf16[384,128], index: 1, kind: input, shape index: {}]
  %s2 = inlined_call_operand.vmem [shape: f32[1,128], index: 2, kind: input, shape index: {}]
  %s3 = inlined_call_operand.vmem [shape: f32[1,128], index: 3, kind: input, shape index: {}]
  %s4 = inlined_call_operand.vmem [shape: bf16[32,128], index: 4, kind: input, shape index: {}]
  %s5 = inlined_call_operand.vmem [shape: bf16[32,128], index: 5, kind: output, shape index: {}]
  %s6 = sld [smem:[#allocation0]]
  $region38: #{neck_forward.66} parent=0
    _
  %s8 = ssub.s32 1, %s6
  %s9 = scalar_select 0, %s8, %s6
  // Predicated region
  $region2: #{neck_forward.66} parent=0 // pred_check
    _
  $region3: #{neck_forward.66} parent=0 // pred_check_branch
    %11 = sbr.rel (0) target = $region5
  $region4: #{neck_forward.66} parent=0 // pred_region
    _
  $region5: #{neck_forward.66} parent=0 // pred_fallthru
    _
  // Predicated region
  $region6: #{neck_forward.66} parent=0 // pred_check
    _
  $region7: #{neck_forward.66} parent=0 // pred_check_branch
    %13 = sbr.rel (0) target = $region9
  $region8: #{neck_forward.66} parent=0 // pred_region
    _
  $region9: #{neck_forward.66} parent=0 // pred_fallthru
    _
  // Predicated region
  $region10: #{neck_forward.66} parent=0 // pred_check
    _
  $region11: #{neck_forward.66} parent=0 // pred_check_branch
    %15 = sbr.rel (0) target = $region13
  $region12: #{neck_forward.66} parent=0 // pred_region
    _
  $region13: #{neck_forward.66} parent=0 // pred_fallthru
    _
  // Predicated region
  $region14: #{neck_forward.66} parent=0 // pred_check
    _
  $region15: #{neck_forward.66} parent=0 // pred_check_branch
    %17 = sbr.rel (0) target = $region17
  $region16: #{neck_forward.66} parent=0 // pred_region
    _
  $region17: #{neck_forward.66} parent=0 // pred_fallthru
    _
  // Predicated region
  $region18: #{neck_forward.66} parent=0 // pred_check
    _
  $region19: #{neck_forward.66} parent=0 // pred_check_branch
    %19 = sbr.rel (0) target = $region21
  $region20: #{neck_forward.66} parent=0 // pred_region
    _
  $region21: #{neck_forward.66} parent=0 // pred_fallthru
    _
  %p21 = scmp.eq.s32.totalorder 0, 0
  // Predicated region
  $region22: #{neck_forward.66} parent=0 // pred_check
    %p22 = pneg %p21
  $region23: #{neck_forward.66} parent=0 // pred_check_branch
    %24 = sbr.rel (%p22) target = $region25
  $region24: #{neck_forward.66} parent=0 // pred_region
    %25 = vst [vmem:[#allocation2] sm:$0xff] 0.0
    %26 = vst [vmem:[#allocation2 + $0x8] sm:$0xff] 0.0
    %27 = vst [vmem:[#allocation2 + $0x10] sm:$0xff] 0.0
    %28 = vst [vmem:[#allocation2 + $0x18] sm:$0xff] 0.0
  $region25: #{neck_forward.66} parent=0 // pred_fallthru
    _
  %v29 = vld [vmem:[#allocation2] sm:$0xff]
  %v30 = vld [vmem:[#allocation2 + $0x8] sm:$0xff]
  %v31 = vld [vmem:[#allocation2 + $0x10] sm:$0xff]
  %v32 = vld [vmem:[#allocation2 + $0x18] sm:$0xff]
  %v33 = vld [vmem:[%s0] sm:$0xff]
  %v34 = vld [vmem:[%s0 + $0x8] sm:$0xf]
  %v35 = vld [vmem:[%s0 + $0xc] sm:$0xff]
  %v36 = vld [vmem:[%s0 + $0x14] sm:$0xf]
  %v37 = vld [vmem:[%s0 + $0x18] sm:$0xff]
  %v38 = vld [vmem:[%s0 + $0x20] sm:$0xf]
  %v39 = vld [vmem:[%s0 + $0x24] sm:$0xff]
  %v40 = vld [vmem:[%s0 + $0x2c] sm:$0xf]
  %v41 = vld [vmem:[%s1] sm:$0xf]
  %v42 = vld [vmem:[%s1 + $0x4] sm:$0xf]
  %v43 = vld [vmem:[%s1 + $0x8] sm:$0xf]
  %v44 = vld [vmem:[%s1 + $0xc] sm:$0xf]
  %v45 = vld [vmem:[%s1 + $0x10] sm:$0xf]
  %v46 = vld [vmem:[%s1 + $0x14] sm:$0xf]
  %v47 = vld [vmem:[%s1 + $0x18] sm:$0xf]
  %v48 = vld [vmem:[%s1 + $0x1c] sm:$0xf]
  %v49 = vld [vmem:[%s1 + $0x20] sm:$0xf]
  %v50 = vld [vmem:[%s1 + $0x24] sm:$0xf]
  %v51 = vld [vmem:[%s1 + $0x28] sm:$0xf]
  %v52 = vld [vmem:[%s1 + $0x2c] sm:$0xf]
  %v53 = vld [vmem:[%s1 + $0x30] sm:$0xf]
  %v54 = vld [vmem:[%s1 + $0x34] sm:$0xf]
  %v55 = vld [vmem:[%s1 + $0x38] sm:$0xf]
  %v56 = vld [vmem:[%s1 + $0x3c] sm:$0xf]
  %v57 = vld [vmem:[%s1 + $0x40] sm:$0xf]
  %v58 = vld [vmem:[%s1 + $0x44] sm:$0xf]
  %v59 = vld [vmem:[%s1 + $0x48] sm:$0xf]
  %v60 = vld [vmem:[%s1 + $0x4c] sm:$0xf]
  %v61 = vld [vmem:[%s1 + $0x50] sm:$0xf]
  %v62 = vld [vmem:[%s1 + $0x54] sm:$0xf]
  %v63 = vld [vmem:[%s1 + $0x58] sm:$0xf]
  %v64 = vld [vmem:[%s1 + $0x5c] sm:$0xf]
  %v65 = vld [vmem:[%s1 + $0x60] sm:$0xf]
  %v66 = vld [vmem:[%s1 + $0x64] sm:$0xf]
  %v67 = vld [vmem:[%s1 + $0x68] sm:$0xf]
  %v68 = vld [vmem:[%s1 + $0x6c] sm:$0xf]
  %v69 = vld [vmem:[%s1 + $0x70] sm:$0xf]
  %v70 = vld [vmem:[%s1 + $0x74] sm:$0xf]
  %v71 = vld [vmem:[%s1 + $0x78] sm:$0xf]
  %v72 = vld [vmem:[%s1 + $0x7c] sm:$0xf]
  %v73 = vld [vmem:[%s1 + $0x80] sm:$0xf]
  %v74 = vld [vmem:[%s1 + $0x84] sm:$0xf]
  %v75 = vld [vmem:[%s1 + $0x88] sm:$0xf]
  %v76 = vld [vmem:[%s1 + $0x8c] sm:$0xf]
  %v77 = vld [vmem:[%s1 + $0x90] sm:$0xf]
  %v78 = vld [vmem:[%s1 + $0x94] sm:$0xf]
  %v79 = vld [vmem:[%s1 + $0x98] sm:$0xf]
  %v80 = vld [vmem:[%s1 + $0x9c] sm:$0xf]
  %v81 = vld [vmem:[%s1 + $0xa0] sm:$0xf]
  %v82 = vld [vmem:[%s1 + $0xa4] sm:$0xf]
  %v83 = vld [vmem:[%s1 + $0xa8] sm:$0xf]
  %v84 = vld [vmem:[%s1 + $0xac] sm:$0xf]
  %v85 = vld [vmem:[%s1 + $0xb0] sm:$0xf]
  %v86 = vld [vmem:[%s1 + $0xb4] sm:$0xf]
  %v87 = vld [vmem:[%s1 + $0xb8] sm:$0xf]
  %v88 = vld [vmem:[%s1 + $0xbc] sm:$0xf]
  %v97 = vunpack.c.l.b16 %v33
  %v98 = vunpack.c.h.b16 %v33
  %v99 = vunpack.c.l.b16 %v34
  %v100 = vunpack.c.l.b16 %v35
  %v101 = vunpack.c.h.b16 %v35
  %v102 = vunpack.c.l.b16 %v36
  %v103 = vunpack.c.l.b16 %v37
  %v104 = vunpack.c.h.b16 %v37
  %v105 = vunpack.c.l.b16 %v38
  %v106 = vunpack.c.l.b16 %v39
  %v107 = vunpack.c.h.b16 %v39
  %v108 = vunpack.c.l.b16 %v40
  %v109 = vpack.c.b16 %v100, %v97
  %v110 = vpack.c.b16 %v101, %v98
  %v111 = vpack.c.b16 %v102, %v99
  %v112 = vpack.c.b16 %v106, %v103
  %v113 = vpack.c.b16 %v107, %v104
  %v114 = vpack.c.b16 %v108, %v105
  %v169 = vunpack.c.l.b16 %v41
  %v170 = vunpack.c.l.b16 %v42
  %v171 = vunpack.c.l.b16 %v43
  %v172 = vunpack.c.l.b16 %v44
  %v173 = vunpack.c.l.b16 %v45
  %v174 = vunpack.c.l.b16 %v46
  %v175 = vunpack.c.l.b16 %v47
  %v176 = vunpack.c.l.b16 %v48
  %v177 = vunpack.c.l.b16 %v49
  %v178 = vunpack.c.l.b16 %v50
  %v179 = vunpack.c.l.b16 %v51
  %v180 = vunpack.c.l.b16 %v52
  %v181 = vunpack.c.l.b16 %v53
  %v182 = vunpack.c.l.b16 %v54
  %v183 = vunpack.c.l.b16 %v55
  %v184 = vunpack.c.l.b16 %v56
  %v185 = vunpack.c.l.b16 %v57
  %v186 = vunpack.c.l.b16 %v58
  %v187 = vunpack.c.l.b16 %v59
  %v188 = vunpack.c.l.b16 %v60
  %v189 = vunpack.c.l.b16 %v61
  %v190 = vunpack.c.l.b16 %v62
  %v191 = vunpack.c.l.b16 %v63
  %v192 = vunpack.c.l.b16 %v64
  %v193 = vunpack.c.l.b16 %v65
  %v194 = vunpack.c.l.b16 %v66
  %v195 = vunpack.c.l.b16 %v67
  %v196 = vunpack.c.l.b16 %v68
  %v197 = vunpack.c.l.b16 %v69
  %v198 = vunpack.c.l.b16 %v70
  %v199 = vunpack.c.l.b16 %v71
  %v200 = vunpack.c.l.b16 %v72
  %v201 = vunpack.c.l.b16 %v73
  %v202 = vunpack.c.l.b16 %v74
  %v203 = vunpack.c.l.b16 %v75
  %v204 = vunpack.c.l.b16 %v76
  %v205 = vunpack.c.l.b16 %v77
  %v206 = vunpack.c.l.b16 %v78
  %v207 = vunpack.c.l.b16 %v79
  %v208 = vunpack.c.l.b16 %v80
  %v209 = vunpack.c.l.b16 %v81
  %v210 = vunpack.c.l.b16 %v82
  %v211 = vunpack.c.l.b16 %v83
  %v212 = vunpack.c.l.b16 %v84
  %v213 = vunpack.c.l.b16 %v85
  %v214 = vunpack.c.l.b16 %v86
  %v215 = vunpack.c.l.b16 %v87
  %v216 = vunpack.c.l.b16 %v88
  %v217 = vpack.c.b16 %v170, %v169
  %v218 = vpack.c.b16 %v172, %v171
  %v219 = vpack.c.b16 %v174, %v173
  %v220 = vpack.c.b16 %v176, %v175
  %v221 = vpack.c.b16 %v178, %v177
  %v222 = vpack.c.b16 %v180, %v179
  %v223 = vpack.c.b16 %v182, %v181
  %v224 = vpack.c.b16 %v184, %v183
  %v225 = vpack.c.b16 %v186, %v185
  %v226 = vpack.c.b16 %v188, %v187
  %v227 = vpack.c.b16 %v190, %v189
  %v228 = vpack.c.b16 %v192, %v191
  %v229 = vpack.c.b16 %v194, %v193
  %v230 = vpack.c.b16 %v196, %v195
  %v231 = vpack.c.b16 %v198, %v197
  %v232 = vpack.c.b16 %v200, %v199
  %v233 = vpack.c.b16 %v202, %v201
  %v234 = vpack.c.b16 %v204, %v203
  %v235 = vpack.c.b16 %v206, %v205
  %v236 = vpack.c.b16 %v208, %v207
  %v237 = vpack.c.b16 %v210, %v209
  %v238 = vpack.c.b16 %v212, %v211
  %v239 = vpack.c.b16 %v214, %v213
  %v240 = vpack.c.b16 %v216, %v215
  %265 = vmatprep.subr.bf16.mxu0 0
  %266 = vmatpush1.bf16.msra.mxu0 %v224
  %267 = vmatprep.subr.bf16.mxu0 0
  %268 = vmatpush1.bf16.msra.mxu0 %v223
  %269 = vmatprep.subr.bf16.mxu0 0
  %270 = vmatpush1.bf16.msra.mxu0 %v222
  %271 = vmatprep.subr.bf16.mxu0 0
  %272 = vmatpush1.bf16.msra.mxu0 %v221
  %273 = vmatprep.subr.bf16.mxu0 0
  %274 = vmatpush1.bf16.msra.mxu0 %v220
  %275 = vmatprep.subr.bf16.mxu0 0
  %276 = vmatpush1.bf16.msra.mxu0 %v219
  %277 = vmatprep.subr.bf16.mxu0 0
  %278 = vmatpush1.bf16.msra.mxu0 %v218
  %279 = vmatprep.subr.bf16.mxu0 0
  %280 = vmatpush1.bf16.msra.mxu0 %v217
  %281 = vmatprep.subr.bf16.mxu0 0
  %282 = vmatpush2.bf16.msra.mxu0 %v232
  %283 = vmatprep.subr.bf16.mxu0 0
  %284 = vmatpush2.bf16.msra.mxu0 %v231
  %285 = vmatprep.subr.bf16.mxu0 0
  %286 = vmatpush2.bf16.msra.mxu0 %v230
  %287 = vmatprep.subr.bf16.mxu0 0
  %288 = vmatpush2.bf16.msra.mxu0 %v229
  %289 = vmatprep.subr.bf16.mxu0 0
  %290 = vmatpush2.bf16.msra.mxu0 %v228
  %291 = vmatprep.subr.bf16.mxu0 0
  %292 = vmatpush2.bf16.msra.mxu0 %v227
  %293 = vmatprep.subr.bf16.mxu0 0
  %294 = vmatpush2.bf16.msra.mxu0 %v226
  %295 = vmatprep.subr.bf16.mxu0 0
  %296 = vmatpush2.bf16.msra.mxu0 %v225
  %297 = vmatprep.mubr.bf16.mxu0 %v110
  %298 = vmatmul.mubr.bf16.gmra.mxu0 %v109
  %v299 = vpop.f32.mrf.mxu0
  %v300 = vadd.f32 0.0, %v299
  %v301 = vpop.f32.mrf.mxu0
  %v302 = vpop.f32.mrf.mxu0
  %v303 = vadd.f32 0.0, %v302
  %v304 = vpop.f32.mrf.mxu0
  %305 = vmatprep.mubr.bf16.mxu0 %v113
  %306 = vmatmul.mubr.bf16.gmra.mxu0 %v112
  %v307 = vpop.f32.mrf.mxu0
  %v308 = vadd.f32 0.0, %v307
  %v309 = vpop.f32.mrf.mxu0
  %v310 = vpop.f32.mrf.mxu0
  %v311 = vadd.f32 0.0, %v310
  %v312 = vpop.f32.mrf.mxu0
  %313 = vdwg.mxu0
  %314 = vmatprep.subr.bf16.mxu0 0
  %315 = vmatpush1.bf16.msra.mxu0 %v240
  %316 = vmatprep.subr.bf16.mxu0 0
  %317 = vmatpush1.bf16.msra.mxu0 %v239
  %318 = vmatprep.subr.bf16.mxu0 0
  %319 = vmatpush1.bf16.msra.mxu0 %v238
  %320 = vmatprep.subr.bf16.mxu0 0
  %321 = vmatpush1.bf16.msra.mxu0 %v237
  %322 = vmatprep.subr.bf16.mxu0 0
  %323 = vmatpush1.bf16.msra.mxu0 %v236
  %324 = vmatprep.subr.bf16.mxu0 0
  %325 = vmatpush1.bf16.msra.mxu0 %v235
  %326 = vmatprep.subr.bf16.mxu0 0
  %327 = vmatpush1.bf16.msra.mxu0 %v234
  %328 = vmatprep.subr.bf16.mxu0 0
  %329 = vmatpush1.bf16.msra.mxu0 %v233
  %330 = vmatprep.subr.bf16.mxu0 0
  %331 = vmatpush2.bf16.msra.mxu0 0
  %332 = vmatprep.subr.bf16.mxu0 0
  %333 = vmatpush2.bf16.msra.mxu0 0
  %334 = vmatprep.subr.bf16.mxu0 0
  %335 = vmatpush2.bf16.msra.mxu0 0
  %336 = vmatprep.subr.bf16.mxu0 0
  %337 = vmatpush2.bf16.msra.mxu0 0
  %338 = vmatprep.subr.bf16.mxu0 0
  %339 = vmatpush2.bf16.msra.mxu0 0
  %340 = vmatprep.subr.bf16.mxu0 0
  %341 = vmatpush2.bf16.msra.mxu0 0
  %342 = vmatprep.subr.bf16.mxu0 0
  %343 = vmatpush2.bf16.msra.mxu0 0
  %344 = vmatprep.subr.bf16.mxu0 0
  %345 = vmatpush2.bf16.msra.mxu0 0
  %346 = vmatprep.mubr.bf16.mxu0 0
  %347 = vmatmul.mubr.bf16.gmra.mxu0 %v111
  %v348 = vpop.f32.mrf.mxu0
  %v349 = vadd.f32 %v300, %v348
  %v350 = vpop.f32.mrf.mxu0
  %v351 = vpop.f32.mrf.mxu0
  %v352 = vadd.f32 %v303, %v351
  %v353 = vpop.f32.mrf.mxu0
  %354 = vmatprep.mubr.bf16.mxu0 0
  %355 = vmatmul.mubr.bf16.gmra.mxu0 %v114
  %v356 = vpop.f32.mrf.mxu0
  %v357 = vadd.f32 %v308, %v356
  %v358 = vpop.f32.mrf.mxu0
  %v359 = vpop.f32.mrf.mxu0
  %v360 = vadd.f32 %v311, %v359
  %v361 = vpop.f32.mrf.mxu0
  %362 = vdwg.mxu0
  %v363 = vadd.f32 %v29, %v349
  %v364 = vadd.f32 %v30, %v352
  %v365 = vadd.f32 %v31, %v357
  %v366 = vadd.f32 %v32, %v360
  %367 = vst [vmem:[#allocation2] sm:$0xff] %v363
  %368 = vst [vmem:[#allocation2 + $0x8] sm:$0xff] %v364
  %369 = vst [vmem:[#allocation2 + $0x10] sm:$0xff] %v365
  %370 = vst [vmem:[#allocation2 + $0x18] sm:$0xff] %v366
  // Predicated region
  $region26: #{neck_forward.66} parent=0 // pred_check
    %p371 = pneg %p21
  $region27: #{neck_forward.66} parent=0 // pred_check_branch
    %373 = sbr.rel (%p371) target = $region29
  $region28: #{neck_forward.66} parent=0 // pred_region
    %v374 = vld [vmem:[#allocation2] sm:$0xff]
    %v375 = vld [vmem:[#allocation2 + $0x8] sm:$0xff]
    %v376 = vld [vmem:[#allocation2 + $0x10] sm:$0xff]
    %v377 = vld [vmem:[#allocation2 + $0x18] sm:$0xff]
    %v378 = vld [vmem:[%s2] sm:$0x1]
    %v380 = vlaneseq
    %v381 = vshrl.u32 %v380, 7
    %v382 = vsub.s32 0, %v381
    %v383 = vrot.slane %v378, %v382
    %v385 = vmul.f32 %v374, %v383
    %v386 = vmul.f32 %v375, %v383
    %v387 = vmul.f32 %v376, %v383
    %v388 = vmul.f32 %v377, %v383
    %v389 = vld [vmem:[%s3] sm:$0x1]
    %v391 = vlaneseq
    %v392 = vshrl.u32 %v391, 7
    %v393 = vsub.s32 0, %v392
    %v394 = vrot.slane %v389, %v393
    %v396 = vadd.f32 %v385, %v394
    %v397 = vadd.f32 %v386, %v394
    %v398 = vadd.f32 %v387, %v394
    %v399 = vadd.f32 %v388, %v394
    %v400 = vxor.u32 %v396, 2147483648
    %v401 = vxor.u32 %v397, 2147483648
    %v402 = vxor.u32 %v398, 2147483648
    %v403 = vxor.u32 %v399, 2147483648
    %v404 = vmul.f32 %v400, 1.442695
    %v405 = vpow.pop %v404
    %v406 = vmul.f32 %v401, 1.442695
    %v407 = vpow.pop %v406
    %v408 = vmul.f32 %v402, 1.442695
    %v409 = vpow.pop %v408
    %v410 = vmul.f32 %v403, 1.442695
    %v411 = vpow.pop %v410
    %v412 = vadd.f32 %v405, 1.0
    %v413 = vadd.f32 %v407, 1.0
    %v414 = vadd.f32 %v409, 1.0
    %v415 = vadd.f32 %v411, 1.0
    %v416 = vrcp.pop %v412
    %v417 = vmul.f32 1.0, %v416
    %v418 = vrcp.pop %v413
    %v419 = vmul.f32 1.0, %v418
    %v420 = vrcp.pop %v414
    %v421 = vmul.f32 1.0, %v420
    %v422 = vrcp.pop %v415
    %v423 = vmul.f32 1.0, %v422
    %v424 = vmul.f32 %v396, %v417
    %v425 = vmul.f32 %v397, %v419
    %v426 = vmul.f32 %v398, %v421
    %v427 = vmul.f32 %v399, %v423
    %v428 = vld [vmem:[%s4] sm:$0xf]
    %v429 = vld [vmem:[%s4 + $0x4] sm:$0xf]
    %v430 = vld [vmem:[%s4 + $0x8] sm:$0xf]
    %v431 = vld [vmem:[%s4 + $0xc] sm:$0xf]
    %v432 = vunpack.c.l.bf16 %v428
    %v433 = vunpack.c.l.bf16 %v429
    %v434 = vunpack.c.l.bf16 %v430
    %v435 = vunpack.c.l.bf16 %v431
    %v436 = vadd.f32 %v424, %v432
    %v437 = vadd.f32 %v425, %v433
    %v438 = vadd.f32 %v426, %v434
    %v439 = vadd.f32 %v427, %v435
    %v440 = vpack.c.bf16 %v437, %v436
    %v441 = vpack.c.bf16 %v439, %v438
    %v444 = vunpack.c.l.b16 %v440
    %v445 = vunpack.c.h.b16 %v440
    %v446 = vunpack.c.l.b16 %v441
    %v447 = vunpack.c.h.b16 %v441
    %v448 = vpack.c.b16 %v444, %v444
    %v449 = vpack.c.b16 %v445, %v445
    %v450 = vpack.c.b16 %v446, %v446
    %v451 = vpack.c.b16 %v447, %v447
    %456 = vst [vmem:[%s5] sm:$0xf] %v448
    %457 = vst [vmem:[%s5 + $0x4] sm:$0xf] %v449
    %458 = vst [vmem:[%s5 + $0x8] sm:$0xf] %v450
    %459 = vst [vmem:[%s5 + $0xc] sm:$0xf] %v451
  $region29: #{neck_forward.66} parent=0 // pred_fallthru
    _
  // Predicated region
  $region30: #{neck_forward.66} parent=0 // pred_check
    _
  $region31: #{neck_forward.66} parent=0 // pred_check_branch
    %461 = sbr.rel (0) target = $region33
  $region32: #{neck_forward.66} parent=0 // pred_region
    _
  $region33: #{neck_forward.66} parent=0 // pred_fallthru
    _
  // Predicated region
  $region34: #{neck_forward.66} parent=0 // pred_check
    _
  $region35: #{neck_forward.66} parent=0 // pred_check_branch
    %463 = sbr.rel (0) target = $region37
  $region36: #{neck_forward.66} parent=0 // pred_region
    _
  $region37: #{neck_forward.66} parent=0 // pred_fallthru
    _

// kernel: neck_forward.71
$region0: #{neck_forward.71}
  #allocation0 [shape = 'u32[]', space=smem, size = 0x4, offset = 0x4, fixed_abs, tag = 'smem constant byte address 0x4 - core index']
  #allocation1 [shape = 'u32[144,128]{1,0:T(1,128)}', space=vmem, size = 0x12000, scoped, tag = 'internal scratch']
  #allocation2 [shape = 'f32[32,128]{1,0:T(8,128)}', space=vmem, size = 0x4000, scoped, tag = 'scratch operand']
  %s0 = inlined_call_operand.vmem [shape: bf16[32,256], index: 0, kind: input, shape index: {}]
  %s1 = inlined_call_operand.vmem [shape: bf16[256,128], index: 1, kind: input, shape index: {}]
  %s2 = inlined_call_operand.vmem [shape: f32[1,128], index: 2, kind: input, shape index: {}]
  %s3 = inlined_call_operand.vmem [shape: f32[1,128], index: 3, kind: input, shape index: {}]
  %s4 = inlined_call_operand.hbm [shape: bf16[32,128], index: 4, kind: output, shape index: {}]
  %s5 = sld [smem:[#allocation0]]
  $region34: #{neck_forward.71} parent=0
    _
  %s7 = ssub.s32 1, %s5
  %s8 = scalar_select 0, %s7, %s5
  $region1: #{neck_forward.71} parent=0
    #allocation3 [shape = 'u8[8192]{0}', space=vmem, size = 0x2000, scoped, tag = 'output window, operand 0, single buffered']
    #allocation4 [shape = 's32[1]{0}', space=sflag, size = 0x4, scoped, tag = 'scoped memory for neck_forward.71']
    %9 = vsyncpa [#allocation4], 0
    // Predicated region
    $region2: #{neck_forward.71} parent=1 // pred_check
      _
    $region3: #{neck_forward.71} parent=1 // pred_check_branch
      %11 = sbr.rel (0) target = $region5
    $region4: #{neck_forward.71} parent=1 // pred_region
      _
    $region5: #{neck_forward.71} parent=1 // pred_fallthru
      _
    // Predicated region
    $region6: #{neck_forward.71} parent=1 // pred_check
      _
    $region7: #{neck_forward.71} parent=1 // pred_check_branch
      %13 = sbr.rel (0) target = $region9
    $region8: #{neck_forward.71} parent=1 // pred_region
      _
    $region9: #{neck_forward.71} parent=1 // pred_fallthru
      _
    // Predicated region
    $region10: #{neck_forward.71} parent=1 // pred_check
      _
    $region11: #{neck_forward.71} parent=1 // pred_check_branch
      %15 = sbr.rel (0) target = $region13
    $region12: #{neck_forward.71} parent=1 // pred_region
      _
    $region13: #{neck_forward.71} parent=1 // pred_fallthru
      _
    // Predicated region
    $region14: #{neck_forward.71} parent=1 // pred_check
      _
    $region15: #{neck_forward.71} parent=1 // pred_check_branch
      %17 = sbr.rel (0) target = $region17
    $region16: #{neck_forward.71} parent=1 // pred_region
      _
    $region17: #{neck_forward.71} parent=1 // pred_fallthru
      _
    %p19 = scmp.eq.s32.totalorder 0, 0
    // Predicated region
    $region18: #{neck_forward.71} parent=1 // pred_check
      %p20 = pneg %p19
    $region19: #{neck_forward.71} parent=1 // pred_check_branch
      %22 = sbr.rel (%p20) target = $region21
    $region20: #{neck_forward.71} parent=1 // pred_region
      %23 = vst [vmem:[#allocation2] sm:$0xff] 0.0
      %24 = vst [vmem:[#allocation2 + $0x8] sm:$0xff] 0.0
      %25 = vst [vmem:[#allocation2 + $0x10] sm:$0xff] 0.0
      %26 = vst [vmem:[#allocation2 + $0x18] sm:$0xff] 0.0
    $region21: #{neck_forward.71} parent=1 // pred_fallthru
      _
    %v27 = vld [vmem:[#allocation2] sm:$0xff]
    %v28 = vld [vmem:[#allocation2 + $0x8] sm:$0xff]
    %v29 = vld [vmem:[#allocation2 + $0x10] sm:$0xff]
    %v30 = vld [vmem:[#allocation2 + $0x18] sm:$0xff]
    %v31 = vld [vmem:[%s0] sm:$0xff]
    %v32 = vld [vmem:[%s0 + $0x8] sm:$0xff]
    %v33 = vld [vmem:[%s0 + $0x10] sm:$0xff]
    %v34 = vld [vmem:[%s0 + $0x18] sm:$0xff]
    %v35 = vld [vmem:[%s1] sm:$0xf]
    %v36 = vld [vmem:[%s1 + $0x4] sm:$0xf]
    %v37 = vld [vmem:[%s1 + $0x8] sm:$0xf]
    %v38 = vld [vmem:[%s1 + $0xc] sm:$0xf]
    %v39 = vld [vmem:[%s1 + $0x10] sm:$0xf]
    %v40 = vld [vmem:[%s1 + $0x14] sm:$0xf]
    %v41 = vld [vmem:[%s1 + $0x18] sm:$0xf]
    %v42 = vld [vmem:[%s1 + $0x1c] sm:$0xf]
    %v43 = vld [vmem:[%s1 + $0x20] sm:$0xf]
    %v44 = vld [vmem:[%s1 + $0x24] sm:$0xf]
    %v45 = vld [vmem:[%s1 + $0x28] sm:$0xf]
    %v46 = vld [vmem:[%s1 + $0x2c] sm:$0xf]
    %v47 = vld [vmem:[%s1 + $0x30] sm:$0xf]
    %v48 = vld [vmem:[%s1 + $0x34] sm:$0xf]
    %v49 = vld [vmem:[%s1 + $0x38] sm:$0xf]
    %v50 = vld [vmem:[%s1 + $0x3c] sm:$0xf]
    %v51 = vld [vmem:[%s1 + $0x40] sm:$0xf]
    %v52 = vld [vmem:[%s1 + $0x44] sm:$0xf]
    %v53 = vld [vmem:[%s1 + $0x48] sm:$0xf]
    %v54 = vld [vmem:[%s1 + $0x4c] sm:$0xf]
    %v55 = vld [vmem:[%s1 + $0x50] sm:$0xf]
    %v56 = vld [vmem:[%s1 + $0x54] sm:$0xf]
    %v57 = vld [vmem:[%s1 + $0x58] sm:$0xf]
    %v58 = vld [vmem:[%s1 + $0x5c] sm:$0xf]
    %v59 = vld [vmem:[%s1 + $0x60] sm:$0xf]
    %v60 = vld [vmem:[%s1 + $0x64] sm:$0xf]
    %v61 = vld [vmem:[%s1 + $0x68] sm:$0xf]
    %v62 = vld [vmem:[%s1 + $0x6c] sm:$0xf]
    %v63 = vld [vmem:[%s1 + $0x70] sm:$0xf]
    %v64 = vld [vmem:[%s1 + $0x74] sm:$0xf]
    %v65 = vld [vmem:[%s1 + $0x78] sm:$0xf]
    %v66 = vld [vmem:[%s1 + $0x7c] sm:$0xf]
    %v71 = vunpack.c.l.b16 %v31
    %v72 = vunpack.c.h.b16 %v31
    %v73 = vunpack.c.l.b16 %v32
    %v74 = vunpack.c.h.b16 %v32
    %v75 = vunpack.c.l.b16 %v33
    %v76 = vunpack.c.h.b16 %v33
    %v77 = vunpack.c.l.b16 %v34
    %v78 = vunpack.c.h.b16 %v34
    %v79 = vpack.c.b16 %v73, %v71
    %v80 = vpack.c.b16 %v74, %v72
    %v81 = vpack.c.b16 %v77, %v75
    %v82 = vpack.c.b16 %v78, %v76
    %v119 = vunpack.c.l.b16 %v35
    %v120 = vunpack.c.l.b16 %v36
    %v121 = vunpack.c.l.b16 %v37
    %v122 = vunpack.c.l.b16 %v38
    %v123 = vunpack.c.l.b16 %v39
    %v124 = vunpack.c.l.b16 %v40
    %v125 = vunpack.c.l.b16 %v41
    %v126 = vunpack.c.l.b16 %v42
    %v127 = vunpack.c.l.b16 %v43
    %v128 = vunpack.c.l.b16 %v44
    %v129 = vunpack.c.l.b16 %v45
    %v130 = vunpack.c.l.b16 %v46
    %v131 = vunpack.c.l.b16 %v47
    %v132 = vunpack.c.l.b16 %v48
    %v133 = vunpack.c.l.b16 %v49
    %v134 = vunpack.c.l.b16 %v50
    %v135 = vunpack.c.l.b16 %v51
    %v136 = vunpack.c.l.b16 %v52
    %v137 = vunpack.c.l.b16 %v53
    %v138 = vunpack.c.l.b16 %v54
    %v139 = vunpack.c.l.b16 %v55
    %v140 = vunpack.c.l.b16 %v56
    %v141 = vunpack.c.l.b16 %v57
    %v142 = vunpack.c.l.b16 %v58
    %v143 = vunpack.c.l.b16 %v59
    %v144 = vunpack.c.l.b16 %v60
    %v145 = vunpack.c.l.b16 %v61
    %v146 = vunpack.c.l.b16 %v62
    %v147 = vunpack.c.l.b16 %v63
    %v148 = vunpack.c.l.b16 %v64
    %v149 = vunpack.c.l.b16 %v65
    %v150 = vunpack.c.l.b16 %v66
    %v151 = vpack.c.b16 %v120, %v119
    %v152 = vpack.c.b16 %v122, %v121
    %v153 = vpack.c.b16 %v124, %v123
    %v154 = vpack.c.b16 %v126, %v125
    %v155 = vpack.c.b16 %v128, %v127
    %v156 = vpack.c.b16 %v130, %v129
    %v157 = vpack.c.b16 %v132, %v131
    %v158 = vpack.c.b16 %v134, %v133
    %v159 = vpack.c.b16 %v136, %v135
    %v160 = vpack.c.b16 %v138, %v137
    %v161 = vpack.c.b16 %v140, %v139
    %v162 = vpack.c.b16 %v142, %v141
    %v163 = vpack.c.b16 %v144, %v143
    %v164 = vpack.c.b16 %v146, %v145
    %v165 = vpack.c.b16 %v148, %v147
    %v166 = vpack.c.b16 %v150, %v149
    %183 = vmatprep.subr.bf16.mxu0 0
    %184 = vmatpush1.bf16.msra.mxu0 %v158
    %185 = vmatprep.subr.bf16.mxu0 0
    %186 = vmatpush1.bf16.msra.mxu0 %v157
    %187 = vmatprep.subr.bf16.mxu0 0
    %188 = vmatpush1.bf16.msra.mxu0 %v156
    %189 = vmatprep.subr.bf16.mxu0 0
    %190 = vmatpush1.bf16.msra.mxu0 %v155
    %191 = vmatprep.subr.bf16.mxu0 0
    %192 = vmatpush1.bf16.msra.mxu0 %v154
    %193 = vmatprep.subr.bf16.mxu0 0
    %194 = vmatpush1.bf16.msra.mxu0 %v153
    %195 = vmatprep.subr.bf16.mxu0 0
    %196 = vmatpush1.bf16.msra.mxu0 %v152
    %197 = vmatprep.subr.bf16.mxu0 0
    %198 = vmatpush1.bf16.msra.mxu0 %v151
    %199 = vmatprep.subr.bf16.mxu0 0
    %200 = vmatpush2.bf16.msra.mxu0 %v166
    %201 = vmatprep.subr.bf16.mxu0 0
    %202 = vmatpush2.bf16.msra.mxu0 %v165
    %203 = vmatprep.subr.bf16.mxu0 0
    %204 = vmatpush2.bf16.msra.mxu0 %v164
    %205 = vmatprep.subr.bf16.mxu0 0
    %206 = vmatpush2.bf16.msra.mxu0 %v163
    %207 = vmatprep.subr.bf16.mxu0 0
    %208 = vmatpush2.bf16.msra.mxu0 %v162
    %209 = vmatprep.subr.bf16.mxu0 0
    %210 = vmatpush2.bf16.msra.mxu0 %v161
    %211 = vmatprep.subr.bf16.mxu0 0
    %212 = vmatpush2.bf16.msra.mxu0 %v160
    %213 = vmatprep.subr.bf16.mxu0 0
    %214 = vmatpush2.bf16.msra.mxu0 %v159
    %215 = vmatprep.mubr.bf16.mxu0 %v80
    %216 = vmatmul.mubr.bf16.gmra.mxu0 %v79
    %v217 = vpop.f32.mrf.mxu0
    %v218 = vadd.f32 0.0, %v217
    %v219 = vpop.f32.mrf.mxu0
    %v220 = vpop.f32.mrf.mxu0
    %v221 = vadd.f32 0.0, %v220
    %v222 = vpop.f32.mrf.mxu0
    %223 = vmatprep.mubr.bf16.mxu0 %v82
    %224 = vmatmul.mubr.bf16.gmra.mxu0 %v81
    %v225 = vpop.f32.mrf.mxu0
    %v226 = vadd.f32 0.0, %v225
    %v227 = vpop.f32.mrf.mxu0
    %v228 = vpop.f32.mrf.mxu0
    %v229 = vadd.f32 0.0, %v228
    %v230 = vpop.f32.mrf.mxu0
    %231 = vdwg.mxu0
    %v232 = vadd.f32 %v27, %v218
    %v233 = vadd.f32 %v28, %v221
    %v234 = vadd.f32 %v29, %v226
    %v235 = vadd.f32 %v30, %v229
    %236 = vst [vmem:[#allocation2] sm:$0xff] %v232
    %237 = vst [vmem:[#allocation2 + $0x8] sm:$0xff] %v233
    %238 = vst [vmem:[#allocation2 + $0x10] sm:$0xff] %v234
    %239 = vst [vmem:[#allocation2 + $0x18] sm:$0xff] %v235
    // Predicated region
    $region22: #{neck_forward.71} parent=1 // pred_check
      %p240 = pneg %p19
    $region23: #{neck_forward.71} parent=1 // pred_check_branch
      %242 = sbr.rel (%p240) target = $region25
    $region24: #{neck_forward.71} parent=1 // pred_region
      %v243 = vld [vmem:[#allocation2] sm:$0xff]
      %v244 = vld [vmem:[#allocation2 + $0x8] sm:$0xff]
      %v245 = vld [vmem:[#allocation2 + $0x10] sm:$0xff]
      %v246 = vld [vmem:[#allocation2 + $0x18] sm:$0xff]
      %v247 = vld [vmem:[%s2] sm:$0x1]
      %v249 = vlaneseq
      %v250 = vshrl.u32 %v249, 7
      %v251 = vsub.s32 0, %v250
      %v252 = vrot.slane %v247, %v251
      %v254 = vmul.f32 %v243, %v252
      %v255 = vmul.f32 %v244, %v252
      %v256 = vmul.f32 %v245, %v252
      %v257 = vmul.f32 %v246, %v252
      %v258 = vld [vmem:[%s3] sm:$0x1]
      %v260 = vlaneseq
      %v261 = vshrl.u32 %v260, 7
      %v262 = vsub.s32 0, %v261
      %v263 = vrot.slane %v258, %v262
      %v265 = vadd.f32 %v254, %v263
      %v266 = vadd.f32 %v255, %v263
      %v267 = vadd.f32 %v256, %v263
      %v268 = vadd.f32 %v257, %v263
      %v269 = vxor.u32 %v265, 2147483648
      %v270 = vxor.u32 %v266, 2147483648
      %v271 = vxor.u32 %v267, 2147483648
      %v272 = vxor.u32 %v268, 2147483648
      %v273 = vmul.f32 %v269, 1.442695
      %v274 = vpow.pop %v273
      %v275 = vmul.f32 %v270, 1.442695
      %v276 = vpow.pop %v275
      %v277 = vmul.f32 %v271, 1.442695
      %v278 = vpow.pop %v277
      %v279 = vmul.f32 %v272, 1.442695
      %v280 = vpow.pop %v279
      %v281 = vadd.f32 %v274, 1.0
      %v282 = vadd.f32 %v276, 1.0
      %v283 = vadd.f32 %v278, 1.0
      %v284 = vadd.f32 %v280, 1.0
      %v285 = vrcp.pop %v281
      %v286 = vmul.f32 1.0, %v285
      %v287 = vrcp.pop %v282
      %v288 = vmul.f32 1.0, %v287
      %v289 = vrcp.pop %v283
      %v290 = vmul.f32 1.0, %v289
      %v291 = vrcp.pop %v284
      %v292 = vmul.f32 1.0, %v291
      %v293 = vmul.f32 %v265, %v286
      %v294 = vmul.f32 %v266, %v288
      %v295 = vmul.f32 %v267, %v290
      %v296 = vmul.f32 %v268, %v292
      %v297 = vpack.c.bf16 %v294, %v293
      %v298 = vpack.c.bf16 %v296, %v295
      %v301 = vunpack.c.l.b16 %v297
      %v302 = vunpack.c.h.b16 %v297
      %v303 = vunpack.c.l.b16 %v298
      %v304 = vunpack.c.h.b16 %v298
      %v305 = vpack.c.b16 %v301, %v301
      %v306 = vpack.c.b16 %v302, %v302
      %v307 = vpack.c.b16 %v303, %v303
      %v308 = vpack.c.b16 %v304, %v304
      %313 = vst [vmem:[#allocation3] sm:$0xf] %v305
      %314 = vst [vmem:[#allocation3 + $0x4] sm:$0xf] %v306
      %315 = vst [vmem:[#allocation3 + $0x8] sm:$0xf] %v307
      %316 = vst [vmem:[#allocation3 + $0xc] sm:$0xf] %v308
    $region25: #{neck_forward.71} parent=1 // pred_fallthru
      _
    // Predicated region
    $region26: #{neck_forward.71} parent=1 // pred_check
      _
    $region27: #{neck_forward.71} parent=1 // pred_check_branch
      %318 = sbr.rel (0) target = $region29
    $region28: #{neck_forward.71} parent=1 // pred_region
      %s320 = ssub.s32 256, 256
      %321 = vsyncadd [#allocation4], %s320
      %s322 = sshll.u32 [#allocation3], 4
      %s323 = int_to_ptr.vmem [resolvable:$true] %s322
      %328 = dma.vmem_to_hbm [thread:$0]  %s323, 256, %s4, [#allocation4], 64, 64, 4
    $region29: #{neck_forward.71} parent=1 // pred_fallthru
      _
    // Predicated region
    $region30: #{neck_forward.71} parent=1 // pred_check
      _
    $region31: #{neck_forward.71} parent=1 // pred_check_branch
      %330 = sbr.rel (0) target = $region33
    $region32: #{neck_forward.71} parent=1 // pred_region
      %331 = dma.done [#allocation4], 256
    $region33: #{neck_forward.71} parent=1 // pred_fallthru
      _
    %332 = vsyncpa [#allocation4], 1

</llo_original>
